<compile_context>
chip_gen: v5e
topology: v5e:2x2
jax: 0.10.0
libtpu: 0.0.40
codegen_flags: <defaults>
</compile_context>

<pallas_src>
import functools

import jax
import jax.numpy as jnp
from jax.experimental import pallas as pl
from jax.experimental.pallas import tpu as pltpu


def _softmax_last(x):
    """Softmax over the last axis; denominator reciprocal goes to the EUP."""
    m = jnp.max(x, axis=-1, keepdims=True)
    e = jnp.exp(x - m)
    return e * pl.reciprocal(jnp.sum(e, axis=-1, keepdims=True), approx=True)


def _inter_modality_kernel(
    # flattened activations / masks (rows = batch_tile * seq)
    v_ref, q_ref, k_ref, vm_ref, qm_ref, km_ref,
    # pre-split projection weights (only the chunks the forward actually uses)
    wvq_ref, bvq_ref,        # v -> v_q            [Dv, O], [1, O]
    wqk_ref, bqk_ref,        # q -> q_k            [Dq, O], [1, O]
    wqv_ref, bqv_ref,        # q -> q_v            [Dq, O], [1, O]
    wkk_ref, bkk_ref,        # k -> k_k            [Dk, O], [1, O]
    wkq_ref, bkq_ref,        # k -> k_q (== "kv")  [Dk, O], [1, O]
    # combined output weights: columns [:O] -> updated_V, [O:] -> updated_v
    wov_ref, woq_ref, wok_ref, bo_ref,
    out_ref,
    *, output_size, num_head, batch_tile, num_obj, len_q, len_k):
    f32 = jnp.float32
    O, H, Bt = output_size, num_head, batch_tile
    No, Lq, Lk = num_obj, len_q, len_k
    hd = O // H
    inv_scale = jnp.float32(1.0 / (float(hd) ** 0.5))
    neg_big = jnp.float32(-1e9)

    relu = lambda x: jnp.maximum(x, 0.0)

    def proj(act, w_ref, b_ref, gate):
        return (jnp.dot(act, w_ref[...], preferred_element_type=f32)
                + b_ref[...]) * gate

    # Whole batch tile at once: rows are (batch, position) flattened so the
    # projection matmuls run at [Bt*seq, D] granularity on the MXU.
    v_in = v_ref[...]                       # [Bt*No, Dv]
    vm = vm_ref[...]                        # [Bt*No, 1]
    qm = qm_ref[...]                        # [Bt*Lq, 1]
    km = km_ref[...]                        # [Bt*Lk, 1]
    v_act = relu(v_in)
    q_act = relu(q_ref[...])
    k_act = relu(k_ref[...])

    v_q = proj(v_act, wvq_ref, bvq_ref, vm)   # [Bt*No, O]
    q_k = proj(q_act, wqk_ref, bqk_ref, qm)   # [Bt*Lq, O]
    q_v = proj(q_act, wqv_ref, bqv_ref, qm)   # [Bt*Lq, O]
    k_k = proj(k_act, wkk_ref, bkk_ref, km)   # [Bt*Lk, O]
    k_q = proj(k_act, wkq_ref, bkq_ref, km)   # [Bt*Lk, O]; also used as values
                                              # (original splits "kv" from k_q)

    # NOTE: the v->q (q_update) branch of the original forward is dead code
    # (never used in the returned outputs), so it is not computed.

    vq_rows = []
    vk_rows = []
    for b in range(Bt):                       # unrolled; Bt is small & static
        vq_b = v_q[b * No:(b + 1) * No].reshape(No, H, hd)
        qk_b = q_k[b * Lq:(b + 1) * Lq].reshape(Lq, H, hd)
        qv_b = q_v[b * Lq:(b + 1) * Lq].reshape(Lq, H, hd)
        kk_b = k_k[b * Lk:(b + 1) * Lk].reshape(Lk, H, hd)
        kq_b = k_q[b * Lk:(b + 1) * Lk].reshape(Lk, H, hd)

        # key-axis pad masks, derived once per batch (not per head) in-kernel
        q_pad = qm[b * Lq:(b + 1) * Lq].reshape(1, Lq) == 0.0
        k_pad = km[b * Lk:(b + 1) * Lk].reshape(1, Lk) == 0.0

        # q -> v attention, all heads in one batched contraction
        q2v = jnp.einsum('nhd,lhd->hnl', vq_b, qk_b,
                         preferred_element_type=f32)            # [H, No, Lq]
        q2v = jnp.where(q_pad, neg_big, q2v) * inv_scale        # mask BEFORE scale
        vq_ctx = jnp.einsum('hnl,lhd->nhd', _softmax_last(q2v), qv_b,
                            preferred_element_type=f32)         # [No, H, hd]
        vq_rows.append(vq_ctx.reshape(No, O))

        # k -> v attention (values are k_q: faithful to the original split quirk)
        k2v = jnp.einsum('nhd,lhd->hnl', kq_b, kk_b,
                         preferred_element_type=f32)            # [H, Lk, Lk]
        k2v = jnp.where(k_pad, neg_big, k2v) * inv_scale
        vk_ctx = jnp.einsum('hnl,lhd->nhd', _softmax_last(k2v), kq_b,
                            preferred_element_type=f32)         # [Lk, H, hd]
        vk_rows.append(vk_ctx.reshape(Lk, O))

    vq_update = vq_rows[0] if Bt == 1 else jnp.concatenate(vq_rows, axis=0)
    vk_update = vk_rows[0] if Bt == 1 else jnp.concatenate(vk_rows, axis=0)

    # Output Linears as partial products (no cat_v / cat_v2qk lane concat);
    # both outputs written as one lane-dense [Bt*No, 2*O] slab.
    out = (jnp.dot(v_in, wov_ref[...], preferred_element_type=f32)
           + jnp.dot(vq_update, woq_ref[...], preferred_element_type=f32)
           + jnp.dot(vk_update, wok_ref[...], preferred_element_type=f32)
           + bo_ref[...])
    out_ref[...] = out


def inter_modality_update(v, q, k, v_mask, q_mask, k_mask, params, *,
                          output_size, num_head, batch_tile=None):
    f32 = jnp.float32
    B, No, Dv = v.shape
    _, Lq, Dq = q.shape
    _, Lk, Dk = k.shape
    O, H = output_size, num_head

    # shape constraints implied by the original forward -- fail loudly
    assert O % H == 0, "output_size must be divisible by num_head"
    assert Lk == No, "module requires num_obj == max_len_k"
    assert Dk == O, "module requires k_size == output_size"
    assert params['Wv'].shape == (Dv, 3 * O) and params['Wq'].shape == (Dq, 3 * O)
    assert params['Wk'].shape == (Dk, 3 * O)
    assert params['Wvo'].shape == (Dv + O, O)
    assert params['Wko'].shape == (Dv + 2 * O, O)

    if batch_tile is None:
        # Whole batch per grid step: amortizes grid + DMA overhead and fills
        # MXU sublanes.  (On v7x one may set batch_tile=B//2 so the "parallel"
        # grid axis shards across both TensorCores.)  VMEM is ample for these
        # feature sizes on v5e/v6e/v7x; no vmem_limit override needed.
        batch_tile = B
    Bt = batch_tile
    assert B % Bt == 0
    n_steps = B // Bt
    if n_steps > 1:
        # blocks smaller than the full row extent must stay sublane-aligned
        assert (Bt * No) % 8 == 0 and (Bt * Lq) % 8 == 0 and (Bt * Lk) % 8 == 0

    # --- flatten batch into the sublane (row) axis (free XLA reshapes) ---
    v2 = v.astype(f32).reshape(B * No, Dv)
    q2 = q.astype(f32).reshape(B * Lq, Dq)
    k2 = k.astype(f32).reshape(B * Lk, Dk)
    vm = v_mask.astype(f32).reshape(B * No, 1)
    qm = q_mask.astype(f32).reshape(B * Lq, 1)
    km = k_mask.astype(f32).reshape(B * Lk, 1)

    # --- pre-split weights into exactly the chunks the forward uses ---
    Wv, bv = params['Wv'], params['bv']
    Wq, bq = params['Wq'], params['bq']
    Wk, bk = params['Wk'], params['bk']
    Wvo, bvo = params['Wvo'], params['bvo']
    Wko, bko = params['Wko'], params['bko']

    Wv_q, bv_q = Wv[:, O:2 * O], bv[:, O:2 * O]
    Wq_k, bq_k = Wq[:, :O], bq[:, :O]
    Wq_v, bq_v = Wq[:, 2 * O:], bq[:, 2 * O:]
    Wk_k, bk_k = Wk[:, :O], bk[:, :O]
    Wk_q, bk_q = Wk[:, O:2 * O], bk[:, O:2 * O]

    # combined output weights: columns [:O] -> updated_V (Wko path),
    # columns [O:] -> updated_v (Wvo path; vk partial has no Wvo term).
    Wo_v = jnp.concatenate([Wko[:Dv], Wvo[:Dv]], axis=1)                    # [Dv, 2O]
    Wo_q = jnp.concatenate([Wko[Dv:Dv + O], Wvo[Dv:Dv + O]], axis=1)        # [O, 2O]
    Wo_k = jnp.concatenate([Wko[Dv + O:Dv + 2 * O],
                            jnp.zeros((O, O), f32)], axis=1)                # [O, 2O]
    b_o = jnp.concatenate([bko, bvo], axis=1)                               # [1, 2O]

    weights = [Wv_q, bv_q, Wq_k, bq_k, Wq_v, bq_v, Wk_k, bk_k, Wk_q, bk_q,
               Wo_v, Wo_q, Wo_k, b_o]

    def row_spec(seq, feat):
        return pl.BlockSpec((Bt * seq, feat), lambda i: (i, 0))

    in_specs = ([row_spec(No, Dv), row_spec(Lq, Dq), row_spec(Lk, Dk),
                 row_spec(No, 1), row_spec(Lq, 1), row_spec(Lk, 1)]
                + [pl.BlockSpec(w.shape, lambda i: (0, 0)) for w in weights])

    out_shape = jax.ShapeDtypeStruct((B * No, 2 * O), f32)
    out_specs = pl.BlockSpec((Bt * No, 2 * O), lambda i: (i, 0))

    kernel = functools.partial(_inter_modality_kernel,
                               output_size=O, num_head=H, batch_tile=Bt,
                               num_obj=No, len_q=Lq, len_k=Lk)

    out = pl.pallas_call(
        kernel,
        out_shape=out_shape,
        grid=(n_steps,),
        in_specs=in_specs,
        out_specs=out_specs,
        compiler_params=pltpu.CompilerParams(
            dimension_semantics=("parallel",)),
    )(v2, q2, k2, vm, qm, km, *weights)

    updated_V = out[:, :O].reshape(B, No, O)
    updated_v = out[:, O:].reshape(B, No, O)
    return updated_V, updated_v


def reference(v, q, k, v_mask, q_mask, k_mask, p, *, output_size, num_head):
    """Pure-JAX replica of the PyTorch forward (outputs only)."""
    O, H = output_size, num_head
    hd = O // H
    relu = lambda x: jnp.maximum(x, 0.0)
    v_trans = (relu(v) @ p['Wv'] + p['bv']) * v_mask[:, :, None]
    q_trans = (relu(q) @ p['Wq'] + p['bq']) * q_mask[:, :, None]
    k_trans = (relu(k) @ p['Wk'] + p['bk']) * k_mask[:, :, None]
    v_q = v_trans[:, :, O:2 * O]
    q_k = q_trans[:, :, :O]
    q_v = q_trans[:, :, 2 * O:]
    k_k = k_trans[:, :, :O]
    k_q = k_trans[:, :, O:2 * O]
    scale = hd ** 0.5
    vq_up, vk_up = [], []
    for i in range(H):
        sl = slice(i * hd, (i + 1) * hd)
        q2v = jnp.einsum('bnd,bld->bnl', v_q[:, :, sl], q_k[:, :, sl])
        q2v = jnp.where(q_mask[:, None, :] == 0, -1e9, q2v) / scale
        vq_up.append(jnp.einsum('bnl,bld->bnd',
                                jax.nn.softmax(q2v, axis=-1), q_v[:, :, sl]))
        k2v = jnp.einsum('bnd,bld->bnl', k_q[:, :, sl], k_k[:, :, sl])
        k2v = jnp.where(k_mask[:, None, :] == 0, -1e9, k2v) / scale
        vk_up.append(jnp.einsum('bnl,bld->bnd',
                                jax.nn.softmax(k2v, axis=-1), k_q[:, :, sl]))
    vq_update = jnp.concatenate(vq_up, -1)
    vk_update = jnp.concatenate(vk_up, -1)
    cat_v = jnp.concatenate([v, vq_update], -1)
    cat_vqk = jnp.concatenate([v, vq_update, vk_update], -1)
    updated_v = cat_v @ p['Wvo'] + p['bvo']
    updated_V = cat_vqk @ p['Wko'] + p['bko']
    return updated_V, updated_v


if __name__ == "__main__":
    key = jax.random.PRNGKey(0)

    # Small shapes consistent with the module's forward constraints:
    # num_obj == max_len_k and k_size == output_size.
    B = 2
    num_obj = 8
    max_len = 16
    max_len_k = 8
    v_size = q_size = k_size = 32
    output_size = 32
    num_head = 4

    keys = jax.random.split(key, 16)
    f32 = jnp.float32

    v = jax.random.normal(keys[0], (B, num_obj, v_size), f32)
    q = jax.random.normal(keys[1], (B, max_len, q_size), f32)
    k = jax.random.normal(keys[2], (B, max_len_k, k_size), f32)

    # deterministic 0/1 masks (float, as in typical usage)
    v_lens = jnp.array([8, 5])
    q_lens = jnp.array([16, 10])
    k_lens = jnp.array([8, 6])
    v_mask = (jnp.arange(num_obj)[None, :] < v_lens[:, None]).astype(f32)
    q_mask = (jnp.arange(max_len)[None, :] < q_lens[:, None]).astype(f32)
    k_mask = (jnp.arange(max_len_k)[None, :] < k_lens[:, None]).astype(f32)

    def lin(kw, kb, fan_in, fan_out, scale=0.05):
        W = jax.random.normal(kw, (fan_in, fan_out), f32) * scale   # [in, out]
        b = jax.random.normal(kb, (1, fan_out), f32) * scale
        return W, b

    Wv, bv = lin(keys[3], keys[4], v_size, output_size * 3)
    Wq, bq = lin(keys[5], keys[6], q_size, output_size * 3)
    Wk, bk = lin(keys[7], keys[8], k_size, output_size * 3)
    Wvo, bvo = lin(keys[9], keys[10], output_size + v_size, output_size)
    Wko, bko = lin(keys[11], keys[12], output_size + k_size + v_size, output_size)

    params = dict(Wv=Wv, bv=bv, Wq=Wq, bq=bq, Wk=Wk, bk=bk,
                  Wvo=Wvo, bvo=bvo, Wko=Wko, bko=bko)

    updated_V, updated_v = inter_modality_update(
        v, q, k, v_mask, q_mask, k_mask, params,
        output_size=output_size, num_head=num_head)
    jax.block_until_ready((updated_V, updated_v))

    ref_V, ref_v = reference(v, q, k, v_mask, q_mask, k_mask, params,
                             output_size=output_size, num_head=num_head)

    assert updated_V.shape == (B, num_obj, output_size)
    assert updated_v.shape == (B, num_obj, output_size)
    assert jnp.allclose(updated_V, ref_V, atol=1e-3, rtol=1e-3)
    assert jnp.allclose(updated_v, ref_v, atol=1e-3, rtol=1e-3)

    print("KERNEL_OK")
</pallas_src>

<mosaic_0001>
module attributes {stable_mosaic.version = 11 : i64} {
  func.func @_inter_modality_kernel(%arg0: i32, %arg1: memref<16x32xf32, #tpu.memory_space<vmem>>, %arg2: memref<32x32xf32, #tpu.memory_space<vmem>>, %arg3: memref<16x32xf32, #tpu.memory_space<vmem>>, %arg4: memref<16x1xf32, #tpu.memory_space<vmem>>, %arg5: memref<32x1xf32, #tpu.memory_space<vmem>>, %arg6: memref<16x1xf32, #tpu.memory_space<vmem>>, %arg7: memref<32x32xf32, #tpu.memory_space<vmem>>, %arg8: memref<1x32xf32, #tpu.memory_space<vmem>>, %arg9: memref<32x32xf32, #tpu.memory_space<vmem>>, %arg10: memref<1x32xf32, #tpu.memory_space<vmem>>, %arg11: memref<32x32xf32, #tpu.memory_space<vmem>>, %arg12: memref<1x32xf32, #tpu.memory_space<vmem>>, %arg13: memref<32x32xf32, #tpu.memory_space<vmem>>, %arg14: memref<1x32xf32, #tpu.memory_space<vmem>>, %arg15: memref<32x32xf32, #tpu.memory_space<vmem>>, %arg16: memref<1x32xf32, #tpu.memory_space<vmem>>, %arg17: memref<32x64xf32, #tpu.memory_space<vmem>>, %arg18: memref<32x64xf32, #tpu.memory_space<vmem>>, %arg19: memref<32x64xf32, #tpu.memory_space<vmem>>, %arg20: memref<1x64xf32, #tpu.memory_space<vmem>>, %arg21: memref<16x64xf32, #tpu.memory_space<vmem>>) attributes {dimension_semantics = [#tpu.dimension_semantics<parallel>], iteration_bounds = array<i64: 1>, scalar_prefetch = 0 : i64, scratch_operands = 0 : i64, tpu.core_type = #tpu.core_type<tc>, window_params = [{transform_indices = @transform_0, window_bounds = array<i64: 16, 32>}, {transform_indices = @transform_1, window_bounds = array<i64: 32, 32>}, {transform_indices = @transform_2, window_bounds = array<i64: 16, 32>}, {transform_indices = @transform_3, window_bounds = array<i64: 16, 1>}, {transform_indices = @transform_4, window_bounds = array<i64: 32, 1>}, {transform_indices = @transform_5, window_bounds = array<i64: 16, 1>}, {pipeline_mode = #tpu.pipeline_mode<synchronous>, transform_indices = @transform_6, window_bounds = array<i64: 32, 32>}, {pipeline_mode = #tpu.pipeline_mode<synchronous>, transform_indices = @transform_7, window_bounds = array<i64: 1, 32>}, {pipeline_mode = #tpu.pipeline_mode<synchronous>, transform_indices = @transform_8, window_bounds = array<i64: 32, 32>}, {pipeline_mode = #tpu.pipeline_mode<synchronous>, transform_indices = @transform_9, window_bounds = array<i64: 1, 32>}, {pipeline_mode = #tpu.pipeline_mode<synchronous>, transform_indices = @transform_10, window_bounds = array<i64: 32, 32>}, {pipeline_mode = #tpu.pipeline_mode<synchronous>, transform_indices = @transform_11, window_bounds = array<i64: 1, 32>}, {pipeline_mode = #tpu.pipeline_mode<synchronous>, transform_indices = @transform_12, window_bounds = array<i64: 32, 32>}, {pipeline_mode = #tpu.pipeline_mode<synchronous>, transform_indices = @transform_13, window_bounds = array<i64: 1, 32>}, {pipeline_mode = #tpu.pipeline_mode<synchronous>, transform_indices = @transform_14, window_bounds = array<i64: 32, 32>}, {pipeline_mode = #tpu.pipeline_mode<synchronous>, transform_indices = @transform_15, window_bounds = array<i64: 1, 32>}, {pipeline_mode = #tpu.pipeline_mode<synchronous>, transform_indices = @transform_16, window_bounds = array<i64: 32, 64>}, {pipeline_mode = #tpu.pipeline_mode<synchronous>, transform_indices = @transform_17, window_bounds = array<i64: 32, 64>}, {pipeline_mode = #tpu.pipeline_mode<synchronous>, transform_indices = @transform_18, window_bounds = array<i64: 32, 64>}, {pipeline_mode = #tpu.pipeline_mode<synchronous>, transform_indices = @transform_19, window_bounds = array<i64: 1, 64>}, {transform_indices = @transform_20, window_bounds = array<i64: 16, 64>}]} {
    %c0 = arith.constant 0 : index
    %c0_0 = arith.constant 0 : index
    %0 = vector.load %arg1[%c0, %c0_0] : memref<16x32xf32, #tpu.memory_space<vmem>>, vector<16x32xf32>
    %c0_1 = arith.constant 0 : index
    %c0_2 = arith.constant 0 : index
    %1 = vector.load %arg4[%c0_1, %c0_2] : memref<16x1xf32, #tpu.memory_space<vmem>>, vector<16x1xf32>
    %c0_3 = arith.constant 0 : index
    %c0_4 = arith.constant 0 : index
    %2 = vector.load %arg5[%c0_3, %c0_4] : memref<32x1xf32, #tpu.memory_space<vmem>>, vector<32x1xf32>
    %c0_5 = arith.constant 0 : index
    %c0_6 = arith.constant 0 : index
    %3 = vector.load %arg6[%c0_5, %c0_6] : memref<16x1xf32, #tpu.memory_space<vmem>>, vector<16x1xf32>
    %cst = arith.constant 0.000000e+00 : f32
    %4 = vector.broadcast %cst : f32 to vector<16x32xf32>
    %5 = arith.maximumf %0, %4 : vector<16x32xf32>
    %c0_7 = arith.constant 0 : index
    %c0_8 = arith.constant 0 : index
    %6 = vector.load %arg2[%c0_7, %c0_8] : memref<32x32xf32, #tpu.memory_space<vmem>>, vector<32x32xf32>
    %cst_9 = arith.constant 0.000000e+00 : f32
    %7 = vector.broadcast %cst_9 : f32 to vector<32x32xf32>
    %8 = arith.maximumf %6, %7 : vector<32x32xf32>
    %c0_10 = arith.constant 0 : index
    %c0_11 = arith.constant 0 : index
    %9 = vector.load %arg3[%c0_10, %c0_11] : memref<16x32xf32, #tpu.memory_space<vmem>>, vector<16x32xf32>
    %cst_12 = arith.constant 0.000000e+00 : f32
    %10 = vector.broadcast %cst_12 : f32 to vector<16x32xf32>
    %11 = arith.maximumf %9, %10 : vector<16x32xf32>
    %c0_13 = arith.constant 0 : index
    %c0_14 = arith.constant 0 : index
    %12 = vector.load %arg7[%c0_13, %c0_14] : memref<32x32xf32, #tpu.memory_space<vmem>>, vector<32x32xf32>
    %cst_15 = arith.constant dense<0.000000e+00> : vector<16x32xf32>
    %13 = tpu.matmul %5, %12, %cst_15 {dimension_numbers = #tpu.dot_dimension_numbers<[1], [0], [0], [1], [0, 0, 1, 1], [], []>} : vector<16x32xf32>, vector<32x32xf32>, vector<16x32xf32> -> vector<16x32xf32>
    %c0_16 = arith.constant 0 : index
    %c0_17 = arith.constant 0 : index
    %14 = vector.load %arg8[%c0_16, %c0_17] : memref<1x32xf32, #tpu.memory_space<vmem>>, vector<1x32xf32>
    %15 = vector.broadcast %14 : vector<1x32xf32> to vector<16x32xf32>
    %16 = arith.addf %13, %15 : vector<16x32xf32>
    %17 = vector.broadcast %1 : vector<16x1xf32> to vector<16x32xf32>
    %18 = arith.mulf %16, %17 : vector<16x32xf32>
    %c0_18 = arith.constant 0 : index
    %c0_19 = arith.constant 0 : index
    %19 = vector.load %arg9[%c0_18, %c0_19] : memref<32x32xf32, #tpu.memory_space<vmem>>, vector<32x32xf32>
    %cst_20 = arith.constant dense<0.000000e+00> : vector<32x32xf32>
    %20 = tpu.matmul %8, %19, %cst_20 {dimension_numbers = #tpu.dot_dimension_numbers<[1], [0], [0], [1], [0, 0, 1, 1], [], []>} : vector<32x32xf32>, vector<32x32xf32>, vector<32x32xf32> -> vector<32x32xf32>
    %c0_21 = arith.constant 0 : index
    %c0_22 = arith.constant 0 : index
    %21 = vector.load %arg10[%c0_21, %c0_22] : memref<1x32xf32, #tpu.memory_space<vmem>>, vector<1x32xf32>
    %22 = vector.broadcast %21 : vector<1x32xf32> to vector<32x32xf32>
    %23 = arith.addf %20, %22 : vector<32x32xf32>
    %24 = vector.broadcast %2 : vector<32x1xf32> to vector<32x32xf32>
    %25 = arith.mulf %23, %24 : vector<32x32xf32>
    %c0_23 = arith.constant 0 : index
    %c0_24 = arith.constant 0 : index
    %26 = vector.load %arg11[%c0_23, %c0_24] : memref<32x32xf32, #tpu.memory_space<vmem>>, vector<32x32xf32>
    %cst_25 = arith.constant dense<0.000000e+00> : vector<32x32xf32>
    %27 = tpu.matmul %8, %26, %cst_25 {dimension_numbers = #tpu.dot_dimension_numbers<[1], [0], [0], [1], [0, 0, 1, 1], [], []>} : vector<32x32xf32>, vector<32x32xf32>, vector<32x32xf32> -> vector<32x32xf32>
    %c0_26 = arith.constant 0 : index
    %c0_27 = arith.constant 0 : index
    %28 = vector.load %arg12[%c0_26, %c0_27] : memref<1x32xf32, #tpu.memory_space<vmem>>, vector<1x32xf32>
    %29 = vector.broadcast %28 : vector<1x32xf32> to vector<32x32xf32>
    %30 = arith.addf %27, %29 : vector<32x32xf32>
    %31 = vector.broadcast %2 : vector<32x1xf32> to vector<32x32xf32>
    %32 = arith.mulf %30, %31 : vector<32x32xf32>
    %c0_28 = arith.constant 0 : index
    %c0_29 = arith.constant 0 : index
    %33 = vector.load %arg13[%c0_28, %c0_29] : memref<32x32xf32, #tpu.memory_space<vmem>>, vector<32x32xf32>
    %cst_30 = arith.constant dense<0.000000e+00> : vector<16x32xf32>
    %34 = tpu.matmul %11, %33, %cst_30 {dimension_numbers = #tpu.dot_dimension_numbers<[1], [0], [0], [1], [0, 0, 1, 1], [], []>} : vector<16x32xf32>, vector<32x32xf32>, vector<16x32xf32> -> vector<16x32xf32>
    %c0_31 = arith.constant 0 : index
    %c0_32 = arith.constant 0 : index
    %35 = vector.load %arg14[%c0_31, %c0_32] : memref<1x32xf32, #tpu.memory_space<vmem>>, vector<1x32xf32>
    %36 = vector.broadcast %35 : vector<1x32xf32> to vector<16x32xf32>
    %37 = arith.addf %34, %36 : vector<16x32xf32>
    %38 = vector.broadcast %3 : vector<16x1xf32> to vector<16x32xf32>
    %39 = arith.mulf %37, %38 : vector<16x32xf32>
    %c0_33 = arith.constant 0 : index
    %c0_34 = arith.constant 0 : index
    %40 = vector.load %arg15[%c0_33, %c0_34] : memref<32x32xf32, #tpu.memory_space<vmem>>, vector<32x32xf32>
    %cst_35 = arith.constant dense<0.000000e+00> : vector<16x32xf32>
    %41 = tpu.matmul %11, %40, %cst_35 {dimension_numbers = #tpu.dot_dimension_numbers<[1], [0], [0], [1], [0, 0, 1, 1], [], []>} : vector<16x32xf32>, vector<32x32xf32>, vector<16x32xf32> -> vector<16x32xf32>
    %c0_36 = arith.constant 0 : index
    %c0_37 = arith.constant 0 : index
    %42 = vector.load %arg16[%c0_36, %c0_37] : memref<1x32xf32, #tpu.memory_space<vmem>>, vector<1x32xf32>
    %43 = vector.broadcast %42 : vector<1x32xf32> to vector<16x32xf32>
    %44 = arith.addf %41, %43 : vector<16x32xf32>
    %45 = vector.broadcast %3 : vector<16x1xf32> to vector<16x32xf32>
    %46 = arith.mulf %44, %45 : vector<16x32xf32>
    %47 = vector.extract_strided_slice %18 {offsets = [0, 0], sizes = [8, 32], strides = [1, 1]} : vector<16x32xf32> to vector<8x32xf32>
    %48 = vector.shape_cast %47 : vector<8x32xf32> to vector<8x4x8xf32>
    %49 = vector.extract_strided_slice %25 {offsets = [0, 0], sizes = [16, 32], strides = [1, 1]} : vector<32x32xf32> to vector<16x32xf32>
    %50 = vector.shape_cast %49 : vector<16x32xf32> to vector<16x4x8xf32>
    %51 = vector.extract_strided_slice %32 {offsets = [0, 0], sizes = [16, 32], strides = [1, 1]} : vector<32x32xf32> to vector<16x32xf32>
    %52 = vector.shape_cast %51 : vector<16x32xf32> to vector<16x4x8xf32>
    %53 = vector.extract_strided_slice %39 {offsets = [0, 0], sizes = [8, 32], strides = [1, 1]} : vector<16x32xf32> to vector<8x32xf32>
    %54 = vector.shape_cast %53 : vector<8x32xf32> to vector<8x4x8xf32>
    %55 = vector.extract_strided_slice %46 {offsets = [0, 0], sizes = [8, 32], strides = [1, 1]} : vector<16x32xf32> to vector<8x32xf32>
    %56 = vector.shape_cast %55 : vector<8x32xf32> to vector<8x4x8xf32>
    %57 = vector.extract_strided_slice %2 {offsets = [0, 0], sizes = [16, 1], strides = [1, 1]} : vector<32x1xf32> to vector<16x1xf32>
    %58 = vector.shape_cast %57 : vector<16x1xf32> to vector<1x16xf32>
    %cst_38 = arith.constant 0.000000e+00 : f32
    %59 = vector.broadcast %cst_38 : f32 to vector<1x16xf32>
    %60 = arith.cmpf oeq, %58, %59 : vector<1x16xf32>
    %61 = vector.extract_strided_slice %3 {offsets = [0, 0], sizes = [8, 1], strides = [1, 1]} : vector<16x1xf32> to vector<8x1xf32>
    %62 = vector.shape_cast %61 : vector<8x1xf32> to vector<1x8xf32>
    %cst_39 = arith.constant 0.000000e+00 : f32
    %63 = vector.broadcast %cst_39 : f32 to vector<1x8xf32>
    %64 = arith.cmpf oeq, %62, %63 : vector<1x8xf32>
    "tpu.trace_start"() <{level = 10 : i32, message = "nhd,lhd->hnl"}> : () -> ()
    %cst_40 = arith.constant dense<0.000000e+00> : vector<4x8x16xf32>
    %65 = tpu.matmul %48, %50, %cst_40 {dimension_numbers = #tpu.dot_dimension_numbers<[2], [2], [0], [0], [0, 1, 0, 0, 1, 0], [1], [1]>} : vector<8x4x8xf32>, vector<16x4x8xf32>, vector<4x8x16xf32> -> vector<4x8x16xf32>
    %cst_41 = arith.constant -1.000000e+09 : f32
    "tpu.trace_stop"() : () -> ()
    %66 = vector.shape_cast %60 : vector<1x16xi1> to vector<1x1x16xi1>
    %67 = vector.broadcast %66 : vector<1x1x16xi1> to vector<4x8x16xi1>
    %68 = vector.broadcast %cst_41 : f32 to vector<4x8x16xf32>
    %69 = arith.select %67, %68, %65 : vector<4x8x16xi1>, vector<4x8x16xf32>
    %cst_42 = arith.constant 0.353553385 : f32
    %70 = vector.broadcast %cst_42 : f32 to vector<4x8x16xf32>
    %71 = arith.mulf %69, %70 : vector<4x8x16xf32>
    %cst_43 = arith.constant dense<0xFF800000> : vector<4x8xf32>
    %72 = vector.multi_reduction <maximumf>, %71, %cst_43 [2] : vector<4x8x16xf32> to vector<4x8xf32>
    %73 = vector.shape_cast %72 : vector<4x8xf32> to vector<4x8x1xf32>
    %74 = vector.broadcast %73 : vector<4x8x1xf32> to vector<4x8x16xf32>
    %75 = arith.subf %71, %74 : vector<4x8x16xf32>
    %76 = math.exp %75 : vector<4x8x16xf32>
    %cst_44 = arith.constant dense<0.000000e+00> : vector<4x8xf32>
    %77 = vector.multi_reduction <add>, %76, %cst_44 [2] : vector<4x8x16xf32> to vector<4x8xf32>
    %78 = vector.shape_cast %77 : vector<4x8xf32> to vector<4x8x1xf32>
    %79 = tpu.reciprocal %78 {approx = true} : vector<4x8x1xf32> -> vector<4x8x1xf32>
    %80 = vector.broadcast %79 : vector<4x8x1xf32> to vector<4x8x16xf32>
    %81 = arith.mulf %76, %80 : vector<4x8x16xf32>
    "tpu.trace_start"() <{level = 10 : i32, message = "hnl,lhd->nhd"}> : () -> ()
    %cst_45 = arith.constant dense<0.000000e+00> : vector<4x8x8xf32>
    %82 = tpu.matmul %52, %81, %cst_45 {dimension_numbers = #tpu.dot_dimension_numbers<[0], [2], [2], [1], [0, 1, 0, 2, 1, 1], [1], [0]>} : vector<16x4x8xf32>, vector<4x8x16xf32>, vector<4x8x8xf32> -> vector<4x8x8xf32>
    %83 = tpu.transpose %82, [2, 0, 1] : vector<4x8x8xf32> -> vector<8x4x8xf32>
    "tpu.trace_stop"() : () -> ()
    %84 = vector.shape_cast %83 : vector<8x4x8xf32> to vector<8x32xf32>
    "tpu.trace_start"() <{level = 10 : i32, message = "nhd,lhd->hnl"}> : () -> ()
    %cst_46 = arith.constant dense<0.000000e+00> : vector<4x8x8xf32>
    %85 = tpu.matmul %56, %54, %cst_46 {dimension_numbers = #tpu.dot_dimension_numbers<[2], [2], [0], [0], [0, 1, 0, 0, 1, 0], [1], [1]>} : vector<8x4x8xf32>, vector<8x4x8xf32>, vector<4x8x8xf32> -> vector<4x8x8xf32>
    %cst_47 = arith.constant -1.000000e+09 : f32
    "tpu.trace_stop"() : () -> ()
    %86 = vector.shape_cast %64 : vector<1x8xi1> to vector<1x1x8xi1>
    %87 = vector.broadcast %86 : vector<1x1x8xi1> to vector<4x8x8xi1>
    %88 = vector.broadcast %cst_47 : f32 to vector<4x8x8xf32>
    %89 = arith.select %87, %88, %85 : vector<4x8x8xi1>, vector<4x8x8xf32>
    %cst_48 = arith.constant 0.353553385 : f32
    %90 = vector.broadcast %cst_48 : f32 to vector<4x8x8xf32>
    %91 = arith.mulf %89, %90 : vector<4x8x8xf32>
    %cst_49 = arith.constant dense<0xFF800000> : vector<4x8xf32>
    %92 = vector.multi_reduction <maximumf>, %91, %cst_49 [2] : vector<4x8x8xf32> to vector<4x8xf32>
    %93 = vector.shape_cast %92 : vector<4x8xf32> to vector<4x8x1xf32>
    %94 = vector.broadcast %93 : vector<4x8x1xf32> to vector<4x8x8xf32>
    %95 = arith.subf %91, %94 : vector<4x8x8xf32>
    %96 = math.exp %95 : vector<4x8x8xf32>
    %cst_50 = arith.constant dense<0.000000e+00> : vector<4x8xf32>
    %97 = vector.multi_reduction <add>, %96, %cst_50 [2] : vector<4x8x8xf32> to vector<4x8xf32>
    %98 = vector.shape_cast %97 : vector<4x8xf32> to vector<4x8x1xf32>
    %99 = tpu.reciprocal %98 {approx = true} : vector<4x8x1xf32> -> vector<4x8x1xf32>
    %100 = vector.broadcast %99 : vector<4x8x1xf32> to vector<4x8x8xf32>
    %101 = arith.mulf %96, %100 : vector<4x8x8xf32>
    "tpu.trace_start"() <{level = 10 : i32, message = "hnl,lhd->nhd"}> : () -> ()
    %cst_51 = arith.constant dense<0.000000e+00> : vector<4x8x8xf32>
    %102 = tpu.matmul %56, %101, %cst_51 {dimension_numbers = #tpu.dot_dimension_numbers<[0], [2], [2], [1], [0, 1, 0, 2, 1, 1], [1], [0]>} : vector<8x4x8xf32>, vector<4x8x8xf32>, vector<4x8x8xf32> -> vector<4x8x8xf32>
    %103 = tpu.transpose %102, [2, 0, 1] : vector<4x8x8xf32> -> vector<8x4x8xf32>
    "tpu.trace_stop"() : () -> ()
    %104 = vector.shape_cast %103 : vector<8x4x8xf32> to vector<8x32xf32>
    %105 = vector.extract_strided_slice %18 {offsets = [8, 0], sizes = [8, 32], strides = [1, 1]} : vector<16x32xf32> to vector<8x32xf32>
    %106 = vector.shape_cast %105 : vector<8x32xf32> to vector<8x4x8xf32>
    %107 = vector.extract_strided_slice %25 {offsets = [16, 0], sizes = [16, 32], strides = [1, 1]} : vector<32x32xf32> to vector<16x32xf32>
    %108 = vector.shape_cast %107 : vector<16x32xf32> to vector<16x4x8xf32>
    %109 = vector.extract_strided_slice %32 {offsets = [16, 0], sizes = [16, 32], strides = [1, 1]} : vector<32x32xf32> to vector<16x32xf32>
    %110 = vector.shape_cast %109 : vector<16x32xf32> to vector<16x4x8xf32>
    %111 = vector.extract_strided_slice %39 {offsets = [8, 0], sizes = [8, 32], strides = [1, 1]} : vector<16x32xf32> to vector<8x32xf32>
    %112 = vector.shape_cast %111 : vector<8x32xf32> to vector<8x4x8xf32>
    %113 = vector.extract_strided_slice %46 {offsets = [8, 0], sizes = [8, 32], strides = [1, 1]} : vector<16x32xf32> to vector<8x32xf32>
    %114 = vector.shape_cast %113 : vector<8x32xf32> to vector<8x4x8xf32>
    %115 = vector.extract_strided_slice %2 {offsets = [16, 0], sizes = [16, 1], strides = [1, 1]} : vector<32x1xf32> to vector<16x1xf32>
    %116 = vector.shape_cast %115 : vector<16x1xf32> to vector<1x16xf32>
    %cst_52 = arith.constant 0.000000e+00 : f32
    %117 = vector.broadcast %cst_52 : f32 to vector<1x16xf32>
    %118 = arith.cmpf oeq, %116, %117 : vector<1x16xf32>
    %119 = vector.extract_strided_slice %3 {offsets = [8, 0], sizes = [8, 1], strides = [1, 1]} : vector<16x1xf32> to vector<8x1xf32>
    %120 = vector.shape_cast %119 : vector<8x1xf32> to vector<1x8xf32>
    %cst_53 = arith.constant 0.000000e+00 : f32
    %121 = vector.broadcast %cst_53 : f32 to vector<1x8xf32>
    %122 = arith.cmpf oeq, %120, %121 : vector<1x8xf32>
    "tpu.trace_start"() <{level = 10 : i32, message = "nhd,lhd->hnl"}> : () -> ()
    %cst_54 = arith.constant dense<0.000000e+00> : vector<4x8x16xf32>
    %123 = tpu.matmul %106, %108, %cst_54 {dimension_numbers = #tpu.dot_dimension_numbers<[2], [2], [0], [0], [0, 1, 0, 0, 1, 0], [1], [1]>} : vector<8x4x8xf32>, vector<16x4x8xf32>, vector<4x8x16xf32> -> vector<4x8x16xf32>
    %cst_55 = arith.constant -1.000000e+09 : f32
    "tpu.trace_stop"() : () -> ()
    %124 = vector.shape_cast %118 : vector<1x16xi1> to vector<1x1x16xi1>
    %125 = vector.broadcast %124 : vector<1x1x16xi1> to vector<4x8x16xi1>
    %126 = vector.broadcast %cst_55 : f32 to vector<4x8x16xf32>
    %127 = arith.select %125, %126, %123 : vector<4x8x16xi1>, vector<4x8x16xf32>
    %cst_56 = arith.constant 0.353553385 : f32
    %128 = vector.broadcast %cst_56 : f32 to vector<4x8x16xf32>
    %129 = arith.mulf %127, %128 : vector<4x8x16xf32>
    %cst_57 = arith.constant dense<0xFF800000> : vector<4x8xf32>
    %130 = vector.multi_reduction <maximumf>, %129, %cst_57 [2] : vector<4x8x16xf32> to vector<4x8xf32>
    %131 = vector.shape_cast %130 : vector<4x8xf32> to vector<4x8x1xf32>
    %132 = vector.broadcast %131 : vector<4x8x1xf32> to vector<4x8x16xf32>
    %133 = arith.subf %129, %132 : vector<4x8x16xf32>
    %134 = math.exp %133 : vector<4x8x16xf32>
    %cst_58 = arith.constant dense<0.000000e+00> : vector<4x8xf32>
    %135 = vector.multi_reduction <add>, %134, %cst_58 [2] : vector<4x8x16xf32> to vector<4x8xf32>
    %136 = vector.shape_cast %135 : vector<4x8xf32> to vector<4x8x1xf32>
    %137 = tpu.reciprocal %136 {approx = true} : vector<4x8x1xf32> -> vector<4x8x1xf32>
    %138 = vector.broadcast %137 : vector<4x8x1xf32> to vector<4x8x16xf32>
    %139 = arith.mulf %134, %138 : vector<4x8x16xf32>
    "tpu.trace_start"() <{level = 10 : i32, message = "hnl,lhd->nhd"}> : () -> ()
    %cst_59 = arith.constant dense<0.000000e+00> : vector<4x8x8xf32>
    %140 = tpu.matmul %110, %139, %cst_59 {dimension_numbers = #tpu.dot_dimension_numbers<[0], [2], [2], [1], [0, 1, 0, 2, 1, 1], [1], [0]>} : vector<16x4x8xf32>, vector<4x8x16xf32>, vector<4x8x8xf32> -> vector<4x8x8xf32>
    %141 = tpu.transpose %140, [2, 0, 1] : vector<4x8x8xf32> -> vector<8x4x8xf32>
    "tpu.trace_stop"() : () -> ()
    %142 = vector.shape_cast %141 : vector<8x4x8xf32> to vector<8x32xf32>
    "tpu.trace_start"() <{level = 10 : i32, message = "nhd,lhd->hnl"}> : () -> ()
    %cst_60 = arith.constant dense<0.000000e+00> : vector<4x8x8xf32>
    %143 = tpu.matmul %114, %112, %cst_60 {dimension_numbers = #tpu.dot_dimension_numbers<[2], [2], [0], [0], [0, 1, 0, 0, 1, 0], [1], [1]>} : vector<8x4x8xf32>, vector<8x4x8xf32>, vector<4x8x8xf32> -> vector<4x8x8xf32>
    %cst_61 = arith.constant -1.000000e+09 : f32
    "tpu.trace_stop"() : () -> ()
    %144 = vector.shape_cast %122 : vector<1x8xi1> to vector<1x1x8xi1>
    %145 = vector.broadcast %144 : vector<1x1x8xi1> to vector<4x8x8xi1>
    %146 = vector.broadcast %cst_61 : f32 to vector<4x8x8xf32>
    %147 = arith.select %145, %146, %143 : vector<4x8x8xi1>, vector<4x8x8xf32>
    %cst_62 = arith.constant 0.353553385 : f32
    %148 = vector.broadcast %cst_62 : f32 to vector<4x8x8xf32>
    %149 = arith.mulf %147, %148 : vector<4x8x8xf32>
    %cst_63 = arith.constant dense<0xFF800000> : vector<4x8xf32>
    %150 = vector.multi_reduction <maximumf>, %149, %cst_63 [2] : vector<4x8x8xf32> to vector<4x8xf32>
    %151 = vector.shape_cast %150 : vector<4x8xf32> to vector<4x8x1xf32>
    %152 = vector.broadcast %151 : vector<4x8x1xf32> to vector<4x8x8xf32>
    %153 = arith.subf %149, %152 : vector<4x8x8xf32>
    %154 = math.exp %153 : vector<4x8x8xf32>
    %cst_64 = arith.constant dense<0.000000e+00> : vector<4x8xf32>
    %155 = vector.multi_reduction <add>, %154, %cst_64 [2] : vector<4x8x8xf32> to vector<4x8xf32>
    %156 = vector.shape_cast %155 : vector<4x8xf32> to vector<4x8x1xf32>
    %157 = tpu.reciprocal %156 {approx = true} : vector<4x8x1xf32> -> vector<4x8x1xf32>
    %158 = vector.broadcast %157 : vector<4x8x1xf32> to vector<4x8x8xf32>
    %159 = arith.mulf %154, %158 : vector<4x8x8xf32>
    "tpu.trace_start"() <{level = 10 : i32, message = "hnl,lhd->nhd"}> : () -> ()
    %cst_65 = arith.constant dense<0.000000e+00> : vector<4x8x8xf32>
    %160 = tpu.matmul %114, %159, %cst_65 {dimension_numbers = #tpu.dot_dimension_numbers<[0], [2], [2], [1], [0, 1, 0, 2, 1, 1], [1], [0]>} : vector<8x4x8xf32>, vector<4x8x8xf32>, vector<4x8x8xf32> -> vector<4x8x8xf32>
    %161 = tpu.transpose %160, [2, 0, 1] : vector<4x8x8xf32> -> vector<8x4x8xf32>
    "tpu.trace_stop"() : () -> ()
    %162 = vector.shape_cast %161 : vector<8x4x8xf32> to vector<8x32xf32>
    %163 = tpu.concatenate %84, %142 in 0 : vector<8x32xf32>, vector<8x32xf32> -> vector<16x32xf32>
    %164 = tpu.concatenate %104, %162 in 0 : vector<8x32xf32>, vector<8x32xf32> -> vector<16x32xf32>
    %c0_66 = arith.constant 0 : index
    %c0_67 = arith.constant 0 : index
    %165 = vector.load %arg17[%c0_66, %c0_67] : memref<32x64xf32, #tpu.memory_space<vmem>>, vector<32x64xf32>
    %cst_68 = arith.constant dense<0.000000e+00> : vector<16x64xf32>
    %166 = tpu.matmul %0, %165, %cst_68 {dimension_numbers = #tpu.dot_dimension_numbers<[1], [0], [0], [1], [0, 0, 1, 1], [], []>} : vector<16x32xf32>, vector<32x64xf32>, vector<16x64xf32> -> vector<16x64xf32>
    %c0_69 = arith.constant 0 : index
    %c0_70 = arith.constant 0 : index
    %167 = vector.load %arg18[%c0_69, %c0_70] : memref<32x64xf32, #tpu.memory_space<vmem>>, vector<32x64xf32>
    %cst_71 = arith.constant dense<0.000000e+00> : vector<16x64xf32>
    %168 = tpu.matmul %163, %167, %cst_71 {dimension_numbers = #tpu.dot_dimension_numbers<[1], [0], [0], [1], [0, 0, 1, 1], [], []>} : vector<16x32xf32>, vector<32x64xf32>, vector<16x64xf32> -> vector<16x64xf32>
    %169 = arith.addf %166, %168 : vector<16x64xf32>
    %c0_72 = arith.constant 0 : index
    %c0_73 = arith.constant 0 : index
    %170 = vector.load %arg19[%c0_72, %c0_73] : memref<32x64xf32, #tpu.memory_space<vmem>>, vector<32x64xf32>
    %cst_74 = arith.constant dense<0.000000e+00> : vector<16x64xf32>
    %171 = tpu.matmul %164, %170, %cst_74 {dimension_numbers = #tpu.dot_dimension_numbers<[1], [0], [0], [1], [0, 0, 1, 1], [], []>} : vector<16x32xf32>, vector<32x64xf32>, vector<16x64xf32> -> vector<16x64xf32>
    %172 = arith.addf %169, %171 : vector<16x64xf32>
    %c0_75 = arith.constant 0 : index
    %c0_76 = arith.constant 0 : index
    %173 = vector.load %arg20[%c0_75, %c0_76] : memref<1x64xf32, #tpu.memory_space<vmem>>, vector<1x64xf32>
    %174 = vector.broadcast %173 : vector<1x64xf32> to vector<16x64xf32>
    %175 = arith.addf %172, %174 : vector<16x64xf32>
    %c0_77 = arith.constant 0 : index
    %c0_78 = arith.constant 0 : index
    %176 = vector.load %arg21[%c0_77, %c0_78] : memref<16x64xf32, #tpu.memory_space<vmem>>, vector<16x64xf32>
    tpu.vector_store %arg21[%c0_77, %c0_78], %175 {strides = array<i32>} : memref<16x64xf32, #tpu.memory_space<vmem>>, vector<16x64xf32>,
    return
  }
  func.func @transform_0(%arg0: i32) -> (i32, i32) {
    %c0_i32 = arith.constant 0 : i32
    %c0_i32_0 = arith.constant 0 : i32
    return %arg0, %c0_i32 : i32, i32
  }
  func.func @transform_1(%arg0: i32) -> (i32, i32) {
    %c0_i32 = arith.constant 0 : i32
    %c0_i32_0 = arith.constant 0 : i32
    return %arg0, %c0_i32 : i32, i32
  }
  func.func @transform_2(%arg0: i32) -> (i32, i32) {
    %c0_i32 = arith.constant 0 : i32
    %c0_i32_0 = arith.constant 0 : i32
    return %arg0, %c0_i32 : i32, i32
  }
  func.func @transform_3(%arg0: i32) -> (i32, i32) {
    %c0_i32 = arith.constant 0 : i32
    %c0_i32_0 = arith.constant 0 : i32
    return %arg0, %c0_i32 : i32, i32
  }
  func.func @transform_4(%arg0: i32) -> (i32, i32) {
    %c0_i32 = arith.constant 0 : i32
    %c0_i32_0 = arith.constant 0 : i32
    return %arg0, %c0_i32 : i32, i32
  }
  func.func @transform_5(%arg0: i32) -> (i32, i32) {
    %c0_i32 = arith.constant 0 : i32
    %c0_i32_0 = arith.constant 0 : i32
    return %arg0, %c0_i32 : i32, i32
  }
  func.func @transform_6(%arg0: i32) -> (i32, i32) {
    %c0_i32 = arith.constant 0 : i32
    %c0_i32_0 = arith.constant 0 : i32
    %c0_i32_1 = arith.constant 0 : i32
    return %c0_i32, %c0_i32_0 : i32, i32
  }
  func.func @transform_7(%arg0: i32) -> (i32, i32) {
    %c0_i32 = arith.constant 0 : i32
    %c0_i32_0 = arith.constant 0 : i32
    %c0_i32_1 = arith.constant 0 : i32
    return %c0_i32, %c0_i32_0 : i32, i32
  }
  func.func @transform_8(%arg0: i32) -> (i32, i32) {
    %c0_i32 = arith.constant 0 : i32
    %c0_i32_0 = arith.constant 0 : i32
    %c0_i32_1 = arith.constant 0 : i32
    return %c0_i32, %c0_i32_0 : i32, i32
  }
  func.func @transform_9(%arg0: i32) -> (i32, i32) {
    %c0_i32 = arith.constant 0 : i32
    %c0_i32_0 = arith.constant 0 : i32
    %c0_i32_1 = arith.constant 0 : i32
    return %c0_i32, %c0_i32_0 : i32, i32
  }
  func.func @transform_10(%arg0: i32) -> (i32, i32) {
    %c0_i32 = arith.constant 0 : i32
    %c0_i32_0 = arith.constant 0 : i32
    %c0_i32_1 = arith.constant 0 : i32
    return %c0_i32, %c0_i32_0 : i32, i32
  }
  func.func @transform_11(%arg0: i32) -> (i32, i32) {
    %c0_i32 = arith.constant 0 : i32
    %c0_i32_0 = arith.constant 0 : i32
    %c0_i32_1 = arith.constant 0 : i32
    return %c0_i32, %c0_i32_0 : i32, i32
  }
  func.func @transform_12(%arg0: i32) -> (i32, i32) {
    %c0_i32 = arith.constant 0 : i32
    %c0_i32_0 = arith.constant 0 : i32
    %c0_i32_1 = arith.constant 0 : i32
    return %c0_i32, %c0_i32_0 : i32, i32
  }
  func.func @transform_13(%arg0: i32) -> (i32, i32) {
    %c0_i32 = arith.constant 0 : i32
    %c0_i32_0 = arith.constant 0 : i32
    %c0_i32_1 = arith.constant 0 : i32
    return %c0_i32, %c0_i32_0 : i32, i32
  }
  func.func @transform_14(%arg0: i32) -> (i32, i32) {
    %c0_i32 = arith.constant 0 : i32
    %c0_i32_0 = arith.constant 0 : i32
    %c0_i32_1 = arith.constant 0 : i32
    return %c0_i32, %c0_i32_0 : i32, i32
  }
  func.func @transform_15(%arg0: i32) -> (i32, i32) {
    %c0_i32 = arith.constant 0 : i32
    %c0_i32_0 = arith.constant 0 : i32
    %c0_i32_1 = arith.constant 0 : i32
    return %c0_i32, %c0_i32_0 : i32, i32
  }
  func.func @transform_16(%arg0: i32) -> (i32, i32) {
    %c0_i32 = arith.constant 0 : i32
    %c0_i32_0 = arith.constant 0 : i32
    %c0_i32_1 = arith.constant 0 : i32
    return %c0_i32, %c0_i32_0 : i32, i32
  }
  func.func @transform_17(%arg0: i32) -> (i32, i32) {
    %c0_i32 = arith.constant 0 : i32
    %c0_i32_0 = arith.constant 0 : i32
    %c0_i32_1 = arith.constant 0 : i32
    return %c0_i32, %c0_i32_0 : i32, i32
  }
  func.func @transform_18(%arg0: i32) -> (i32, i32) {
    %c0_i32 = arith.constant 0 : i32
    %c0_i32_0 = arith.constant 0 : i32
    %c0_i32_1 = arith.constant 0 : i32
    return %c0_i32, %c0_i32_0 : i32, i32
  }
  func.func @transform_19(%arg0: i32) -> (i32, i32) {
    %c0_i32 = arith.constant 0 : i32
    %c0_i32_0 = arith.constant 0 : i32
    %c0_i32_1 = arith.constant 0 : i32
    return %c0_i32, %c0_i32_0 : i32, i32
  }
  func.func @transform_20(%arg0: i32) -> (i32, i32) {
    %c0_i32 = arith.constant 0 : i32
    %c0_i32_0 = arith.constant 0 : i32
    return %arg0, %c0_i32 : i32, i32
  }
}

</mosaic_0001>

<llo_original>
// kernel: tpu_custom_call.1
$region0: #{tpu_custom_call.1}
  #allocation0 [shape = 'u32[]', space=smem, size = 0x4, offset = 0x4, fixed_abs, tag = 'smem constant byte address 0x4 - core index']
  #allocation1 [shape = 'u32[72,128]{1,0:T(1,128)}', space=vmem, size = 0x9000, scoped, tag = 'internal scratch']
  %s0 = inlined_call_operand.hbm [shape: f32[16,32], index: 0, kind: input, shape index: {}]
  %s1 = inlined_call_operand.vmem [shape: f32[32,32], index: 1, kind: input, shape index: {}]
  %s2 = inlined_call_operand.hbm [shape: f32[16,32], index: 2, kind: input, shape index: {}]
  %s3 = inlined_call_operand.vmem [shape: f32[16,1], index: 3, kind: input, shape index: {}]
  %s4 = inlined_call_operand.vmem [shape: f32[32,1], index: 4, kind: input, shape index: {}]
  %s5 = inlined_call_operand.vmem [shape: f32[16,1], index: 5, kind: input, shape index: {}]
  %s6 = inlined_call_operand.vmem [shape: f32[32,32], index: 6, kind: input, shape index: {}]
  %s7 = inlined_call_operand.vmem [shape: f32[1,32], index: 7, kind: input, shape index: {}]
  %s8 = inlined_call_operand.hbm [shape: f32[32,32], index: 8, kind: input, shape index: {}]
  %s9 = inlined_call_operand.vmem [shape: f32[1,32], index: 9, kind: input, shape index: {}]
  %s10 = inlined_call_operand.hbm [shape: f32[32,32], index: 10, kind: input, shape index: {}]
  %s11 = inlined_call_operand.vmem [shape: f32[1,32], index: 11, kind: input, shape index: {}]
  %s12 = inlined_call_operand.hbm [shape: f32[32,32], index: 12, kind: input, shape index: {}]
  %s13 = inlined_call_operand.vmem [shape: f32[1,32], index: 13, kind: input, shape index: {}]
  %s14 = inlined_call_operand.hbm [shape: f32[32,32], index: 14, kind: input, shape index: {}]
  %s15 = inlined_call_operand.vmem [shape: f32[1,32], index: 15, kind: input, shape index: {}]
  %s16 = inlined_call_operand.hbm [shape: f32[32,64], index: 16, kind: input, shape index: {}]
  %s17 = inlined_call_operand.hbm [shape: f32[32,64], index: 17, kind: input, shape index: {}]
  %s18 = inlined_call_operand.hbm [shape: f32[32,64], index: 18, kind: input, shape index: {}]
  %s19 = inlined_call_operand.vmem [shape: f32[1,64], index: 19, kind: input, shape index: {}]
  %s20 = inlined_call_operand.hbm [shape: f32[16,64], index: 20, kind: output, shape index: {}]
  %s21 = sld [smem:[#allocation0]]
  $region126: #{tpu_custom_call.1} parent=0
    _
  %s23 = ssub.s32 1, %s21
  %s24 = scalar_select 0, %s23, %s21
  $region1: #{tpu_custom_call.1} parent=0
    #allocation2 [shape = 'u8[8192]{0}', space=vmem, size = 0x2000, scoped, tag = 'input window, operand 0, single buffered']
    #allocation3 [shape = 's32[1]{0}', space=sflag, size = 0x4, scoped, tag = 'scoped memory for tpu_custom_call.1']
    #allocation4 [shape = 's32[1]{0}', space=sflag, size = 0x4, scoped, tag = 'scoped memory for tpu_custom_call.1']
    #allocation5 [shape = 'u8[8192]{0}', space=vmem, size = 0x2000, scoped, tag = 'input window, operand 2, single buffered']
    #allocation6 [shape = 's32[1]{0}', space=sflag, size = 0x4, scoped, tag = 'scoped memory for tpu_custom_call.1']
    #allocation7 [shape = 'u8[16384]{0}', space=vmem, size = 0x4000, scoped, tag = 'input window, operand 8, single buffered']
    #allocation8 [shape = 'u8[16384]{0}', space=vmem, size = 0x4000, scoped, tag = 'input window, operand 10, single buffered']
    #allocation9 [shape = 's32[1]{0}', space=sflag, size = 0x4, scoped, tag = 'scoped memory for tpu_custom_call.1']
    #allocation10 [shape = 'u8[16384]{0}', space=vmem, size = 0x4000, scoped, tag = 'input window, operand 12, single buffered']
    #allocation11 [shape = 'u8[16384]{0}', space=vmem, size = 0x4000, scoped, tag = 'input window, operand 14, single buffered']
    #allocation12 [shape = 's32[1]{0}', space=sflag, size = 0x4, scoped, tag = 'scoped memory for tpu_custom_call.1']
    #allocation13 [shape = 'u8[16384]{0}', space=vmem, size = 0x4000, scoped, tag = 'input window, operand 16, single buffered']
    #allocation14 [shape = 'u8[16384]{0}', space=vmem, size = 0x4000, scoped, tag = 'input window, operand 17, single buffered']
    #allocation15 [shape = 's32[1]{0}', space=sflag, size = 0x4, scoped, tag = 'scoped memory for tpu_custom_call.1']
    #allocation16 [shape = 'u8[16384]{0}', space=vmem, size = 0x4000, scoped, tag = 'input window, operand 18, single buffered']
    #allocation17 [shape = 'u8[8192]{0}', space=vmem, size = 0x2000, scoped, tag = 'output window, operand 0, single buffered']
    %25 = vsyncpa [#allocation3], 0
    %26 = vsyncpa [#allocation6], 0
    %27 = vsyncpa [#allocation9], 0
    %28 = vsyncpa [#allocation12], 0
    %29 = vsyncpa [#allocation15], 0
    %30 = vsyncpa [#allocation4], 0
    // Predicated region
    $region2: #{tpu_custom_call.1} parent=1 // pred_check
      _
    $region3: #{tpu_custom_call.1} parent=1 // pred_check_branch
      %32 = sbr.rel (0) target = $region5
    $region4: #{tpu_custom_call.1} parent=1 // pred_region
      %34 = vsyncadd [#allocation3], 0
      %s35 = sshll.u32 %s0, 4
      %s36 = int_to_ptr.hbm [resolvable:$true] %s35
      %s37 = sshll.u32 [#allocation2], 4
      %s38 = int_to_ptr.vmem [resolvable:$true] %s37
      %43 = dma.hbm_to_vmem [thread:$0]  %s36, 256, %s38, [#allocation3], 128, 128, 8
    $region5: #{tpu_custom_call.1} parent=1 // pred_fallthru
      _
    // Predicated region
    $region6: #{tpu_custom_call.1} parent=1 // pred_check
      _
    $region7: #{tpu_custom_call.1} parent=1 // pred_check_branch
      %45 = sbr.rel (0) target = $region9
    $region8: #{tpu_custom_call.1} parent=1 // pred_region
      _
    $region9: #{tpu_custom_call.1} parent=1 // pred_fallthru
      _
    // Predicated region
    $region10: #{tpu_custom_call.1} parent=1 // pred_check
      _
    $region11: #{tpu_custom_call.1} parent=1 // pred_check_branch
      %47 = sbr.rel (0) target = $region13
    $region12: #{tpu_custom_call.1} parent=1 // pred_region
      %49 = vsyncadd [#allocation6], 0
      %s50 = sshll.u32 %s2, 4
      %s51 = int_to_ptr.hbm [resolvable:$true] %s50
      %s52 = sshll.u32 [#allocation5], 4
      %s53 = int_to_ptr.vmem [resolvable:$true] %s52
      %58 = dma.hbm_to_vmem [thread:$0]  %s51, 256, %s53, [#allocation6], 128, 128, 8
    $region13: #{tpu_custom_call.1} parent=1 // pred_fallthru
      _
    // Predicated region
    $region14: #{tpu_custom_call.1} parent=1 // pred_check
      _
    $region15: #{tpu_custom_call.1} parent=1 // pred_check_branch
      %60 = sbr.rel (0) target = $region17
    $region16: #{tpu_custom_call.1} parent=1 // pred_region
      _
    $region17: #{tpu_custom_call.1} parent=1 // pred_fallthru
      _
    // Predicated region
    $region18: #{tpu_custom_call.1} parent=1 // pred_check
      _
    $region19: #{tpu_custom_call.1} parent=1 // pred_check_branch
      %62 = sbr.rel (0) target = $region21
    $region20: #{tpu_custom_call.1} parent=1 // pred_region
      _
    $region21: #{tpu_custom_call.1} parent=1 // pred_fallthru
      _
    // Predicated region
    $region22: #{tpu_custom_call.1} parent=1 // pred_check
      _
    $region23: #{tpu_custom_call.1} parent=1 // pred_check_branch
      %64 = sbr.rel (0) target = $region25
    $region24: #{tpu_custom_call.1} parent=1 // pred_region
      _
    $region25: #{tpu_custom_call.1} parent=1 // pred_fallthru
      _
    // Predicated region
    $region26: #{tpu_custom_call.1} parent=1 // pred_check
      _
    $region27: #{tpu_custom_call.1} parent=1 // pred_check_branch
      %66 = sbr.rel (0) target = $region29
    $region28: #{tpu_custom_call.1} parent=1 // pred_region
      _
    $region29: #{tpu_custom_call.1} parent=1 // pred_fallthru
      _
    // Predicated region
    $region30: #{tpu_custom_call.1} parent=1 // pred_check
      _
    $region31: #{tpu_custom_call.1} parent=1 // pred_check_branch
      %68 = sbr.rel (0) target = $region33
    $region32: #{tpu_custom_call.1} parent=1 // pred_region
      _
    $region33: #{tpu_custom_call.1} parent=1 // pred_fallthru
      _
    // Predicated region
    $region34: #{tpu_custom_call.1} parent=1 // pred_check
      _
    $region35: #{tpu_custom_call.1} parent=1 // pred_check_branch
      %70 = sbr.rel (0) target = $region37
    $region36: #{tpu_custom_call.1} parent=1 // pred_region
      %72 = vsyncadd [#allocation6], 0
      %s73 = sshll.u32 %s8, 4
      %s74 = int_to_ptr.hbm [resolvable:$true] %s73
      %s75 = sshll.u32 [#allocation7], 4
      %s76 = int_to_ptr.vmem [resolvable:$true] %s75
      %81 = dma.hbm_to_vmem [thread:$0]  %s74, 512, %s76, [#allocation6], 128, 128, 8
    $region37: #{tpu_custom_call.1} parent=1 // pred_fallthru
      _
    // Predicated region
    $region38: #{tpu_custom_call.1} parent=1 // pred_check
      _
    $region39: #{tpu_custom_call.1} parent=1 // pred_check_branch
      %83 = sbr.rel (0) target = $region41
    $region40: #{tpu_custom_call.1} parent=1 // pred_region
      _
    $region41: #{tpu_custom_call.1} parent=1 // pred_fallthru
      _
    // Predicated region
    $region42: #{tpu_custom_call.1} parent=1 // pred_check
      _
    $region43: #{tpu_custom_call.1} parent=1 // pred_check_branch
      %85 = sbr.rel (0) target = $region45
    $region44: #{tpu_custom_call.1} parent=1 // pred_region
      %87 = vsyncadd [#allocation9], 0
      %s88 = sshll.u32 %s10, 4
      %s89 = int_to_ptr.hbm [resolvable:$true] %s88
      %s90 = sshll.u32 [#allocation8], 4
      %s91 = int_to_ptr.vmem [resolvable:$true] %s90
      %96 = dma.hbm_to_vmem [thread:$0]  %s89, 512, %s91, [#allocation9], 128, 128, 8
    $region45: #{tpu_custom_call.1} parent=1 // pred_fallthru
      _
    // Predicated region
    $region46: #{tpu_custom_call.1} parent=1 // pred_check
      _
    $region47: #{tpu_custom_call.1} parent=1 // pred_check_branch
      %98 = sbr.rel (0) target = $region49
    $region48: #{tpu_custom_call.1} parent=1 // pred_region
      _
    $region49: #{tpu_custom_call.1} parent=1 // pred_fallthru
      _
    // Predicated region
    $region50: #{tpu_custom_call.1} parent=1 // pred_check
      _
    $region51: #{tpu_custom_call.1} parent=1 // pred_check_branch
      %100 = sbr.rel (0) target = $region53
    $region52: #{tpu_custom_call.1} parent=1 // pred_region
      %102 = vsyncadd [#allocation9], 0
      %s103 = sshll.u32 %s12, 4
      %s104 = int_to_ptr.hbm [resolvable:$true] %s103
      %s105 = sshll.u32 [#allocation10], 4
      %s106 = int_to_ptr.vmem [resolvable:$true] %s105
      %111 = dma.hbm_to_vmem [thread:$0]  %s104, 512, %s106, [#allocation9], 128, 128, 8
    $region53: #{tpu_custom_call.1} parent=1 // pred_fallthru
      _
    // Predicated region
    $region54: #{tpu_custom_call.1} parent=1 // pred_check
      _
    $region55: #{tpu_custom_call.1} parent=1 // pred_check_branch
      %113 = sbr.rel (0) target = $region57
    $region56: #{tpu_custom_call.1} parent=1 // pred_region
      _
    $region57: #{tpu_custom_call.1} parent=1 // pred_fallthru
      _
    // Predicated region
    $region58: #{tpu_custom_call.1} parent=1 // pred_check
      _
    $region59: #{tpu_custom_call.1} parent=1 // pred_check_branch
      %115 = sbr.rel (0) target = $region61
    $region60: #{tpu_custom_call.1} parent=1 // pred_region
      %117 = vsyncadd [#allocation12], 0
      %s118 = sshll.u32 %s14, 4
      %s119 = int_to_ptr.hbm [resolvable:$true] %s118
      %s120 = sshll.u32 [#allocation11], 4
      %s121 = int_to_ptr.vmem [resolvable:$true] %s120
      %126 = dma.hbm_to_vmem [thread:$0]  %s119, 512, %s121, [#allocation12], 128, 128, 8
    $region61: #{tpu_custom_call.1} parent=1 // pred_fallthru
      _
    // Predicated region
    $region62: #{tpu_custom_call.1} parent=1 // pred_check
      _
    $region63: #{tpu_custom_call.1} parent=1 // pred_check_branch
      %128 = sbr.rel (0) target = $region65
    $region64: #{tpu_custom_call.1} parent=1 // pred_region
      _
    $region65: #{tpu_custom_call.1} parent=1 // pred_fallthru
      _
    // Predicated region
    $region66: #{tpu_custom_call.1} parent=1 // pred_check
      _
    $region67: #{tpu_custom_call.1} parent=1 // pred_check_branch
      %130 = sbr.rel (0) target = $region69
    $region68: #{tpu_custom_call.1} parent=1 // pred_region
      %132 = vsyncadd [#allocation12], 0
      %s133 = sshll.u32 %s16, 4
      %s134 = int_to_ptr.hbm [resolvable:$true] %s133
      %s135 = sshll.u32 [#allocation13], 4
      %s136 = int_to_ptr.vmem [resolvable:$true] %s135
      %141 = dma.hbm_to_vmem [thread:$0]  %s134, 512, %s136, [#allocation12], 128, 128, 8
    $region69: #{tpu_custom_call.1} parent=1 // pred_fallthru
      _
    // Predicated region
    $region70: #{tpu_custom_call.1} parent=1 // pred_check
      _
    $region71: #{tpu_custom_call.1} parent=1 // pred_check_branch
      %143 = sbr.rel (0) target = $region73
    $region72: #{tpu_custom_call.1} parent=1 // pred_region
      %145 = vsyncadd [#allocation15], 0
      %s146 = sshll.u32 %s17, 4
      %s147 = int_to_ptr.hbm [resolvable:$true] %s146
      %s148 = sshll.u32 [#allocation14], 4
      %s149 = int_to_ptr.vmem [resolvable:$true] %s148
      %154 = dma.hbm_to_vmem [thread:$0]  %s147, 512, %s149, [#allocation15], 128, 128, 8
    $region73: #{tpu_custom_call.1} parent=1 // pred_fallthru
      _
    // Predicated region
    $region74: #{tpu_custom_call.1} parent=1 // pred_check
      _
    $region75: #{tpu_custom_call.1} parent=1 // pred_check_branch
      %156 = sbr.rel (0) target = $region77
    $region76: #{tpu_custom_call.1} parent=1 // pred_region
      %158 = vsyncadd [#allocation15], 0
      %s159 = sshll.u32 %s18, 4
      %s160 = int_to_ptr.hbm [resolvable:$true] %s159
      %s161 = sshll.u32 [#allocation16], 4
      %s162 = int_to_ptr.vmem [resolvable:$true] %s161
      %167 = dma.hbm_to_vmem [thread:$0]  %s160, 512, %s162, [#allocation15], 128, 128, 8
    $region77: #{tpu_custom_call.1} parent=1 // pred_fallthru
      _
    // Predicated region
    $region78: #{tpu_custom_call.1} parent=1 // pred_check
      _
    $region79: #{tpu_custom_call.1} parent=1 // pred_check_branch
      %169 = sbr.rel (0) target = $region81
    $region80: #{tpu_custom_call.1} parent=1 // pred_region
      _
    $region81: #{tpu_custom_call.1} parent=1 // pred_fallthru
      _
    // Predicated region
    $region82: #{tpu_custom_call.1} parent=1 // pred_check
      _
    $region83: #{tpu_custom_call.1} parent=1 // pred_check_branch
      %171 = sbr.rel (0) target = $region85
    $region84: #{tpu_custom_call.1} parent=1 // pred_region
      %173 = dma.done [#allocation3], 256
    $region85: #{tpu_custom_call.1} parent=1 // pred_fallthru
      _
    // Predicated region
    $region86: #{tpu_custom_call.1} parent=1 // pred_check
      _
    $region87: #{tpu_custom_call.1} parent=1 // pred_check_branch
      %175 = sbr.rel (0) target = $region89
    $region88: #{tpu_custom_call.1} parent=1 // pred_region
      %177 = dma.done [#allocation6], 256
    $region89: #{tpu_custom_call.1} parent=1 // pred_fallthru
      _
    // Predicated region
    $region90: #{tpu_custom_call.1} parent=1 // pred_check
      _
    $region91: #{tpu_custom_call.1} parent=1 // pred_check_branch
      %179 = sbr.rel (0) target = $region93
    $region92: #{tpu_custom_call.1} parent=1 // pred_region
      %181 = dma.done [#allocation6], 512
    $region93: #{tpu_custom_call.1} parent=1 // pred_fallthru
      _
    // Predicated region
    $region94: #{tpu_custom_call.1} parent=1 // pred_check
      _
    $region95: #{tpu_custom_call.1} parent=1 // pred_check_branch
      %183 = sbr.rel (0) target = $region97
    $region96: #{tpu_custom_call.1} parent=1 // pred_region
      %185 = dma.done [#allocation9], 512
    $region97: #{tpu_custom_call.1} parent=1 // pred_fallthru
      _
    // Predicated region
    $region98: #{tpu_custom_call.1} parent=1 // pred_check
      _
    $region99: #{tpu_custom_call.1} parent=1 // pred_check_branch
      %187 = sbr.rel (0) target = $region101
    $region100: #{tpu_custom_call.1} parent=1 // pred_region
      %189 = dma.done [#allocation9], 512
    $region101: #{tpu_custom_call.1} parent=1 // pred_fallthru
      _
    // Predicated region
    $region102: #{tpu_custom_call.1} parent=1 // pred_check
      _
    $region103: #{tpu_custom_call.1} parent=1 // pred_check_branch
      %191 = sbr.rel (0) target = $region105
    $region104: #{tpu_custom_call.1} parent=1 // pred_region
      %193 = dma.done [#allocation12], 512
    $region105: #{tpu_custom_call.1} parent=1 // pred_fallthru
      _
    // Predicated region
    $region106: #{tpu_custom_call.1} parent=1 // pred_check
      _
    $region107: #{tpu_custom_call.1} parent=1 // pred_check_branch
      %195 = sbr.rel (0) target = $region109
    $region108: #{tpu_custom_call.1} parent=1 // pred_region
      %197 = dma.done [#allocation12], 512
    $region109: #{tpu_custom_call.1} parent=1 // pred_fallthru
      _
    // Predicated region
    $region110: #{tpu_custom_call.1} parent=1 // pred_check
      _
    $region111: #{tpu_custom_call.1} parent=1 // pred_check_branch
      %199 = sbr.rel (0) target = $region113
    $region112: #{tpu_custom_call.1} parent=1 // pred_region
      %201 = dma.done [#allocation15], 512
    $region113: #{tpu_custom_call.1} parent=1 // pred_fallthru
      _
    // Predicated region
    $region114: #{tpu_custom_call.1} parent=1 // pred_check
      _
    $region115: #{tpu_custom_call.1} parent=1 // pred_check_branch
      %203 = sbr.rel (0) target = $region117
    $region116: #{tpu_custom_call.1} parent=1 // pred_region
      %205 = dma.done [#allocation15], 512
    $region117: #{tpu_custom_call.1} parent=1 // pred_fallthru
      _
    %v206 = vld [vmem:[#allocation2] sm:$0xff]
    %v207 = vld [vmem:[#allocation2 + $0x8] sm:$0xff]
    %v208 = vld [vmem:[%s3] sm:$0xff]
    %v209 = vld [vmem:[%s3 + $0x8] sm:$0xff]
    %v210 = vld [vmem:[%s4] sm:$0xff]
    %v211 = vld [vmem:[%s4 + $0x8] sm:$0xff]
    %v212 = vld [vmem:[%s4 + $0x10] sm:$0xff]
    %v213 = vld [vmem:[%s4 + $0x18] sm:$0xff]
    %v214 = vld [vmem:[%s5] sm:$0xff]
    %v215 = vld [vmem:[%s5 + $0x8] sm:$0xff]
    %v216 = vmax.f32 %v206, 0.0
    %v217 = vmax.f32 %v207, 0.0
    %v218 = vld [vmem:[%s1] sm:$0xff]
    %v219 = vld [vmem:[%s1 + $0x8] sm:$0xff]
    %v220 = vld [vmem:[%s1 + $0x10] sm:$0xff]
    %v221 = vld [vmem:[%s1 + $0x18] sm:$0xff]
    %v222 = vmax.f32 %v218, 0.0
    %v223 = vmax.f32 %v219, 0.0
    %v224 = vmax.f32 %v220, 0.0
    %v225 = vmax.f32 %v221, 0.0
    %v226 = vld [vmem:[#allocation5] sm:$0xff]
    %v227 = vld [vmem:[#allocation5 + $0x8] sm:$0xff]
    %v228 = vmax.f32 %v226, 0.0
    %v229 = vmax.f32 %v227, 0.0
    %v230 = vld [vmem:[%s6] sm:$0xff]
    %v231 = vld [vmem:[%s6 + $0x8] sm:$0xff]
    %v232 = vld [vmem:[%s6 + $0x10] sm:$0xff]
    %v233 = vld [vmem:[%s6 + $0x18] sm:$0xff]
    %v234 = vld [vmem:[%s7] sm:$0x1]
    %v236 = vperm.slane %v234, 0
    %vm238 = vcmask 261120
    %v240 = vsel %vm238, %v216, 0
    %v243 = vsel %vm238, %v217, 0
    %245 = vmatpush.msra.mxu0 0.0
    %246 = vmatpush.msra.mxu0 0.0
    %247 = vmatpush.msra.mxu0 0.0
    %248 = vmatpush.msra.mxu0 0.0
    %249 = vmatpush.msra.mxu0 0.0
    %250 = vmatpush.msra.mxu0 0.0
    %251 = vmatpush.msra.mxu0 0.0
    %252 = vmatpush.msra.mxu0 0.0
    %253 = vmatpush.msra.mxu0 0.0
    %254 = vmatpush.msra.mxu0 0.0
    %255 = vmatpush.msra.mxu0 0.0
    %256 = vmatpush.msra.mxu0 0.0
    %257 = vmatpush.msra.mxu0 %v233
    %258 = vmatpush.msra.mxu0 %v232
    %259 = vmatpush.msra.mxu0 %v231
    %260 = vmatpush.msra.mxu0 %v230
    %261 = vmatmul.f32.gmra.mxu0 %v240
    %v262 = vpop.f32.mrf.mxu0
    %v263 = vadd.f32 %v236, %v262
    %264 = vmatmul.f32.gmra.mxu0 %v243
    %v265 = vpop.f32.mrf.mxu0
    %v266 = vadd.f32 %v236, %v265
    %267 = vdwg.mxu0
    %269 = vset.pattern.permute.xlu0 0
    %270 = vperm.xlu0 %269, %v208
    %v271 = vpop.permute.xlu0 %270
    %274 = vset.pattern.permute.xlu0 0
    %275 = vperm.xlu0 %274, %v209
    %v276 = vpop.permute.xlu0 %275
    %v278 = vmul.f32 %v263, %v271
    %v279 = vmul.f32 %v266, %v276
    %v280 = vld [vmem:[#allocation7] sm:$0xff]
    %v281 = vld [vmem:[#allocation7 + $0x8] sm:$0xff]
    %v282 = vld [vmem:[#allocation7 + $0x10] sm:$0xff]
    %v283 = vld [vmem:[#allocation7 + $0x18] sm:$0xff]
    %v284 = vld [vmem:[%s9] sm:$0x1]
    %v286 = vperm.slane %v284, 0
    %v289 = vsel %vm238, %v222, 0
    %v292 = vsel %vm238, %v223, 0
    %v295 = vsel %vm238, %v224, 0
    %v298 = vsel %vm238, %v225, 0
    %300 = vmatpush.msra.mxu0 0.0
    %301 = vmatpush.msra.mxu0 0.0
    %302 = vmatpush.msra.mxu0 0.0
    %303 = vmatpush.msra.mxu0 0.0
    %304 = vmatpush.msra.mxu0 0.0
    %305 = vmatpush.msra.mxu0 0.0
    %306 = vmatpush.msra.mxu0 0.0
    %307 = vmatpush.msra.mxu0 0.0
    %308 = vmatpush.msra.mxu0 0.0
    %309 = vmatpush.msra.mxu0 0.0
    %310 = vmatpush.msra.mxu0 0.0
    %311 = vmatpush.msra.mxu0 0.0
    %312 = vmatpush.msra.mxu0 %v283
    %313 = vmatpush.msra.mxu0 %v282
    %314 = vmatpush.msra.mxu0 %v281
    %315 = vmatpush.msra.mxu0 %v280
    %316 = vmatmul.f32.gmra.mxu0 %v289
    %v317 = vpop.f32.mrf.mxu0
    %v318 = vadd.f32 %v286, %v317
    %319 = vmatmul.f32.gmra.mxu0 %v292
    %v320 = vpop.f32.mrf.mxu0
    %v321 = vadd.f32 %v286, %v320
    %322 = vmatmul.f32.gmra.mxu0 %v295
    %v323 = vpop.f32.mrf.mxu0
    %v324 = vadd.f32 %v286, %v323
    %325 = vmatmul.f32.gmra.mxu0 %v298
    %v326 = vpop.f32.mrf.mxu0
    %v327 = vadd.f32 %v286, %v326
    %328 = vdwg.mxu0
    %330 = vset.pattern.permute.xlu0 0
    %331 = vperm.xlu0 %330, %v210
    %v332 = vpop.permute.xlu0 %331
    %335 = vset.pattern.permute.xlu0 0
    %336 = vperm.xlu0 %335, %v211
    %v337 = vpop.permute.xlu0 %336
    %340 = vset.pattern.permute.xlu0 0
    %341 = vperm.xlu0 %340, %v212
    %v342 = vpop.permute.xlu0 %341
    %345 = vset.pattern.permute.xlu0 0
    %346 = vperm.xlu0 %345, %v213
    %v347 = vpop.permute.xlu0 %346
    %v349 = vmul.f32 %v318, %v332
    %v350 = vmul.f32 %v321, %v337
    %v351 = vmul.f32 %v324, %v342
    %v352 = vmul.f32 %v327, %v347
    %v353 = vld [vmem:[#allocation8] sm:$0xff]
    %v354 = vld [vmem:[#allocation8 + $0x8] sm:$0xff]
    %v355 = vld [vmem:[#allocation8 + $0x10] sm:$0xff]
    %v356 = vld [vmem:[#allocation8 + $0x18] sm:$0xff]
    %v357 = vld [vmem:[%s11] sm:$0x1]
    %v359 = vperm.slane %v357, 0
    %361 = vmatpush.msra.mxu0 0.0
    %362 = vmatpush.msra.mxu0 0.0
    %363 = vmatpush.msra.mxu0 0.0
    %364 = vmatpush.msra.mxu0 0.0
    %365 = vmatpush.msra.mxu0 0.0
    %366 = vmatpush.msra.mxu0 0.0
    %367 = vmatpush.msra.mxu0 0.0
    %368 = vmatpush.msra.mxu0 0.0
    %369 = vmatpush.msra.mxu0 0.0
    %370 = vmatpush.msra.mxu0 0.0
    %371 = vmatpush.msra.mxu0 0.0
    %372 = vmatpush.msra.mxu0 0.0
    %373 = vmatpush.msra.mxu0 %v356
    %374 = vmatpush.msra.mxu0 %v355
    %375 = vmatpush.msra.mxu0 %v354
    %376 = vmatpush.msra.mxu0 %v353
    %377 = vmatmul.f32.gmra.mxu0 %v289
    %v378 = vpop.f32.mrf.mxu0
    %v379 = vadd.f32 %v359, %v378
    %380 = vmatmul.f32.gmra.mxu0 %v292
    %v381 = vpop.f32.mrf.mxu0
    %v382 = vadd.f32 %v359, %v381
    %383 = vmatmul.f32.gmra.mxu0 %v295
    %v384 = vpop.f32.mrf.mxu0
    %v385 = vadd.f32 %v359, %v384
    %386 = vmatmul.f32.gmra.mxu0 %v298
    %v387 = vpop.f32.mrf.mxu0
    %v388 = vadd.f32 %v359, %v387
    %389 = vdwg.mxu0
    %v390 = vmul.f32 %v379, %v332
    %v391 = vmul.f32 %v382, %v337
    %v392 = vmul.f32 %v385, %v342
    %v393 = vmul.f32 %v388, %v347
    %v394 = vld [vmem:[#allocation10] sm:$0xff]
    %v395 = vld [vmem:[#allocation10 + $0x8] sm:$0xff]
    %v396 = vld [vmem:[#allocation10 + $0x10] sm:$0xff]
    %v397 = vld [vmem:[#allocation10 + $0x18] sm:$0xff]
    %v398 = vld [vmem:[%s13] sm:$0x1]
    %v400 = vperm.slane %v398, 0
    %v403 = vsel %vm238, %v228, 0
    %v406 = vsel %vm238, %v229, 0
    %408 = vmatpush.msra.mxu0 0.0
    %409 = vmatpush.msra.mxu0 0.0
    %410 = vmatpush.msra.mxu0 0.0
    %411 = vmatpush.msra.mxu0 0.0
    %412 = vmatpush.msra.mxu0 0.0
    %413 = vmatpush.msra.mxu0 0.0
    %414 = vmatpush.msra.mxu0 0.0
    %415 = vmatpush.msra.mxu0 0.0
    %416 = vmatpush.msra.mxu0 0.0
    %417 = vmatpush.msra.mxu0 0.0
    %418 = vmatpush.msra.mxu0 0.0
    %419 = vmatpush.msra.mxu0 0.0
    %420 = vmatpush.msra.mxu0 %v397
    %421 = vmatpush.msra.mxu0 %v396
    %422 = vmatpush.msra.mxu0 %v395
    %423 = vmatpush.msra.mxu0 %v394
    %424 = vmatmul.f32.gmra.mxu0 %v403
    %v425 = vpop.f32.mrf.mxu0
    %v426 = vadd.f32 %v400, %v425
    %427 = vmatmul.f32.gmra.mxu0 %v406
    %v428 = vpop.f32.mrf.mxu0
    %v429 = vadd.f32 %v400, %v428
    %430 = vdwg.mxu0
    %432 = vset.pattern.permute.xlu0 0
    %433 = vperm.xlu0 %432, %v214
    %v434 = vpop.permute.xlu0 %433
    %437 = vset.pattern.permute.xlu0 0
    %438 = vperm.xlu0 %437, %v215
    %v439 = vpop.permute.xlu0 %438
    %v441 = vmul.f32 %v426, %v434
    %v442 = vmul.f32 %v429, %v439
    %v443 = vld [vmem:[#allocation11] sm:$0xff]
    %v444 = vld [vmem:[#allocation11 + $0x8] sm:$0xff]
    %v445 = vld [vmem:[#allocation11 + $0x10] sm:$0xff]
    %v446 = vld [vmem:[#allocation11 + $0x18] sm:$0xff]
    %v447 = vld [vmem:[%s15] sm:$0x1]
    %v449 = vperm.slane %v447, 0
    %451 = vmatpush.msra.mxu0 0.0
    %452 = vmatpush.msra.mxu0 0.0
    %453 = vmatpush.msra.mxu0 0.0
    %454 = vmatpush.msra.mxu0 0.0
    %455 = vmatpush.msra.mxu0 0.0
    %456 = vmatpush.msra.mxu0 0.0
    %457 = vmatpush.msra.mxu0 0.0
    %458 = vmatpush.msra.mxu0 0.0
    %459 = vmatpush.msra.mxu0 0.0
    %460 = vmatpush.msra.mxu0 0.0
    %461 = vmatpush.msra.mxu0 0.0
    %462 = vmatpush.msra.mxu0 0.0
    %463 = vmatpush.msra.mxu0 %v446
    %464 = vmatpush.msra.mxu0 %v445
    %465 = vmatpush.msra.mxu0 %v444
    %466 = vmatpush.msra.mxu0 %v443
    %467 = vmatmul.f32.gmra.mxu0 %v403
    %v468 = vpop.f32.mrf.mxu0
    %v469 = vadd.f32 %v449, %v468
    %470 = vmatmul.f32.gmra.mxu0 %v406
    %v471 = vpop.f32.mrf.mxu0
    %v472 = vadd.f32 %v449, %v471
    %473 = vdwg.mxu0
    %v474 = vmul.f32 %v469, %v434
    %v475 = vmul.f32 %v472, %v439
    %477 = vrot.lane.b32.xlu0 %v278, 120
    %v478 = vpop.permute.xlu0 %477
    %479 = vrot.lane.b32.xlu0 %v278, 112
    %v480 = vpop.permute.xlu0 %479
    %481 = vrot.lane.b32.xlu0 %v278, 104
    %v482 = vpop.permute.xlu0 %481
    %485 = vrot.lane.b32.xlu0 %v349, 120
    %v486 = vpop.permute.xlu0 %485
    %487 = vrot.lane.b32.xlu0 %v350, 120
    %v488 = vpop.permute.xlu0 %487
    %491 = vrot.lane.b32.xlu0 %v349, 112
    %v492 = vpop.permute.xlu0 %491
    %493 = vrot.lane.b32.xlu0 %v350, 112
    %v494 = vpop.permute.xlu0 %493
    %497 = vrot.lane.b32.xlu0 %v349, 104
    %v498 = vpop.permute.xlu0 %497
    %499 = vrot.lane.b32.xlu0 %v350, 104
    %v500 = vpop.permute.xlu0 %499
    %505 = vrot.lane.b32.xlu0 %v390, 120
    %v506 = vpop.permute.xlu0 %505
    %507 = vrot.lane.b32.xlu0 %v391, 120
    %v508 = vpop.permute.xlu0 %507
    %511 = vrot.lane.b32.xlu0 %v390, 112
    %v512 = vpop.permute.xlu0 %511
    %513 = vrot.lane.b32.xlu0 %v391, 112
    %v514 = vpop.permute.xlu0 %513
    %517 = vrot.lane.b32.xlu0 %v390, 104
    %v518 = vpop.permute.xlu0 %517
    %519 = vrot.lane.b32.xlu0 %v391, 104
    %v520 = vpop.permute.xlu0 %519
    %524 = vrot.lane.b32.xlu0 %v441, 120
    %v525 = vpop.permute.xlu0 %524
    %527 = vrot.lane.b32.xlu0 %v441, 112
    %v528 = vpop.permute.xlu0 %527
    %530 = vrot.lane.b32.xlu0 %v441, 104
    %v531 = vpop.permute.xlu0 %530
    %534 = vrot.lane.b32.xlu0 %v474, 120
    %v535 = vpop.permute.xlu0 %534
    %537 = vrot.lane.b32.xlu0 %v474, 112
    %v538 = vpop.permute.xlu0 %537
    %540 = vrot.lane.b32.xlu0 %v474, 104
    %v541 = vpop.permute.xlu0 %540
    %vm543 = vcmp.eq.f32.partialorder %v210, 0.0
    %vm544 = vcmp.eq.f32.partialorder %v211, 0.0
    %vm545 = vcmp.eq.f32.partialorder %v214, 0.0
    %546 = vxpose.xlu0.b32.start [1/16] %v349, 128
    %547 = vxpose.xlu0.b32.cont [2/16] %v350, 128
    %548 = vxpose.xlu0.b32.cont [3/16] 0.0, 128
    %549 = vxpose.xlu0.b32.cont [4/16] 0.0, 128
    %550 = vxpose.xlu0.b32.cont [5/16] 0.0, 128
    %551 = vxpose.xlu0.b32.cont [6/16] 0.0, 128
    %552 = vxpose.xlu0.b32.cont [7/16] 0.0, 128
    %553 = vxpose.xlu0.b32.cont [8/16] 0.0, 128
    %554 = vxpose.xlu0.b32.cont [9/16] 0.0, 128
    %555 = vxpose.xlu0.b32.cont [10/16] 0.0, 128
    %556 = vxpose.xlu0.b32.cont [11/16] 0.0, 128
    %557 = vxpose.xlu0.b32.cont [12/16] 0.0, 128
    %558 = vxpose.xlu0.b32.cont [13/16] 0.0, 128
    %559 = vxpose.xlu0.b32.cont [14/16] 0.0, 128
    %560 = vxpose.xlu0.b32.cont [15/16] 0.0, 128
    %561 = vxpose.xlu0.b32.end [16/16] 0.0, 128
    %v562 = vpop.trf.xlu0
    %v563 = vpop.trf.xlu0
    %v564 = vpop.trf.xlu0
    %v565 = vpop.trf.xlu0
    %v566 = vpop.trf.xlu0
    %v567 = vpop.trf.xlu0
    %v568 = vpop.trf.xlu0
    %v569 = vpop.trf.xlu0
    %v570 = vpop.trf.xlu0
    %v571 = vpop.trf.xlu0
    %v572 = vpop.trf.xlu0
    %v573 = vpop.trf.xlu0
    %v574 = vpop.trf.xlu0
    %v575 = vpop.trf.xlu0
    %v576 = vpop.trf.xlu0
    %v577 = vpop.trf.xlu0
    %578 = vxpose.xlu0.b32.start [1/16] %v486, 128
    %579 = vxpose.xlu0.b32.cont [2/16] %v488, 128
    %580 = vxpose.xlu0.b32.cont [3/16] 0.0, 128
    %581 = vxpose.xlu0.b32.cont [4/16] 0.0, 128
    %582 = vxpose.xlu0.b32.cont [5/16] 0.0, 128
    %583 = vxpose.xlu0.b32.cont [6/16] 0.0, 128
    %584 = vxpose.xlu0.b32.cont [7/16] 0.0, 128
    %585 = vxpose.xlu0.b32.cont [8/16] 0.0, 128
    %586 = vxpose.xlu0.b32.cont [9/16] 0.0, 128
    %587 = vxpose.xlu0.b32.cont [10/16] 0.0, 128
    %588 = vxpose.xlu0.b32.cont [11/16] 0.0, 128
    %589 = vxpose.xlu0.b32.cont [12/16] 0.0, 128
    %590 = vxpose.xlu0.b32.cont [13/16] 0.0, 128
    %591 = vxpose.xlu0.b32.cont [14/16] 0.0, 128
    %592 = vxpose.xlu0.b32.cont [15/16] 0.0, 128
    %593 = vxpose.xlu0.b32.end [16/16] 0.0, 128
    %v594 = vpop.trf.xlu0
    %v595 = vpop.trf.xlu0
    %v596 = vpop.trf.xlu0
    %v597 = vpop.trf.xlu0
    %v598 = vpop.trf.xlu0
    %v599 = vpop.trf.xlu0
    %v600 = vpop.trf.xlu0
    %v601 = vpop.trf.xlu0
    %v602 = vpop.trf.xlu0
    %v603 = vpop.trf.xlu0
    %v604 = vpop.trf.xlu0
    %v605 = vpop.trf.xlu0
    %v606 = vpop.trf.xlu0
    %v607 = vpop.trf.xlu0
    %v608 = vpop.trf.xlu0
    %v609 = vpop.trf.xlu0
    %610 = vxpose.xlu0.b32.start [1/16] %v492, 128
    %611 = vxpose.xlu0.b32.cont [2/16] %v494, 128
    %612 = vxpose.xlu0.b32.cont [3/16] 0.0, 128
    %613 = vxpose.xlu0.b32.cont [4/16] 0.0, 128
    %614 = vxpose.xlu0.b32.cont [5/16] 0.0, 128
    %615 = vxpose.xlu0.b32.cont [6/16] 0.0, 128
    %616 = vxpose.xlu0.b32.cont [7/16] 0.0, 128
    %617 = vxpose.xlu0.b32.cont [8/16] 0.0, 128
    %618 = vxpose.xlu0.b32.cont [9/16] 0.0, 128
    %619 = vxpose.xlu0.b32.cont [10/16] 0.0, 128
    %620 = vxpose.xlu0.b32.cont [11/16] 0.0, 128
    %621 = vxpose.xlu0.b32.cont [12/16] 0.0, 128
    %622 = vxpose.xlu0.b32.cont [13/16] 0.0, 128
    %623 = vxpose.xlu0.b32.cont [14/16] 0.0, 128
    %624 = vxpose.xlu0.b32.cont [15/16] 0.0, 128
    %625 = vxpose.xlu0.b32.end [16/16] 0.0, 128
    %v626 = vpop.trf.xlu0
    %v627 = vpop.trf.xlu0
    %v628 = vpop.trf.xlu0
    %v629 = vpop.trf.xlu0
    %v630 = vpop.trf.xlu0
    %v631 = vpop.trf.xlu0
    %v632 = vpop.trf.xlu0
    %v633 = vpop.trf.xlu0
    %v634 = vpop.trf.xlu0
    %v635 = vpop.trf.xlu0
    %v636 = vpop.trf.xlu0
    %v637 = vpop.trf.xlu0
    %v638 = vpop.trf.xlu0
    %v639 = vpop.trf.xlu0
    %v640 = vpop.trf.xlu0
    %v641 = vpop.trf.xlu0
    %642 = vxpose.xlu0.b32.start [1/16] %v498, 128
    %643 = vxpose.xlu0.b32.cont [2/16] %v500, 128
    %644 = vxpose.xlu0.b32.cont [3/16] 0.0, 128
    %645 = vxpose.xlu0.b32.cont [4/16] 0.0, 128
    %646 = vxpose.xlu0.b32.cont [5/16] 0.0, 128
    %647 = vxpose.xlu0.b32.cont [6/16] 0.0, 128
    %648 = vxpose.xlu0.b32.cont [7/16] 0.0, 128
    %649 = vxpose.xlu0.b32.cont [8/16] 0.0, 128
    %650 = vxpose.xlu0.b32.cont [9/16] 0.0, 128
    %651 = vxpose.xlu0.b32.cont [10/16] 0.0, 128
    %652 = vxpose.xlu0.b32.cont [11/16] 0.0, 128
    %653 = vxpose.xlu0.b32.cont [12/16] 0.0, 128
    %654 = vxpose.xlu0.b32.cont [13/16] 0.0, 128
    %655 = vxpose.xlu0.b32.cont [14/16] 0.0, 128
    %656 = vxpose.xlu0.b32.cont [15/16] 0.0, 128
    %657 = vxpose.xlu0.b32.end [16/16] 0.0, 128
    %v658 = vpop.trf.xlu0
    %v659 = vpop.trf.xlu0
    %v660 = vpop.trf.xlu0
    %v661 = vpop.trf.xlu0
    %v662 = vpop.trf.xlu0
    %v663 = vpop.trf.xlu0
    %v664 = vpop.trf.xlu0
    %v665 = vpop.trf.xlu0
    %v666 = vpop.trf.xlu0
    %v667 = vpop.trf.xlu0
    %v668 = vpop.trf.xlu0
    %v669 = vpop.trf.xlu0
    %v670 = vpop.trf.xlu0
    %v671 = vpop.trf.xlu0
    %v672 = vpop.trf.xlu0
    %v673 = vpop.trf.xlu0
    %vm674 = vcmask 64512
    %v675 = vsel %vm674, %v278, 0
    %677 = vmatpush.msra.mxu0 0.0
    %678 = vmatpush.msra.mxu0 0.0
    %679 = vmatpush.msra.mxu0 0.0
    %680 = vmatpush.msra.mxu0 0.0
    %681 = vmatpush.msra.mxu0 0.0
    %682 = vmatpush.msra.mxu0 0.0
    %683 = vmatpush.msra.mxu0 0.0
    %684 = vmatpush.msra.mxu0 0.0
    %685 = vmatpush.msra.mxu0 0.0
    %686 = vmatpush.msra.mxu0 0.0
    %687 = vmatpush.msra.mxu0 0.0
    %688 = vmatpush.msra.mxu0 0.0
    %689 = vmatpush.msra.mxu0 0.0
    %690 = vmatpush.msra.mxu0 0.0
    %691 = vmatpush.msra.mxu0 0.0
    %692 = vmatpush.msra.mxu0 %v562
    %693 = vmatmul.f32.gmra.mxu0 %v675
    %v694 = vpop.f32.mrf.mxu0
    %v695 = vadd.f32 0.0, %v694
    %696 = vdwg.mxu0
    %v697 = vsel %vm674, %v478, 0
    %699 = vmatpush.msra.mxu0 0.0
    %700 = vmatpush.msra.mxu0 0.0
    %701 = vmatpush.msra.mxu0 0.0
    %702 = vmatpush.msra.mxu0 0.0
    %703 = vmatpush.msra.mxu0 0.0
    %704 = vmatpush.msra.mxu0 0.0
    %705 = vmatpush.msra.mxu0 0.0
    %706 = vmatpush.msra.mxu0 0.0
    %707 = vmatpush.msra.mxu0 0.0
    %708 = vmatpush.msra.mxu0 0.0
    %709 = vmatpush.msra.mxu0 0.0
    %710 = vmatpush.msra.mxu0 0.0
    %711 = vmatpush.msra.mxu0 0.0
    %712 = vmatpush.msra.mxu0 0.0
    %713 = vmatpush.msra.mxu0 0.0
    %714 = vmatpush.msra.mxu0 %v594
    %715 = vmatmul.f32.gmra.mxu0 %v697
    %v716 = vpop.f32.mrf.mxu0
    %v717 = vadd.f32 0.0, %v716
    %718 = vdwg.mxu0
    %v719 = vsel %vm674, %v480, 0
    %721 = vmatpush.msra.mxu0 0.0
    %722 = vmatpush.msra.mxu0 0.0
    %723 = vmatpush.msra.mxu0 0.0
    %724 = vmatpush.msra.mxu0 0.0
    %725 = vmatpush.msra.mxu0 0.0
    %726 = vmatpush.msra.mxu0 0.0
    %727 = vmatpush.msra.mxu0 0.0
    %728 = vmatpush.msra.mxu0 0.0
    %729 = vmatpush.msra.mxu0 0.0
    %730 = vmatpush.msra.mxu0 0.0
    %731 = vmatpush.msra.mxu0 0.0
    %732 = vmatpush.msra.mxu0 0.0
    %733 = vmatpush.msra.mxu0 0.0
    %734 = vmatpush.msra.mxu0 0.0
    %735 = vmatpush.msra.mxu0 0.0
    %736 = vmatpush.msra.mxu0 %v626
    %737 = vmatmul.f32.gmra.mxu0 %v719
    %v738 = vpop.f32.mrf.mxu0
    %v739 = vadd.f32 0.0, %v738
    %740 = vdwg.mxu0
    %v741 = vsel %vm674, %v482, 0
    %743 = vmatpush.msra.mxu0 0.0
    %744 = vmatpush.msra.mxu0 0.0
    %745 = vmatpush.msra.mxu0 0.0
    %746 = vmatpush.msra.mxu0 0.0
    %747 = vmatpush.msra.mxu0 0.0
    %748 = vmatpush.msra.mxu0 0.0
    %749 = vmatpush.msra.mxu0 0.0
    %750 = vmatpush.msra.mxu0 0.0
    %751 = vmatpush.msra.mxu0 0.0
    %752 = vmatpush.msra.mxu0 0.0
    %753 = vmatpush.msra.mxu0 0.0
    %754 = vmatpush.msra.mxu0 0.0
    %755 = vmatpush.msra.mxu0 0.0
    %756 = vmatpush.msra.mxu0 0.0
    %757 = vmatpush.msra.mxu0 0.0
    %758 = vmatpush.msra.mxu0 %v658
    %759 = vmatmul.f32.gmra.mxu0 %v741
    %v760 = vpop.f32.mrf.mxu0
    %v761 = vadd.f32 0.0, %v760
    %762 = vdwg.mxu0
    %v763 = vsel %vm543, 1, 0
    %v764 = vsel %vm544, 1, 0
    %vm765 = vcmp.eq.s32.totalorder %v763, 1
    %vm766 = vcmp.eq.s32.totalorder %v764, 1
    %v771 = vperm.slane %v695, 0
    %v772 = vlaneseq
    %v773 = vshrl.u32 %v772, 7
    %775 = vset.pattern.permute.xlu0 %v773
    %776 = vperm.xlu0 %775, %v771
    %v777 = vpop.permute.xlu0 %776
    %v778 = vlaneseq
    %v779 = vshrl.u32 %v778, 7
    %v780 = vadd.s32 %v779, 8
    %781 = vset.pattern.permute.xlu0 %v780
    %782 = vperm.xlu0 %781, %v771
    %v783 = vpop.permute.xlu0 %782
    %v784 = vperm.slane %v695, 1
    %v785 = vlaneseq
    %v786 = vshrl.u32 %v785, 7
    %788 = vset.pattern.permute.xlu0 %v786
    %789 = vperm.xlu0 %788, %v784
    %v790 = vpop.permute.xlu0 %789
    %v791 = vlaneseq
    %v792 = vshrl.u32 %v791, 7
    %v793 = vadd.s32 %v792, 8
    %794 = vset.pattern.permute.xlu0 %v793
    %795 = vperm.xlu0 %794, %v784
    %v796 = vpop.permute.xlu0 %795
    %v797 = vperm.slane %v695, 2
    %v798 = vlaneseq
    %v799 = vshrl.u32 %v798, 7
    %801 = vset.pattern.permute.xlu0 %v799
    %802 = vperm.xlu0 %801, %v797
    %v803 = vpop.permute.xlu0 %802
    %v804 = vlaneseq
    %v805 = vshrl.u32 %v804, 7
    %v806 = vadd.s32 %v805, 8
    %807 = vset.pattern.permute.xlu0 %v806
    %808 = vperm.xlu0 %807, %v797
    %v809 = vpop.permute.xlu0 %808
    %v810 = vperm.slane %v695, 3
    %v811 = vlaneseq
    %v812 = vshrl.u32 %v811, 7
    %814 = vset.pattern.permute.xlu0 %v812
    %815 = vperm.xlu0 %814, %v810
    %v816 = vpop.permute.xlu0 %815
    %v817 = vlaneseq
    %v818 = vshrl.u32 %v817, 7
    %v819 = vadd.s32 %v818, 8
    %820 = vset.pattern.permute.xlu0 %v819
    %821 = vperm.xlu0 %820, %v810
    %v822 = vpop.permute.xlu0 %821
    %v823 = vperm.slane %v695, 4
    %v824 = vlaneseq
    %v825 = vshrl.u32 %v824, 7
    %827 = vset.pattern.permute.xlu0 %v825
    %828 = vperm.xlu0 %827, %v823
    %v829 = vpop.permute.xlu0 %828
    %v830 = vlaneseq
    %v831 = vshrl.u32 %v830, 7
    %v832 = vadd.s32 %v831, 8
    %833 = vset.pattern.permute.xlu0 %v832
    %834 = vperm.xlu0 %833, %v823
    %v835 = vpop.permute.xlu0 %834
    %v836 = vperm.slane %v695, 5
    %v837 = vlaneseq
    %v838 = vshrl.u32 %v837, 7
    %840 = vset.pattern.permute.xlu0 %v838
    %841 = vperm.xlu0 %840, %v836
    %v842 = vpop.permute.xlu0 %841
    %v843 = vlaneseq
    %v844 = vshrl.u32 %v843, 7
    %v845 = vadd.s32 %v844, 8
    %846 = vset.pattern.permute.xlu0 %v845
    %847 = vperm.xlu0 %846, %v836
    %v848 = vpop.permute.xlu0 %847
    %v849 = vperm.slane %v695, 6
    %v850 = vlaneseq
    %v851 = vshrl.u32 %v850, 7
    %853 = vset.pattern.permute.xlu0 %v851
    %854 = vperm.xlu0 %853, %v849
    %v855 = vpop.permute.xlu0 %854
    %v856 = vlaneseq
    %v857 = vshrl.u32 %v856, 7
    %v858 = vadd.s32 %v857, 8
    %859 = vset.pattern.permute.xlu0 %v858
    %860 = vperm.xlu0 %859, %v849
    %v861 = vpop.permute.xlu0 %860
    %v862 = vperm.slane %v695, 7
    %v863 = vlaneseq
    %v864 = vshrl.u32 %v863, 7
    %866 = vset.pattern.permute.xlu0 %v864
    %867 = vperm.xlu0 %866, %v862
    %v868 = vpop.permute.xlu0 %867
    %v869 = vlaneseq
    %v870 = vshrl.u32 %v869, 7
    %v871 = vadd.s32 %v870, 8
    %872 = vset.pattern.permute.xlu0 %v871
    %873 = vperm.xlu0 %872, %v862
    %v874 = vpop.permute.xlu0 %873
    %v875 = vperm.slane %v717, 0
    %v876 = vlaneseq
    %v877 = vshrl.u32 %v876, 7
    %879 = vset.pattern.permute.xlu0 %v877
    %880 = vperm.xlu0 %879, %v875
    %v881 = vpop.permute.xlu0 %880
    %v882 = vlaneseq
    %v883 = vshrl.u32 %v882, 7
    %v884 = vadd.s32 %v883, 8
    %885 = vset.pattern.permute.xlu0 %v884
    %886 = vperm.xlu0 %885, %v875
    %v887 = vpop.permute.xlu0 %886
    %v888 = vperm.slane %v717, 1
    %v889 = vlaneseq
    %v890 = vshrl.u32 %v889, 7
    %892 = vset.pattern.permute.xlu0 %v890
    %893 = vperm.xlu0 %892, %v888
    %v894 = vpop.permute.xlu0 %893
    %v895 = vlaneseq
    %v896 = vshrl.u32 %v895, 7
    %v897 = vadd.s32 %v896, 8
    %898 = vset.pattern.permute.xlu0 %v897
    %899 = vperm.xlu0 %898, %v888
    %v900 = vpop.permute.xlu0 %899
    %v901 = vperm.slane %v717, 2
    %v902 = vlaneseq
    %v903 = vshrl.u32 %v902, 7
    %905 = vset.pattern.permute.xlu0 %v903
    %906 = vperm.xlu0 %905, %v901
    %v907 = vpop.permute.xlu0 %906
    %v908 = vlaneseq
    %v909 = vshrl.u32 %v908, 7
    %v910 = vadd.s32 %v909, 8
    %911 = vset.pattern.permute.xlu0 %v910
    %912 = vperm.xlu0 %911, %v901
    %v913 = vpop.permute.xlu0 %912
    %v914 = vperm.slane %v717, 3
    %v915 = vlaneseq
    %v916 = vshrl.u32 %v915, 7
    %918 = vset.pattern.permute.xlu0 %v916
    %919 = vperm.xlu0 %918, %v914
    %v920 = vpop.permute.xlu0 %919
    %v921 = vlaneseq
    %v922 = vshrl.u32 %v921, 7
    %v923 = vadd.s32 %v922, 8
    %924 = vset.pattern.permute.xlu0 %v923
    %925 = vperm.xlu0 %924, %v914
    %v926 = vpop.permute.xlu0 %925
    %v927 = vperm.slane %v717, 4
    %v928 = vlaneseq
    %v929 = vshrl.u32 %v928, 7
    %931 = vset.pattern.permute.xlu0 %v929
    %932 = vperm.xlu0 %931, %v927
    %v933 = vpop.permute.xlu0 %932
    %v934 = vlaneseq
    %v935 = vshrl.u32 %v934, 7
    %v936 = vadd.s32 %v935, 8
    %937 = vset.pattern.permute.xlu0 %v936
    %938 = vperm.xlu0 %937, %v927
    %v939 = vpop.permute.xlu0 %938
    %v940 = vperm.slane %v717, 5
    %v941 = vlaneseq
    %v942 = vshrl.u32 %v941, 7
    %944 = vset.pattern.permute.xlu0 %v942
    %945 = vperm.xlu0 %944, %v940
    %v946 = vpop.permute.xlu0 %945
    %v947 = vlaneseq
    %v948 = vshrl.u32 %v947, 7
    %v949 = vadd.s32 %v948, 8
    %950 = vset.pattern.permute.xlu0 %v949
    %951 = vperm.xlu0 %950, %v940
    %v952 = vpop.permute.xlu0 %951
    %v953 = vperm.slane %v717, 6
    %v954 = vlaneseq
    %v955 = vshrl.u32 %v954, 7
    %957 = vset.pattern.permute.xlu0 %v955
    %958 = vperm.xlu0 %957, %v953
    %v959 = vpop.permute.xlu0 %958
    %v960 = vlaneseq
    %v961 = vshrl.u32 %v960, 7
    %v962 = vadd.s32 %v961, 8
    %963 = vset.pattern.permute.xlu0 %v962
    %964 = vperm.xlu0 %963, %v953
    %v965 = vpop.permute.xlu0 %964
    %v966 = vperm.slane %v717, 7
    %v967 = vlaneseq
    %v968 = vshrl.u32 %v967, 7
    %970 = vset.pattern.permute.xlu0 %v968
    %971 = vperm.xlu0 %970, %v966
    %v972 = vpop.permute.xlu0 %971
    %v973 = vlaneseq
    %v974 = vshrl.u32 %v973, 7
    %v975 = vadd.s32 %v974, 8
    %976 = vset.pattern.permute.xlu0 %v975
    %977 = vperm.xlu0 %976, %v966
    %v978 = vpop.permute.xlu0 %977
    %v979 = vperm.slane %v739, 0
    %v980 = vlaneseq
    %v981 = vshrl.u32 %v980, 7
    %983 = vset.pattern.permute.xlu0 %v981
    %984 = vperm.xlu0 %983, %v979
    %v985 = vpop.permute.xlu0 %984
    %v986 = vlaneseq
    %v987 = vshrl.u32 %v986, 7
    %v988 = vadd.s32 %v987, 8
    %989 = vset.pattern.permute.xlu0 %v988
    %990 = vperm.xlu0 %989, %v979
    %v991 = vpop.permute.xlu0 %990
    %v992 = vperm.slane %v739, 1
    %v993 = vlaneseq
    %v994 = vshrl.u32 %v993, 7
    %996 = vset.pattern.permute.xlu0 %v994
    %997 = vperm.xlu0 %996, %v992
    %v998 = vpop.permute.xlu0 %997
    %v999 = vlaneseq
    %v1000 = vshrl.u32 %v999, 7
    %v1001 = vadd.s32 %v1000, 8
    %1002 = vset.pattern.permute.xlu0 %v1001
    %1003 = vperm.xlu0 %1002, %v992
    %v1004 = vpop.permute.xlu0 %1003
    %v1005 = vperm.slane %v739, 2
    %v1006 = vlaneseq
    %v1007 = vshrl.u32 %v1006, 7
    %1009 = vset.pattern.permute.xlu0 %v1007
    %1010 = vperm.xlu0 %1009, %v1005
    %v1011 = vpop.permute.xlu0 %1010
    %v1012 = vlaneseq
    %v1013 = vshrl.u32 %v1012, 7
    %v1014 = vadd.s32 %v1013, 8
    %1015 = vset.pattern.permute.xlu0 %v1014
    %1016 = vperm.xlu0 %1015, %v1005
    %v1017 = vpop.permute.xlu0 %1016
    %v1018 = vperm.slane %v739, 3
    %v1019 = vlaneseq
    %v1020 = vshrl.u32 %v1019, 7
    %1022 = vset.pattern.permute.xlu0 %v1020
    %1023 = vperm.xlu0 %1022, %v1018
    %v1024 = vpop.permute.xlu0 %1023
    %v1025 = vlaneseq
    %v1026 = vshrl.u32 %v1025, 7
    %v1027 = vadd.s32 %v1026, 8
    %1028 = vset.pattern.permute.xlu0 %v1027
    %1029 = vperm.xlu0 %1028, %v1018
    %v1030 = vpop.permute.xlu0 %1029
    %v1031 = vperm.slane %v739, 4
    %v1032 = vlaneseq
    %v1033 = vshrl.u32 %v1032, 7
    %1035 = vset.pattern.permute.xlu0 %v1033
    %1036 = vperm.xlu0 %1035, %v1031
    %v1037 = vpop.permute.xlu0 %1036
    %v1038 = vlaneseq
    %v1039 = vshrl.u32 %v1038, 7
    %v1040 = vadd.s32 %v1039, 8
    %1041 = vset.pattern.permute.xlu0 %v1040
    %1042 = vperm.xlu0 %1041, %v1031
    %v1043 = vpop.permute.xlu0 %1042
    %v1044 = vperm.slane %v739, 5
    %v1045 = vlaneseq
    %v1046 = vshrl.u32 %v1045, 7
    %1048 = vset.pattern.permute.xlu0 %v1046
    %1049 = vperm.xlu0 %1048, %v1044
    %v1050 = vpop.permute.xlu0 %1049
    %v1051 = vlaneseq
    %v1052 = vshrl.u32 %v1051, 7
    %v1053 = vadd.s32 %v1052, 8
    %1054 = vset.pattern.permute.xlu0 %v1053
    %1055 = vperm.xlu0 %1054, %v1044
    %v1056 = vpop.permute.xlu0 %1055
    %v1057 = vperm.slane %v739, 6
    %v1058 = vlaneseq
    %v1059 = vshrl.u32 %v1058, 7
    %1061 = vset.pattern.permute.xlu0 %v1059
    %1062 = vperm.xlu0 %1061, %v1057
    %v1063 = vpop.permute.xlu0 %1062
    %v1064 = vlaneseq
    %v1065 = vshrl.u32 %v1064, 7
    %v1066 = vadd.s32 %v1065, 8
    %1067 = vset.pattern.permute.xlu0 %v1066
    %1068 = vperm.xlu0 %1067, %v1057
    %v1069 = vpop.permute.xlu0 %1068
    %v1070 = vperm.slane %v739, 7
    %v1071 = vlaneseq
    %v1072 = vshrl.u32 %v1071, 7
    %1074 = vset.pattern.permute.xlu0 %v1072
    %1075 = vperm.xlu0 %1074, %v1070
    %v1076 = vpop.permute.xlu0 %1075
    %v1077 = vlaneseq
    %v1078 = vshrl.u32 %v1077, 7
    %v1079 = vadd.s32 %v1078, 8
    %1080 = vset.pattern.permute.xlu0 %v1079
    %1081 = vperm.xlu0 %1080, %v1070
    %v1082 = vpop.permute.xlu0 %1081
    %v1083 = vperm.slane %v761, 0
    %v1084 = vlaneseq
    %v1085 = vshrl.u32 %v1084, 7
    %1087 = vset.pattern.permute.xlu0 %v1085
    %1088 = vperm.xlu0 %1087, %v1083
    %v1089 = vpop.permute.xlu0 %1088
    %v1090 = vlaneseq
    %v1091 = vshrl.u32 %v1090, 7
    %v1092 = vadd.s32 %v1091, 8
    %1093 = vset.pattern.permute.xlu0 %v1092
    %1094 = vperm.xlu0 %1093, %v1083
    %v1095 = vpop.permute.xlu0 %1094
    %v1096 = vperm.slane %v761, 1
    %v1097 = vlaneseq
    %v1098 = vshrl.u32 %v1097, 7
    %1100 = vset.pattern.permute.xlu0 %v1098
    %1101 = vperm.xlu0 %1100, %v1096
    %v1102 = vpop.permute.xlu0 %1101
    %v1103 = vlaneseq
    %v1104 = vshrl.u32 %v1103, 7
    %v1105 = vadd.s32 %v1104, 8
    %1106 = vset.pattern.permute.xlu0 %v1105
    %1107 = vperm.xlu0 %1106, %v1096
    %v1108 = vpop.permute.xlu0 %1107
    %v1109 = vperm.slane %v761, 2
    %v1110 = vlaneseq
    %v1111 = vshrl.u32 %v1110, 7
    %1113 = vset.pattern.permute.xlu0 %v1111
    %1114 = vperm.xlu0 %1113, %v1109
    %v1115 = vpop.permute.xlu0 %1114
    %v1116 = vlaneseq
    %v1117 = vshrl.u32 %v1116, 7
    %v1118 = vadd.s32 %v1117, 8
    %1119 = vset.pattern.permute.xlu0 %v1118
    %1120 = vperm.xlu0 %1119, %v1109
    %v1121 = vpop.permute.xlu0 %1120
    %v1122 = vperm.slane %v761, 3
    %v1123 = vlaneseq
    %v1124 = vshrl.u32 %v1123, 7
    %1126 = vset.pattern.permute.xlu0 %v1124
    %1127 = vperm.xlu0 %1126, %v1122
    %v1128 = vpop.permute.xlu0 %1127
    %v1129 = vlaneseq
    %v1130 = vshrl.u32 %v1129, 7
    %v1131 = vadd.s32 %v1130, 8
    %1132 = vset.pattern.permute.xlu0 %v1131
    %1133 = vperm.xlu0 %1132, %v1122
    %v1134 = vpop.permute.xlu0 %1133
    %v1135 = vperm.slane %v761, 4
    %v1136 = vlaneseq
    %v1137 = vshrl.u32 %v1136, 7
    %1139 = vset.pattern.permute.xlu0 %v1137
    %1140 = vperm.xlu0 %1139, %v1135
    %v1141 = vpop.permute.xlu0 %1140
    %v1142 = vlaneseq
    %v1143 = vshrl.u32 %v1142, 7
    %v1144 = vadd.s32 %v1143, 8
    %1145 = vset.pattern.permute.xlu0 %v1144
    %1146 = vperm.xlu0 %1145, %v1135
    %v1147 = vpop.permute.xlu0 %1146
    %v1148 = vperm.slane %v761, 5
    %v1149 = vlaneseq
    %v1150 = vshrl.u32 %v1149, 7
    %1152 = vset.pattern.permute.xlu0 %v1150
    %1153 = vperm.xlu0 %1152, %v1148
    %v1154 = vpop.permute.xlu0 %1153
    %v1155 = vlaneseq
    %v1156 = vshrl.u32 %v1155, 7
    %v1157 = vadd.s32 %v1156, 8
    %1158 = vset.pattern.permute.xlu0 %v1157
    %1159 = vperm.xlu0 %1158, %v1148
    %v1160 = vpop.permute.xlu0 %1159
    %v1161 = vperm.slane %v761, 6
    %v1162 = vlaneseq
    %v1163 = vshrl.u32 %v1162, 7
    %1165 = vset.pattern.permute.xlu0 %v1163
    %1166 = vperm.xlu0 %1165, %v1161
    %v1167 = vpop.permute.xlu0 %1166
    %v1168 = vlaneseq
    %v1169 = vshrl.u32 %v1168, 7
    %v1170 = vadd.s32 %v1169, 8
    %1171 = vset.pattern.permute.xlu0 %v1170
    %1172 = vperm.xlu0 %1171, %v1161
    %v1173 = vpop.permute.xlu0 %1172
    %v1174 = vperm.slane %v761, 7
    %v1175 = vlaneseq
    %v1176 = vshrl.u32 %v1175, 7
    %1178 = vset.pattern.permute.xlu0 %v1176
    %1179 = vperm.xlu0 %1178, %v1174
    %v1180 = vpop.permute.xlu0 %1179
    %v1181 = vlaneseq
    %v1182 = vshrl.u32 %v1181, 7
    %v1183 = vadd.s32 %v1182, 8
    %1184 = vset.pattern.permute.xlu0 %v1183
    %1185 = vperm.xlu0 %1184, %v1174
    %v1186 = vpop.permute.xlu0 %1185
    %v1251 = vsel %vm765, -1e+09, %v777
    %v1252 = vsel %vm766, -1e+09, %v783
    %v1253 = vsel %vm765, -1e+09, %v790
    %v1254 = vsel %vm766, -1e+09, %v796
    %v1255 = vsel %vm765, -1e+09, %v803
    %v1256 = vsel %vm766, -1e+09, %v809
    %v1257 = vsel %vm765, -1e+09, %v816
    %v1258 = vsel %vm766, -1e+09, %v822
    %v1259 = vsel %vm765, -1e+09, %v829
    %v1260 = vsel %vm766, -1e+09, %v835
    %v1261 = vsel %vm765, -1e+09, %v842
    %v1262 = vsel %vm766, -1e+09, %v848
    %v1263 = vsel %vm765, -1e+09, %v855
    %v1264 = vsel %vm766, -1e+09, %v861
    %v1265 = vsel %vm765, -1e+09, %v868
    %v1266 = vsel %vm766, -1e+09, %v874
    %v1267 = vsel %vm765, -1e+09, %v881
    %v1268 = vsel %vm766, -1e+09, %v887
    %v1269 = vsel %vm765, -1e+09, %v894
    %v1270 = vsel %vm766, -1e+09, %v900
    %v1271 = vsel %vm765, -1e+09, %v907
    %v1272 = vsel %vm766, -1e+09, %v913
    %v1273 = vsel %vm765, -1e+09, %v920
    %v1274 = vsel %vm766, -1e+09, %v926
    %v1275 = vsel %vm765, -1e+09, %v933
    %v1276 = vsel %vm766, -1e+09, %v939
    %v1277 = vsel %vm765, -1e+09, %v946
    %v1278 = vsel %vm766, -1e+09, %v952
    %v1279 = vsel %vm765, -1e+09, %v959
    %v1280 = vsel %vm766, -1e+09, %v965
    %v1281 = vsel %vm765, -1e+09, %v972
    %v1282 = vsel %vm766, -1e+09, %v978
    %v1283 = vsel %vm765, -1e+09, %v985
    %v1284 = vsel %vm766, -1e+09, %v991
    %v1285 = vsel %vm765, -1e+09, %v998
    %v1286 = vsel %vm766, -1e+09, %v1004
    %v1287 = vsel %vm765, -1e+09, %v1011
    %v1288 = vsel %vm766, -1e+09, %v1017
    %v1289 = vsel %vm765, -1e+09, %v1024
    %v1290 = vsel %vm766, -1e+09, %v1030
    %v1291 = vsel %vm765, -1e+09, %v1037
    %v1292 = vsel %vm766, -1e+09, %v1043
    %v1293 = vsel %vm765, -1e+09, %v1050
    %v1294 = vsel %vm766, -1e+09, %v1056
    %v1295 = vsel %vm765, -1e+09, %v1063
    %v1296 = vsel %vm766, -1e+09, %v1069
    %v1297 = vsel %vm765, -1e+09, %v1076
    %v1298 = vsel %vm766, -1e+09, %v1082
    %v1299 = vsel %vm765, -1e+09, %v1089
    %v1300 = vsel %vm766, -1e+09, %v1095
    %v1301 = vsel %vm765, -1e+09, %v1102
    %v1302 = vsel %vm766, -1e+09, %v1108
    %v1303 = vsel %vm765, -1e+09, %v1115
    %v1304 = vsel %vm766, -1e+09, %v1121
    %v1305 = vsel %vm765, -1e+09, %v1128
    %v1306 = vsel %vm766, -1e+09, %v1134
    %v1307 = vsel %vm765, -1e+09, %v1141
    %v1308 = vsel %vm766, -1e+09, %v1147
    %v1309 = vsel %vm765, -1e+09, %v1154
    %v1310 = vsel %vm766, -1e+09, %v1160
    %v1311 = vsel %vm765, -1e+09, %v1167
    %v1312 = vsel %vm766, -1e+09, %v1173
    %v1313 = vsel %vm765, -1e+09, %v1180
    %v1314 = vsel %vm766, -1e+09, %v1186
    %v1315 = vmul.f32 %v1251, 0.35355338
    %v1316 = vmul.f32 %v1252, 0.35355338
    %v1317 = vmul.f32 %v1253, 0.35355338
    %v1318 = vmul.f32 %v1254, 0.35355338
    %v1319 = vmul.f32 %v1255, 0.35355338
    %v1320 = vmul.f32 %v1256, 0.35355338
    %v1321 = vmul.f32 %v1257, 0.35355338
    %v1322 = vmul.f32 %v1258, 0.35355338
    %v1323 = vmul.f32 %v1259, 0.35355338
    %v1324 = vmul.f32 %v1260, 0.35355338
    %v1325 = vmul.f32 %v1261, 0.35355338
    %v1326 = vmul.f32 %v1262, 0.35355338
    %v1327 = vmul.f32 %v1263, 0.35355338
    %v1328 = vmul.f32 %v1264, 0.35355338
    %v1329 = vmul.f32 %v1265, 0.35355338
    %v1330 = vmul.f32 %v1266, 0.35355338
    %v1331 = vmul.f32 %v1267, 0.35355338
    %v1332 = vmul.f32 %v1268, 0.35355338
    %v1333 = vmul.f32 %v1269, 0.35355338
    %v1334 = vmul.f32 %v1270, 0.35355338
    %v1335 = vmul.f32 %v1271, 0.35355338
    %v1336 = vmul.f32 %v1272, 0.35355338
    %v1337 = vmul.f32 %v1273, 0.35355338
    %v1338 = vmul.f32 %v1274, 0.35355338
    %v1339 = vmul.f32 %v1275, 0.35355338
    %v1340 = vmul.f32 %v1276, 0.35355338
    %v1341 = vmul.f32 %v1277, 0.35355338
    %v1342 = vmul.f32 %v1278, 0.35355338
    %v1343 = vmul.f32 %v1279, 0.35355338
    %v1344 = vmul.f32 %v1280, 0.35355338
    %v1345 = vmul.f32 %v1281, 0.35355338
    %v1346 = vmul.f32 %v1282, 0.35355338
    %v1347 = vmul.f32 %v1283, 0.35355338
    %v1348 = vmul.f32 %v1284, 0.35355338
    %v1349 = vmul.f32 %v1285, 0.35355338
    %v1350 = vmul.f32 %v1286, 0.35355338
    %v1351 = vmul.f32 %v1287, 0.35355338
    %v1352 = vmul.f32 %v1288, 0.35355338
    %v1353 = vmul.f32 %v1289, 0.35355338
    %v1354 = vmul.f32 %v1290, 0.35355338
    %v1355 = vmul.f32 %v1291, 0.35355338
    %v1356 = vmul.f32 %v1292, 0.35355338
    %v1357 = vmul.f32 %v1293, 0.35355338
    %v1358 = vmul.f32 %v1294, 0.35355338
    %v1359 = vmul.f32 %v1295, 0.35355338
    %v1360 = vmul.f32 %v1296, 0.35355338
    %v1361 = vmul.f32 %v1297, 0.35355338
    %v1362 = vmul.f32 %v1298, 0.35355338
    %v1363 = vmul.f32 %v1299, 0.35355338
    %v1364 = vmul.f32 %v1300, 0.35355338
    %v1365 = vmul.f32 %v1301, 0.35355338
    %v1366 = vmul.f32 %v1302, 0.35355338
    %v1367 = vmul.f32 %v1303, 0.35355338
    %v1368 = vmul.f32 %v1304, 0.35355338
    %v1369 = vmul.f32 %v1305, 0.35355338
    %v1370 = vmul.f32 %v1306, 0.35355338
    %v1371 = vmul.f32 %v1307, 0.35355338
    %v1372 = vmul.f32 %v1308, 0.35355338
    %v1373 = vmul.f32 %v1309, 0.35355338
    %v1374 = vmul.f32 %v1310, 0.35355338
    %v1375 = vmul.f32 %v1311, 0.35355338
    %v1376 = vmul.f32 %v1312, 0.35355338
    %v1377 = vmul.f32 %v1313, 0.35355338
    %v1378 = vmul.f32 %v1314, 0.35355338
    %1443 = vset.pattern.permute.xlu0 0
    %1444 = vperm.xlu0 %1443, %v1315
    %v1445 = vpop.permute.xlu0 %1444
    %1446 = vset.pattern.permute.xlu0 0
    %1447 = vperm.xlu0 %1446, %v1316
    %v1448 = vpop.permute.xlu0 %1447
    %1449 = vset.pattern.permute.xlu0 0
    %1450 = vperm.xlu0 %1449, %v1317
    %v1451 = vpop.permute.xlu0 %1450
    %1452 = vset.pattern.permute.xlu0 0
    %1453 = vperm.xlu0 %1452, %v1318
    %v1454 = vpop.permute.xlu0 %1453
    %1455 = vset.pattern.permute.xlu0 0
    %1456 = vperm.xlu0 %1455, %v1319
    %v1457 = vpop.permute.xlu0 %1456
    %1458 = vset.pattern.permute.xlu0 0
    %1459 = vperm.xlu0 %1458, %v1320
    %v1460 = vpop.permute.xlu0 %1459
    %1461 = vset.pattern.permute.xlu0 0
    %1462 = vperm.xlu0 %1461, %v1321
    %v1463 = vpop.permute.xlu0 %1462
    %1464 = vset.pattern.permute.xlu0 0
    %1465 = vperm.xlu0 %1464, %v1322
    %v1466 = vpop.permute.xlu0 %1465
    %1467 = vset.pattern.permute.xlu0 0
    %1468 = vperm.xlu0 %1467, %v1323
    %v1469 = vpop.permute.xlu0 %1468
    %1470 = vset.pattern.permute.xlu0 0
    %1471 = vperm.xlu0 %1470, %v1324
    %v1472 = vpop.permute.xlu0 %1471
    %1473 = vset.pattern.permute.xlu0 0
    %1474 = vperm.xlu0 %1473, %v1325
    %v1475 = vpop.permute.xlu0 %1474
    %1476 = vset.pattern.permute.xlu0 0
    %1477 = vperm.xlu0 %1476, %v1326
    %v1478 = vpop.permute.xlu0 %1477
    %1479 = vset.pattern.permute.xlu0 0
    %1480 = vperm.xlu0 %1479, %v1327
    %v1481 = vpop.permute.xlu0 %1480
    %1482 = vset.pattern.permute.xlu0 0
    %1483 = vperm.xlu0 %1482, %v1328
    %v1484 = vpop.permute.xlu0 %1483
    %1485 = vset.pattern.permute.xlu0 0
    %1486 = vperm.xlu0 %1485, %v1329
    %v1487 = vpop.permute.xlu0 %1486
    %1488 = vset.pattern.permute.xlu0 0
    %1489 = vperm.xlu0 %1488, %v1330
    %v1490 = vpop.permute.xlu0 %1489
    %1491 = vset.pattern.permute.xlu0 0
    %1492 = vperm.xlu0 %1491, %v1331
    %v1493 = vpop.permute.xlu0 %1492
    %1494 = vset.pattern.permute.xlu0 0
    %1495 = vperm.xlu0 %1494, %v1332
    %v1496 = vpop.permute.xlu0 %1495
    %1497 = vset.pattern.permute.xlu0 0
    %1498 = vperm.xlu0 %1497, %v1333
    %v1499 = vpop.permute.xlu0 %1498
    %1500 = vset.pattern.permute.xlu0 0
    %1501 = vperm.xlu0 %1500, %v1334
    %v1502 = vpop.permute.xlu0 %1501
    %1503 = vset.pattern.permute.xlu0 0
    %1504 = vperm.xlu0 %1503, %v1335
    %v1505 = vpop.permute.xlu0 %1504
    %1506 = vset.pattern.permute.xlu0 0
    %1507 = vperm.xlu0 %1506, %v1336
    %v1508 = vpop.permute.xlu0 %1507
    %1509 = vset.pattern.permute.xlu0 0
    %1510 = vperm.xlu0 %1509, %v1337
    %v1511 = vpop.permute.xlu0 %1510
    %1512 = vset.pattern.permute.xlu0 0
    %1513 = vperm.xlu0 %1512, %v1338
    %v1514 = vpop.permute.xlu0 %1513
    %1515 = vset.pattern.permute.xlu0 0
    %1516 = vperm.xlu0 %1515, %v1339
    %v1517 = vpop.permute.xlu0 %1516
    %1518 = vset.pattern.permute.xlu0 0
    %1519 = vperm.xlu0 %1518, %v1340
    %v1520 = vpop.permute.xlu0 %1519
    %1521 = vset.pattern.permute.xlu0 0
    %1522 = vperm.xlu0 %1521, %v1341
    %v1523 = vpop.permute.xlu0 %1522
    %1524 = vset.pattern.permute.xlu0 0
    %1525 = vperm.xlu0 %1524, %v1342
    %v1526 = vpop.permute.xlu0 %1525
    %1527 = vset.pattern.permute.xlu0 0
    %1528 = vperm.xlu0 %1527, %v1343
    %v1529 = vpop.permute.xlu0 %1528
    %1530 = vset.pattern.permute.xlu0 0
    %1531 = vperm.xlu0 %1530, %v1344
    %v1532 = vpop.permute.xlu0 %1531
    %1533 = vset.pattern.permute.xlu0 0
    %1534 = vperm.xlu0 %1533, %v1345
    %v1535 = vpop.permute.xlu0 %1534
    %1536 = vset.pattern.permute.xlu0 0
    %1537 = vperm.xlu0 %1536, %v1346
    %v1538 = vpop.permute.xlu0 %1537
    %1539 = vset.pattern.permute.xlu0 0
    %1540 = vperm.xlu0 %1539, %v1347
    %v1541 = vpop.permute.xlu0 %1540
    %1542 = vset.pattern.permute.xlu0 0
    %1543 = vperm.xlu0 %1542, %v1348
    %v1544 = vpop.permute.xlu0 %1543
    %1545 = vset.pattern.permute.xlu0 0
    %1546 = vperm.xlu0 %1545, %v1349
    %v1547 = vpop.permute.xlu0 %1546
    %1548 = vset.pattern.permute.xlu0 0
    %1549 = vperm.xlu0 %1548, %v1350
    %v1550 = vpop.permute.xlu0 %1549
    %1551 = vset.pattern.permute.xlu0 0
    %1552 = vperm.xlu0 %1551, %v1351
    %v1553 = vpop.permute.xlu0 %1552
    %1554 = vset.pattern.permute.xlu0 0
    %1555 = vperm.xlu0 %1554, %v1352
    %v1556 = vpop.permute.xlu0 %1555
    %1557 = vset.pattern.permute.xlu0 0
    %1558 = vperm.xlu0 %1557, %v1353
    %v1559 = vpop.permute.xlu0 %1558
    %1560 = vset.pattern.permute.xlu0 0
    %1561 = vperm.xlu0 %1560, %v1354
    %v1562 = vpop.permute.xlu0 %1561
    %1563 = vset.pattern.permute.xlu0 0
    %1564 = vperm.xlu0 %1563, %v1355
    %v1565 = vpop.permute.xlu0 %1564
    %1566 = vset.pattern.permute.xlu0 0
    %1567 = vperm.xlu0 %1566, %v1356
    %v1568 = vpop.permute.xlu0 %1567
    %1569 = vset.pattern.permute.xlu0 0
    %1570 = vperm.xlu0 %1569, %v1357
    %v1571 = vpop.permute.xlu0 %1570
    %1572 = vset.pattern.permute.xlu0 0
    %1573 = vperm.xlu0 %1572, %v1358
    %v1574 = vpop.permute.xlu0 %1573
    %1575 = vset.pattern.permute.xlu0 0
    %1576 = vperm.xlu0 %1575, %v1359
    %v1577 = vpop.permute.xlu0 %1576
    %1578 = vset.pattern.permute.xlu0 0
    %1579 = vperm.xlu0 %1578, %v1360
    %v1580 = vpop.permute.xlu0 %1579
    %1581 = vset.pattern.permute.xlu0 0
    %1582 = vperm.xlu0 %1581, %v1361
    %v1583 = vpop.permute.xlu0 %1582
    %1584 = vset.pattern.permute.xlu0 0
    %1585 = vperm.xlu0 %1584, %v1362
    %v1586 = vpop.permute.xlu0 %1585
    %1587 = vset.pattern.permute.xlu0 0
    %1588 = vperm.xlu0 %1587, %v1363
    %v1589 = vpop.permute.xlu0 %1588
    %1590 = vset.pattern.permute.xlu0 0
    %1591 = vperm.xlu0 %1590, %v1364
    %v1592 = vpop.permute.xlu0 %1591
    %1593 = vset.pattern.permute.xlu0 0
    %1594 = vperm.xlu0 %1593, %v1365
    %v1595 = vpop.permute.xlu0 %1594
    %1596 = vset.pattern.permute.xlu0 0
    %1597 = vperm.xlu0 %1596, %v1366
    %v1598 = vpop.permute.xlu0 %1597
    %1599 = vset.pattern.permute.xlu0 0
    %1600 = vperm.xlu0 %1599, %v1367
    %v1601 = vpop.permute.xlu0 %1600
    %1602 = vset.pattern.permute.xlu0 0
    %1603 = vperm.xlu0 %1602, %v1368
    %v1604 = vpop.permute.xlu0 %1603
    %1605 = vset.pattern.permute.xlu0 0
    %1606 = vperm.xlu0 %1605, %v1369
    %v1607 = vpop.permute.xlu0 %1606
    %1608 = vset.pattern.permute.xlu0 0
    %1609 = vperm.xlu0 %1608, %v1370
    %v1610 = vpop.permute.xlu0 %1609
    %1611 = vset.pattern.permute.xlu0 0
    %1612 = vperm.xlu0 %1611, %v1371
    %v1613 = vpop.permute.xlu0 %1612
    %1614 = vset.pattern.permute.xlu0 0
    %1615 = vperm.xlu0 %1614, %v1372
    %v1616 = vpop.permute.xlu0 %1615
    %1617 = vset.pattern.permute.xlu0 0
    %1618 = vperm.xlu0 %1617, %v1373
    %v1619 = vpop.permute.xlu0 %1618
    %1620 = vset.pattern.permute.xlu0 0
    %1621 = vperm.xlu0 %1620, %v1374
    %v1622 = vpop.permute.xlu0 %1621
    %1623 = vset.pattern.permute.xlu0 0
    %1624 = vperm.xlu0 %1623, %v1375
    %v1625 = vpop.permute.xlu0 %1624
    %1626 = vset.pattern.permute.xlu0 0
    %1627 = vperm.xlu0 %1626, %v1376
    %v1628 = vpop.permute.xlu0 %1627
    %1629 = vset.pattern.permute.xlu0 0
    %1630 = vperm.xlu0 %1629, %v1377
    %v1631 = vpop.permute.xlu0 %1630
    %1632 = vset.pattern.permute.xlu0 0
    %1633 = vperm.xlu0 %1632, %v1378
    %v1634 = vpop.permute.xlu0 %1633
    %v1635 = vlaneseq
    %v1636 = vand.u32 %v1635, 127
    %v1637 = vperm.slane %v1445, %v1636
    %v1638 = vadd.s32 %v1636, 4294967288
    %v1639 = vperm.slane %v1448, %v1638
    %vm1640 = vcmask 130112
    %v1641 = vsel %vm1640, %v1639, %v1637
    %v1642 = vperm.slane %v1451, %v1636
    %v1643 = vperm.slane %v1454, %v1638
    %v1644 = vsel %vm1640, %v1643, %v1642
    %v1645 = vperm.slane %v1457, %v1636
    %v1646 = vperm.slane %v1460, %v1638
    %v1647 = vsel %vm1640, %v1646, %v1645
    %v1648 = vperm.slane %v1463, %v1636
    %v1649 = vperm.slane %v1466, %v1638
    %v1650 = vsel %vm1640, %v1649, %v1648
    %v1651 = vperm.slane %v1469, %v1636
    %v1652 = vperm.slane %v1472, %v1638
    %v1653 = vsel %vm1640, %v1652, %v1651
    %v1654 = vperm.slane %v1475, %v1636
    %v1655 = vperm.slane %v1478, %v1638
    %v1656 = vsel %vm1640, %v1655, %v1654
    %v1657 = vperm.slane %v1481, %v1636
    %v1658 = vperm.slane %v1484, %v1638
    %v1659 = vsel %vm1640, %v1658, %v1657
    %v1660 = vperm.slane %v1487, %v1636
    %v1661 = vperm.slane %v1490, %v1638
    %v1662 = vsel %vm1640, %v1661, %v1660
    %v1663 = vperm.slane %v1493, %v1636
    %v1664 = vperm.slane %v1496, %v1638
    %v1665 = vsel %vm1640, %v1664, %v1663
    %v1666 = vperm.slane %v1499, %v1636
    %v1667 = vperm.slane %v1502, %v1638
    %v1668 = vsel %vm1640, %v1667, %v1666
    %v1669 = vperm.slane %v1505, %v1636
    %v1670 = vperm.slane %v1508, %v1638
    %v1671 = vsel %vm1640, %v1670, %v1669
    %v1672 = vperm.slane %v1511, %v1636
    %v1673 = vperm.slane %v1514, %v1638
    %v1674 = vsel %vm1640, %v1673, %v1672
    %v1675 = vperm.slane %v1517, %v1636
    %v1676 = vperm.slane %v1520, %v1638
    %v1677 = vsel %vm1640, %v1676, %v1675
    %v1678 = vperm.slane %v1523, %v1636
    %v1679 = vperm.slane %v1526, %v1638
    %v1680 = vsel %vm1640, %v1679, %v1678
    %v1681 = vperm.slane %v1529, %v1636
    %v1682 = vperm.slane %v1532, %v1638
    %v1683 = vsel %vm1640, %v1682, %v1681
    %v1684 = vperm.slane %v1535, %v1636
    %v1685 = vperm.slane %v1538, %v1638
    %v1686 = vsel %vm1640, %v1685, %v1684
    %v1687 = vperm.slane %v1541, %v1636
    %v1688 = vperm.slane %v1544, %v1638
    %v1689 = vsel %vm1640, %v1688, %v1687
    %v1690 = vperm.slane %v1547, %v1636
    %v1691 = vperm.slane %v1550, %v1638
    %v1692 = vsel %vm1640, %v1691, %v1690
    %v1693 = vperm.slane %v1553, %v1636
    %v1694 = vperm.slane %v1556, %v1638
    %v1695 = vsel %vm1640, %v1694, %v1693
    %v1696 = vperm.slane %v1559, %v1636
    %v1697 = vperm.slane %v1562, %v1638
    %v1698 = vsel %vm1640, %v1697, %v1696
    %v1699 = vperm.slane %v1565, %v1636
    %v1700 = vperm.slane %v1568, %v1638
    %v1701 = vsel %vm1640, %v1700, %v1699
    %v1702 = vperm.slane %v1571, %v1636
    %v1703 = vperm.slane %v1574, %v1638
    %v1704 = vsel %vm1640, %v1703, %v1702
    %v1705 = vperm.slane %v1577, %v1636
    %v1706 = vperm.slane %v1580, %v1638
    %v1707 = vsel %vm1640, %v1706, %v1705
    %v1708 = vperm.slane %v1583, %v1636
    %v1709 = vperm.slane %v1586, %v1638
    %v1710 = vsel %vm1640, %v1709, %v1708
    %v1711 = vperm.slane %v1589, %v1636
    %v1712 = vperm.slane %v1592, %v1638
    %v1713 = vsel %vm1640, %v1712, %v1711
    %v1714 = vperm.slane %v1595, %v1636
    %v1715 = vperm.slane %v1598, %v1638
    %v1716 = vsel %vm1640, %v1715, %v1714
    %v1717 = vperm.slane %v1601, %v1636
    %v1718 = vperm.slane %v1604, %v1638
    %v1719 = vsel %vm1640, %v1718, %v1717
    %v1720 = vperm.slane %v1607, %v1636
    %v1721 = vperm.slane %v1610, %v1638
    %v1722 = vsel %vm1640, %v1721, %v1720
    %v1723 = vperm.slane %v1613, %v1636
    %v1724 = vperm.slane %v1616, %v1638
    %v1725 = vsel %vm1640, %v1724, %v1723
    %v1726 = vperm.slane %v1619, %v1636
    %v1727 = vperm.slane %v1622, %v1638
    %v1728 = vsel %vm1640, %v1727, %v1726
    %v1729 = vperm.slane %v1625, %v1636
    %v1730 = vperm.slane %v1628, %v1638
    %v1731 = vsel %vm1640, %v1730, %v1729
    %v1732 = vperm.slane %v1631, %v1636
    %v1733 = vperm.slane %v1634, %v1638
    %v1734 = vsel %vm1640, %v1733, %v1732
    %vm1735 = vcmask 1041409
    %v1736 = vsel %vm1735, %v1644, %v1641
    %vm1737 = vcmask 1042434
    %v1738 = vsel %vm1737, %v1647, %v1736
    %vm1739 = vcmask 1043459
    %v1740 = vsel %vm1739, %v1650, %v1738
    %vm1741 = vcmask 1044484
    %v1742 = vsel %vm1741, %v1653, %v1740
    %vm1743 = vcmask 1045509
    %v1744 = vsel %vm1743, %v1656, %v1742
    %vm1745 = vcmask 1046534
    %v1746 = vsel %vm1745, %v1659, %v1744
    %vm1747 = vcmask 1047559
    %v1748 = vsel %vm1747, %v1662, %v1746
    %v1749 = vsel %vm1735, %v1668, %v1665
    %v1750 = vsel %vm1737, %v1671, %v1749
    %v1751 = vsel %vm1739, %v1674, %v1750
    %v1752 = vsel %vm1741, %v1677, %v1751
    %v1753 = vsel %vm1743, %v1680, %v1752
    %v1754 = vsel %vm1745, %v1683, %v1753
    %v1755 = vsel %vm1747, %v1686, %v1754
    %v1756 = vsel %vm1735, %v1692, %v1689
    %v1757 = vsel %vm1737, %v1695, %v1756
    %v1758 = vsel %vm1739, %v1698, %v1757
    %v1759 = vsel %vm1741, %v1701, %v1758
    %v1760 = vsel %vm1743, %v1704, %v1759
    %v1761 = vsel %vm1745, %v1707, %v1760
    %v1762 = vsel %vm1747, %v1710, %v1761
    %v1763 = vsel %vm1735, %v1716, %v1713
    %v1764 = vsel %vm1737, %v1719, %v1763
    %v1765 = vsel %vm1739, %v1722, %v1764
    %v1766 = vsel %vm1741, %v1725, %v1765
    %v1767 = vsel %vm1743, %v1728, %v1766
    %v1768 = vsel %vm1745, %v1731, %v1767
    %v1769 = vsel %vm1747, %v1734, %v1768
    %vm1774 = vcmask 130048
    %v1775 = vsel %vm1774, %v1748, -inf
    %1776 = vmax.xlane.f32.xlu0 %v1775
    %v1777 = vpop.xlane.xlu0 %1776
    %v1778 = vsel %vm1774, %v1755, -inf
    %1779 = vmax.xlane.f32.xlu0 %v1778
    %v1780 = vpop.xlane.xlu0 %1779
    %v1781 = vsel %vm1774, %v1762, -inf
    %1782 = vmax.xlane.f32.xlu0 %v1781
    %v1783 = vpop.xlane.xlu0 %1782
    %v1784 = vsel %vm1774, %v1769, -inf
    %1785 = vmax.xlane.f32.xlu0 %v1784
    %v1786 = vpop.xlane.xlu0 %1785
    %v1791 = vperm.slane %v1777, 0
    %v1792 = vperm.slane %v1777, 1
    %v1793 = vperm.slane %v1777, 2
    %v1794 = vperm.slane %v1777, 3
    %v1795 = vperm.slane %v1777, 4
    %v1796 = vperm.slane %v1777, 5
    %v1797 = vperm.slane %v1777, 6
    %v1798 = vperm.slane %v1777, 7
    %v1799 = vperm.slane %v1780, 0
    %v1800 = vperm.slane %v1780, 1
    %v1801 = vperm.slane %v1780, 2
    %v1802 = vperm.slane %v1780, 3
    %v1803 = vperm.slane %v1780, 4
    %v1804 = vperm.slane %v1780, 5
    %v1805 = vperm.slane %v1780, 6
    %v1806 = vperm.slane %v1780, 7
    %v1807 = vperm.slane %v1783, 0
    %v1808 = vperm.slane %v1783, 1
    %v1809 = vperm.slane %v1783, 2
    %v1810 = vperm.slane %v1783, 3
    %v1811 = vperm.slane %v1783, 4
    %v1812 = vperm.slane %v1783, 5
    %v1813 = vperm.slane %v1783, 6
    %v1814 = vperm.slane %v1783, 7
    %v1815 = vperm.slane %v1786, 0
    %v1816 = vperm.slane %v1786, 1
    %v1817 = vperm.slane %v1786, 2
    %v1818 = vperm.slane %v1786, 3
    %v1819 = vperm.slane %v1786, 4
    %v1820 = vperm.slane %v1786, 5
    %v1821 = vperm.slane %v1786, 6
    %v1822 = vperm.slane %v1786, 7
    %v1855 = vsub.f32 %v1315, %v1791
    %v1856 = vsub.f32 %v1316, %v1791
    %v1857 = vsub.f32 %v1317, %v1792
    %v1858 = vsub.f32 %v1318, %v1792
    %v1859 = vsub.f32 %v1319, %v1793
    %v1860 = vsub.f32 %v1320, %v1793
    %v1861 = vsub.f32 %v1321, %v1794
    %v1862 = vsub.f32 %v1322, %v1794
    %v1863 = vsub.f32 %v1323, %v1795
    %v1864 = vsub.f32 %v1324, %v1795
    %v1865 = vsub.f32 %v1325, %v1796
    %v1866 = vsub.f32 %v1326, %v1796
    %v1867 = vsub.f32 %v1327, %v1797
    %v1868 = vsub.f32 %v1328, %v1797
    %v1869 = vsub.f32 %v1329, %v1798
    %v1870 = vsub.f32 %v1330, %v1798
    %v1871 = vsub.f32 %v1331, %v1799
    %v1872 = vsub.f32 %v1332, %v1799
    %v1873 = vsub.f32 %v1333, %v1800
    %v1874 = vsub.f32 %v1334, %v1800
    %v1875 = vsub.f32 %v1335, %v1801
    %v1876 = vsub.f32 %v1336, %v1801
    %v1877 = vsub.f32 %v1337, %v1802
    %v1878 = vsub.f32 %v1338, %v1802
    %v1879 = vsub.f32 %v1339, %v1803
    %v1880 = vsub.f32 %v1340, %v1803
    %v1881 = vsub.f32 %v1341, %v1804
    %v1882 = vsub.f32 %v1342, %v1804
    %v1883 = vsub.f32 %v1343, %v1805
    %v1884 = vsub.f32 %v1344, %v1805
    %v1885 = vsub.f32 %v1345, %v1806
    %v1886 = vsub.f32 %v1346, %v1806
    %v1887 = vsub.f32 %v1347, %v1807
    %v1888 = vsub.f32 %v1348, %v1807
    %v1889 = vsub.f32 %v1349, %v1808
    %v1890 = vsub.f32 %v1350, %v1808
    %v1891 = vsub.f32 %v1351, %v1809
    %v1892 = vsub.f32 %v1352, %v1809
    %v1893 = vsub.f32 %v1353, %v1810
    %v1894 = vsub.f32 %v1354, %v1810
    %v1895 = vsub.f32 %v1355, %v1811
    %v1896 = vsub.f32 %v1356, %v1811
    %v1897 = vsub.f32 %v1357, %v1812
    %v1898 = vsub.f32 %v1358, %v1812
    %v1899 = vsub.f32 %v1359, %v1813
    %v1900 = vsub.f32 %v1360, %v1813
    %v1901 = vsub.f32 %v1361, %v1814
    %v1902 = vsub.f32 %v1362, %v1814
    %v1903 = vsub.f32 %v1363, %v1815
    %v1904 = vsub.f32 %v1364, %v1815
    %v1905 = vsub.f32 %v1365, %v1816
    %v1906 = vsub.f32 %v1366, %v1816
    %v1907 = vsub.f32 %v1367, %v1817
    %v1908 = vsub.f32 %v1368, %v1817
    %v1909 = vsub.f32 %v1369, %v1818
    %v1910 = vsub.f32 %v1370, %v1818
    %v1911 = vsub.f32 %v1371, %v1819
    %v1912 = vsub.f32 %v1372, %v1819
    %v1913 = vsub.f32 %v1373, %v1820
    %v1914 = vsub.f32 %v1374, %v1820
    %v1915 = vsub.f32 %v1375, %v1821
    %v1916 = vsub.f32 %v1376, %v1821
    %v1917 = vsub.f32 %v1377, %v1822
    %v1918 = vsub.f32 %v1378, %v1822
    %v1919 = vmul.f32 %v1855, 1.442695
    %v1920 = vpow.pop %v1919
    %v1921 = vmul.f32 %v1856, 1.442695
    %v1922 = vpow.pop %v1921
    %v1923 = vmul.f32 %v1857, 1.442695
    %v1924 = vpow.pop %v1923
    %v1925 = vmul.f32 %v1858, 1.442695
    %v1926 = vpow.pop %v1925
    %v1927 = vmul.f32 %v1859, 1.442695
    %v1928 = vpow.pop %v1927
    %v1929 = vmul.f32 %v1860, 1.442695
    %v1930 = vpow.pop %v1929
    %v1931 = vmul.f32 %v1861, 1.442695
    %v1932 = vpow.pop %v1931
    %v1933 = vmul.f32 %v1862, 1.442695
    %v1934 = vpow.pop %v1933
    %v1935 = vmul.f32 %v1863, 1.442695
    %v1936 = vpow.pop %v1935
    %v1937 = vmul.f32 %v1864, 1.442695
    %v1938 = vpow.pop %v1937
    %v1939 = vmul.f32 %v1865, 1.442695
    %v1940 = vpow.pop %v1939
    %v1941 = vmul.f32 %v1866, 1.442695
    %v1942 = vpow.pop %v1941
    %v1943 = vmul.f32 %v1867, 1.442695
    %v1944 = vpow.pop %v1943
    %v1945 = vmul.f32 %v1868, 1.442695
    %v1946 = vpow.pop %v1945
    %v1947 = vmul.f32 %v1869, 1.442695
    %v1948 = vpow.pop %v1947
    %v1949 = vmul.f32 %v1870, 1.442695
    %v1950 = vpow.pop %v1949
    %v1951 = vmul.f32 %v1871, 1.442695
    %v1952 = vpow.pop %v1951
    %v1953 = vmul.f32 %v1872, 1.442695
    %v1954 = vpow.pop %v1953
    %v1955 = vmul.f32 %v1873, 1.442695
    %v1956 = vpow.pop %v1955
    %v1957 = vmul.f32 %v1874, 1.442695
    %v1958 = vpow.pop %v1957
    %v1959 = vmul.f32 %v1875, 1.442695
    %v1960 = vpow.pop %v1959
    %v1961 = vmul.f32 %v1876, 1.442695
    %v1962 = vpow.pop %v1961
    %v1963 = vmul.f32 %v1877, 1.442695
    %v1964 = vpow.pop %v1963
    %v1965 = vmul.f32 %v1878, 1.442695
    %v1966 = vpow.pop %v1965
    %v1967 = vmul.f32 %v1879, 1.442695
    %v1968 = vpow.pop %v1967
    %v1969 = vmul.f32 %v1880, 1.442695
    %v1970 = vpow.pop %v1969
    %v1971 = vmul.f32 %v1881, 1.442695
    %v1972 = vpow.pop %v1971
    %v1973 = vmul.f32 %v1882, 1.442695
    %v1974 = vpow.pop %v1973
    %v1975 = vmul.f32 %v1883, 1.442695
    %v1976 = vpow.pop %v1975
    %v1977 = vmul.f32 %v1884, 1.442695
    %v1978 = vpow.pop %v1977
    %v1979 = vmul.f32 %v1885, 1.442695
    %v1980 = vpow.pop %v1979
    %v1981 = vmul.f32 %v1886, 1.442695
    %v1982 = vpow.pop %v1981
    %v1983 = vmul.f32 %v1887, 1.442695
    %v1984 = vpow.pop %v1983
    %v1985 = vmul.f32 %v1888, 1.442695
    %v1986 = vpow.pop %v1985
    %v1987 = vmul.f32 %v1889, 1.442695
    %v1988 = vpow.pop %v1987
    %v1989 = vmul.f32 %v1890, 1.442695
    %v1990 = vpow.pop %v1989
    %v1991 = vmul.f32 %v1891, 1.442695
    %v1992 = vpow.pop %v1991
    %v1993 = vmul.f32 %v1892, 1.442695
    %v1994 = vpow.pop %v1993
    %v1995 = vmul.f32 %v1893, 1.442695
    %v1996 = vpow.pop %v1995
    %v1997 = vmul.f32 %v1894, 1.442695
    %v1998 = vpow.pop %v1997
    %v1999 = vmul.f32 %v1895, 1.442695
    %v2000 = vpow.pop %v1999
    %v2001 = vmul.f32 %v1896, 1.442695
    %v2002 = vpow.pop %v2001
    %v2003 = vmul.f32 %v1897, 1.442695
    %v2004 = vpow.pop %v2003
    %v2005 = vmul.f32 %v1898, 1.442695
    %v2006 = vpow.pop %v2005
    %v2007 = vmul.f32 %v1899, 1.442695
    %v2008 = vpow.pop %v2007
    %v2009 = vmul.f32 %v1900, 1.442695
    %v2010 = vpow.pop %v2009
    %v2011 = vmul.f32 %v1901, 1.442695
    %v2012 = vpow.pop %v2011
    %v2013 = vmul.f32 %v1902, 1.442695
    %v2014 = vpow.pop %v2013
    %v2015 = vmul.f32 %v1903, 1.442695
    %v2016 = vpow.pop %v2015
    %v2017 = vmul.f32 %v1904, 1.442695
    %v2018 = vpow.pop %v2017
    %v2019 = vmul.f32 %v1905, 1.442695
    %v2020 = vpow.pop %v2019
    %v2021 = vmul.f32 %v1906, 1.442695
    %v2022 = vpow.pop %v2021
    %v2023 = vmul.f32 %v1907, 1.442695
    %v2024 = vpow.pop %v2023
    %v2025 = vmul.f32 %v1908, 1.442695
    %v2026 = vpow.pop %v2025
    %v2027 = vmul.f32 %v1909, 1.442695
    %v2028 = vpow.pop %v2027
    %v2029 = vmul.f32 %v1910, 1.442695
    %v2030 = vpow.pop %v2029
    %v2031 = vmul.f32 %v1911, 1.442695
    %v2032 = vpow.pop %v2031
    %v2033 = vmul.f32 %v1912, 1.442695
    %v2034 = vpow.pop %v2033
    %v2035 = vmul.f32 %v1913, 1.442695
    %v2036 = vpow.pop %v2035
    %v2037 = vmul.f32 %v1914, 1.442695
    %v2038 = vpow.pop %v2037
    %v2039 = vmul.f32 %v1915, 1.442695
    %v2040 = vpow.pop %v2039
    %v2041 = vmul.f32 %v1916, 1.442695
    %v2042 = vpow.pop %v2041
    %v2043 = vmul.f32 %v1917, 1.442695
    %v2044 = vpow.pop %v2043
    %v2045 = vmul.f32 %v1918, 1.442695
    %v2046 = vpow.pop %v2045
    %2111 = vset.pattern.permute.xlu0 0
    %2112 = vperm.xlu0 %2111, %v1920
    %v2113 = vpop.permute.xlu0 %2112
    %2114 = vset.pattern.permute.xlu0 0
    %2115 = vperm.xlu0 %2114, %v1922
    %v2116 = vpop.permute.xlu0 %2115
    %2117 = vset.pattern.permute.xlu0 0
    %2118 = vperm.xlu0 %2117, %v1924
    %v2119 = vpop.permute.xlu0 %2118
    %2120 = vset.pattern.permute.xlu0 0
    %2121 = vperm.xlu0 %2120, %v1926
    %v2122 = vpop.permute.xlu0 %2121
    %2123 = vset.pattern.permute.xlu0 0
    %2124 = vperm.xlu0 %2123, %v1928
    %v2125 = vpop.permute.xlu0 %2124
    %2126 = vset.pattern.permute.xlu0 0
    %2127 = vperm.xlu0 %2126, %v1930
    %v2128 = vpop.permute.xlu0 %2127
    %2129 = vset.pattern.permute.xlu0 0
    %2130 = vperm.xlu0 %2129, %v1932
    %v2131 = vpop.permute.xlu0 %2130
    %2132 = vset.pattern.permute.xlu0 0
    %2133 = vperm.xlu0 %2132, %v1934
    %v2134 = vpop.permute.xlu0 %2133
    %2135 = vset.pattern.permute.xlu0 0
    %2136 = vperm.xlu0 %2135, %v1936
    %v2137 = vpop.permute.xlu0 %2136
    %2138 = vset.pattern.permute.xlu0 0
    %2139 = vperm.xlu0 %2138, %v1938
    %v2140 = vpop.permute.xlu0 %2139
    %2141 = vset.pattern.permute.xlu0 0
    %2142 = vperm.xlu0 %2141, %v1940
    %v2143 = vpop.permute.xlu0 %2142
    %2144 = vset.pattern.permute.xlu0 0
    %2145 = vperm.xlu0 %2144, %v1942
    %v2146 = vpop.permute.xlu0 %2145
    %2147 = vset.pattern.permute.xlu0 0
    %2148 = vperm.xlu0 %2147, %v1944
    %v2149 = vpop.permute.xlu0 %2148
    %2150 = vset.pattern.permute.xlu0 0
    %2151 = vperm.xlu0 %2150, %v1946
    %v2152 = vpop.permute.xlu0 %2151
    %2153 = vset.pattern.permute.xlu0 0
    %2154 = vperm.xlu0 %2153, %v1948
    %v2155 = vpop.permute.xlu0 %2154
    %2156 = vset.pattern.permute.xlu0 0
    %2157 = vperm.xlu0 %2156, %v1950
    %v2158 = vpop.permute.xlu0 %2157
    %2159 = vset.pattern.permute.xlu0 0
    %2160 = vperm.xlu0 %2159, %v1952
    %v2161 = vpop.permute.xlu0 %2160
    %2162 = vset.pattern.permute.xlu0 0
    %2163 = vperm.xlu0 %2162, %v1954
    %v2164 = vpop.permute.xlu0 %2163
    %2165 = vset.pattern.permute.xlu0 0
    %2166 = vperm.xlu0 %2165, %v1956
    %v2167 = vpop.permute.xlu0 %2166
    %2168 = vset.pattern.permute.xlu0 0
    %2169 = vperm.xlu0 %2168, %v1958
    %v2170 = vpop.permute.xlu0 %2169
    %2171 = vset.pattern.permute.xlu0 0
    %2172 = vperm.xlu0 %2171, %v1960
    %v2173 = vpop.permute.xlu0 %2172
    %2174 = vset.pattern.permute.xlu0 0
    %2175 = vperm.xlu0 %2174, %v1962
    %v2176 = vpop.permute.xlu0 %2175
    %2177 = vset.pattern.permute.xlu0 0
    %2178 = vperm.xlu0 %2177, %v1964
    %v2179 = vpop.permute.xlu0 %2178
    %2180 = vset.pattern.permute.xlu0 0
    %2181 = vperm.xlu0 %2180, %v1966
    %v2182 = vpop.permute.xlu0 %2181
    %2183 = vset.pattern.permute.xlu0 0
    %2184 = vperm.xlu0 %2183, %v1968
    %v2185 = vpop.permute.xlu0 %2184
    %2186 = vset.pattern.permute.xlu0 0
    %2187 = vperm.xlu0 %2186, %v1970
    %v2188 = vpop.permute.xlu0 %2187
    %2189 = vset.pattern.permute.xlu0 0
    %2190 = vperm.xlu0 %2189, %v1972
    %v2191 = vpop.permute.xlu0 %2190
    %2192 = vset.pattern.permute.xlu0 0
    %2193 = vperm.xlu0 %2192, %v1974
    %v2194 = vpop.permute.xlu0 %2193
    %2195 = vset.pattern.permute.xlu0 0
    %2196 = vperm.xlu0 %2195, %v1976
    %v2197 = vpop.permute.xlu0 %2196
    %2198 = vset.pattern.permute.xlu0 0
    %2199 = vperm.xlu0 %2198, %v1978
    %v2200 = vpop.permute.xlu0 %2199
    %2201 = vset.pattern.permute.xlu0 0
    %2202 = vperm.xlu0 %2201, %v1980
    %v2203 = vpop.permute.xlu0 %2202
    %2204 = vset.pattern.permute.xlu0 0
    %2205 = vperm.xlu0 %2204, %v1982
    %v2206 = vpop.permute.xlu0 %2205
    %2207 = vset.pattern.permute.xlu0 0
    %2208 = vperm.xlu0 %2207, %v1984
    %v2209 = vpop.permute.xlu0 %2208
    %2210 = vset.pattern.permute.xlu0 0
    %2211 = vperm.xlu0 %2210, %v1986
    %v2212 = vpop.permute.xlu0 %2211
    %2213 = vset.pattern.permute.xlu0 0
    %2214 = vperm.xlu0 %2213, %v1988
    %v2215 = vpop.permute.xlu0 %2214
    %2216 = vset.pattern.permute.xlu0 0
    %2217 = vperm.xlu0 %2216, %v1990
    %v2218 = vpop.permute.xlu0 %2217
    %2219 = vset.pattern.permute.xlu0 0
    %2220 = vperm.xlu0 %2219, %v1992
    %v2221 = vpop.permute.xlu0 %2220
    %2222 = vset.pattern.permute.xlu0 0
    %2223 = vperm.xlu0 %2222, %v1994
    %v2224 = vpop.permute.xlu0 %2223
    %2225 = vset.pattern.permute.xlu0 0
    %2226 = vperm.xlu0 %2225, %v1996
    %v2227 = vpop.permute.xlu0 %2226
    %2228 = vset.pattern.permute.xlu0 0
    %2229 = vperm.xlu0 %2228, %v1998
    %v2230 = vpop.permute.xlu0 %2229
    %2231 = vset.pattern.permute.xlu0 0
    %2232 = vperm.xlu0 %2231, %v2000
    %v2233 = vpop.permute.xlu0 %2232
    %2234 = vset.pattern.permute.xlu0 0
    %2235 = vperm.xlu0 %2234, %v2002
    %v2236 = vpop.permute.xlu0 %2235
    %2237 = vset.pattern.permute.xlu0 0
    %2238 = vperm.xlu0 %2237, %v2004
    %v2239 = vpop.permute.xlu0 %2238
    %2240 = vset.pattern.permute.xlu0 0
    %2241 = vperm.xlu0 %2240, %v2006
    %v2242 = vpop.permute.xlu0 %2241
    %2243 = vset.pattern.permute.xlu0 0
    %2244 = vperm.xlu0 %2243, %v2008
    %v2245 = vpop.permute.xlu0 %2244
    %2246 = vset.pattern.permute.xlu0 0
    %2247 = vperm.xlu0 %2246, %v2010
    %v2248 = vpop.permute.xlu0 %2247
    %2249 = vset.pattern.permute.xlu0 0
    %2250 = vperm.xlu0 %2249, %v2012
    %v2251 = vpop.permute.xlu0 %2250
    %2252 = vset.pattern.permute.xlu0 0
    %2253 = vperm.xlu0 %2252, %v2014
    %v2254 = vpop.permute.xlu0 %2253
    %2255 = vset.pattern.permute.xlu0 0
    %2256 = vperm.xlu0 %2255, %v2016
    %v2257 = vpop.permute.xlu0 %2256
    %2258 = vset.pattern.permute.xlu0 0
    %2259 = vperm.xlu0 %2258, %v2018
    %v2260 = vpop.permute.xlu0 %2259
    %2261 = vset.pattern.permute.xlu0 0
    %2262 = vperm.xlu0 %2261, %v2020
    %v2263 = vpop.permute.xlu0 %2262
    %2264 = vset.pattern.permute.xlu0 0
    %2265 = vperm.xlu0 %2264, %v2022
    %v2266 = vpop.permute.xlu0 %2265
    %2267 = vset.pattern.permute.xlu0 0
    %2268 = vperm.xlu0 %2267, %v2024
    %v2269 = vpop.permute.xlu0 %2268
    %2270 = vset.pattern.permute.xlu0 0
    %2271 = vperm.xlu0 %2270, %v2026
    %v2272 = vpop.permute.xlu0 %2271
    %2273 = vset.pattern.permute.xlu0 0
    %2274 = vperm.xlu0 %2273, %v2028
    %v2275 = vpop.permute.xlu0 %2274
    %2276 = vset.pattern.permute.xlu0 0
    %2277 = vperm.xlu0 %2276, %v2030
    %v2278 = vpop.permute.xlu0 %2277
    %2279 = vset.pattern.permute.xlu0 0
    %2280 = vperm.xlu0 %2279, %v2032
    %v2281 = vpop.permute.xlu0 %2280
    %2282 = vset.pattern.permute.xlu0 0
    %2283 = vperm.xlu0 %2282, %v2034
    %v2284 = vpop.permute.xlu0 %2283
    %2285 = vset.pattern.permute.xlu0 0
    %2286 = vperm.xlu0 %2285, %v2036
    %v2287 = vpop.permute.xlu0 %2286
    %2288 = vset.pattern.permute.xlu0 0
    %2289 = vperm.xlu0 %2288, %v2038
    %v2290 = vpop.permute.xlu0 %2289
    %2291 = vset.pattern.permute.xlu0 0
    %2292 = vperm.xlu0 %2291, %v2040
    %v2293 = vpop.permute.xlu0 %2292
    %2294 = vset.pattern.permute.xlu0 0
    %2295 = vperm.xlu0 %2294, %v2042
    %v2296 = vpop.permute.xlu0 %2295
    %2297 = vset.pattern.permute.xlu0 0
    %2298 = vperm.xlu0 %2297, %v2044
    %v2299 = vpop.permute.xlu0 %2298
    %2300 = vset.pattern.permute.xlu0 0
    %2301 = vperm.xlu0 %2300, %v2046
    %v2302 = vpop.permute.xlu0 %2301
    %v2303 = vperm.slane %v2113, %v1636
    %v2304 = vperm.slane %v2116, %v1638
    %v2305 = vsel %vm1640, %v2304, %v2303
    %v2306 = vperm.slane %v2119, %v1636
    %v2307 = vperm.slane %v2122, %v1638
    %v2308 = vsel %vm1640, %v2307, %v2306
    %v2309 = vperm.slane %v2125, %v1636
    %v2310 = vperm.slane %v2128, %v1638
    %v2311 = vsel %vm1640, %v2310, %v2309
    %v2312 = vperm.slane %v2131, %v1636
    %v2313 = vperm.slane %v2134, %v1638
    %v2314 = vsel %vm1640, %v2313, %v2312
    %v2315 = vperm.slane %v2137, %v1636
    %v2316 = vperm.slane %v2140, %v1638
    %v2317 = vsel %vm1640, %v2316, %v2315
    %v2318 = vperm.slane %v2143, %v1636
    %v2319 = vperm.slane %v2146, %v1638
    %v2320 = vsel %vm1640, %v2319, %v2318
    %v2321 = vperm.slane %v2149, %v1636
    %v2322 = vperm.slane %v2152, %v1638
    %v2323 = vsel %vm1640, %v2322, %v2321
    %v2324 = vperm.slane %v2155, %v1636
    %v2325 = vperm.slane %v2158, %v1638
    %v2326 = vsel %vm1640, %v2325, %v2324
    %v2327 = vperm.slane %v2161, %v1636
    %v2328 = vperm.slane %v2164, %v1638
    %v2329 = vsel %vm1640, %v2328, %v2327
    %v2330 = vperm.slane %v2167, %v1636
    %v2331 = vperm.slane %v2170, %v1638
    %v2332 = vsel %vm1640, %v2331, %v2330
    %v2333 = vperm.slane %v2173, %v1636
    %v2334 = vperm.slane %v2176, %v1638
    %v2335 = vsel %vm1640, %v2334, %v2333
    %v2336 = vperm.slane %v2179, %v1636
    %v2337 = vperm.slane %v2182, %v1638
    %v2338 = vsel %vm1640, %v2337, %v2336
    %v2339 = vperm.slane %v2185, %v1636
    %v2340 = vperm.slane %v2188, %v1638
    %v2341 = vsel %vm1640, %v2340, %v2339
    %v2342 = vperm.slane %v2191, %v1636
    %v2343 = vperm.slane %v2194, %v1638
    %v2344 = vsel %vm1640, %v2343, %v2342
    %v2345 = vperm.slane %v2197, %v1636
    %v2346 = vperm.slane %v2200, %v1638
    %v2347 = vsel %vm1640, %v2346, %v2345
    %v2348 = vperm.slane %v2203, %v1636
    %v2349 = vperm.slane %v2206, %v1638
    %v2350 = vsel %vm1640, %v2349, %v2348
    %v2351 = vperm.slane %v2209, %v1636
    %v2352 = vperm.slane %v2212, %v1638
    %v2353 = vsel %vm1640, %v2352, %v2351
    %v2354 = vperm.slane %v2215, %v1636
    %v2355 = vperm.slane %v2218, %v1638
    %v2356 = vsel %vm1640, %v2355, %v2354
    %v2357 = vperm.slane %v2221, %v1636
    %v2358 = vperm.slane %v2224, %v1638
    %v2359 = vsel %vm1640, %v2358, %v2357
    %v2360 = vperm.slane %v2227, %v1636
    %v2361 = vperm.slane %v2230, %v1638
    %v2362 = vsel %vm1640, %v2361, %v2360
    %v2363 = vperm.slane %v2233, %v1636
    %v2364 = vperm.slane %v2236, %v1638
    %v2365 = vsel %vm1640, %v2364, %v2363
    %v2366 = vperm.slane %v2239, %v1636
    %v2367 = vperm.slane %v2242, %v1638
    %v2368 = vsel %vm1640, %v2367, %v2366
    %v2369 = vperm.slane %v2245, %v1636
    %v2370 = vperm.slane %v2248, %v1638
    %v2371 = vsel %vm1640, %v2370, %v2369
    %v2372 = vperm.slane %v2251, %v1636
    %v2373 = vperm.slane %v2254, %v1638
    %v2374 = vsel %vm1640, %v2373, %v2372
    %v2375 = vperm.slane %v2257, %v1636
    %v2376 = vperm.slane %v2260, %v1638
    %v2377 = vsel %vm1640, %v2376, %v2375
    %v2378 = vperm.slane %v2263, %v1636
    %v2379 = vperm.slane %v2266, %v1638
    %v2380 = vsel %vm1640, %v2379, %v2378
    %v2381 = vperm.slane %v2269, %v1636
    %v2382 = vperm.slane %v2272, %v1638
    %v2383 = vsel %vm1640, %v2382, %v2381
    %v2384 = vperm.slane %v2275, %v1636
    %v2385 = vperm.slane %v2278, %v1638
    %v2386 = vsel %vm1640, %v2385, %v2384
    %v2387 = vperm.slane %v2281, %v1636
    %v2388 = vperm.slane %v2284, %v1638
    %v2389 = vsel %vm1640, %v2388, %v2387
    %v2390 = vperm.slane %v2287, %v1636
    %v2391 = vperm.slane %v2290, %v1638
    %v2392 = vsel %vm1640, %v2391, %v2390
    %v2393 = vperm.slane %v2293, %v1636
    %v2394 = vperm.slane %v2296, %v1638
    %v2395 = vsel %vm1640, %v2394, %v2393
    %v2396 = vperm.slane %v2299, %v1636
    %v2397 = vperm.slane %v2302, %v1638
    %v2398 = vsel %vm1640, %v2397, %v2396
    %v2399 = vsel %vm1735, %v2308, %v2305
    %v2400 = vsel %vm1737, %v2311, %v2399
    %v2401 = vsel %vm1739, %v2314, %v2400
    %v2402 = vsel %vm1741, %v2317, %v2401
    %v2403 = vsel %vm1743, %v2320, %v2402
    %v2404 = vsel %vm1745, %v2323, %v2403
    %v2405 = vsel %vm1747, %v2326, %v2404
    %v2406 = vsel %vm1735, %v2332, %v2329
    %v2407 = vsel %vm1737, %v2335, %v2406
    %v2408 = vsel %vm1739, %v2338, %v2407
    %v2409 = vsel %vm1741, %v2341, %v2408
    %v2410 = vsel %vm1743, %v2344, %v2409
    %v2411 = vsel %vm1745, %v2347, %v2410
    %v2412 = vsel %vm1747, %v2350, %v2411
    %v2413 = vsel %vm1735, %v2356, %v2353
    %v2414 = vsel %vm1737, %v2359, %v2413
    %v2415 = vsel %vm1739, %v2362, %v2414
    %v2416 = vsel %vm1741, %v2365, %v2415
    %v2417 = vsel %vm1743, %v2368, %v2416
    %v2418 = vsel %vm1745, %v2371, %v2417
    %v2419 = vsel %vm1747, %v2374, %v2418
    %v2420 = vsel %vm1735, %v2380, %v2377
    %v2421 = vsel %vm1737, %v2383, %v2420
    %v2422 = vsel %vm1739, %v2386, %v2421
    %v2423 = vsel %vm1741, %v2389, %v2422
    %v2424 = vsel %vm1743, %v2392, %v2423
    %v2425 = vsel %vm1745, %v2395, %v2424
    %v2426 = vsel %vm1747, %v2398, %v2425
    %v2431 = vsel %vm1774, %v2405, 0.0
    %2432 = vadd.xlane.f32.xlu0 %v2431
    %v2433 = vpop.xlane.xlu0 %2432
    %v2434 = vsel %vm1774, %v2412, 0.0
    %2435 = vadd.xlane.f32.xlu0 %v2434
    %v2436 = vpop.xlane.xlu0 %2435
    %v2437 = vsel %vm1774, %v2419, 0.0
    %2438 = vadd.xlane.f32.xlu0 %v2437
    %v2439 = vpop.xlane.xlu0 %2438
    %v2440 = vsel %vm1774, %v2426, 0.0
    %2441 = vadd.xlane.f32.xlu0 %v2440
    %v2442 = vpop.xlane.xlu0 %2441
    %v2443 = vrcp.pop %v2433
    %v2444 = vrcp.pop %v2436
    %v2445 = vrcp.pop %v2439
    %v2446 = vrcp.pop %v2442
    %v2451 = vperm.slane %v2443, 0
    %v2452 = vperm.slane %v2443, 1
    %v2453 = vperm.slane %v2443, 2
    %v2454 = vperm.slane %v2443, 3
    %v2455 = vperm.slane %v2443, 4
    %v2456 = vperm.slane %v2443, 5
    %v2457 = vperm.slane %v2443, 6
    %v2458 = vperm.slane %v2443, 7
    %v2459 = vperm.slane %v2444, 0
    %v2460 = vperm.slane %v2444, 1
    %v2461 = vperm.slane %v2444, 2
    %v2462 = vperm.slane %v2444, 3
    %v2463 = vperm.slane %v2444, 4
    %v2464 = vperm.slane %v2444, 5
    %v2465 = vperm.slane %v2444, 6
    %v2466 = vperm.slane %v2444, 7
    %v2467 = vperm.slane %v2445, 0
    %v2468 = vperm.slane %v2445, 1
    %v2469 = vperm.slane %v2445, 2
    %v2470 = vperm.slane %v2445, 3
    %v2471 = vperm.slane %v2445, 4
    %v2472 = vperm.slane %v2445, 5
    %v2473 = vperm.slane %v2445, 6
    %v2474 = vperm.slane %v2445, 7
    %v2475 = vperm.slane %v2446, 0
    %v2476 = vperm.slane %v2446, 1
    %v2477 = vperm.slane %v2446, 2
    %v2478 = vperm.slane %v2446, 3
    %v2479 = vperm.slane %v2446, 4
    %v2480 = vperm.slane %v2446, 5
    %v2481 = vperm.slane %v2446, 6
    %v2482 = vperm.slane %v2446, 7
    %v2515 = vmul.f32 %v1920, %v2451
    %v2516 = vmul.f32 %v1922, %v2451
    %v2517 = vmul.f32 %v1924, %v2452
    %v2518 = vmul.f32 %v1926, %v2452
    %v2519 = vmul.f32 %v1928, %v2453
    %v2520 = vmul.f32 %v1930, %v2453
    %v2521 = vmul.f32 %v1932, %v2454
    %v2522 = vmul.f32 %v1934, %v2454
    %v2523 = vmul.f32 %v1936, %v2455
    %v2524 = vmul.f32 %v1938, %v2455
    %v2525 = vmul.f32 %v1940, %v2456
    %v2526 = vmul.f32 %v1942, %v2456
    %v2527 = vmul.f32 %v1944, %v2457
    %v2528 = vmul.f32 %v1946, %v2457
    %v2529 = vmul.f32 %v1948, %v2458
    %v2530 = vmul.f32 %v1950, %v2458
    %v2531 = vmul.f32 %v1952, %v2459
    %v2532 = vmul.f32 %v1954, %v2459
    %v2533 = vmul.f32 %v1956, %v2460
    %v2534 = vmul.f32 %v1958, %v2460
    %v2535 = vmul.f32 %v1960, %v2461
    %v2536 = vmul.f32 %v1962, %v2461
    %v2537 = vmul.f32 %v1964, %v2462
    %v2538 = vmul.f32 %v1966, %v2462
    %v2539 = vmul.f32 %v1968, %v2463
    %v2540 = vmul.f32 %v1970, %v2463
    %v2541 = vmul.f32 %v1972, %v2464
    %v2542 = vmul.f32 %v1974, %v2464
    %v2543 = vmul.f32 %v1976, %v2465
    %v2544 = vmul.f32 %v1978, %v2465
    %v2545 = vmul.f32 %v1980, %v2466
    %v2546 = vmul.f32 %v1982, %v2466
    %v2547 = vmul.f32 %v1984, %v2467
    %v2548 = vmul.f32 %v1986, %v2467
    %v2549 = vmul.f32 %v1988, %v2468
    %v2550 = vmul.f32 %v1990, %v2468
    %v2551 = vmul.f32 %v1992, %v2469
    %v2552 = vmul.f32 %v1994, %v2469
    %v2553 = vmul.f32 %v1996, %v2470
    %v2554 = vmul.f32 %v1998, %v2470
    %v2555 = vmul.f32 %v2000, %v2471
    %v2556 = vmul.f32 %v2002, %v2471
    %v2557 = vmul.f32 %v2004, %v2472
    %v2558 = vmul.f32 %v2006, %v2472
    %v2559 = vmul.f32 %v2008, %v2473
    %v2560 = vmul.f32 %v2010, %v2473
    %v2561 = vmul.f32 %v2012, %v2474
    %v2562 = vmul.f32 %v2014, %v2474
    %v2563 = vmul.f32 %v2016, %v2475
    %v2564 = vmul.f32 %v2018, %v2475
    %v2565 = vmul.f32 %v2020, %v2476
    %v2566 = vmul.f32 %v2022, %v2476
    %v2567 = vmul.f32 %v2024, %v2477
    %v2568 = vmul.f32 %v2026, %v2477
    %v2569 = vmul.f32 %v2028, %v2478
    %v2570 = vmul.f32 %v2030, %v2478
    %v2571 = vmul.f32 %v2032, %v2479
    %v2572 = vmul.f32 %v2034, %v2479
    %v2573 = vmul.f32 %v2036, %v2480
    %v2574 = vmul.f32 %v2038, %v2480
    %v2575 = vmul.f32 %v2040, %v2481
    %v2576 = vmul.f32 %v2042, %v2481
    %v2577 = vmul.f32 %v2044, %v2482
    %v2578 = vmul.f32 %v2046, %v2482
    %2579 = vxpose.xlu0.b32.start [1/16] %v390, 128
    %2580 = vxpose.xlu0.b32.cont [2/16] %v391, 128
    %2581 = vxpose.xlu0.b32.cont [3/16] 0.0, 128
    %2582 = vxpose.xlu0.b32.cont [4/16] 0.0, 128
    %2583 = vxpose.xlu0.b32.cont [5/16] 0.0, 128
    %2584 = vxpose.xlu0.b32.cont [6/16] 0.0, 128
    %2585 = vxpose.xlu0.b32.cont [7/16] 0.0, 128
    %2586 = vxpose.xlu0.b32.cont [8/16] 0.0, 128
    %2587 = vxpose.xlu0.b32.cont [9/16] 0.0, 128
    %2588 = vxpose.xlu0.b32.cont [10/16] 0.0, 128
    %2589 = vxpose.xlu0.b32.cont [11/16] 0.0, 128
    %2590 = vxpose.xlu0.b32.cont [12/16] 0.0, 128
    %2591 = vxpose.xlu0.b32.cont [13/16] 0.0, 128
    %2592 = vxpose.xlu0.b32.cont [14/16] 0.0, 128
    %2593 = vxpose.xlu0.b32.cont [15/16] 0.0, 128
    %2594 = vxpose.xlu0.b32.end [16/16] 0.0, 128
    %v2595 = vpop.trf.xlu0
    %v2596 = vpop.trf.xlu0
    %v2597 = vpop.trf.xlu0
    %v2598 = vpop.trf.xlu0
    %v2599 = vpop.trf.xlu0
    %v2600 = vpop.trf.xlu0
    %v2601 = vpop.trf.xlu0
    %v2602 = vpop.trf.xlu0
    %v2603 = vpop.trf.xlu0
    %v2604 = vpop.trf.xlu0
    %v2605 = vpop.trf.xlu0
    %v2606 = vpop.trf.xlu0
    %v2607 = vpop.trf.xlu0
    %v2608 = vpop.trf.xlu0
    %v2609 = vpop.trf.xlu0
    %v2610 = vpop.trf.xlu0
    %2611 = vxpose.xlu0.b32.start [1/16] %v506, 128
    %2612 = vxpose.xlu0.b32.cont [2/16] %v508, 128
    %2613 = vxpose.xlu0.b32.cont [3/16] 0.0, 128
    %2614 = vxpose.xlu0.b32.cont [4/16] 0.0, 128
    %2615 = vxpose.xlu0.b32.cont [5/16] 0.0, 128
    %2616 = vxpose.xlu0.b32.cont [6/16] 0.0, 128
    %2617 = vxpose.xlu0.b32.cont [7/16] 0.0, 128
    %2618 = vxpose.xlu0.b32.cont [8/16] 0.0, 128
    %2619 = vxpose.xlu0.b32.cont [9/16] 0.0, 128
    %2620 = vxpose.xlu0.b32.cont [10/16] 0.0, 128
    %2621 = vxpose.xlu0.b32.cont [11/16] 0.0, 128
    %2622 = vxpose.xlu0.b32.cont [12/16] 0.0, 128
    %2623 = vxpose.xlu0.b32.cont [13/16] 0.0, 128
    %2624 = vxpose.xlu0.b32.cont [14/16] 0.0, 128
    %2625 = vxpose.xlu0.b32.cont [15/16] 0.0, 128
    %2626 = vxpose.xlu0.b32.end [16/16] 0.0, 128
    %v2627 = vpop.trf.xlu0
    %v2628 = vpop.trf.xlu0
    %v2629 = vpop.trf.xlu0
    %v2630 = vpop.trf.xlu0
    %v2631 = vpop.trf.xlu0
    %v2632 = vpop.trf.xlu0
    %v2633 = vpop.trf.xlu0
    %v2634 = vpop.trf.xlu0
    %v2635 = vpop.trf.xlu0
    %v2636 = vpop.trf.xlu0
    %v2637 = vpop.trf.xlu0
    %v2638 = vpop.trf.xlu0
    %v2639 = vpop.trf.xlu0
    %v2640 = vpop.trf.xlu0
    %v2641 = vpop.trf.xlu0
    %v2642 = vpop.trf.xlu0
    %2643 = vxpose.xlu0.b32.start [1/16] %v512, 128
    %2644 = vxpose.xlu0.b32.cont [2/16] %v514, 128
    %2645 = vxpose.xlu0.b32.cont [3/16] 0.0, 128
    %2646 = vxpose.xlu0.b32.cont [4/16] 0.0, 128
    %2647 = vxpose.xlu0.b32.cont [5/16] 0.0, 128
    %2648 = vxpose.xlu0.b32.cont [6/16] 0.0, 128
    %2649 = vxpose.xlu0.b32.cont [7/16] 0.0, 128
    %2650 = vxpose.xlu0.b32.cont [8/16] 0.0, 128
    %2651 = vxpose.xlu0.b32.cont [9/16] 0.0, 128
    %2652 = vxpose.xlu0.b32.cont [10/16] 0.0, 128
    %2653 = vxpose.xlu0.b32.cont [11/16] 0.0, 128
    %2654 = vxpose.xlu0.b32.cont [12/16] 0.0, 128
    %2655 = vxpose.xlu0.b32.cont [13/16] 0.0, 128
    %2656 = vxpose.xlu0.b32.cont [14/16] 0.0, 128
    %2657 = vxpose.xlu0.b32.cont [15/16] 0.0, 128
    %2658 = vxpose.xlu0.b32.end [16/16] 0.0, 128
    %v2659 = vpop.trf.xlu0
    %v2660 = vpop.trf.xlu0
    %v2661 = vpop.trf.xlu0
    %v2662 = vpop.trf.xlu0
    %v2663 = vpop.trf.xlu0
    %v2664 = vpop.trf.xlu0
    %v2665 = vpop.trf.xlu0
    %v2666 = vpop.trf.xlu0
    %v2667 = vpop.trf.xlu0
    %v2668 = vpop.trf.xlu0
    %v2669 = vpop.trf.xlu0
    %v2670 = vpop.trf.xlu0
    %v2671 = vpop.trf.xlu0
    %v2672 = vpop.trf.xlu0
    %v2673 = vpop.trf.xlu0
    %v2674 = vpop.trf.xlu0
    %2675 = vxpose.xlu0.b32.start [1/16] %v518, 128
    %2676 = vxpose.xlu0.b32.cont [2/16] %v520, 128
    %2677 = vxpose.xlu0.b32.cont [3/16] 0.0, 128
    %2678 = vxpose.xlu0.b32.cont [4/16] 0.0, 128
    %2679 = vxpose.xlu0.b32.cont [5/16] 0.0, 128
    %2680 = vxpose.xlu0.b32.cont [6/16] 0.0, 128
    %2681 = vxpose.xlu0.b32.cont [7/16] 0.0, 128
    %2682 = vxpose.xlu0.b32.cont [8/16] 0.0, 128
    %2683 = vxpose.xlu0.b32.cont [9/16] 0.0, 128
    %2684 = vxpose.xlu0.b32.cont [10/16] 0.0, 128
    %2685 = vxpose.xlu0.b32.cont [11/16] 0.0, 128
    %2686 = vxpose.xlu0.b32.cont [12/16] 0.0, 128
    %2687 = vxpose.xlu0.b32.cont [13/16] 0.0, 128
    %2688 = vxpose.xlu0.b32.cont [14/16] 0.0, 128
    %2689 = vxpose.xlu0.b32.cont [15/16] 0.0, 128
    %2690 = vxpose.xlu0.b32.end [16/16] 0.0, 128
    %v2691 = vpop.trf.xlu0
    %v2692 = vpop.trf.xlu0
    %v2693 = vpop.trf.xlu0
    %v2694 = vpop.trf.xlu0
    %v2695 = vpop.trf.xlu0
    %v2696 = vpop.trf.xlu0
    %v2697 = vpop.trf.xlu0
    %v2698 = vpop.trf.xlu0
    %v2699 = vpop.trf.xlu0
    %v2700 = vpop.trf.xlu0
    %v2701 = vpop.trf.xlu0
    %v2702 = vpop.trf.xlu0
    %v2703 = vpop.trf.xlu0
    %v2704 = vpop.trf.xlu0
    %v2705 = vpop.trf.xlu0
    %v2706 = vpop.trf.xlu0
    %2723 = vset.pattern.permute.xlu0 0
    %2724 = vperm.xlu0 %2723, %v2515
    %v2725 = vpop.permute.xlu0 %2724
    %2726 = vset.pattern.permute.xlu0 0
    %2727 = vperm.xlu0 %2726, %v2516
    %v2728 = vpop.permute.xlu0 %2727
    %2729 = vset.pattern.permute.xlu0 0
    %2730 = vperm.xlu0 %2729, %v2517
    %v2731 = vpop.permute.xlu0 %2730
    %2732 = vset.pattern.permute.xlu0 0
    %2733 = vperm.xlu0 %2732, %v2518
    %v2734 = vpop.permute.xlu0 %2733
    %2735 = vset.pattern.permute.xlu0 0
    %2736 = vperm.xlu0 %2735, %v2519
    %v2737 = vpop.permute.xlu0 %2736
    %2738 = vset.pattern.permute.xlu0 0
    %2739 = vperm.xlu0 %2738, %v2520
    %v2740 = vpop.permute.xlu0 %2739
    %2741 = vset.pattern.permute.xlu0 0
    %2742 = vperm.xlu0 %2741, %v2521
    %v2743 = vpop.permute.xlu0 %2742
    %2744 = vset.pattern.permute.xlu0 0
    %2745 = vperm.xlu0 %2744, %v2522
    %v2746 = vpop.permute.xlu0 %2745
    %2747 = vset.pattern.permute.xlu0 0
    %2748 = vperm.xlu0 %2747, %v2523
    %v2749 = vpop.permute.xlu0 %2748
    %2750 = vset.pattern.permute.xlu0 0
    %2751 = vperm.xlu0 %2750, %v2524
    %v2752 = vpop.permute.xlu0 %2751
    %2753 = vset.pattern.permute.xlu0 0
    %2754 = vperm.xlu0 %2753, %v2525
    %v2755 = vpop.permute.xlu0 %2754
    %2756 = vset.pattern.permute.xlu0 0
    %2757 = vperm.xlu0 %2756, %v2526
    %v2758 = vpop.permute.xlu0 %2757
    %2759 = vset.pattern.permute.xlu0 0
    %2760 = vperm.xlu0 %2759, %v2527
    %v2761 = vpop.permute.xlu0 %2760
    %2762 = vset.pattern.permute.xlu0 0
    %2763 = vperm.xlu0 %2762, %v2528
    %v2764 = vpop.permute.xlu0 %2763
    %2765 = vset.pattern.permute.xlu0 0
    %2766 = vperm.xlu0 %2765, %v2529
    %v2767 = vpop.permute.xlu0 %2766
    %2768 = vset.pattern.permute.xlu0 0
    %2769 = vperm.xlu0 %2768, %v2530
    %v2770 = vpop.permute.xlu0 %2769
    %v2771 = vperm.slane %v2725, %v1636
    %v2772 = vperm.slane %v2728, %v1638
    %v2773 = vsel %vm1640, %v2772, %v2771
    %v2774 = vperm.slane %v2731, %v1636
    %v2775 = vperm.slane %v2734, %v1638
    %v2776 = vsel %vm1640, %v2775, %v2774
    %v2777 = vperm.slane %v2737, %v1636
    %v2778 = vperm.slane %v2740, %v1638
    %v2779 = vsel %vm1640, %v2778, %v2777
    %v2780 = vperm.slane %v2743, %v1636
    %v2781 = vperm.slane %v2746, %v1638
    %v2782 = vsel %vm1640, %v2781, %v2780
    %v2783 = vperm.slane %v2749, %v1636
    %v2784 = vperm.slane %v2752, %v1638
    %v2785 = vsel %vm1640, %v2784, %v2783
    %v2786 = vperm.slane %v2755, %v1636
    %v2787 = vperm.slane %v2758, %v1638
    %v2788 = vsel %vm1640, %v2787, %v2786
    %v2789 = vperm.slane %v2761, %v1636
    %v2790 = vperm.slane %v2764, %v1638
    %v2791 = vsel %vm1640, %v2790, %v2789
    %v2792 = vperm.slane %v2767, %v1636
    %v2793 = vperm.slane %v2770, %v1638
    %v2794 = vsel %vm1640, %v2793, %v2792
    %v2795 = vsel %vm1735, %v2776, %v2773
    %v2796 = vsel %vm1737, %v2779, %v2795
    %v2797 = vsel %vm1739, %v2782, %v2796
    %v2798 = vsel %vm1741, %v2785, %v2797
    %v2799 = vsel %vm1743, %v2788, %v2798
    %v2800 = vsel %vm1745, %v2791, %v2799
    %v2801 = vsel %vm1747, %v2794, %v2800
    %v2803 = vsel %vm1774, %v2595, 0
    %v2805 = vsel %vm1774, %v2801, 0
    %2807 = vmatpush.xpose.msra.mxu0 0.0
    %2808 = vmatpush.xpose.msra.mxu0 0.0
    %2809 = vmatpush.xpose.msra.mxu0 0.0
    %2810 = vmatpush.xpose.msra.mxu0 0.0
    %2811 = vmatpush.xpose.msra.mxu0 0.0
    %2812 = vmatpush.xpose.msra.mxu0 0.0
    %2813 = vmatpush.xpose.msra.mxu0 0.0
    %2814 = vmatpush.xpose.msra.mxu0 0.0
    %2815 = vmatpush.xpose.msra.mxu0 0.0
    %2816 = vmatpush.xpose.msra.mxu0 0.0
    %2817 = vmatpush.xpose.msra.mxu0 0.0
    %2818 = vmatpush.xpose.msra.mxu0 0.0
    %2819 = vmatpush.xpose.msra.mxu0 0.0
    %2820 = vmatpush.xpose.msra.mxu0 0.0
    %2821 = vmatpush.xpose.msra.mxu0 0.0
    %2822 = vmatpush.xpose.msra.mxu0 %v2805
    %2823 = vmatmul.f32.gmra.mxu0 %v2803
    %v2824 = vpop.f32.mrf.mxu0
    %v2825 = vadd.f32 0.0, %v2824
    %2826 = vdwg.mxu0
    %2843 = vset.pattern.permute.xlu0 0
    %2844 = vperm.xlu0 %2843, %v2531
    %v2845 = vpop.permute.xlu0 %2844
    %2846 = vset.pattern.permute.xlu0 0
    %2847 = vperm.xlu0 %2846, %v2532
    %v2848 = vpop.permute.xlu0 %2847
    %2849 = vset.pattern.permute.xlu0 0
    %2850 = vperm.xlu0 %2849, %v2533
    %v2851 = vpop.permute.xlu0 %2850
    %2852 = vset.pattern.permute.xlu0 0
    %2853 = vperm.xlu0 %2852, %v2534
    %v2854 = vpop.permute.xlu0 %2853
    %2855 = vset.pattern.permute.xlu0 0
    %2856 = vperm.xlu0 %2855, %v2535
    %v2857 = vpop.permute.xlu0 %2856
    %2858 = vset.pattern.permute.xlu0 0
    %2859 = vperm.xlu0 %2858, %v2536
    %v2860 = vpop.permute.xlu0 %2859
    %2861 = vset.pattern.permute.xlu0 0
    %2862 = vperm.xlu0 %2861, %v2537
    %v2863 = vpop.permute.xlu0 %2862
    %2864 = vset.pattern.permute.xlu0 0
    %2865 = vperm.xlu0 %2864, %v2538
    %v2866 = vpop.permute.xlu0 %2865
    %2867 = vset.pattern.permute.xlu0 0
    %2868 = vperm.xlu0 %2867, %v2539
    %v2869 = vpop.permute.xlu0 %2868
    %2870 = vset.pattern.permute.xlu0 0
    %2871 = vperm.xlu0 %2870, %v2540
    %v2872 = vpop.permute.xlu0 %2871
    %2873 = vset.pattern.permute.xlu0 0
    %2874 = vperm.xlu0 %2873, %v2541
    %v2875 = vpop.permute.xlu0 %2874
    %2876 = vset.pattern.permute.xlu0 0
    %2877 = vperm.xlu0 %2876, %v2542
    %v2878 = vpop.permute.xlu0 %2877
    %2879 = vset.pattern.permute.xlu0 0
    %2880 = vperm.xlu0 %2879, %v2543
    %v2881 = vpop.permute.xlu0 %2880
    %2882 = vset.pattern.permute.xlu0 0
    %2883 = vperm.xlu0 %2882, %v2544
    %v2884 = vpop.permute.xlu0 %2883
    %2885 = vset.pattern.permute.xlu0 0
    %2886 = vperm.xlu0 %2885, %v2545
    %v2887 = vpop.permute.xlu0 %2886
    %2888 = vset.pattern.permute.xlu0 0
    %2889 = vperm.xlu0 %2888, %v2546
    %v2890 = vpop.permute.xlu0 %2889
    %v2891 = vperm.slane %v2845, %v1636
    %v2892 = vperm.slane %v2848, %v1638
    %v2893 = vsel %vm1640, %v2892, %v2891
    %v2894 = vperm.slane %v2851, %v1636
    %v2895 = vperm.slane %v2854, %v1638
    %v2896 = vsel %vm1640, %v2895, %v2894
    %v2897 = vperm.slane %v2857, %v1636
    %v2898 = vperm.slane %v2860, %v1638
    %v2899 = vsel %vm1640, %v2898, %v2897
    %v2900 = vperm.slane %v2863, %v1636
    %v2901 = vperm.slane %v2866, %v1638
    %v2902 = vsel %vm1640, %v2901, %v2900
    %v2903 = vperm.slane %v2869, %v1636
    %v2904 = vperm.slane %v2872, %v1638
    %v2905 = vsel %vm1640, %v2904, %v2903
    %v2906 = vperm.slane %v2875, %v1636
    %v2907 = vperm.slane %v2878, %v1638
    %v2908 = vsel %vm1640, %v2907, %v2906
    %v2909 = vperm.slane %v2881, %v1636
    %v2910 = vperm.slane %v2884, %v1638
    %v2911 = vsel %vm1640, %v2910, %v2909
    %v2912 = vperm.slane %v2887, %v1636
    %v2913 = vperm.slane %v2890, %v1638
    %v2914 = vsel %vm1640, %v2913, %v2912
    %v2915 = vsel %vm1735, %v2896, %v2893
    %v2916 = vsel %vm1737, %v2899, %v2915
    %v2917 = vsel %vm1739, %v2902, %v2916
    %v2918 = vsel %vm1741, %v2905, %v2917
    %v2919 = vsel %vm1743, %v2908, %v2918
    %v2920 = vsel %vm1745, %v2911, %v2919
    %v2921 = vsel %vm1747, %v2914, %v2920
    %v2923 = vsel %vm1774, %v2627, 0
    %v2925 = vsel %vm1774, %v2921, 0
    %2927 = vmatpush.xpose.msra.mxu0 0.0
    %2928 = vmatpush.xpose.msra.mxu0 0.0
    %2929 = vmatpush.xpose.msra.mxu0 0.0
    %2930 = vmatpush.xpose.msra.mxu0 0.0
    %2931 = vmatpush.xpose.msra.mxu0 0.0
    %2932 = vmatpush.xpose.msra.mxu0 0.0
    %2933 = vmatpush.xpose.msra.mxu0 0.0
    %2934 = vmatpush.xpose.msra.mxu0 0.0
    %2935 = vmatpush.xpose.msra.mxu0 0.0
    %2936 = vmatpush.xpose.msra.mxu0 0.0
    %2937 = vmatpush.xpose.msra.mxu0 0.0
    %2938 = vmatpush.xpose.msra.mxu0 0.0
    %2939 = vmatpush.xpose.msra.mxu0 0.0
    %2940 = vmatpush.xpose.msra.mxu0 0.0
    %2941 = vmatpush.xpose.msra.mxu0 0.0
    %2942 = vmatpush.xpose.msra.mxu0 %v2925
    %2943 = vmatmul.f32.gmra.mxu0 %v2923
    %v2944 = vpop.f32.mrf.mxu0
    %v2945 = vadd.f32 0.0, %v2944
    %2946 = vdwg.mxu0
    %2963 = vset.pattern.permute.xlu0 0
    %2964 = vperm.xlu0 %2963, %v2547
    %v2965 = vpop.permute.xlu0 %2964
    %2966 = vset.pattern.permute.xlu0 0
    %2967 = vperm.xlu0 %2966, %v2548
    %v2968 = vpop.permute.xlu0 %2967
    %2969 = vset.pattern.permute.xlu0 0
    %2970 = vperm.xlu0 %2969, %v2549
    %v2971 = vpop.permute.xlu0 %2970
    %2972 = vset.pattern.permute.xlu0 0
    %2973 = vperm.xlu0 %2972, %v2550
    %v2974 = vpop.permute.xlu0 %2973
    %2975 = vset.pattern.permute.xlu0 0
    %2976 = vperm.xlu0 %2975, %v2551
    %v2977 = vpop.permute.xlu0 %2976
    %2978 = vset.pattern.permute.xlu0 0
    %2979 = vperm.xlu0 %2978, %v2552
    %v2980 = vpop.permute.xlu0 %2979
    %2981 = vset.pattern.permute.xlu0 0
    %2982 = vperm.xlu0 %2981, %v2553
    %v2983 = vpop.permute.xlu0 %2982
    %2984 = vset.pattern.permute.xlu0 0
    %2985 = vperm.xlu0 %2984, %v2554
    %v2986 = vpop.permute.xlu0 %2985
    %2987 = vset.pattern.permute.xlu0 0
    %2988 = vperm.xlu0 %2987, %v2555
    %v2989 = vpop.permute.xlu0 %2988
    %2990 = vset.pattern.permute.xlu0 0
    %2991 = vperm.xlu0 %2990, %v2556
    %v2992 = vpop.permute.xlu0 %2991
    %2993 = vset.pattern.permute.xlu0 0
    %2994 = vperm.xlu0 %2993, %v2557
    %v2995 = vpop.permute.xlu0 %2994
    %2996 = vset.pattern.permute.xlu0 0
    %2997 = vperm.xlu0 %2996, %v2558
    %v2998 = vpop.permute.xlu0 %2997
    %2999 = vset.pattern.permute.xlu0 0
    %3000 = vperm.xlu0 %2999, %v2559
    %v3001 = vpop.permute.xlu0 %3000
    %3002 = vset.pattern.permute.xlu0 0
    %3003 = vperm.xlu0 %3002, %v2560
    %v3004 = vpop.permute.xlu0 %3003
    %3005 = vset.pattern.permute.xlu0 0
    %3006 = vperm.xlu0 %3005, %v2561
    %v3007 = vpop.permute.xlu0 %3006
    %3008 = vset.pattern.permute.xlu0 0
    %3009 = vperm.xlu0 %3008, %v2562
    %v3010 = vpop.permute.xlu0 %3009
    %v3011 = vperm.slane %v2965, %v1636
    %v3012 = vperm.slane %v2968, %v1638
    %v3013 = vsel %vm1640, %v3012, %v3011
    %v3014 = vperm.slane %v2971, %v1636
    %v3015 = vperm.slane %v2974, %v1638
    %v3016 = vsel %vm1640, %v3015, %v3014
    %v3017 = vperm.slane %v2977, %v1636
    %v3018 = vperm.slane %v2980, %v1638
    %v3019 = vsel %vm1640, %v3018, %v3017
    %v3020 = vperm.slane %v2983, %v1636
    %v3021 = vperm.slane %v2986, %v1638
    %v3022 = vsel %vm1640, %v3021, %v3020
    %v3023 = vperm.slane %v2989, %v1636
    %v3024 = vperm.slane %v2992, %v1638
    %v3025 = vsel %vm1640, %v3024, %v3023
    %v3026 = vperm.slane %v2995, %v1636
    %v3027 = vperm.slane %v2998, %v1638
    %v3028 = vsel %vm1640, %v3027, %v3026
    %v3029 = vperm.slane %v3001, %v1636
    %v3030 = vperm.slane %v3004, %v1638
    %v3031 = vsel %vm1640, %v3030, %v3029
    %v3032 = vperm.slane %v3007, %v1636
    %v3033 = vperm.slane %v3010, %v1638
    %v3034 = vsel %vm1640, %v3033, %v3032
    %v3035 = vsel %vm1735, %v3016, %v3013
    %v3036 = vsel %vm1737, %v3019, %v3035
    %v3037 = vsel %vm1739, %v3022, %v3036
    %v3038 = vsel %vm1741, %v3025, %v3037
    %v3039 = vsel %vm1743, %v3028, %v3038
    %v3040 = vsel %vm1745, %v3031, %v3039
    %v3041 = vsel %vm1747, %v3034, %v3040
    %v3043 = vsel %vm1774, %v2659, 0
    %v3045 = vsel %vm1774, %v3041, 0
    %3047 = vmatpush.xpose.msra.mxu0 0.0
    %3048 = vmatpush.xpose.msra.mxu0 0.0
    %3049 = vmatpush.xpose.msra.mxu0 0.0
    %3050 = vmatpush.xpose.msra.mxu0 0.0
    %3051 = vmatpush.xpose.msra.mxu0 0.0
    %3052 = vmatpush.xpose.msra.mxu0 0.0
    %3053 = vmatpush.xpose.msra.mxu0 0.0
    %3054 = vmatpush.xpose.msra.mxu0 0.0
    %3055 = vmatpush.xpose.msra.mxu0 0.0
    %3056 = vmatpush.xpose.msra.mxu0 0.0
    %3057 = vmatpush.xpose.msra.mxu0 0.0
    %3058 = vmatpush.xpose.msra.mxu0 0.0
    %3059 = vmatpush.xpose.msra.mxu0 0.0
    %3060 = vmatpush.xpose.msra.mxu0 0.0
    %3061 = vmatpush.xpose.msra.mxu0 0.0
    %3062 = vmatpush.xpose.msra.mxu0 %v3045
    %3063 = vmatmul.f32.gmra.mxu0 %v3043
    %v3064 = vpop.f32.mrf.mxu0
    %v3065 = vadd.f32 0.0, %v3064
    %3066 = vdwg.mxu0
    %3083 = vset.pattern.permute.xlu0 0
    %3084 = vperm.xlu0 %3083, %v2563
    %v3085 = vpop.permute.xlu0 %3084
    %3086 = vset.pattern.permute.xlu0 0
    %3087 = vperm.xlu0 %3086, %v2564
    %v3088 = vpop.permute.xlu0 %3087
    %3089 = vset.pattern.permute.xlu0 0
    %3090 = vperm.xlu0 %3089, %v2565
    %v3091 = vpop.permute.xlu0 %3090
    %3092 = vset.pattern.permute.xlu0 0
    %3093 = vperm.xlu0 %3092, %v2566
    %v3094 = vpop.permute.xlu0 %3093
    %3095 = vset.pattern.permute.xlu0 0
    %3096 = vperm.xlu0 %3095, %v2567
    %v3097 = vpop.permute.xlu0 %3096
    %3098 = vset.pattern.permute.xlu0 0
    %3099 = vperm.xlu0 %3098, %v2568
    %v3100 = vpop.permute.xlu0 %3099
    %3101 = vset.pattern.permute.xlu0 0
    %3102 = vperm.xlu0 %3101, %v2569
    %v3103 = vpop.permute.xlu0 %3102
    %3104 = vset.pattern.permute.xlu0 0
    %3105 = vperm.xlu0 %3104, %v2570
    %v3106 = vpop.permute.xlu0 %3105
    %3107 = vset.pattern.permute.xlu0 0
    %3108 = vperm.xlu0 %3107, %v2571
    %v3109 = vpop.permute.xlu0 %3108
    %3110 = vset.pattern.permute.xlu0 0
    %3111 = vperm.xlu0 %3110, %v2572
    %v3112 = vpop.permute.xlu0 %3111
    %3113 = vset.pattern.permute.xlu0 0
    %3114 = vperm.xlu0 %3113, %v2573
    %v3115 = vpop.permute.xlu0 %3114
    %3116 = vset.pattern.permute.xlu0 0
    %3117 = vperm.xlu0 %3116, %v2574
    %v3118 = vpop.permute.xlu0 %3117
    %3119 = vset.pattern.permute.xlu0 0
    %3120 = vperm.xlu0 %3119, %v2575
    %v3121 = vpop.permute.xlu0 %3120
    %3122 = vset.pattern.permute.xlu0 0
    %3123 = vperm.xlu0 %3122, %v2576
    %v3124 = vpop.permute.xlu0 %3123
    %3125 = vset.pattern.permute.xlu0 0
    %3126 = vperm.xlu0 %3125, %v2577
    %v3127 = vpop.permute.xlu0 %3126
    %3128 = vset.pattern.permute.xlu0 0
    %3129 = vperm.xlu0 %3128, %v2578
    %v3130 = vpop.permute.xlu0 %3129
    %v3131 = vperm.slane %v3085, %v1636
    %v3132 = vperm.slane %v3088, %v1638
    %v3133 = vsel %vm1640, %v3132, %v3131
    %v3134 = vperm.slane %v3091, %v1636
    %v3135 = vperm.slane %v3094, %v1638
    %v3136 = vsel %vm1640, %v3135, %v3134
    %v3137 = vperm.slane %v3097, %v1636
    %v3138 = vperm.slane %v3100, %v1638
    %v3139 = vsel %vm1640, %v3138, %v3137
    %v3140 = vperm.slane %v3103, %v1636
    %v3141 = vperm.slane %v3106, %v1638
    %v3142 = vsel %vm1640, %v3141, %v3140
    %v3143 = vperm.slane %v3109, %v1636
    %v3144 = vperm.slane %v3112, %v1638
    %v3145 = vsel %vm1640, %v3144, %v3143
    %v3146 = vperm.slane %v3115, %v1636
    %v3147 = vperm.slane %v3118, %v1638
    %v3148 = vsel %vm1640, %v3147, %v3146
    %v3149 = vperm.slane %v3121, %v1636
    %v3150 = vperm.slane %v3124, %v1638
    %v3151 = vsel %vm1640, %v3150, %v3149
    %v3152 = vperm.slane %v3127, %v1636
    %v3153 = vperm.slane %v3130, %v1638
    %v3154 = vsel %vm1640, %v3153, %v3152
    %v3155 = vsel %vm1735, %v3136, %v3133
    %v3156 = vsel %vm1737, %v3139, %v3155
    %v3157 = vsel %vm1739, %v3142, %v3156
    %v3158 = vsel %vm1741, %v3145, %v3157
    %v3159 = vsel %vm1743, %v3148, %v3158
    %v3160 = vsel %vm1745, %v3151, %v3159
    %v3161 = vsel %vm1747, %v3154, %v3160
    %v3163 = vsel %vm1774, %v2691, 0
    %v3165 = vsel %vm1774, %v3161, 0
    %3167 = vmatpush.xpose.msra.mxu0 0.0
    %3168 = vmatpush.xpose.msra.mxu0 0.0
    %3169 = vmatpush.xpose.msra.mxu0 0.0
    %3170 = vmatpush.xpose.msra.mxu0 0.0
    %3171 = vmatpush.xpose.msra.mxu0 0.0
    %3172 = vmatpush.xpose.msra.mxu0 0.0
    %3173 = vmatpush.xpose.msra.mxu0 0.0
    %3174 = vmatpush.xpose.msra.mxu0 0.0
    %3175 = vmatpush.xpose.msra.mxu0 0.0
    %3176 = vmatpush.xpose.msra.mxu0 0.0
    %3177 = vmatpush.xpose.msra.mxu0 0.0
    %3178 = vmatpush.xpose.msra.mxu0 0.0
    %3179 = vmatpush.xpose.msra.mxu0 0.0
    %3180 = vmatpush.xpose.msra.mxu0 0.0
    %3181 = vmatpush.xpose.msra.mxu0 0.0
    %3182 = vmatpush.xpose.msra.mxu0 %v3165
    %3183 = vmatmul.f32.gmra.mxu0 %v3163
    %v3184 = vpop.f32.mrf.mxu0
    %v3185 = vadd.f32 0.0, %v3184
    %3186 = vdwg.mxu0
    %3187 = vxpose.xlu0.b32.start [1/16] %v2825, 128
    %3188 = vxpose.xlu0.b32.cont [2/16] 0.0, 128
    %3189 = vxpose.xlu0.b32.cont [3/16] 0.0, 128
    %3190 = vxpose.xlu0.b32.cont [4/16] 0.0, 128
    %3191 = vxpose.xlu0.b32.cont [5/16] 0.0, 128
    %3192 = vxpose.xlu0.b32.cont [6/16] 0.0, 128
    %3193 = vxpose.xlu0.b32.cont [7/16] 0.0, 128
    %3194 = vxpose.xlu0.b32.cont [8/16] 0.0, 128
    %3195 = vxpose.xlu0.b32.cont [9/16] 0.0, 128
    %3196 = vxpose.xlu0.b32.cont [10/16] 0.0, 128
    %3197 = vxpose.xlu0.b32.cont [11/16] 0.0, 128
    %3198 = vxpose.xlu0.b32.cont [12/16] 0.0, 128
    %3199 = vxpose.xlu0.b32.cont [13/16] 0.0, 128
    %3200 = vxpose.xlu0.b32.cont [14/16] 0.0, 128
    %3201 = vxpose.xlu0.b32.cont [15/16] 0.0, 128
    %3202 = vxpose.xlu0.b32.end [16/16] 0.0, 128
    %v3203 = vpop.trf.xlu0
    %v3204 = vpop.trf.xlu0
    %v3205 = vpop.trf.xlu0
    %v3206 = vpop.trf.xlu0
    %v3207 = vpop.trf.xlu0
    %v3208 = vpop.trf.xlu0
    %v3209 = vpop.trf.xlu0
    %v3210 = vpop.trf.xlu0
    %v3211 = vpop.trf.xlu0
    %v3212 = vpop.trf.xlu0
    %v3213 = vpop.trf.xlu0
    %v3214 = vpop.trf.xlu0
    %v3215 = vpop.trf.xlu0
    %v3216 = vpop.trf.xlu0
    %v3217 = vpop.trf.xlu0
    %v3218 = vpop.trf.xlu0
    %3219 = vxpose.xlu0.b32.start [1/16] %v2945, 128
    %3220 = vxpose.xlu0.b32.cont [2/16] 0.0, 128
    %3221 = vxpose.xlu0.b32.cont [3/16] 0.0, 128
    %3222 = vxpose.xlu0.b32.cont [4/16] 0.0, 128
    %3223 = vxpose.xlu0.b32.cont [5/16] 0.0, 128
    %3224 = vxpose.xlu0.b32.cont [6/16] 0.0, 128
    %3225 = vxpose.xlu0.b32.cont [7/16] 0.0, 128
    %3226 = vxpose.xlu0.b32.cont [8/16] 0.0, 128
    %3227 = vxpose.xlu0.b32.cont [9/16] 0.0, 128
    %3228 = vxpose.xlu0.b32.cont [10/16] 0.0, 128
    %3229 = vxpose.xlu0.b32.cont [11/16] 0.0, 128
    %3230 = vxpose.xlu0.b32.cont [12/16] 0.0, 128
    %3231 = vxpose.xlu0.b32.cont [13/16] 0.0, 128
    %3232 = vxpose.xlu0.b32.cont [14/16] 0.0, 128
    %3233 = vxpose.xlu0.b32.cont [15/16] 0.0, 128
    %3234 = vxpose.xlu0.b32.end [16/16] 0.0, 128
    %v3235 = vpop.trf.xlu0
    %v3236 = vpop.trf.xlu0
    %v3237 = vpop.trf.xlu0
    %v3238 = vpop.trf.xlu0
    %v3239 = vpop.trf.xlu0
    %v3240 = vpop.trf.xlu0
    %v3241 = vpop.trf.xlu0
    %v3242 = vpop.trf.xlu0
    %v3243 = vpop.trf.xlu0
    %v3244 = vpop.trf.xlu0
    %v3245 = vpop.trf.xlu0
    %v3246 = vpop.trf.xlu0
    %v3247 = vpop.trf.xlu0
    %v3248 = vpop.trf.xlu0
    %v3249 = vpop.trf.xlu0
    %v3250 = vpop.trf.xlu0
    %3251 = vxpose.xlu0.b32.start [1/16] %v3065, 128
    %3252 = vxpose.xlu0.b32.cont [2/16] 0.0, 128
    %3253 = vxpose.xlu0.b32.cont [3/16] 0.0, 128
    %3254 = vxpose.xlu0.b32.cont [4/16] 0.0, 128
    %3255 = vxpose.xlu0.b32.cont [5/16] 0.0, 128
    %3256 = vxpose.xlu0.b32.cont [6/16] 0.0, 128
    %3257 = vxpose.xlu0.b32.cont [7/16] 0.0, 128
    %3258 = vxpose.xlu0.b32.cont [8/16] 0.0, 128
    %3259 = vxpose.xlu0.b32.cont [9/16] 0.0, 128
    %3260 = vxpose.xlu0.b32.cont [10/16] 0.0, 128
    %3261 = vxpose.xlu0.b32.cont [11/16] 0.0, 128
    %3262 = vxpose.xlu0.b32.cont [12/16] 0.0, 128
    %3263 = vxpose.xlu0.b32.cont [13/16] 0.0, 128
    %3264 = vxpose.xlu0.b32.cont [14/16] 0.0, 128
    %3265 = vxpose.xlu0.b32.cont [15/16] 0.0, 128
    %3266 = vxpose.xlu0.b32.end [16/16] 0.0, 128
    %v3267 = vpop.trf.xlu0
    %v3268 = vpop.trf.xlu0
    %v3269 = vpop.trf.xlu0
    %v3270 = vpop.trf.xlu0
    %v3271 = vpop.trf.xlu0
    %v3272 = vpop.trf.xlu0
    %v3273 = vpop.trf.xlu0
    %v3274 = vpop.trf.xlu0
    %v3275 = vpop.trf.xlu0
    %v3276 = vpop.trf.xlu0
    %v3277 = vpop.trf.xlu0
    %v3278 = vpop.trf.xlu0
    %v3279 = vpop.trf.xlu0
    %v3280 = vpop.trf.xlu0
    %v3281 = vpop.trf.xlu0
    %v3282 = vpop.trf.xlu0
    %3283 = vxpose.xlu0.b32.start [1/16] %v3185, 128
    %3284 = vxpose.xlu0.b32.cont [2/16] 0.0, 128
    %3285 = vxpose.xlu0.b32.cont [3/16] 0.0, 128
    %3286 = vxpose.xlu0.b32.cont [4/16] 0.0, 128
    %3287 = vxpose.xlu0.b32.cont [5/16] 0.0, 128
    %3288 = vxpose.xlu0.b32.cont [6/16] 0.0, 128
    %3289 = vxpose.xlu0.b32.cont [7/16] 0.0, 128
    %3290 = vxpose.xlu0.b32.cont [8/16] 0.0, 128
    %3291 = vxpose.xlu0.b32.cont [9/16] 0.0, 128
    %3292 = vxpose.xlu0.b32.cont [10/16] 0.0, 128
    %3293 = vxpose.xlu0.b32.cont [11/16] 0.0, 128
    %3294 = vxpose.xlu0.b32.cont [12/16] 0.0, 128
    %3295 = vxpose.xlu0.b32.cont [13/16] 0.0, 128
    %3296 = vxpose.xlu0.b32.cont [14/16] 0.0, 128
    %3297 = vxpose.xlu0.b32.cont [15/16] 0.0, 128
    %3298 = vxpose.xlu0.b32.end [16/16] 0.0, 128
    %v3299 = vpop.trf.xlu0
    %v3300 = vpop.trf.xlu0
    %v3301 = vpop.trf.xlu0
    %v3302 = vpop.trf.xlu0
    %v3303 = vpop.trf.xlu0
    %v3304 = vpop.trf.xlu0
    %v3305 = vpop.trf.xlu0
    %v3306 = vpop.trf.xlu0
    %v3307 = vpop.trf.xlu0
    %v3308 = vpop.trf.xlu0
    %v3309 = vpop.trf.xlu0
    %v3310 = vpop.trf.xlu0
    %v3311 = vpop.trf.xlu0
    %v3312 = vpop.trf.xlu0
    %v3313 = vpop.trf.xlu0
    %v3314 = vpop.trf.xlu0
    %v3315 = vrot.slane %v3267, 4
    %vm3316 = vcmask 1047556
    %v3317 = vsel %vm3316, %v3315, %v3203
    %v3318 = vrot.slane %v3203, 4
    %v3319 = vsel %vm3316, %v3267, %v3318
    %v3321 = vunpack.c.l.s4 1983009808
    %v3322 = vunpack.c.0.s8 %v3321
    %v3323 = vperm.slane %v3317, %v3322
    %v3325 = vunpack.c.l.s4 1983009808
    %v3326 = vunpack.c.0.s8 %v3325
    %v3327 = vperm.slane %v3319, %v3326
    %v3328 = vrot.slane %v3299, 4
    %v3329 = vsel %vm3316, %v3328, %v3235
    %v3330 = vrot.slane %v3235, 4
    %v3331 = vsel %vm3316, %v3299, %v3330
    %v3333 = vunpack.c.l.s4 1983009808
    %v3334 = vunpack.c.0.s8 %v3333
    %v3335 = vperm.slane %v3329, %v3334
    %v3337 = vunpack.c.l.s4 1983009808
    %v3338 = vunpack.c.0.s8 %v3337
    %v3339 = vperm.slane %v3331, %v3338
    %v3340 = vrot.slane %v3335, 4
    %v3341 = vsel %vm3316, %v3340, %v3323
    %v3342 = vrot.slane %v3323, 4
    %v3343 = vsel %vm3316, %v3335, %v3342
    %v3345 = vunpack.c.l.s4 1934713408
    %v3346 = vunpack.c.0.s8 %v3345
    %v3347 = vperm.slane %v3341, %v3346
    %v3349 = vunpack.c.l.s4 1934713408
    %v3350 = vunpack.c.0.s8 %v3349
    %v3351 = vperm.slane %v3343, %v3350
    %v3352 = vrot.slane %v3339, 4
    %v3353 = vsel %vm3316, %v3352, %v3327
    %v3354 = vrot.slane %v3327, 4
    %v3355 = vsel %vm3316, %v3339, %v3354
    %v3357 = vunpack.c.l.s4 1934713408
    %v3358 = vunpack.c.0.s8 %v3357
    %v3359 = vperm.slane %v3353, %v3358
    %v3361 = vunpack.c.l.s4 1934713408
    %v3362 = vunpack.c.0.s8 %v3361
    %v3363 = vperm.slane %v3355, %v3362
    %v3364 = vrot.slane %v3347, 4
    %v3365 = vsel %vm3316, 0.0, %v3364
    %v3366 = vrot.slane %v3351, 4
    %v3367 = vsel %vm3316, 0.0, %v3366
    %v3368 = vrot.slane %v3359, 4
    %v3369 = vsel %vm3316, 0.0, %v3368
    %v3370 = vrot.slane %v3363, 4
    %v3371 = vsel %vm3316, 0.0, %v3370
    %v3372 = vsel %vm3316, %v3366, %v3347
    %v3374 = vunpack.c.l.s4 1983009808
    %v3375 = vunpack.c.0.s8 %v3374
    %v3376 = vperm.slane %v3372, %v3375
    %v3377 = vrot.slane %v3367, 4
    %v3378 = vsel %vm3316, %v3377, %v3365
    %v3380 = vunpack.c.l.s4 1983009808
    %v3381 = vunpack.c.0.s8 %v3380
    %v3382 = vperm.slane %v3378, %v3381
    %v3383 = vsel %vm3316, %v3370, %v3359
    %v3385 = vunpack.c.l.s4 1983009808
    %v3386 = vunpack.c.0.s8 %v3385
    %v3387 = vperm.slane %v3383, %v3386
    %v3388 = vrot.slane %v3371, 4
    %v3389 = vsel %vm3316, %v3388, %v3369
    %v3391 = vunpack.c.l.s4 1983009808
    %v3392 = vunpack.c.0.s8 %v3391
    %v3393 = vperm.slane %v3389, %v3392
    %v3394 = vrot.slane %v3382, 4
    %v3395 = vsel %vm3316, %v3394, %v3376
    %v3396 = vrot.slane %v3376, 4
    %v3397 = vsel %vm3316, %v3382, %v3396
    %v3399 = vunpack.c.l.s4 1934713408
    %v3400 = vunpack.c.0.s8 %v3399
    %v3401 = vperm.slane %v3395, %v3400
    %v3403 = vunpack.c.l.s4 1934713408
    %v3404 = vunpack.c.0.s8 %v3403
    %v3405 = vperm.slane %v3397, %v3404
    %v3406 = vrot.slane %v3393, 4
    %v3407 = vsel %vm3316, %v3406, %v3387
    %v3408 = vrot.slane %v3387, 4
    %v3409 = vsel %vm3316, %v3393, %v3408
    %v3411 = vunpack.c.l.s4 1934713408
    %v3412 = vunpack.c.0.s8 %v3411
    %v3413 = vperm.slane %v3407, %v3412
    %v3415 = vunpack.c.l.s4 1934713408
    %v3416 = vunpack.c.0.s8 %v3415
    %v3417 = vperm.slane %v3409, %v3416
    %v3418 = vrot.slane %v3413, 4
    %v3419 = vsel %vm3316, %v3418, %v3401
    %v3420 = vrot.slane %v3401, 4
    %v3421 = vsel %vm3316, %v3413, %v3420
    %v3422 = vrot.slane %v3417, 4
    %v3423 = vsel %vm3316, %v3422, %v3405
    %v3424 = vrot.slane %v3405, 4
    %v3425 = vsel %vm3316, %v3417, %v3424
    %3427 = vrot.lane.b32.xlu0 %v3421, 8
    %v3428 = vpop.permute.xlu0 %3427
    %3431 = vrot.lane.b32.xlu0 %v3423, 16
    %v3432 = vpop.permute.xlu0 %3431
    %3435 = vrot.lane.b32.xlu0 %v3425, 24
    %v3436 = vpop.permute.xlu0 %3435
    %v3438 = vsel %vm674, %v3419, %v3428
    %v3439 = vsel %vm1774, %v3438, %v3432
    %vm3440 = vcmask 195584
    %v3441 = vsel %vm3440, %v3439, %v3436
    %3442 = vxpose.xlu0.b32.start [1/16] %v441, 128
    %3443 = vxpose.xlu0.b32.cont [2/16] 0.0, 128
    %3444 = vxpose.xlu0.b32.cont [3/16] 0.0, 128
    %3445 = vxpose.xlu0.b32.cont [4/16] 0.0, 128
    %3446 = vxpose.xlu0.b32.cont [5/16] 0.0, 128
    %3447 = vxpose.xlu0.b32.cont [6/16] 0.0, 128
    %3448 = vxpose.xlu0.b32.cont [7/16] 0.0, 128
    %3449 = vxpose.xlu0.b32.cont [8/16] 0.0, 128
    %3450 = vxpose.xlu0.b32.cont [9/16] 0.0, 128
    %3451 = vxpose.xlu0.b32.cont [10/16] 0.0, 128
    %3452 = vxpose.xlu0.b32.cont [11/16] 0.0, 128
    %3453 = vxpose.xlu0.b32.cont [12/16] 0.0, 128
    %3454 = vxpose.xlu0.b32.cont [13/16] 0.0, 128
    %3455 = vxpose.xlu0.b32.cont [14/16] 0.0, 128
    %3456 = vxpose.xlu0.b32.cont [15/16] 0.0, 128
    %3457 = vxpose.xlu0.b32.end [16/16] 0.0, 128
    %v3458 = vpop.trf.xlu0
    %v3459 = vpop.trf.xlu0
    %v3460 = vpop.trf.xlu0
    %v3461 = vpop.trf.xlu0
    %v3462 = vpop.trf.xlu0
    %v3463 = vpop.trf.xlu0
    %v3464 = vpop.trf.xlu0
    %v3465 = vpop.trf.xlu0
    %v3466 = vpop.trf.xlu0
    %v3467 = vpop.trf.xlu0
    %v3468 = vpop.trf.xlu0
    %v3469 = vpop.trf.xlu0
    %v3470 = vpop.trf.xlu0
    %v3471 = vpop.trf.xlu0
    %v3472 = vpop.trf.xlu0
    %v3473 = vpop.trf.xlu0
    %3474 = vxpose.xlu0.b32.start [1/16] %v525, 128
    %3475 = vxpose.xlu0.b32.cont [2/16] 0.0, 128
    %3476 = vxpose.xlu0.b32.cont [3/16] 0.0, 128
    %3477 = vxpose.xlu0.b32.cont [4/16] 0.0, 128
    %3478 = vxpose.xlu0.b32.cont [5/16] 0.0, 128
    %3479 = vxpose.xlu0.b32.cont [6/16] 0.0, 128
    %3480 = vxpose.xlu0.b32.cont [7/16] 0.0, 128
    %3481 = vxpose.xlu0.b32.cont [8/16] 0.0, 128
    %3482 = vxpose.xlu0.b32.cont [9/16] 0.0, 128
    %3483 = vxpose.xlu0.b32.cont [10/16] 0.0, 128
    %3484 = vxpose.xlu0.b32.cont [11/16] 0.0, 128
    %3485 = vxpose.xlu0.b32.cont [12/16] 0.0, 128
    %3486 = vxpose.xlu0.b32.cont [13/16] 0.0, 128
    %3487 = vxpose.xlu0.b32.cont [14/16] 0.0, 128
    %3488 = vxpose.xlu0.b32.cont [15/16] 0.0, 128
    %3489 = vxpose.xlu0.b32.end [16/16] 0.0, 128
    %v3490 = vpop.trf.xlu0
    %v3491 = vpop.trf.xlu0
    %v3492 = vpop.trf.xlu0
    %v3493 = vpop.trf.xlu0
    %v3494 = vpop.trf.xlu0
    %v3495 = vpop.trf.xlu0
    %v3496 = vpop.trf.xlu0
    %v3497 = vpop.trf.xlu0
    %v3498 = vpop.trf.xlu0
    %v3499 = vpop.trf.xlu0
    %v3500 = vpop.trf.xlu0
    %v3501 = vpop.trf.xlu0
    %v3502 = vpop.trf.xlu0
    %v3503 = vpop.trf.xlu0
    %v3504 = vpop.trf.xlu0
    %v3505 = vpop.trf.xlu0
    %3506 = vxpose.xlu0.b32.start [1/16] %v528, 128
    %3507 = vxpose.xlu0.b32.cont [2/16] 0.0, 128
    %3508 = vxpose.xlu0.b32.cont [3/16] 0.0, 128
    %3509 = vxpose.xlu0.b32.cont [4/16] 0.0, 128
    %3510 = vxpose.xlu0.b32.cont [5/16] 0.0, 128
    %3511 = vxpose.xlu0.b32.cont [6/16] 0.0, 128
    %3512 = vxpose.xlu0.b32.cont [7/16] 0.0, 128
    %3513 = vxpose.xlu0.b32.cont [8/16] 0.0, 128
    %3514 = vxpose.xlu0.b32.cont [9/16] 0.0, 128
    %3515 = vxpose.xlu0.b32.cont [10/16] 0.0, 128
    %3516 = vxpose.xlu0.b32.cont [11/16] 0.0, 128
    %3517 = vxpose.xlu0.b32.cont [12/16] 0.0, 128
    %3518 = vxpose.xlu0.b32.cont [13/16] 0.0, 128
    %3519 = vxpose.xlu0.b32.cont [14/16] 0.0, 128
    %3520 = vxpose.xlu0.b32.cont [15/16] 0.0, 128
    %3521 = vxpose.xlu0.b32.end [16/16] 0.0, 128
    %v3522 = vpop.trf.xlu0
    %v3523 = vpop.trf.xlu0
    %v3524 = vpop.trf.xlu0
    %v3525 = vpop.trf.xlu0
    %v3526 = vpop.trf.xlu0
    %v3527 = vpop.trf.xlu0
    %v3528 = vpop.trf.xlu0
    %v3529 = vpop.trf.xlu0
    %v3530 = vpop.trf.xlu0
    %v3531 = vpop.trf.xlu0
    %v3532 = vpop.trf.xlu0
    %v3533 = vpop.trf.xlu0
    %v3534 = vpop.trf.xlu0
    %v3535 = vpop.trf.xlu0
    %v3536 = vpop.trf.xlu0
    %v3537 = vpop.trf.xlu0
    %3538 = vxpose.xlu0.b32.start [1/16] %v531, 128
    %3539 = vxpose.xlu0.b32.cont [2/16] 0.0, 128
    %3540 = vxpose.xlu0.b32.cont [3/16] 0.0, 128
    %3541 = vxpose.xlu0.b32.cont [4/16] 0.0, 128
    %3542 = vxpose.xlu0.b32.cont [5/16] 0.0, 128
    %3543 = vxpose.xlu0.b32.cont [6/16] 0.0, 128
    %3544 = vxpose.xlu0.b32.cont [7/16] 0.0, 128
    %3545 = vxpose.xlu0.b32.cont [8/16] 0.0, 128
    %3546 = vxpose.xlu0.b32.cont [9/16] 0.0, 128
    %3547 = vxpose.xlu0.b32.cont [10/16] 0.0, 128
    %3548 = vxpose.xlu0.b32.cont [11/16] 0.0, 128
    %3549 = vxpose.xlu0.b32.cont [12/16] 0.0, 128
    %3550 = vxpose.xlu0.b32.cont [13/16] 0.0, 128
    %3551 = vxpose.xlu0.b32.cont [14/16] 0.0, 128
    %3552 = vxpose.xlu0.b32.cont [15/16] 0.0, 128
    %3553 = vxpose.xlu0.b32.end [16/16] 0.0, 128
    %v3554 = vpop.trf.xlu0
    %v3555 = vpop.trf.xlu0
    %v3556 = vpop.trf.xlu0
    %v3557 = vpop.trf.xlu0
    %v3558 = vpop.trf.xlu0
    %v3559 = vpop.trf.xlu0
    %v3560 = vpop.trf.xlu0
    %v3561 = vpop.trf.xlu0
    %v3562 = vpop.trf.xlu0
    %v3563 = vpop.trf.xlu0
    %v3564 = vpop.trf.xlu0
    %v3565 = vpop.trf.xlu0
    %v3566 = vpop.trf.xlu0
    %v3567 = vpop.trf.xlu0
    %v3568 = vpop.trf.xlu0
    %v3569 = vpop.trf.xlu0
    %v3570 = vsel %vm674, %v474, 0
    %3572 = vmatpush.msra.mxu0 0.0
    %3573 = vmatpush.msra.mxu0 0.0
    %3574 = vmatpush.msra.mxu0 0.0
    %3575 = vmatpush.msra.mxu0 0.0
    %3576 = vmatpush.msra.mxu0 0.0
    %3577 = vmatpush.msra.mxu0 0.0
    %3578 = vmatpush.msra.mxu0 0.0
    %3579 = vmatpush.msra.mxu0 0.0
    %3580 = vmatpush.msra.mxu0 0.0
    %3581 = vmatpush.msra.mxu0 0.0
    %3582 = vmatpush.msra.mxu0 0.0
    %3583 = vmatpush.msra.mxu0 0.0
    %3584 = vmatpush.msra.mxu0 0.0
    %3585 = vmatpush.msra.mxu0 0.0
    %3586 = vmatpush.msra.mxu0 0.0
    %3587 = vmatpush.msra.mxu0 %v3458
    %3588 = vmatmul.f32.gmra.mxu0 %v3570
    %v3589 = vpop.f32.mrf.mxu0
    %v3590 = vadd.f32 0.0, %v3589
    %3591 = vdwg.mxu0
    %v3592 = vsel %vm674, %v535, 0
    %3594 = vmatpush.msra.mxu0 0.0
    %3595 = vmatpush.msra.mxu0 0.0
    %3596 = vmatpush.msra.mxu0 0.0
    %3597 = vmatpush.msra.mxu0 0.0
    %3598 = vmatpush.msra.mxu0 0.0
    %3599 = vmatpush.msra.mxu0 0.0
    %3600 = vmatpush.msra.mxu0 0.0
    %3601 = vmatpush.msra.mxu0 0.0
    %3602 = vmatpush.msra.mxu0 0.0
    %3603 = vmatpush.msra.mxu0 0.0
    %3604 = vmatpush.msra.mxu0 0.0
    %3605 = vmatpush.msra.mxu0 0.0
    %3606 = vmatpush.msra.mxu0 0.0
    %3607 = vmatpush.msra.mxu0 0.0
    %3608 = vmatpush.msra.mxu0 0.0
    %3609 = vmatpush.msra.mxu0 %v3490
    %3610 = vmatmul.f32.gmra.mxu0 %v3592
    %v3611 = vpop.f32.mrf.mxu0
    %v3612 = vadd.f32 0.0, %v3611
    %3613 = vdwg.mxu0
    %v3614 = vsel %vm674, %v538, 0
    %3616 = vmatpush.msra.mxu0 0.0
    %3617 = vmatpush.msra.mxu0 0.0
    %3618 = vmatpush.msra.mxu0 0.0
    %3619 = vmatpush.msra.mxu0 0.0
    %3620 = vmatpush.msra.mxu0 0.0
    %3621 = vmatpush.msra.mxu0 0.0
    %3622 = vmatpush.msra.mxu0 0.0
    %3623 = vmatpush.msra.mxu0 0.0
    %3624 = vmatpush.msra.mxu0 0.0
    %3625 = vmatpush.msra.mxu0 0.0
    %3626 = vmatpush.msra.mxu0 0.0
    %3627 = vmatpush.msra.mxu0 0.0
    %3628 = vmatpush.msra.mxu0 0.0
    %3629 = vmatpush.msra.mxu0 0.0
    %3630 = vmatpush.msra.mxu0 0.0
    %3631 = vmatpush.msra.mxu0 %v3522
    %3632 = vmatmul.f32.gmra.mxu0 %v3614
    %v3633 = vpop.f32.mrf.mxu0
    %v3634 = vadd.f32 0.0, %v3633
    %3635 = vdwg.mxu0
    %v3636 = vsel %vm674, %v541, 0
    %3638 = vmatpush.msra.mxu0 0.0
    %3639 = vmatpush.msra.mxu0 0.0
    %3640 = vmatpush.msra.mxu0 0.0
    %3641 = vmatpush.msra.mxu0 0.0
    %3642 = vmatpush.msra.mxu0 0.0
    %3643 = vmatpush.msra.mxu0 0.0
    %3644 = vmatpush.msra.mxu0 0.0
    %3645 = vmatpush.msra.mxu0 0.0
    %3646 = vmatpush.msra.mxu0 0.0
    %3647 = vmatpush.msra.mxu0 0.0
    %3648 = vmatpush.msra.mxu0 0.0
    %3649 = vmatpush.msra.mxu0 0.0
    %3650 = vmatpush.msra.mxu0 0.0
    %3651 = vmatpush.msra.mxu0 0.0
    %3652 = vmatpush.msra.mxu0 0.0
    %3653 = vmatpush.msra.mxu0 %v3554
    %3654 = vmatmul.f32.gmra.mxu0 %v3636
    %v3655 = vpop.f32.mrf.mxu0
    %v3656 = vadd.f32 0.0, %v3655
    %3657 = vdwg.mxu0
    %v3658 = vsel %vm545, 1, 0
    %vm3659 = vcmp.eq.s32.totalorder %v3658, 1
    %v3664 = vperm.slane %v3590, 0
    %v3665 = vlaneseq
    %v3666 = vshrl.u32 %v3665, 7
    %3668 = vset.pattern.permute.xlu0 %v3666
    %3669 = vperm.xlu0 %3668, %v3664
    %v3670 = vpop.permute.xlu0 %3669
    %v3671 = vperm.slane %v3590, 1
    %v3672 = vlaneseq
    %v3673 = vshrl.u32 %v3672, 7
    %3675 = vset.pattern.permute.xlu0 %v3673
    %3676 = vperm.xlu0 %3675, %v3671
    %v3677 = vpop.permute.xlu0 %3676
    %v3678 = vperm.slane %v3590, 2
    %v3679 = vlaneseq
    %v3680 = vshrl.u32 %v3679, 7
    %3682 = vset.pattern.permute.xlu0 %v3680
    %3683 = vperm.xlu0 %3682, %v3678
    %v3684 = vpop.permute.xlu0 %3683
    %v3685 = vperm.slane %v3590, 3
    %v3686 = vlaneseq
    %v3687 = vshrl.u32 %v3686, 7
    %3689 = vset.pattern.permute.xlu0 %v3687
    %3690 = vperm.xlu0 %3689, %v3685
    %v3691 = vpop.permute.xlu0 %3690
    %v3692 = vperm.slane %v3590, 4
    %v3693 = vlaneseq
    %v3694 = vshrl.u32 %v3693, 7
    %3696 = vset.pattern.permute.xlu0 %v3694
    %3697 = vperm.xlu0 %3696, %v3692
    %v3698 = vpop.permute.xlu0 %3697
    %v3699 = vperm.slane %v3590, 5
    %v3700 = vlaneseq
    %v3701 = vshrl.u32 %v3700, 7
    %3703 = vset.pattern.permute.xlu0 %v3701
    %3704 = vperm.xlu0 %3703, %v3699
    %v3705 = vpop.permute.xlu0 %3704
    %v3706 = vperm.slane %v3590, 6
    %v3707 = vlaneseq
    %v3708 = vshrl.u32 %v3707, 7
    %3710 = vset.pattern.permute.xlu0 %v3708
    %3711 = vperm.xlu0 %3710, %v3706
    %v3712 = vpop.permute.xlu0 %3711
    %v3713 = vperm.slane %v3590, 7
    %v3714 = vlaneseq
    %v3715 = vshrl.u32 %v3714, 7
    %3717 = vset.pattern.permute.xlu0 %v3715
    %3718 = vperm.xlu0 %3717, %v3713
    %v3719 = vpop.permute.xlu0 %3718
    %v3720 = vperm.slane %v3612, 0
    %v3721 = vlaneseq
    %v3722 = vshrl.u32 %v3721, 7
    %3724 = vset.pattern.permute.xlu0 %v3722
    %3725 = vperm.xlu0 %3724, %v3720
    %v3726 = vpop.permute.xlu0 %3725
    %v3727 = vperm.slane %v3612, 1
    %v3728 = vlaneseq
    %v3729 = vshrl.u32 %v3728, 7
    %3731 = vset.pattern.permute.xlu0 %v3729
    %3732 = vperm.xlu0 %3731, %v3727
    %v3733 = vpop.permute.xlu0 %3732
    %v3734 = vperm.slane %v3612, 2
    %v3735 = vlaneseq
    %v3736 = vshrl.u32 %v3735, 7
    %3738 = vset.pattern.permute.xlu0 %v3736
    %3739 = vperm.xlu0 %3738, %v3734
    %v3740 = vpop.permute.xlu0 %3739
    %v3741 = vperm.slane %v3612, 3
    %v3742 = vlaneseq
    %v3743 = vshrl.u32 %v3742, 7
    %3745 = vset.pattern.permute.xlu0 %v3743
    %3746 = vperm.xlu0 %3745, %v3741
    %v3747 = vpop.permute.xlu0 %3746
    %v3748 = vperm.slane %v3612, 4
    %v3749 = vlaneseq
    %v3750 = vshrl.u32 %v3749, 7
    %3752 = vset.pattern.permute.xlu0 %v3750
    %3753 = vperm.xlu0 %3752, %v3748
    %v3754 = vpop.permute.xlu0 %3753
    %v3755 = vperm.slane %v3612, 5
    %v3756 = vlaneseq
    %v3757 = vshrl.u32 %v3756, 7
    %3759 = vset.pattern.permute.xlu0 %v3757
    %3760 = vperm.xlu0 %3759, %v3755
    %v3761 = vpop.permute.xlu0 %3760
    %v3762 = vperm.slane %v3612, 6
    %v3763 = vlaneseq
    %v3764 = vshrl.u32 %v3763, 7
    %3766 = vset.pattern.permute.xlu0 %v3764
    %3767 = vperm.xlu0 %3766, %v3762
    %v3768 = vpop.permute.xlu0 %3767
    %v3769 = vperm.slane %v3612, 7
    %v3770 = vlaneseq
    %v3771 = vshrl.u32 %v3770, 7
    %3773 = vset.pattern.permute.xlu0 %v3771
    %3774 = vperm.xlu0 %3773, %v3769
    %v3775 = vpop.permute.xlu0 %3774
    %v3776 = vperm.slane %v3634, 0
    %v3777 = vlaneseq
    %v3778 = vshrl.u32 %v3777, 7
    %3780 = vset.pattern.permute.xlu0 %v3778
    %3781 = vperm.xlu0 %3780, %v3776
    %v3782 = vpop.permute.xlu0 %3781
    %v3783 = vperm.slane %v3634, 1
    %v3784 = vlaneseq
    %v3785 = vshrl.u32 %v3784, 7
    %3787 = vset.pattern.permute.xlu0 %v3785
    %3788 = vperm.xlu0 %3787, %v3783
    %v3789 = vpop.permute.xlu0 %3788
    %v3790 = vperm.slane %v3634, 2
    %v3791 = vlaneseq
    %v3792 = vshrl.u32 %v3791, 7
    %3794 = vset.pattern.permute.xlu0 %v3792
    %3795 = vperm.xlu0 %3794, %v3790
    %v3796 = vpop.permute.xlu0 %3795
    %v3797 = vperm.slane %v3634, 3
    %v3798 = vlaneseq
    %v3799 = vshrl.u32 %v3798, 7
    %3801 = vset.pattern.permute.xlu0 %v3799
    %3802 = vperm.xlu0 %3801, %v3797
    %v3803 = vpop.permute.xlu0 %3802
    %v3804 = vperm.slane %v3634, 4
    %v3805 = vlaneseq
    %v3806 = vshrl.u32 %v3805, 7
    %3808 = vset.pattern.permute.xlu0 %v3806
    %3809 = vperm.xlu0 %3808, %v3804
    %v3810 = vpop.permute.xlu0 %3809
    %v3811 = vperm.slane %v3634, 5
    %v3812 = vlaneseq
    %v3813 = vshrl.u32 %v3812, 7
    %3815 = vset.pattern.permute.xlu0 %v3813
    %3816 = vperm.xlu0 %3815, %v3811
    %v3817 = vpop.permute.xlu0 %3816
    %v3818 = vperm.slane %v3634, 6
    %v3819 = vlaneseq
    %v3820 = vshrl.u32 %v3819, 7
    %3822 = vset.pattern.permute.xlu0 %v3820
    %3823 = vperm.xlu0 %3822, %v3818
    %v3824 = vpop.permute.xlu0 %3823
    %v3825 = vperm.slane %v3634, 7
    %v3826 = vlaneseq
    %v3827 = vshrl.u32 %v3826, 7
    %3829 = vset.pattern.permute.xlu0 %v3827
    %3830 = vperm.xlu0 %3829, %v3825
    %v3831 = vpop.permute.xlu0 %3830
    %v3832 = vperm.slane %v3656, 0
    %v3833 = vlaneseq
    %v3834 = vshrl.u32 %v3833, 7
    %3836 = vset.pattern.permute.xlu0 %v3834
    %3837 = vperm.xlu0 %3836, %v3832
    %v3838 = vpop.permute.xlu0 %3837
    %v3839 = vperm.slane %v3656, 1
    %v3840 = vlaneseq
    %v3841 = vshrl.u32 %v3840, 7
    %3843 = vset.pattern.permute.xlu0 %v3841
    %3844 = vperm.xlu0 %3843, %v3839
    %v3845 = vpop.permute.xlu0 %3844
    %v3846 = vperm.slane %v3656, 2
    %v3847 = vlaneseq
    %v3848 = vshrl.u32 %v3847, 7
    %3850 = vset.pattern.permute.xlu0 %v3848
    %3851 = vperm.xlu0 %3850, %v3846
    %v3852 = vpop.permute.xlu0 %3851
    %v3853 = vperm.slane %v3656, 3
    %v3854 = vlaneseq
    %v3855 = vshrl.u32 %v3854, 7
    %3857 = vset.pattern.permute.xlu0 %v3855
    %3858 = vperm.xlu0 %3857, %v3853
    %v3859 = vpop.permute.xlu0 %3858
    %v3860 = vperm.slane %v3656, 4
    %v3861 = vlaneseq
    %v3862 = vshrl.u32 %v3861, 7
    %3864 = vset.pattern.permute.xlu0 %v3862
    %3865 = vperm.xlu0 %3864, %v3860
    %v3866 = vpop.permute.xlu0 %3865
    %v3867 = vperm.slane %v3656, 5
    %v3868 = vlaneseq
    %v3869 = vshrl.u32 %v3868, 7
    %3871 = vset.pattern.permute.xlu0 %v3869
    %3872 = vperm.xlu0 %3871, %v3867
    %v3873 = vpop.permute.xlu0 %3872
    %v3874 = vperm.slane %v3656, 6
    %v3875 = vlaneseq
    %v3876 = vshrl.u32 %v3875, 7
    %3878 = vset.pattern.permute.xlu0 %v3876
    %3879 = vperm.xlu0 %3878, %v3874
    %v3880 = vpop.permute.xlu0 %3879
    %v3881 = vperm.slane %v3656, 7
    %v3882 = vlaneseq
    %v3883 = vshrl.u32 %v3882, 7
    %3885 = vset.pattern.permute.xlu0 %v3883
    %3886 = vperm.xlu0 %3885, %v3881
    %v3887 = vpop.permute.xlu0 %3886
    %v3920 = vsel %vm3659, -1e+09, %v3670
    %v3921 = vsel %vm3659, -1e+09, %v3677
    %v3922 = vsel %vm3659, -1e+09, %v3684
    %v3923 = vsel %vm3659, -1e+09, %v3691
    %v3924 = vsel %vm3659, -1e+09, %v3698
    %v3925 = vsel %vm3659, -1e+09, %v3705
    %v3926 = vsel %vm3659, -1e+09, %v3712
    %v3927 = vsel %vm3659, -1e+09, %v3719
    %v3928 = vsel %vm3659, -1e+09, %v3726
    %v3929 = vsel %vm3659, -1e+09, %v3733
    %v3930 = vsel %vm3659, -1e+09, %v3740
    %v3931 = vsel %vm3659, -1e+09, %v3747
    %v3932 = vsel %vm3659, -1e+09, %v3754
    %v3933 = vsel %vm3659, -1e+09, %v3761
    %v3934 = vsel %vm3659, -1e+09, %v3768
    %v3935 = vsel %vm3659, -1e+09, %v3775
    %v3936 = vsel %vm3659, -1e+09, %v3782
    %v3937 = vsel %vm3659, -1e+09, %v3789
    %v3938 = vsel %vm3659, -1e+09, %v3796
    %v3939 = vsel %vm3659, -1e+09, %v3803
    %v3940 = vsel %vm3659, -1e+09, %v3810
    %v3941 = vsel %vm3659, -1e+09, %v3817
    %v3942 = vsel %vm3659, -1e+09, %v3824
    %v3943 = vsel %vm3659, -1e+09, %v3831
    %v3944 = vsel %vm3659, -1e+09, %v3838
    %v3945 = vsel %vm3659, -1e+09, %v3845
    %v3946 = vsel %vm3659, -1e+09, %v3852
    %v3947 = vsel %vm3659, -1e+09, %v3859
    %v3948 = vsel %vm3659, -1e+09, %v3866
    %v3949 = vsel %vm3659, -1e+09, %v3873
    %v3950 = vsel %vm3659, -1e+09, %v3880
    %v3951 = vsel %vm3659, -1e+09, %v3887
    %v3952 = vmul.f32 %v3920, 0.35355338
    %v3953 = vmul.f32 %v3921, 0.35355338
    %v3954 = vmul.f32 %v3922, 0.35355338
    %v3955 = vmul.f32 %v3923, 0.35355338
    %v3956 = vmul.f32 %v3924, 0.35355338
    %v3957 = vmul.f32 %v3925, 0.35355338
    %v3958 = vmul.f32 %v3926, 0.35355338
    %v3959 = vmul.f32 %v3927, 0.35355338
    %v3960 = vmul.f32 %v3928, 0.35355338
    %v3961 = vmul.f32 %v3929, 0.35355338
    %v3962 = vmul.f32 %v3930, 0.35355338
    %v3963 = vmul.f32 %v3931, 0.35355338
    %v3964 = vmul.f32 %v3932, 0.35355338
    %v3965 = vmul.f32 %v3933, 0.35355338
    %v3966 = vmul.f32 %v3934, 0.35355338
    %v3967 = vmul.f32 %v3935, 0.35355338
    %v3968 = vmul.f32 %v3936, 0.35355338
    %v3969 = vmul.f32 %v3937, 0.35355338
    %v3970 = vmul.f32 %v3938, 0.35355338
    %v3971 = vmul.f32 %v3939, 0.35355338
    %v3972 = vmul.f32 %v3940, 0.35355338
    %v3973 = vmul.f32 %v3941, 0.35355338
    %v3974 = vmul.f32 %v3942, 0.35355338
    %v3975 = vmul.f32 %v3943, 0.35355338
    %v3976 = vmul.f32 %v3944, 0.35355338
    %v3977 = vmul.f32 %v3945, 0.35355338
    %v3978 = vmul.f32 %v3946, 0.35355338
    %v3979 = vmul.f32 %v3947, 0.35355338
    %v3980 = vmul.f32 %v3948, 0.35355338
    %v3981 = vmul.f32 %v3949, 0.35355338
    %v3982 = vmul.f32 %v3950, 0.35355338
    %v3983 = vmul.f32 %v3951, 0.35355338
    %4016 = vset.pattern.permute.xlu0 0
    %4017 = vperm.xlu0 %4016, %v3952
    %v4018 = vpop.permute.xlu0 %4017
    %4019 = vset.pattern.permute.xlu0 0
    %4020 = vperm.xlu0 %4019, %v3953
    %v4021 = vpop.permute.xlu0 %4020
    %4022 = vset.pattern.permute.xlu0 0
    %4023 = vperm.xlu0 %4022, %v3954
    %v4024 = vpop.permute.xlu0 %4023
    %4025 = vset.pattern.permute.xlu0 0
    %4026 = vperm.xlu0 %4025, %v3955
    %v4027 = vpop.permute.xlu0 %4026
    %4028 = vset.pattern.permute.xlu0 0
    %4029 = vperm.xlu0 %4028, %v3956
    %v4030 = vpop.permute.xlu0 %4029
    %4031 = vset.pattern.permute.xlu0 0
    %4032 = vperm.xlu0 %4031, %v3957
    %v4033 = vpop.permute.xlu0 %4032
    %4034 = vset.pattern.permute.xlu0 0
    %4035 = vperm.xlu0 %4034, %v3958
    %v4036 = vpop.permute.xlu0 %4035
    %4037 = vset.pattern.permute.xlu0 0
    %4038 = vperm.xlu0 %4037, %v3959
    %v4039 = vpop.permute.xlu0 %4038
    %4040 = vset.pattern.permute.xlu0 0
    %4041 = vperm.xlu0 %4040, %v3960
    %v4042 = vpop.permute.xlu0 %4041
    %4043 = vset.pattern.permute.xlu0 0
    %4044 = vperm.xlu0 %4043, %v3961
    %v4045 = vpop.permute.xlu0 %4044
    %4046 = vset.pattern.permute.xlu0 0
    %4047 = vperm.xlu0 %4046, %v3962
    %v4048 = vpop.permute.xlu0 %4047
    %4049 = vset.pattern.permute.xlu0 0
    %4050 = vperm.xlu0 %4049, %v3963
    %v4051 = vpop.permute.xlu0 %4050
    %4052 = vset.pattern.permute.xlu0 0
    %4053 = vperm.xlu0 %4052, %v3964
    %v4054 = vpop.permute.xlu0 %4053
    %4055 = vset.pattern.permute.xlu0 0
    %4056 = vperm.xlu0 %4055, %v3965
    %v4057 = vpop.permute.xlu0 %4056
    %4058 = vset.pattern.permute.xlu0 0
    %4059 = vperm.xlu0 %4058, %v3966
    %v4060 = vpop.permute.xlu0 %4059
    %4061 = vset.pattern.permute.xlu0 0
    %4062 = vperm.xlu0 %4061, %v3967
    %v4063 = vpop.permute.xlu0 %4062
    %4064 = vset.pattern.permute.xlu0 0
    %4065 = vperm.xlu0 %4064, %v3968
    %v4066 = vpop.permute.xlu0 %4065
    %4067 = vset.pattern.permute.xlu0 0
    %4068 = vperm.xlu0 %4067, %v3969
    %v4069 = vpop.permute.xlu0 %4068
    %4070 = vset.pattern.permute.xlu0 0
    %4071 = vperm.xlu0 %4070, %v3970
    %v4072 = vpop.permute.xlu0 %4071
    %4073 = vset.pattern.permute.xlu0 0
    %4074 = vperm.xlu0 %4073, %v3971
    %v4075 = vpop.permute.xlu0 %4074
    %4076 = vset.pattern.permute.xlu0 0
    %4077 = vperm.xlu0 %4076, %v3972
    %v4078 = vpop.permute.xlu0 %4077
    %4079 = vset.pattern.permute.xlu0 0
    %4080 = vperm.xlu0 %4079, %v3973
    %v4081 = vpop.permute.xlu0 %4080
    %4082 = vset.pattern.permute.xlu0 0
    %4083 = vperm.xlu0 %4082, %v3974
    %v4084 = vpop.permute.xlu0 %4083
    %4085 = vset.pattern.permute.xlu0 0
    %4086 = vperm.xlu0 %4085, %v3975
    %v4087 = vpop.permute.xlu0 %4086
    %4088 = vset.pattern.permute.xlu0 0
    %4089 = vperm.xlu0 %4088, %v3976
    %v4090 = vpop.permute.xlu0 %4089
    %4091 = vset.pattern.permute.xlu0 0
    %4092 = vperm.xlu0 %4091, %v3977
    %v4093 = vpop.permute.xlu0 %4092
    %4094 = vset.pattern.permute.xlu0 0
    %4095 = vperm.xlu0 %4094, %v3978
    %v4096 = vpop.permute.xlu0 %4095
    %4097 = vset.pattern.permute.xlu0 0
    %4098 = vperm.xlu0 %4097, %v3979
    %v4099 = vpop.permute.xlu0 %4098
    %4100 = vset.pattern.permute.xlu0 0
    %4101 = vperm.xlu0 %4100, %v3980
    %v4102 = vpop.permute.xlu0 %4101
    %4103 = vset.pattern.permute.xlu0 0
    %4104 = vperm.xlu0 %4103, %v3981
    %v4105 = vpop.permute.xlu0 %4104
    %4106 = vset.pattern.permute.xlu0 0
    %4107 = vperm.xlu0 %4106, %v3982
    %v4108 = vpop.permute.xlu0 %4107
    %4109 = vset.pattern.permute.xlu0 0
    %4110 = vperm.xlu0 %4109, %v3983
    %v4111 = vpop.permute.xlu0 %4110
    %v4112 = vperm.slane %v4018, %v1636
    %v4113 = vperm.slane %v4021, %v1636
    %v4114 = vperm.slane %v4024, %v1636
    %v4115 = vperm.slane %v4027, %v1636
    %v4116 = vperm.slane %v4030, %v1636
    %v4117 = vperm.slane %v4033, %v1636
    %v4118 = vperm.slane %v4036, %v1636
    %v4119 = vperm.slane %v4039, %v1636
    %v4120 = vperm.slane %v4042, %v1636
    %v4121 = vperm.slane %v4045, %v1636
    %v4122 = vperm.slane %v4048, %v1636
    %v4123 = vperm.slane %v4051, %v1636
    %v4124 = vperm.slane %v4054, %v1636
    %v4125 = vperm.slane %v4057, %v1636
    %v4126 = vperm.slane %v4060, %v1636
    %v4127 = vperm.slane %v4063, %v1636
    %v4128 = vperm.slane %v4066, %v1636
    %v4129 = vperm.slane %v4069, %v1636
    %v4130 = vperm.slane %v4072, %v1636
    %v4131 = vperm.slane %v4075, %v1636
    %v4132 = vperm.slane %v4078, %v1636
    %v4133 = vperm.slane %v4081, %v1636
    %v4134 = vperm.slane %v4084, %v1636
    %v4135 = vperm.slane %v4087, %v1636
    %v4136 = vperm.slane %v4090, %v1636
    %v4137 = vperm.slane %v4093, %v1636
    %v4138 = vperm.slane %v4096, %v1636
    %v4139 = vperm.slane %v4099, %v1636
    %v4140 = vperm.slane %v4102, %v1636
    %v4141 = vperm.slane %v4105, %v1636
    %v4142 = vperm.slane %v4108, %v1636
    %v4143 = vperm.slane %v4111, %v1636
    %v4144 = vsel %vm1735, %v4113, %v4112
    %v4145 = vsel %vm1737, %v4114, %v4144
    %v4146 = vsel %vm1739, %v4115, %v4145
    %v4147 = vsel %vm1741, %v4116, %v4146
    %v4148 = vsel %vm1743, %v4117, %v4147
    %v4149 = vsel %vm1745, %v4118, %v4148
    %v4150 = vsel %vm1747, %v4119, %v4149
    %v4151 = vsel %vm1735, %v4121, %v4120
    %v4152 = vsel %vm1737, %v4122, %v4151
    %v4153 = vsel %vm1739, %v4123, %v4152
    %v4154 = vsel %vm1741, %v4124, %v4153
    %v4155 = vsel %vm1743, %v4125, %v4154
    %v4156 = vsel %vm1745, %v4126, %v4155
    %v4157 = vsel %vm1747, %v4127, %v4156
    %v4158 = vsel %vm1735, %v4129, %v4128
    %v4159 = vsel %vm1737, %v4130, %v4158
    %v4160 = vsel %vm1739, %v4131, %v4159
    %v4161 = vsel %vm1741, %v4132, %v4160
    %v4162 = vsel %vm1743, %v4133, %v4161
    %v4163 = vsel %vm1745, %v4134, %v4162
    %v4164 = vsel %vm1747, %v4135, %v4163
    %v4165 = vsel %vm1735, %v4137, %v4136
    %v4166 = vsel %vm1737, %v4138, %v4165
    %v4167 = vsel %vm1739, %v4139, %v4166
    %v4168 = vsel %vm1741, %v4140, %v4167
    %v4169 = vsel %vm1743, %v4141, %v4168
    %v4170 = vsel %vm1745, %v4142, %v4169
    %v4171 = vsel %vm1747, %v4143, %v4170
    %v4176 = vsel %vm674, %v4150, -inf
    %4177 = vmax.xlane.f32.xlu0 %v4176
    %v4178 = vpop.xlane.xlu0 %4177
    %v4179 = vsel %vm674, %v4157, -inf
    %4180 = vmax.xlane.f32.xlu0 %v4179
    %v4181 = vpop.xlane.xlu0 %4180
    %v4182 = vsel %vm674, %v4164, -inf
    %4183 = vmax.xlane.f32.xlu0 %v4182
    %v4184 = vpop.xlane.xlu0 %4183
    %v4185 = vsel %vm674, %v4171, -inf
    %4186 = vmax.xlane.f32.xlu0 %v4185
    %v4187 = vpop.xlane.xlu0 %4186
    %v4192 = vperm.slane %v4178, 0
    %v4193 = vperm.slane %v4178, 1
    %v4194 = vperm.slane %v4178, 2
    %v4195 = vperm.slane %v4178, 3
    %v4196 = vperm.slane %v4178, 4
    %v4197 = vperm.slane %v4178, 5
    %v4198 = vperm.slane %v4178, 6
    %v4199 = vperm.slane %v4178, 7
    %v4200 = vperm.slane %v4181, 0
    %v4201 = vperm.slane %v4181, 1
    %v4202 = vperm.slane %v4181, 2
    %v4203 = vperm.slane %v4181, 3
    %v4204 = vperm.slane %v4181, 4
    %v4205 = vperm.slane %v4181, 5
    %v4206 = vperm.slane %v4181, 6
    %v4207 = vperm.slane %v4181, 7
    %v4208 = vperm.slane %v4184, 0
    %v4209 = vperm.slane %v4184, 1
    %v4210 = vperm.slane %v4184, 2
    %v4211 = vperm.slane %v4184, 3
    %v4212 = vperm.slane %v4184, 4
    %v4213 = vperm.slane %v4184, 5
    %v4214 = vperm.slane %v4184, 6
    %v4215 = vperm.slane %v4184, 7
    %v4216 = vperm.slane %v4187, 0
    %v4217 = vperm.slane %v4187, 1
    %v4218 = vperm.slane %v4187, 2
    %v4219 = vperm.slane %v4187, 3
    %v4220 = vperm.slane %v4187, 4
    %v4221 = vperm.slane %v4187, 5
    %v4222 = vperm.slane %v4187, 6
    %v4223 = vperm.slane %v4187, 7
    %v4256 = vsub.f32 %v3952, %v4192
    %v4257 = vsub.f32 %v3953, %v4193
    %v4258 = vsub.f32 %v3954, %v4194
    %v4259 = vsub.f32 %v3955, %v4195
    %v4260 = vsub.f32 %v3956, %v4196
    %v4261 = vsub.f32 %v3957, %v4197
    %v4262 = vsub.f32 %v3958, %v4198
    %v4263 = vsub.f32 %v3959, %v4199
    %v4264 = vsub.f32 %v3960, %v4200
    %v4265 = vsub.f32 %v3961, %v4201
    %v4266 = vsub.f32 %v3962, %v4202
    %v4267 = vsub.f32 %v3963, %v4203
    %v4268 = vsub.f32 %v3964, %v4204
    %v4269 = vsub.f32 %v3965, %v4205
    %v4270 = vsub.f32 %v3966, %v4206
    %v4271 = vsub.f32 %v3967, %v4207
    %v4272 = vsub.f32 %v3968, %v4208
    %v4273 = vsub.f32 %v3969, %v4209
    %v4274 = vsub.f32 %v3970, %v4210
    %v4275 = vsub.f32 %v3971, %v4211
    %v4276 = vsub.f32 %v3972, %v4212
    %v4277 = vsub.f32 %v3973, %v4213
    %v4278 = vsub.f32 %v3974, %v4214
    %v4279 = vsub.f32 %v3975, %v4215
    %v4280 = vsub.f32 %v3976, %v4216
    %v4281 = vsub.f32 %v3977, %v4217
    %v4282 = vsub.f32 %v3978, %v4218
    %v4283 = vsub.f32 %v3979, %v4219
    %v4284 = vsub.f32 %v3980, %v4220
    %v4285 = vsub.f32 %v3981, %v4221
    %v4286 = vsub.f32 %v3982, %v4222
    %v4287 = vsub.f32 %v3983, %v4223
    %v4288 = vmul.f32 %v4256, 1.442695
    %v4289 = vpow.pop %v4288
    %v4290 = vmul.f32 %v4257, 1.442695
    %v4291 = vpow.pop %v4290
    %v4292 = vmul.f32 %v4258, 1.442695
    %v4293 = vpow.pop %v4292
    %v4294 = vmul.f32 %v4259, 1.442695
    %v4295 = vpow.pop %v4294
    %v4296 = vmul.f32 %v4260, 1.442695
    %v4297 = vpow.pop %v4296
    %v4298 = vmul.f32 %v4261, 1.442695
    %v4299 = vpow.pop %v4298
    %v4300 = vmul.f32 %v4262, 1.442695
    %v4301 = vpow.pop %v4300
    %v4302 = vmul.f32 %v4263, 1.442695
    %v4303 = vpow.pop %v4302
    %v4304 = vmul.f32 %v4264, 1.442695
    %v4305 = vpow.pop %v4304
    %v4306 = vmul.f32 %v4265, 1.442695
    %v4307 = vpow.pop %v4306
    %v4308 = vmul.f32 %v4266, 1.442695
    %v4309 = vpow.pop %v4308
    %v4310 = vmul.f32 %v4267, 1.442695
    %v4311 = vpow.pop %v4310
    %v4312 = vmul.f32 %v4268, 1.442695
    %v4313 = vpow.pop %v4312
    %v4314 = vmul.f32 %v4269, 1.442695
    %v4315 = vpow.pop %v4314
    %v4316 = vmul.f32 %v4270, 1.442695
    %v4317 = vpow.pop %v4316
    %v4318 = vmul.f32 %v4271, 1.442695
    %v4319 = vpow.pop %v4318
    %v4320 = vmul.f32 %v4272, 1.442695
    %v4321 = vpow.pop %v4320
    %v4322 = vmul.f32 %v4273, 1.442695
    %v4323 = vpow.pop %v4322
    %v4324 = vmul.f32 %v4274, 1.442695
    %v4325 = vpow.pop %v4324
    %v4326 = vmul.f32 %v4275, 1.442695
    %v4327 = vpow.pop %v4326
    %v4328 = vmul.f32 %v4276, 1.442695
    %v4329 = vpow.pop %v4328
    %v4330 = vmul.f32 %v4277, 1.442695
    %v4331 = vpow.pop %v4330
    %v4332 = vmul.f32 %v4278, 1.442695
    %v4333 = vpow.pop %v4332
    %v4334 = vmul.f32 %v4279, 1.442695
    %v4335 = vpow.pop %v4334
    %v4336 = vmul.f32 %v4280, 1.442695
    %v4337 = vpow.pop %v4336
    %v4338 = vmul.f32 %v4281, 1.442695
    %v4339 = vpow.pop %v4338
    %v4340 = vmul.f32 %v4282, 1.442695
    %v4341 = vpow.pop %v4340
    %v4342 = vmul.f32 %v4283, 1.442695
    %v4343 = vpow.pop %v4342
    %v4344 = vmul.f32 %v4284, 1.442695
    %v4345 = vpow.pop %v4344
    %v4346 = vmul.f32 %v4285, 1.442695
    %v4347 = vpow.pop %v4346
    %v4348 = vmul.f32 %v4286, 1.442695
    %v4349 = vpow.pop %v4348
    %v4350 = vmul.f32 %v4287, 1.442695
    %v4351 = vpow.pop %v4350
    %4384 = vset.pattern.permute.xlu0 0
    %4385 = vperm.xlu0 %4384, %v4289
    %v4386 = vpop.permute.xlu0 %4385
    %4387 = vset.pattern.permute.xlu0 0
    %4388 = vperm.xlu0 %4387, %v4291
    %v4389 = vpop.permute.xlu0 %4388
    %4390 = vset.pattern.permute.xlu0 0
    %4391 = vperm.xlu0 %4390, %v4293
    %v4392 = vpop.permute.xlu0 %4391
    %4393 = vset.pattern.permute.xlu0 0
    %4394 = vperm.xlu0 %4393, %v4295
    %v4395 = vpop.permute.xlu0 %4394
    %4396 = vset.pattern.permute.xlu0 0
    %4397 = vperm.xlu0 %4396, %v4297
    %v4398 = vpop.permute.xlu0 %4397
    %4399 = vset.pattern.permute.xlu0 0
    %4400 = vperm.xlu0 %4399, %v4299
    %v4401 = vpop.permute.xlu0 %4400
    %4402 = vset.pattern.permute.xlu0 0
    %4403 = vperm.xlu0 %4402, %v4301
    %v4404 = vpop.permute.xlu0 %4403
    %4405 = vset.pattern.permute.xlu0 0
    %4406 = vperm.xlu0 %4405, %v4303
    %v4407 = vpop.permute.xlu0 %4406
    %4408 = vset.pattern.permute.xlu0 0
    %4409 = vperm.xlu0 %4408, %v4305
    %v4410 = vpop.permute.xlu0 %4409
    %4411 = vset.pattern.permute.xlu0 0
    %4412 = vperm.xlu0 %4411, %v4307
    %v4413 = vpop.permute.xlu0 %4412
    %4414 = vset.pattern.permute.xlu0 0
    %4415 = vperm.xlu0 %4414, %v4309
    %v4416 = vpop.permute.xlu0 %4415
    %4417 = vset.pattern.permute.xlu0 0
    %4418 = vperm.xlu0 %4417, %v4311
    %v4419 = vpop.permute.xlu0 %4418
    %4420 = vset.pattern.permute.xlu0 0
    %4421 = vperm.xlu0 %4420, %v4313
    %v4422 = vpop.permute.xlu0 %4421
    %4423 = vset.pattern.permute.xlu0 0
    %4424 = vperm.xlu0 %4423, %v4315
    %v4425 = vpop.permute.xlu0 %4424
    %4426 = vset.pattern.permute.xlu0 0
    %4427 = vperm.xlu0 %4426, %v4317
    %v4428 = vpop.permute.xlu0 %4427
    %4429 = vset.pattern.permute.xlu0 0
    %4430 = vperm.xlu0 %4429, %v4319
    %v4431 = vpop.permute.xlu0 %4430
    %4432 = vset.pattern.permute.xlu0 0
    %4433 = vperm.xlu0 %4432, %v4321
    %v4434 = vpop.permute.xlu0 %4433
    %4435 = vset.pattern.permute.xlu0 0
    %4436 = vperm.xlu0 %4435, %v4323
    %v4437 = vpop.permute.xlu0 %4436
    %4438 = vset.pattern.permute.xlu0 0
    %4439 = vperm.xlu0 %4438, %v4325
    %v4440 = vpop.permute.xlu0 %4439
    %4441 = vset.pattern.permute.xlu0 0
    %4442 = vperm.xlu0 %4441, %v4327
    %v4443 = vpop.permute.xlu0 %4442
    %4444 = vset.pattern.permute.xlu0 0
    %4445 = vperm.xlu0 %4444, %v4329
    %v4446 = vpop.permute.xlu0 %4445
    %4447 = vset.pattern.permute.xlu0 0
    %4448 = vperm.xlu0 %4447, %v4331
    %v4449 = vpop.permute.xlu0 %4448
    %4450 = vset.pattern.permute.xlu0 0
    %4451 = vperm.xlu0 %4450, %v4333
    %v4452 = vpop.permute.xlu0 %4451
    %4453 = vset.pattern.permute.xlu0 0
    %4454 = vperm.xlu0 %4453, %v4335
    %v4455 = vpop.permute.xlu0 %4454
    %4456 = vset.pattern.permute.xlu0 0
    %4457 = vperm.xlu0 %4456, %v4337
    %v4458 = vpop.permute.xlu0 %4457
    %4459 = vset.pattern.permute.xlu0 0
    %4460 = vperm.xlu0 %4459, %v4339
    %v4461 = vpop.permute.xlu0 %4460
    %4462 = vset.pattern.permute.xlu0 0
    %4463 = vperm.xlu0 %4462, %v4341
    %v4464 = vpop.permute.xlu0 %4463
    %4465 = vset.pattern.permute.xlu0 0
    %4466 = vperm.xlu0 %4465, %v4343
    %v4467 = vpop.permute.xlu0 %4466
    %4468 = vset.pattern.permute.xlu0 0
    %4469 = vperm.xlu0 %4468, %v4345
    %v4470 = vpop.permute.xlu0 %4469
    %4471 = vset.pattern.permute.xlu0 0
    %4472 = vperm.xlu0 %4471, %v4347
    %v4473 = vpop.permute.xlu0 %4472
    %4474 = vset.pattern.permute.xlu0 0
    %4475 = vperm.xlu0 %4474, %v4349
    %v4476 = vpop.permute.xlu0 %4475
    %4477 = vset.pattern.permute.xlu0 0
    %4478 = vperm.xlu0 %4477, %v4351
    %v4479 = vpop.permute.xlu0 %4478
    %v4480 = vperm.slane %v4386, %v1636
    %v4481 = vperm.slane %v4389, %v1636
    %v4482 = vperm.slane %v4392, %v1636
    %v4483 = vperm.slane %v4395, %v1636
    %v4484 = vperm.slane %v4398, %v1636
    %v4485 = vperm.slane %v4401, %v1636
    %v4486 = vperm.slane %v4404, %v1636
    %v4487 = vperm.slane %v4407, %v1636
    %v4488 = vperm.slane %v4410, %v1636
    %v4489 = vperm.slane %v4413, %v1636
    %v4490 = vperm.slane %v4416, %v1636
    %v4491 = vperm.slane %v4419, %v1636
    %v4492 = vperm.slane %v4422, %v1636
    %v4493 = vperm.slane %v4425, %v1636
    %v4494 = vperm.slane %v4428, %v1636
    %v4495 = vperm.slane %v4431, %v1636
    %v4496 = vperm.slane %v4434, %v1636
    %v4497 = vperm.slane %v4437, %v1636
    %v4498 = vperm.slane %v4440, %v1636
    %v4499 = vperm.slane %v4443, %v1636
    %v4500 = vperm.slane %v4446, %v1636
    %v4501 = vperm.slane %v4449, %v1636
    %v4502 = vperm.slane %v4452, %v1636
    %v4503 = vperm.slane %v4455, %v1636
    %v4504 = vperm.slane %v4458, %v1636
    %v4505 = vperm.slane %v4461, %v1636
    %v4506 = vperm.slane %v4464, %v1636
    %v4507 = vperm.slane %v4467, %v1636
    %v4508 = vperm.slane %v4470, %v1636
    %v4509 = vperm.slane %v4473, %v1636
    %v4510 = vperm.slane %v4476, %v1636
    %v4511 = vperm.slane %v4479, %v1636
    %v4512 = vsel %vm1735, %v4481, %v4480
    %v4513 = vsel %vm1737, %v4482, %v4512
    %v4514 = vsel %vm1739, %v4483, %v4513
    %v4515 = vsel %vm1741, %v4484, %v4514
    %v4516 = vsel %vm1743, %v4485, %v4515
    %v4517 = vsel %vm1745, %v4486, %v4516
    %v4518 = vsel %vm1747, %v4487, %v4517
    %v4519 = vsel %vm1735, %v4489, %v4488
    %v4520 = vsel %vm1737, %v4490, %v4519
    %v4521 = vsel %vm1739, %v4491, %v4520
    %v4522 = vsel %vm1741, %v4492, %v4521
    %v4523 = vsel %vm1743, %v4493, %v4522
    %v4524 = vsel %vm1745, %v4494, %v4523
    %v4525 = vsel %vm1747, %v4495, %v4524
    %v4526 = vsel %vm1735, %v4497, %v4496
    %v4527 = vsel %vm1737, %v4498, %v4526
    %v4528 = vsel %vm1739, %v4499, %v4527
    %v4529 = vsel %vm1741, %v4500, %v4528
    %v4530 = vsel %vm1743, %v4501, %v4529
    %v4531 = vsel %vm1745, %v4502, %v4530
    %v4532 = vsel %vm1747, %v4503, %v4531
    %v4533 = vsel %vm1735, %v4505, %v4504
    %v4534 = vsel %vm1737, %v4506, %v4533
    %v4535 = vsel %vm1739, %v4507, %v4534
    %v4536 = vsel %vm1741, %v4508, %v4535
    %v4537 = vsel %vm1743, %v4509, %v4536
    %v4538 = vsel %vm1745, %v4510, %v4537
    %v4539 = vsel %vm1747, %v4511, %v4538
    %v4544 = vsel %vm674, %v4518, 0.0
    %4545 = vadd.xlane.f32.xlu0 %v4544
    %v4546 = vpop.xlane.xlu0 %4545
    %v4547 = vsel %vm674, %v4525, 0.0
    %4548 = vadd.xlane.f32.xlu0 %v4547
    %v4549 = vpop.xlane.xlu0 %4548
    %v4550 = vsel %vm674, %v4532, 0.0
    %4551 = vadd.xlane.f32.xlu0 %v4550
    %v4552 = vpop.xlane.xlu0 %4551
    %v4553 = vsel %vm674, %v4539, 0.0
    %4554 = vadd.xlane.f32.xlu0 %v4553
    %v4555 = vpop.xlane.xlu0 %4554
    %v4556 = vrcp.pop %v4546
    %v4557 = vrcp.pop %v4549
    %v4558 = vrcp.pop %v4552
    %v4559 = vrcp.pop %v4555
    %v4564 = vperm.slane %v4556, 0
    %v4565 = vperm.slane %v4556, 1
    %v4566 = vperm.slane %v4556, 2
    %v4567 = vperm.slane %v4556, 3
    %v4568 = vperm.slane %v4556, 4
    %v4569 = vperm.slane %v4556, 5
    %v4570 = vperm.slane %v4556, 6
    %v4571 = vperm.slane %v4556, 7
    %v4572 = vperm.slane %v4557, 0
    %v4573 = vperm.slane %v4557, 1
    %v4574 = vperm.slane %v4557, 2
    %v4575 = vperm.slane %v4557, 3
    %v4576 = vperm.slane %v4557, 4
    %v4577 = vperm.slane %v4557, 5
    %v4578 = vperm.slane %v4557, 6
    %v4579 = vperm.slane %v4557, 7
    %v4580 = vperm.slane %v4558, 0
    %v4581 = vperm.slane %v4558, 1
    %v4582 = vperm.slane %v4558, 2
    %v4583 = vperm.slane %v4558, 3
    %v4584 = vperm.slane %v4558, 4
    %v4585 = vperm.slane %v4558, 5
    %v4586 = vperm.slane %v4558, 6
    %v4587 = vperm.slane %v4558, 7
    %v4588 = vperm.slane %v4559, 0
    %v4589 = vperm.slane %v4559, 1
    %v4590 = vperm.slane %v4559, 2
    %v4591 = vperm.slane %v4559, 3
    %v4592 = vperm.slane %v4559, 4
    %v4593 = vperm.slane %v4559, 5
    %v4594 = vperm.slane %v4559, 6
    %v4595 = vperm.slane %v4559, 7
    %v4628 = vmul.f32 %v4289, %v4564
    %v4629 = vmul.f32 %v4291, %v4565
    %v4630 = vmul.f32 %v4293, %v4566
    %v4631 = vmul.f32 %v4295, %v4567
    %v4632 = vmul.f32 %v4297, %v4568
    %v4633 = vmul.f32 %v4299, %v4569
    %v4634 = vmul.f32 %v4301, %v4570
    %v4635 = vmul.f32 %v4303, %v4571
    %v4636 = vmul.f32 %v4305, %v4572
    %v4637 = vmul.f32 %v4307, %v4573
    %v4638 = vmul.f32 %v4309, %v4574
    %v4639 = vmul.f32 %v4311, %v4575
    %v4640 = vmul.f32 %v4313, %v4576
    %v4641 = vmul.f32 %v4315, %v4577
    %v4642 = vmul.f32 %v4317, %v4578
    %v4643 = vmul.f32 %v4319, %v4579
    %v4644 = vmul.f32 %v4321, %v4580
    %v4645 = vmul.f32 %v4323, %v4581
    %v4646 = vmul.f32 %v4325, %v4582
    %v4647 = vmul.f32 %v4327, %v4583
    %v4648 = vmul.f32 %v4329, %v4584
    %v4649 = vmul.f32 %v4331, %v4585
    %v4650 = vmul.f32 %v4333, %v4586
    %v4651 = vmul.f32 %v4335, %v4587
    %v4652 = vmul.f32 %v4337, %v4588
    %v4653 = vmul.f32 %v4339, %v4589
    %v4654 = vmul.f32 %v4341, %v4590
    %v4655 = vmul.f32 %v4343, %v4591
    %v4656 = vmul.f32 %v4345, %v4592
    %v4657 = vmul.f32 %v4347, %v4593
    %v4658 = vmul.f32 %v4349, %v4594
    %v4659 = vmul.f32 %v4351, %v4595
    %4660 = vxpose.xlu0.b32.start [1/16] %v474, 128
    %4661 = vxpose.xlu0.b32.cont [2/16] 0.0, 128
    %4662 = vxpose.xlu0.b32.cont [3/16] 0.0, 128
    %4663 = vxpose.xlu0.b32.cont [4/16] 0.0, 128
    %4664 = vxpose.xlu0.b32.cont [5/16] 0.0, 128
    %4665 = vxpose.xlu0.b32.cont [6/16] 0.0, 128
    %4666 = vxpose.xlu0.b32.cont [7/16] 0.0, 128
    %4667 = vxpose.xlu0.b32.cont [8/16] 0.0, 128
    %4668 = vxpose.xlu0.b32.cont [9/16] 0.0, 128
    %4669 = vxpose.xlu0.b32.cont [10/16] 0.0, 128
    %4670 = vxpose.xlu0.b32.cont [11/16] 0.0, 128
    %4671 = vxpose.xlu0.b32.cont [12/16] 0.0, 128
    %4672 = vxpose.xlu0.b32.cont [13/16] 0.0, 128
    %4673 = vxpose.xlu0.b32.cont [14/16] 0.0, 128
    %4674 = vxpose.xlu0.b32.cont [15/16] 0.0, 128
    %4675 = vxpose.xlu0.b32.end [16/16] 0.0, 128
    %v4676 = vpop.trf.xlu0
    %v4677 = vpop.trf.xlu0
    %v4678 = vpop.trf.xlu0
    %v4679 = vpop.trf.xlu0
    %v4680 = vpop.trf.xlu0
    %v4681 = vpop.trf.xlu0
    %v4682 = vpop.trf.xlu0
    %v4683 = vpop.trf.xlu0
    %v4684 = vpop.trf.xlu0
    %v4685 = vpop.trf.xlu0
    %v4686 = vpop.trf.xlu0
    %v4687 = vpop.trf.xlu0
    %v4688 = vpop.trf.xlu0
    %v4689 = vpop.trf.xlu0
    %v4690 = vpop.trf.xlu0
    %v4691 = vpop.trf.xlu0
    %4692 = vxpose.xlu0.b32.start [1/16] %v535, 128
    %4693 = vxpose.xlu0.b32.cont [2/16] 0.0, 128
    %4694 = vxpose.xlu0.b32.cont [3/16] 0.0, 128
    %4695 = vxpose.xlu0.b32.cont [4/16] 0.0, 128
    %4696 = vxpose.xlu0.b32.cont [5/16] 0.0, 128
    %4697 = vxpose.xlu0.b32.cont [6/16] 0.0, 128
    %4698 = vxpose.xlu0.b32.cont [7/16] 0.0, 128
    %4699 = vxpose.xlu0.b32.cont [8/16] 0.0, 128
    %4700 = vxpose.xlu0.b32.cont [9/16] 0.0, 128
    %4701 = vxpose.xlu0.b32.cont [10/16] 0.0, 128
    %4702 = vxpose.xlu0.b32.cont [11/16] 0.0, 128
    %4703 = vxpose.xlu0.b32.cont [12/16] 0.0, 128
    %4704 = vxpose.xlu0.b32.cont [13/16] 0.0, 128
    %4705 = vxpose.xlu0.b32.cont [14/16] 0.0, 128
    %4706 = vxpose.xlu0.b32.cont [15/16] 0.0, 128
    %4707 = vxpose.xlu0.b32.end [16/16] 0.0, 128
    %v4708 = vpop.trf.xlu0
    %v4709 = vpop.trf.xlu0
    %v4710 = vpop.trf.xlu0
    %v4711 = vpop.trf.xlu0
    %v4712 = vpop.trf.xlu0
    %v4713 = vpop.trf.xlu0
    %v4714 = vpop.trf.xlu0
    %v4715 = vpop.trf.xlu0
    %v4716 = vpop.trf.xlu0
    %v4717 = vpop.trf.xlu0
    %v4718 = vpop.trf.xlu0
    %v4719 = vpop.trf.xlu0
    %v4720 = vpop.trf.xlu0
    %v4721 = vpop.trf.xlu0
    %v4722 = vpop.trf.xlu0
    %v4723 = vpop.trf.xlu0
    %4724 = vxpose.xlu0.b32.start [1/16] %v538, 128
    %4725 = vxpose.xlu0.b32.cont [2/16] 0.0, 128
    %4726 = vxpose.xlu0.b32.cont [3/16] 0.0, 128
    %4727 = vxpose.xlu0.b32.cont [4/16] 0.0, 128
    %4728 = vxpose.xlu0.b32.cont [5/16] 0.0, 128
    %4729 = vxpose.xlu0.b32.cont [6/16] 0.0, 128
    %4730 = vxpose.xlu0.b32.cont [7/16] 0.0, 128
    %4731 = vxpose.xlu0.b32.cont [8/16] 0.0, 128
    %4732 = vxpose.xlu0.b32.cont [9/16] 0.0, 128
    %4733 = vxpose.xlu0.b32.cont [10/16] 0.0, 128
    %4734 = vxpose.xlu0.b32.cont [11/16] 0.0, 128
    %4735 = vxpose.xlu0.b32.cont [12/16] 0.0, 128
    %4736 = vxpose.xlu0.b32.cont [13/16] 0.0, 128
    %4737 = vxpose.xlu0.b32.cont [14/16] 0.0, 128
    %4738 = vxpose.xlu0.b32.cont [15/16] 0.0, 128
    %4739 = vxpose.xlu0.b32.end [16/16] 0.0, 128
    %v4740 = vpop.trf.xlu0
    %v4741 = vpop.trf.xlu0
    %v4742 = vpop.trf.xlu0
    %v4743 = vpop.trf.xlu0
    %v4744 = vpop.trf.xlu0
    %v4745 = vpop.trf.xlu0
    %v4746 = vpop.trf.xlu0
    %v4747 = vpop.trf.xlu0
    %v4748 = vpop.trf.xlu0
    %v4749 = vpop.trf.xlu0
    %v4750 = vpop.trf.xlu0
    %v4751 = vpop.trf.xlu0
    %v4752 = vpop.trf.xlu0
    %v4753 = vpop.trf.xlu0
    %v4754 = vpop.trf.xlu0
    %v4755 = vpop.trf.xlu0
    %4756 = vxpose.xlu0.b32.start [1/16] %v541, 128
    %4757 = vxpose.xlu0.b32.cont [2/16] 0.0, 128
    %4758 = vxpose.xlu0.b32.cont [3/16] 0.0, 128
    %4759 = vxpose.xlu0.b32.cont [4/16] 0.0, 128
    %4760 = vxpose.xlu0.b32.cont [5/16] 0.0, 128
    %4761 = vxpose.xlu0.b32.cont [6/16] 0.0, 128
    %4762 = vxpose.xlu0.b32.cont [7/16] 0.0, 128
    %4763 = vxpose.xlu0.b32.cont [8/16] 0.0, 128
    %4764 = vxpose.xlu0.b32.cont [9/16] 0.0, 128
    %4765 = vxpose.xlu0.b32.cont [10/16] 0.0, 128
    %4766 = vxpose.xlu0.b32.cont [11/16] 0.0, 128
    %4767 = vxpose.xlu0.b32.cont [12/16] 0.0, 128
    %4768 = vxpose.xlu0.b32.cont [13/16] 0.0, 128
    %4769 = vxpose.xlu0.b32.cont [14/16] 0.0, 128
    %4770 = vxpose.xlu0.b32.cont [15/16] 0.0, 128
    %4771 = vxpose.xlu0.b32.end [16/16] 0.0, 128
    %v4772 = vpop.trf.xlu0
    %v4773 = vpop.trf.xlu0
    %v4774 = vpop.trf.xlu0
    %v4775 = vpop.trf.xlu0
    %v4776 = vpop.trf.xlu0
    %v4777 = vpop.trf.xlu0
    %v4778 = vpop.trf.xlu0
    %v4779 = vpop.trf.xlu0
    %v4780 = vpop.trf.xlu0
    %v4781 = vpop.trf.xlu0
    %v4782 = vpop.trf.xlu0
    %v4783 = vpop.trf.xlu0
    %v4784 = vpop.trf.xlu0
    %v4785 = vpop.trf.xlu0
    %v4786 = vpop.trf.xlu0
    %v4787 = vpop.trf.xlu0
    %4796 = vset.pattern.permute.xlu0 0
    %4797 = vperm.xlu0 %4796, %v4628
    %v4798 = vpop.permute.xlu0 %4797
    %4799 = vset.pattern.permute.xlu0 0
    %4800 = vperm.xlu0 %4799, %v4629
    %v4801 = vpop.permute.xlu0 %4800
    %4802 = vset.pattern.permute.xlu0 0
    %4803 = vperm.xlu0 %4802, %v4630
    %v4804 = vpop.permute.xlu0 %4803
    %4805 = vset.pattern.permute.xlu0 0
    %4806 = vperm.xlu0 %4805, %v4631
    %v4807 = vpop.permute.xlu0 %4806
    %4808 = vset.pattern.permute.xlu0 0
    %4809 = vperm.xlu0 %4808, %v4632
    %v4810 = vpop.permute.xlu0 %4809
    %4811 = vset.pattern.permute.xlu0 0
    %4812 = vperm.xlu0 %4811, %v4633
    %v4813 = vpop.permute.xlu0 %4812
    %4814 = vset.pattern.permute.xlu0 0
    %4815 = vperm.xlu0 %4814, %v4634
    %v4816 = vpop.permute.xlu0 %4815
    %4817 = vset.pattern.permute.xlu0 0
    %4818 = vperm.xlu0 %4817, %v4635
    %v4819 = vpop.permute.xlu0 %4818
    %v4820 = vperm.slane %v4798, %v1636
    %v4821 = vperm.slane %v4801, %v1636
    %v4822 = vperm.slane %v4804, %v1636
    %v4823 = vperm.slane %v4807, %v1636
    %v4824 = vperm.slane %v4810, %v1636
    %v4825 = vperm.slane %v4813, %v1636
    %v4826 = vperm.slane %v4816, %v1636
    %v4827 = vperm.slane %v4819, %v1636
    %v4828 = vsel %vm1735, %v4821, %v4820
    %v4829 = vsel %vm1737, %v4822, %v4828
    %v4830 = vsel %vm1739, %v4823, %v4829
    %v4831 = vsel %vm1741, %v4824, %v4830
    %v4832 = vsel %vm1743, %v4825, %v4831
    %v4833 = vsel %vm1745, %v4826, %v4832
    %v4834 = vsel %vm1747, %v4827, %v4833
    %v4836 = vsel %vm674, %v4676, 0
    %v4838 = vsel %vm674, %v4834, 0
    %4840 = vmatpush.xpose.msra.mxu0 0.0
    %4841 = vmatpush.xpose.msra.mxu0 0.0
    %4842 = vmatpush.xpose.msra.mxu0 0.0
    %4843 = vmatpush.xpose.msra.mxu0 0.0
    %4844 = vmatpush.xpose.msra.mxu0 0.0
    %4845 = vmatpush.xpose.msra.mxu0 0.0
    %4846 = vmatpush.xpose.msra.mxu0 0.0
    %4847 = vmatpush.xpose.msra.mxu0 0.0
    %4848 = vmatpush.xpose.msra.mxu0 0.0
    %4849 = vmatpush.xpose.msra.mxu0 0.0
    %4850 = vmatpush.xpose.msra.mxu0 0.0
    %4851 = vmatpush.xpose.msra.mxu0 0.0
    %4852 = vmatpush.xpose.msra.mxu0 0.0
    %4853 = vmatpush.xpose.msra.mxu0 0.0
    %4854 = vmatpush.xpose.msra.mxu0 0.0
    %4855 = vmatpush.xpose.msra.mxu0 %v4838
    %4856 = vmatmul.f32.gmra.mxu0 %v4836
    %v4857 = vpop.f32.mrf.mxu0
    %v4858 = vadd.f32 0.0, %v4857
    %4859 = vdwg.mxu0
    %4868 = vset.pattern.permute.xlu0 0
    %4869 = vperm.xlu0 %4868, %v4636
    %v4870 = vpop.permute.xlu0 %4869
    %4871 = vset.pattern.permute.xlu0 0
    %4872 = vperm.xlu0 %4871, %v4637
    %v4873 = vpop.permute.xlu0 %4872
    %4874 = vset.pattern.permute.xlu0 0
    %4875 = vperm.xlu0 %4874, %v4638
    %v4876 = vpop.permute.xlu0 %4875
    %4877 = vset.pattern.permute.xlu0 0
    %4878 = vperm.xlu0 %4877, %v4639
    %v4879 = vpop.permute.xlu0 %4878
    %4880 = vset.pattern.permute.xlu0 0
    %4881 = vperm.xlu0 %4880, %v4640
    %v4882 = vpop.permute.xlu0 %4881
    %4883 = vset.pattern.permute.xlu0 0
    %4884 = vperm.xlu0 %4883, %v4641
    %v4885 = vpop.permute.xlu0 %4884
    %4886 = vset.pattern.permute.xlu0 0
    %4887 = vperm.xlu0 %4886, %v4642
    %v4888 = vpop.permute.xlu0 %4887
    %4889 = vset.pattern.permute.xlu0 0
    %4890 = vperm.xlu0 %4889, %v4643
    %v4891 = vpop.permute.xlu0 %4890
    %v4892 = vperm.slane %v4870, %v1636
    %v4893 = vperm.slane %v4873, %v1636
    %v4894 = vperm.slane %v4876, %v1636
    %v4895 = vperm.slane %v4879, %v1636
    %v4896 = vperm.slane %v4882, %v1636
    %v4897 = vperm.slane %v4885, %v1636
    %v4898 = vperm.slane %v4888, %v1636
    %v4899 = vperm.slane %v4891, %v1636
    %v4900 = vsel %vm1735, %v4893, %v4892
    %v4901 = vsel %vm1737, %v4894, %v4900
    %v4902 = vsel %vm1739, %v4895, %v4901
    %v4903 = vsel %vm1741, %v4896, %v4902
    %v4904 = vsel %vm1743, %v4897, %v4903
    %v4905 = vsel %vm1745, %v4898, %v4904
    %v4906 = vsel %vm1747, %v4899, %v4905
    %v4908 = vsel %vm674, %v4708, 0
    %v4910 = vsel %vm674, %v4906, 0
    %4912 = vmatpush.xpose.msra.mxu0 0.0
    %4913 = vmatpush.xpose.msra.mxu0 0.0
    %4914 = vmatpush.xpose.msra.mxu0 0.0
    %4915 = vmatpush.xpose.msra.mxu0 0.0
    %4916 = vmatpush.xpose.msra.mxu0 0.0
    %4917 = vmatpush.xpose.msra.mxu0 0.0
    %4918 = vmatpush.xpose.msra.mxu0 0.0
    %4919 = vmatpush.xpose.msra.mxu0 0.0
    %4920 = vmatpush.xpose.msra.mxu0 0.0
    %4921 = vmatpush.xpose.msra.mxu0 0.0
    %4922 = vmatpush.xpose.msra.mxu0 0.0
    %4923 = vmatpush.xpose.msra.mxu0 0.0
    %4924 = vmatpush.xpose.msra.mxu0 0.0
    %4925 = vmatpush.xpose.msra.mxu0 0.0
    %4926 = vmatpush.xpose.msra.mxu0 0.0
    %4927 = vmatpush.xpose.msra.mxu0 %v4910
    %4928 = vmatmul.f32.gmra.mxu0 %v4908
    %v4929 = vpop.f32.mrf.mxu0
    %v4930 = vadd.f32 0.0, %v4929
    %4931 = vdwg.mxu0
    %4940 = vset.pattern.permute.xlu0 0
    %4941 = vperm.xlu0 %4940, %v4644
    %v4942 = vpop.permute.xlu0 %4941
    %4943 = vset.pattern.permute.xlu0 0
    %4944 = vperm.xlu0 %4943, %v4645
    %v4945 = vpop.permute.xlu0 %4944
    %4946 = vset.pattern.permute.xlu0 0
    %4947 = vperm.xlu0 %4946, %v4646
    %v4948 = vpop.permute.xlu0 %4947
    %4949 = vset.pattern.permute.xlu0 0
    %4950 = vperm.xlu0 %4949, %v4647
    %v4951 = vpop.permute.xlu0 %4950
    %4952 = vset.pattern.permute.xlu0 0
    %4953 = vperm.xlu0 %4952, %v4648
    %v4954 = vpop.permute.xlu0 %4953
    %4955 = vset.pattern.permute.xlu0 0
    %4956 = vperm.xlu0 %4955, %v4649
    %v4957 = vpop.permute.xlu0 %4956
    %4958 = vset.pattern.permute.xlu0 0
    %4959 = vperm.xlu0 %4958, %v4650
    %v4960 = vpop.permute.xlu0 %4959
    %4961 = vset.pattern.permute.xlu0 0
    %4962 = vperm.xlu0 %4961, %v4651
    %v4963 = vpop.permute.xlu0 %4962
    %v4964 = vperm.slane %v4942, %v1636
    %v4965 = vperm.slane %v4945, %v1636
    %v4966 = vperm.slane %v4948, %v1636
    %v4967 = vperm.slane %v4951, %v1636
    %v4968 = vperm.slane %v4954, %v1636
    %v4969 = vperm.slane %v4957, %v1636
    %v4970 = vperm.slane %v4960, %v1636
    %v4971 = vperm.slane %v4963, %v1636
    %v4972 = vsel %vm1735, %v4965, %v4964
    %v4973 = vsel %vm1737, %v4966, %v4972
    %v4974 = vsel %vm1739, %v4967, %v4973
    %v4975 = vsel %vm1741, %v4968, %v4974
    %v4976 = vsel %vm1743, %v4969, %v4975
    %v4977 = vsel %vm1745, %v4970, %v4976
    %v4978 = vsel %vm1747, %v4971, %v4977
    %v4980 = vsel %vm674, %v4740, 0
    %v4982 = vsel %vm674, %v4978, 0
    %4984 = vmatpush.xpose.msra.mxu0 0.0
    %4985 = vmatpush.xpose.msra.mxu0 0.0
    %4986 = vmatpush.xpose.msra.mxu0 0.0
    %4987 = vmatpush.xpose.msra.mxu0 0.0
    %4988 = vmatpush.xpose.msra.mxu0 0.0
    %4989 = vmatpush.xpose.msra.mxu0 0.0
    %4990 = vmatpush.xpose.msra.mxu0 0.0
    %4991 = vmatpush.xpose.msra.mxu0 0.0
    %4992 = vmatpush.xpose.msra.mxu0 0.0
    %4993 = vmatpush.xpose.msra.mxu0 0.0
    %4994 = vmatpush.xpose.msra.mxu0 0.0
    %4995 = vmatpush.xpose.msra.mxu0 0.0
    %4996 = vmatpush.xpose.msra.mxu0 0.0
    %4997 = vmatpush.xpose.msra.mxu0 0.0
    %4998 = vmatpush.xpose.msra.mxu0 0.0
    %4999 = vmatpush.xpose.msra.mxu0 %v4982
    %5000 = vmatmul.f32.gmra.mxu0 %v4980
    %v5001 = vpop.f32.mrf.mxu0
    %v5002 = vadd.f32 0.0, %v5001
    %5003 = vdwg.mxu0
    %5012 = vset.pattern.permute.xlu0 0
    %5013 = vperm.xlu0 %5012, %v4652
    %v5014 = vpop.permute.xlu0 %5013
    %5015 = vset.pattern.permute.xlu0 0
    %5016 = vperm.xlu0 %5015, %v4653
    %v5017 = vpop.permute.xlu0 %5016
    %5018 = vset.pattern.permute.xlu0 0
    %5019 = vperm.xlu0 %5018, %v4654
    %v5020 = vpop.permute.xlu0 %5019
    %5021 = vset.pattern.permute.xlu0 0
    %5022 = vperm.xlu0 %5021, %v4655
    %v5023 = vpop.permute.xlu0 %5022
    %5024 = vset.pattern.permute.xlu0 0
    %5025 = vperm.xlu0 %5024, %v4656
    %v5026 = vpop.permute.xlu0 %5025
    %5027 = vset.pattern.permute.xlu0 0
    %5028 = vperm.xlu0 %5027, %v4657
    %v5029 = vpop.permute.xlu0 %5028
    %5030 = vset.pattern.permute.xlu0 0
    %5031 = vperm.xlu0 %5030, %v4658
    %v5032 = vpop.permute.xlu0 %5031
    %5033 = vset.pattern.permute.xlu0 0
    %5034 = vperm.xlu0 %5033, %v4659
    %v5035 = vpop.permute.xlu0 %5034
    %v5036 = vperm.slane %v5014, %v1636
    %v5037 = vperm.slane %v5017, %v1636
    %v5038 = vperm.slane %v5020, %v1636
    %v5039 = vperm.slane %v5023, %v1636
    %v5040 = vperm.slane %v5026, %v1636
    %v5041 = vperm.slane %v5029, %v1636
    %v5042 = vperm.slane %v5032, %v1636
    %v5043 = vperm.slane %v5035, %v1636
    %v5044 = vsel %vm1735, %v5037, %v5036
    %v5045 = vsel %vm1737, %v5038, %v5044
    %v5046 = vsel %vm1739, %v5039, %v5045
    %v5047 = vsel %vm1741, %v5040, %v5046
    %v5048 = vsel %vm1743, %v5041, %v5047
    %v5049 = vsel %vm1745, %v5042, %v5048
    %v5050 = vsel %vm1747, %v5043, %v5049
    %v5052 = vsel %vm674, %v4772, 0
    %v5054 = vsel %vm674, %v5050, 0
    %5056 = vmatpush.xpose.msra.mxu0 0.0
    %5057 = vmatpush.xpose.msra.mxu0 0.0
    %5058 = vmatpush.xpose.msra.mxu0 0.0
    %5059 = vmatpush.xpose.msra.mxu0 0.0
    %5060 = vmatpush.xpose.msra.mxu0 0.0
    %5061 = vmatpush.xpose.msra.mxu0 0.0
    %5062 = vmatpush.xpose.msra.mxu0 0.0
    %5063 = vmatpush.xpose.msra.mxu0 0.0
    %5064 = vmatpush.xpose.msra.mxu0 0.0
    %5065 = vmatpush.xpose.msra.mxu0 0.0
    %5066 = vmatpush.xpose.msra.mxu0 0.0
    %5067 = vmatpush.xpose.msra.mxu0 0.0
    %5068 = vmatpush.xpose.msra.mxu0 0.0
    %5069 = vmatpush.xpose.msra.mxu0 0.0
    %5070 = vmatpush.xpose.msra.mxu0 0.0
    %5071 = vmatpush.xpose.msra.mxu0 %v5054
    %5072 = vmatmul.f32.gmra.mxu0 %v5052
    %v5073 = vpop.f32.mrf.mxu0
    %v5074 = vadd.f32 0.0, %v5073
    %5075 = vdwg.mxu0
    %5076 = vxpose.xlu0.b32.start [1/16] %v4858, 128
    %5077 = vxpose.xlu0.b32.cont [2/16] 0.0, 128
    %5078 = vxpose.xlu0.b32.cont [3/16] 0.0, 128
    %5079 = vxpose.xlu0.b32.cont [4/16] 0.0, 128
    %5080 = vxpose.xlu0.b32.cont [5/16] 0.0, 128
    %5081 = vxpose.xlu0.b32.cont [6/16] 0.0, 128
    %5082 = vxpose.xlu0.b32.cont [7/16] 0.0, 128
    %5083 = vxpose.xlu0.b32.cont [8/16] 0.0, 128
    %5084 = vxpose.xlu0.b32.cont [9/16] 0.0, 128
    %5085 = vxpose.xlu0.b32.cont [10/16] 0.0, 128
    %5086 = vxpose.xlu0.b32.cont [11/16] 0.0, 128
    %5087 = vxpose.xlu0.b32.cont [12/16] 0.0, 128
    %5088 = vxpose.xlu0.b32.cont [13/16] 0.0, 128
    %5089 = vxpose.xlu0.b32.cont [14/16] 0.0, 128
    %5090 = vxpose.xlu0.b32.cont [15/16] 0.0, 128
    %5091 = vxpose.xlu0.b32.end [16/16] 0.0, 128
    %v5092 = vpop.trf.xlu0
    %v5093 = vpop.trf.xlu0
    %v5094 = vpop.trf.xlu0
    %v5095 = vpop.trf.xlu0
    %v5096 = vpop.trf.xlu0
    %v5097 = vpop.trf.xlu0
    %v5098 = vpop.trf.xlu0
    %v5099 = vpop.trf.xlu0
    %v5100 = vpop.trf.xlu0
    %v5101 = vpop.trf.xlu0
    %v5102 = vpop.trf.xlu0
    %v5103 = vpop.trf.xlu0
    %v5104 = vpop.trf.xlu0
    %v5105 = vpop.trf.xlu0
    %v5106 = vpop.trf.xlu0
    %v5107 = vpop.trf.xlu0
    %5108 = vxpose.xlu0.b32.start [1/16] %v4930, 128
    %5109 = vxpose.xlu0.b32.cont [2/16] 0.0, 128
    %5110 = vxpose.xlu0.b32.cont [3/16] 0.0, 128
    %5111 = vxpose.xlu0.b32.cont [4/16] 0.0, 128
    %5112 = vxpose.xlu0.b32.cont [5/16] 0.0, 128
    %5113 = vxpose.xlu0.b32.cont [6/16] 0.0, 128
    %5114 = vxpose.xlu0.b32.cont [7/16] 0.0, 128
    %5115 = vxpose.xlu0.b32.cont [8/16] 0.0, 128
    %5116 = vxpose.xlu0.b32.cont [9/16] 0.0, 128
    %5117 = vxpose.xlu0.b32.cont [10/16] 0.0, 128
    %5118 = vxpose.xlu0.b32.cont [11/16] 0.0, 128
    %5119 = vxpose.xlu0.b32.cont [12/16] 0.0, 128
    %5120 = vxpose.xlu0.b32.cont [13/16] 0.0, 128
    %5121 = vxpose.xlu0.b32.cont [14/16] 0.0, 128
    %5122 = vxpose.xlu0.b32.cont [15/16] 0.0, 128
    %5123 = vxpose.xlu0.b32.end [16/16] 0.0, 128
    %v5124 = vpop.trf.xlu0
    %v5125 = vpop.trf.xlu0
    %v5126 = vpop.trf.xlu0
    %v5127 = vpop.trf.xlu0
    %v5128 = vpop.trf.xlu0
    %v5129 = vpop.trf.xlu0
    %v5130 = vpop.trf.xlu0
    %v5131 = vpop.trf.xlu0
    %v5132 = vpop.trf.xlu0
    %v5133 = vpop.trf.xlu0
    %v5134 = vpop.trf.xlu0
    %v5135 = vpop.trf.xlu0
    %v5136 = vpop.trf.xlu0
    %v5137 = vpop.trf.xlu0
    %v5138 = vpop.trf.xlu0
    %v5139 = vpop.trf.xlu0
    %5140 = vxpose.xlu0.b32.start [1/16] %v5002, 128
    %5141 = vxpose.xlu0.b32.cont [2/16] 0.0, 128
    %5142 = vxpose.xlu0.b32.cont [3/16] 0.0, 128
    %5143 = vxpose.xlu0.b32.cont [4/16] 0.0, 128
    %5144 = vxpose.xlu0.b32.cont [5/16] 0.0, 128
    %5145 = vxpose.xlu0.b32.cont [6/16] 0.0, 128
    %5146 = vxpose.xlu0.b32.cont [7/16] 0.0, 128
    %5147 = vxpose.xlu0.b32.cont [8/16] 0.0, 128
    %5148 = vxpose.xlu0.b32.cont [9/16] 0.0, 128
    %5149 = vxpose.xlu0.b32.cont [10/16] 0.0, 128
    %5150 = vxpose.xlu0.b32.cont [11/16] 0.0, 128
    %5151 = vxpose.xlu0.b32.cont [12/16] 0.0, 128
    %5152 = vxpose.xlu0.b32.cont [13/16] 0.0, 128
    %5153 = vxpose.xlu0.b32.cont [14/16] 0.0, 128
    %5154 = vxpose.xlu0.b32.cont [15/16] 0.0, 128
    %5155 = vxpose.xlu0.b32.end [16/16] 0.0, 128
    %v5156 = vpop.trf.xlu0
    %v5157 = vpop.trf.xlu0
    %v5158 = vpop.trf.xlu0
    %v5159 = vpop.trf.xlu0
    %v5160 = vpop.trf.xlu0
    %v5161 = vpop.trf.xlu0
    %v5162 = vpop.trf.xlu0
    %v5163 = vpop.trf.xlu0
    %v5164 = vpop.trf.xlu0
    %v5165 = vpop.trf.xlu0
    %v5166 = vpop.trf.xlu0
    %v5167 = vpop.trf.xlu0
    %v5168 = vpop.trf.xlu0
    %v5169 = vpop.trf.xlu0
    %v5170 = vpop.trf.xlu0
    %v5171 = vpop.trf.xlu0
    %5172 = vxpose.xlu0.b32.start [1/16] %v5074, 128
    %5173 = vxpose.xlu0.b32.cont [2/16] 0.0, 128
    %5174 = vxpose.xlu0.b32.cont [3/16] 0.0, 128
    %5175 = vxpose.xlu0.b32.cont [4/16] 0.0, 128
    %5176 = vxpose.xlu0.b32.cont [5/16] 0.0, 128
    %5177 = vxpose.xlu0.b32.cont [6/16] 0.0, 128
    %5178 = vxpose.xlu0.b32.cont [7/16] 0.0, 128
    %5179 = vxpose.xlu0.b32.cont [8/16] 0.0, 128
    %5180 = vxpose.xlu0.b32.cont [9/16] 0.0, 128
    %5181 = vxpose.xlu0.b32.cont [10/16] 0.0, 128
    %5182 = vxpose.xlu0.b32.cont [11/16] 0.0, 128
    %5183 = vxpose.xlu0.b32.cont [12/16] 0.0, 128
    %5184 = vxpose.xlu0.b32.cont [13/16] 0.0, 128
    %5185 = vxpose.xlu0.b32.cont [14/16] 0.0, 128
    %5186 = vxpose.xlu0.b32.cont [15/16] 0.0, 128
    %5187 = vxpose.xlu0.b32.end [16/16] 0.0, 128
    %v5188 = vpop.trf.xlu0
    %v5189 = vpop.trf.xlu0
    %v5190 = vpop.trf.xlu0
    %v5191 = vpop.trf.xlu0
    %v5192 = vpop.trf.xlu0
    %v5193 = vpop.trf.xlu0
    %v5194 = vpop.trf.xlu0
    %v5195 = vpop.trf.xlu0
    %v5196 = vpop.trf.xlu0
    %v5197 = vpop.trf.xlu0
    %v5198 = vpop.trf.xlu0
    %v5199 = vpop.trf.xlu0
    %v5200 = vpop.trf.xlu0
    %v5201 = vpop.trf.xlu0
    %v5202 = vpop.trf.xlu0
    %v5203 = vpop.trf.xlu0
    %v5204 = vrot.slane %v5156, 4
    %v5205 = vsel %vm3316, %v5204, %v5092
    %v5206 = vrot.slane %v5092, 4
    %v5207 = vsel %vm3316, %v5156, %v5206
    %v5209 = vunpack.c.l.s4 1983009808
    %v5210 = vunpack.c.0.s8 %v5209
    %v5211 = vperm.slane %v5205, %v5210
    %v5213 = vunpack.c.l.s4 1983009808
    %v5214 = vunpack.c.0.s8 %v5213
    %v5215 = vperm.slane %v5207, %v5214
    %v5216 = vrot.slane %v5188, 4
    %v5217 = vsel %vm3316, %v5216, %v5124
    %v5218 = vrot.slane %v5124, 4
    %v5219 = vsel %vm3316, %v5188, %v5218
    %v5221 = vunpack.c.l.s4 1983009808
    %v5222 = vunpack.c.0.s8 %v5221
    %v5223 = vperm.slane %v5217, %v5222
    %v5225 = vunpack.c.l.s4 1983009808
    %v5226 = vunpack.c.0.s8 %v5225
    %v5227 = vperm.slane %v5219, %v5226
    %v5228 = vrot.slane %v5223, 4
    %v5229 = vsel %vm3316, %v5228, %v5211
    %v5230 = vrot.slane %v5211, 4
    %v5231 = vsel %vm3316, %v5223, %v5230
    %v5233 = vunpack.c.l.s4 1934713408
    %v5234 = vunpack.c.0.s8 %v5233
    %v5235 = vperm.slane %v5229, %v5234
    %v5237 = vunpack.c.l.s4 1934713408
    %v5238 = vunpack.c.0.s8 %v5237
    %v5239 = vperm.slane %v5231, %v5238
    %v5240 = vrot.slane %v5227, 4
    %v5241 = vsel %vm3316, %v5240, %v5215
    %v5242 = vrot.slane %v5215, 4
    %v5243 = vsel %vm3316, %v5227, %v5242
    %v5245 = vunpack.c.l.s4 1934713408
    %v5246 = vunpack.c.0.s8 %v5245
    %v5247 = vperm.slane %v5241, %v5246
    %v5249 = vunpack.c.l.s4 1934713408
    %v5250 = vunpack.c.0.s8 %v5249
    %v5251 = vperm.slane %v5243, %v5250
    %v5252 = vrot.slane %v5235, 4
    %v5253 = vsel %vm3316, 0.0, %v5252
    %v5254 = vrot.slane %v5239, 4
    %v5255 = vsel %vm3316, 0.0, %v5254
    %v5256 = vrot.slane %v5247, 4
    %v5257 = vsel %vm3316, 0.0, %v5256
    %v5258 = vrot.slane %v5251, 4
    %v5259 = vsel %vm3316, 0.0, %v5258
    %v5260 = vsel %vm3316, %v5254, %v5235
    %v5262 = vunpack.c.l.s4 1983009808
    %v5263 = vunpack.c.0.s8 %v5262
    %v5264 = vperm.slane %v5260, %v5263
    %v5265 = vrot.slane %v5255, 4
    %v5266 = vsel %vm3316, %v5265, %v5253
    %v5268 = vunpack.c.l.s4 1983009808
    %v5269 = vunpack.c.0.s8 %v5268
    %v5270 = vperm.slane %v5266, %v5269
    %v5271 = vsel %vm3316, %v5258, %v5247
    %v5273 = vunpack.c.l.s4 1983009808
    %v5274 = vunpack.c.0.s8 %v5273
    %v5275 = vperm.slane %v5271, %v5274
    %v5276 = vrot.slane %v5259, 4
    %v5277 = vsel %vm3316, %v5276, %v5257
    %v5279 = vunpack.c.l.s4 1983009808
    %v5280 = vunpack.c.0.s8 %v5279
    %v5281 = vperm.slane %v5277, %v5280
    %v5282 = vrot.slane %v5270, 4
    %v5283 = vsel %vm3316, %v5282, %v5264
    %v5284 = vrot.slane %v5264, 4
    %v5285 = vsel %vm3316, %v5270, %v5284
    %v5287 = vunpack.c.l.s4 1934713408
    %v5288 = vunpack.c.0.s8 %v5287
    %v5289 = vperm.slane %v5283, %v5288
    %v5291 = vunpack.c.l.s4 1934713408
    %v5292 = vunpack.c.0.s8 %v5291
    %v5293 = vperm.slane %v5285, %v5292
    %v5294 = vrot.slane %v5281, 4
    %v5295 = vsel %vm3316, %v5294, %v5275
    %v5296 = vrot.slane %v5275, 4
    %v5297 = vsel %vm3316, %v5281, %v5296
    %v5299 = vunpack.c.l.s4 1934713408
    %v5300 = vunpack.c.0.s8 %v5299
    %v5301 = vperm.slane %v5295, %v5300
    %v5303 = vunpack.c.l.s4 1934713408
    %v5304 = vunpack.c.0.s8 %v5303
    %v5305 = vperm.slane %v5297, %v5304
    %v5306 = vrot.slane %v5301, 4
    %v5307 = vsel %vm3316, %v5306, %v5289
    %v5308 = vrot.slane %v5289, 4
    %v5309 = vsel %vm3316, %v5301, %v5308
    %v5310 = vrot.slane %v5305, 4
    %v5311 = vsel %vm3316, %v5310, %v5293
    %v5312 = vrot.slane %v5293, 4
    %v5313 = vsel %vm3316, %v5305, %v5312
    %5315 = vrot.lane.b32.xlu0 %v5309, 8
    %v5316 = vpop.permute.xlu0 %5315
    %5319 = vrot.lane.b32.xlu0 %v5311, 16
    %v5320 = vpop.permute.xlu0 %5319
    %5323 = vrot.lane.b32.xlu0 %v5313, 24
    %v5324 = vpop.permute.xlu0 %5323
    %v5326 = vsel %vm674, %v5307, %v5316
    %v5327 = vsel %vm1774, %v5326, %v5320
    %v5328 = vsel %vm3440, %v5327, %v5324
    %5330 = vrot.lane.b32.xlu0 %v279, 120
    %v5331 = vpop.permute.xlu0 %5330
    %5332 = vrot.lane.b32.xlu0 %v279, 112
    %v5333 = vpop.permute.xlu0 %5332
    %5334 = vrot.lane.b32.xlu0 %v279, 104
    %v5335 = vpop.permute.xlu0 %5334
    %5338 = vrot.lane.b32.xlu0 %v351, 120
    %v5339 = vpop.permute.xlu0 %5338
    %5340 = vrot.lane.b32.xlu0 %v352, 120
    %v5341 = vpop.permute.xlu0 %5340
    %5344 = vrot.lane.b32.xlu0 %v351, 112
    %v5345 = vpop.permute.xlu0 %5344
    %5346 = vrot.lane.b32.xlu0 %v352, 112
    %v5347 = vpop.permute.xlu0 %5346
    %5350 = vrot.lane.b32.xlu0 %v351, 104
    %v5351 = vpop.permute.xlu0 %5350
    %5352 = vrot.lane.b32.xlu0 %v352, 104
    %v5353 = vpop.permute.xlu0 %5352
    %5358 = vrot.lane.b32.xlu0 %v392, 120
    %v5359 = vpop.permute.xlu0 %5358
    %5360 = vrot.lane.b32.xlu0 %v393, 120
    %v5361 = vpop.permute.xlu0 %5360
    %5364 = vrot.lane.b32.xlu0 %v392, 112
    %v5365 = vpop.permute.xlu0 %5364
    %5366 = vrot.lane.b32.xlu0 %v393, 112
    %v5367 = vpop.permute.xlu0 %5366
    %5370 = vrot.lane.b32.xlu0 %v392, 104
    %v5371 = vpop.permute.xlu0 %5370
    %5372 = vrot.lane.b32.xlu0 %v393, 104
    %v5373 = vpop.permute.xlu0 %5372
    %5377 = vrot.lane.b32.xlu0 %v442, 120
    %v5378 = vpop.permute.xlu0 %5377
    %5380 = vrot.lane.b32.xlu0 %v442, 112
    %v5381 = vpop.permute.xlu0 %5380
    %5383 = vrot.lane.b32.xlu0 %v442, 104
    %v5384 = vpop.permute.xlu0 %5383
    %5387 = vrot.lane.b32.xlu0 %v475, 120
    %v5388 = vpop.permute.xlu0 %5387
    %5390 = vrot.lane.b32.xlu0 %v475, 112
    %v5391 = vpop.permute.xlu0 %5390
    %5393 = vrot.lane.b32.xlu0 %v475, 104
    %v5394 = vpop.permute.xlu0 %5393
    %vm5396 = vcmp.eq.f32.partialorder %v212, 0.0
    %vm5397 = vcmp.eq.f32.partialorder %v213, 0.0
    %vm5398 = vcmp.eq.f32.partialorder %v215, 0.0
    %5399 = vxpose.xlu0.b32.start [1/16] %v351, 128
    %5400 = vxpose.xlu0.b32.cont [2/16] %v352, 128
    %5401 = vxpose.xlu0.b32.cont [3/16] 0.0, 128
    %5402 = vxpose.xlu0.b32.cont [4/16] 0.0, 128
    %5403 = vxpose.xlu0.b32.cont [5/16] 0.0, 128
    %5404 = vxpose.xlu0.b32.cont [6/16] 0.0, 128
    %5405 = vxpose.xlu0.b32.cont [7/16] 0.0, 128
    %5406 = vxpose.xlu0.b32.cont [8/16] 0.0, 128
    %5407 = vxpose.xlu0.b32.cont [9/16] 0.0, 128
    %5408 = vxpose.xlu0.b32.cont [10/16] 0.0, 128
    %5409 = vxpose.xlu0.b32.cont [11/16] 0.0, 128
    %5410 = vxpose.xlu0.b32.cont [12/16] 0.0, 128
    %5411 = vxpose.xlu0.b32.cont [13/16] 0.0, 128
    %5412 = vxpose.xlu0.b32.cont [14/16] 0.0, 128
    %5413 = vxpose.xlu0.b32.cont [15/16] 0.0, 128
    %5414 = vxpose.xlu0.b32.end [16/16] 0.0, 128
    %v5415 = vpop.trf.xlu0
    %v5416 = vpop.trf.xlu0
    %v5417 = vpop.trf.xlu0
    %v5418 = vpop.trf.xlu0
    %v5419 = vpop.trf.xlu0
    %v5420 = vpop.trf.xlu0
    %v5421 = vpop.trf.xlu0
    %v5422 = vpop.trf.xlu0
    %v5423 = vpop.trf.xlu0
    %v5424 = vpop.trf.xlu0
    %v5425 = vpop.trf.xlu0
    %v5426 = vpop.trf.xlu0
    %v5427 = vpop.trf.xlu0
    %v5428 = vpop.trf.xlu0
    %v5429 = vpop.trf.xlu0
    %v5430 = vpop.trf.xlu0
    %5431 = vxpose.xlu0.b32.start [1/16] %v5339, 128
    %5432 = vxpose.xlu0.b32.cont [2/16] %v5341, 128
    %5433 = vxpose.xlu0.b32.cont [3/16] 0.0, 128
    %5434 = vxpose.xlu0.b32.cont [4/16] 0.0, 128
    %5435 = vxpose.xlu0.b32.cont [5/16] 0.0, 128
    %5436 = vxpose.xlu0.b32.cont [6/16] 0.0, 128
    %5437 = vxpose.xlu0.b32.cont [7/16] 0.0, 128
    %5438 = vxpose.xlu0.b32.cont [8/16] 0.0, 128
    %5439 = vxpose.xlu0.b32.cont [9/16] 0.0, 128
    %5440 = vxpose.xlu0.b32.cont [10/16] 0.0, 128
    %5441 = vxpose.xlu0.b32.cont [11/16] 0.0, 128
    %5442 = vxpose.xlu0.b32.cont [12/16] 0.0, 128
    %5443 = vxpose.xlu0.b32.cont [13/16] 0.0, 128
    %5444 = vxpose.xlu0.b32.cont [14/16] 0.0, 128
    %5445 = vxpose.xlu0.b32.cont [15/16] 0.0, 128
    %5446 = vxpose.xlu0.b32.end [16/16] 0.0, 128
    %v5447 = vpop.trf.xlu0
    %v5448 = vpop.trf.xlu0
    %v5449 = vpop.trf.xlu0
    %v5450 = vpop.trf.xlu0
    %v5451 = vpop.trf.xlu0
    %v5452 = vpop.trf.xlu0
    %v5453 = vpop.trf.xlu0
    %v5454 = vpop.trf.xlu0
    %v5455 = vpop.trf.xlu0
    %v5456 = vpop.trf.xlu0
    %v5457 = vpop.trf.xlu0
    %v5458 = vpop.trf.xlu0
    %v5459 = vpop.trf.xlu0
    %v5460 = vpop.trf.xlu0
    %v5461 = vpop.trf.xlu0
    %v5462 = vpop.trf.xlu0
    %5463 = vxpose.xlu0.b32.start [1/16] %v5345, 128
    %5464 = vxpose.xlu0.b32.cont [2/16] %v5347, 128
    %5465 = vxpose.xlu0.b32.cont [3/16] 0.0, 128
    %5466 = vxpose.xlu0.b32.cont [4/16] 0.0, 128
    %5467 = vxpose.xlu0.b32.cont [5/16] 0.0, 128
    %5468 = vxpose.xlu0.b32.cont [6/16] 0.0, 128
    %5469 = vxpose.xlu0.b32.cont [7/16] 0.0, 128
    %5470 = vxpose.xlu0.b32.cont [8/16] 0.0, 128
    %5471 = vxpose.xlu0.b32.cont [9/16] 0.0, 128
    %5472 = vxpose.xlu0.b32.cont [10/16] 0.0, 128
    %5473 = vxpose.xlu0.b32.cont [11/16] 0.0, 128
    %5474 = vxpose.xlu0.b32.cont [12/16] 0.0, 128
    %5475 = vxpose.xlu0.b32.cont [13/16] 0.0, 128
    %5476 = vxpose.xlu0.b32.cont [14/16] 0.0, 128
    %5477 = vxpose.xlu0.b32.cont [15/16] 0.0, 128
    %5478 = vxpose.xlu0.b32.end [16/16] 0.0, 128
    %v5479 = vpop.trf.xlu0
    %v5480 = vpop.trf.xlu0
    %v5481 = vpop.trf.xlu0
    %v5482 = vpop.trf.xlu0
    %v5483 = vpop.trf.xlu0
    %v5484 = vpop.trf.xlu0
    %v5485 = vpop.trf.xlu0
    %v5486 = vpop.trf.xlu0
    %v5487 = vpop.trf.xlu0
    %v5488 = vpop.trf.xlu0
    %v5489 = vpop.trf.xlu0
    %v5490 = vpop.trf.xlu0
    %v5491 = vpop.trf.xlu0
    %v5492 = vpop.trf.xlu0
    %v5493 = vpop.trf.xlu0
    %v5494 = vpop.trf.xlu0
    %5495 = vxpose.xlu0.b32.start [1/16] %v5351, 128
    %5496 = vxpose.xlu0.b32.cont [2/16] %v5353, 128
    %5497 = vxpose.xlu0.b32.cont [3/16] 0.0, 128
    %5498 = vxpose.xlu0.b32.cont [4/16] 0.0, 128
    %5499 = vxpose.xlu0.b32.cont [5/16] 0.0, 128
    %5500 = vxpose.xlu0.b32.cont [6/16] 0.0, 128
    %5501 = vxpose.xlu0.b32.cont [7/16] 0.0, 128
    %5502 = vxpose.xlu0.b32.cont [8/16] 0.0, 128
    %5503 = vxpose.xlu0.b32.cont [9/16] 0.0, 128
    %5504 = vxpose.xlu0.b32.cont [10/16] 0.0, 128
    %5505 = vxpose.xlu0.b32.cont [11/16] 0.0, 128
    %5506 = vxpose.xlu0.b32.cont [12/16] 0.0, 128
    %5507 = vxpose.xlu0.b32.cont [13/16] 0.0, 128
    %5508 = vxpose.xlu0.b32.cont [14/16] 0.0, 128
    %5509 = vxpose.xlu0.b32.cont [15/16] 0.0, 128
    %5510 = vxpose.xlu0.b32.end [16/16] 0.0, 128
    %v5511 = vpop.trf.xlu0
    %v5512 = vpop.trf.xlu0
    %v5513 = vpop.trf.xlu0
    %v5514 = vpop.trf.xlu0
    %v5515 = vpop.trf.xlu0
    %v5516 = vpop.trf.xlu0
    %v5517 = vpop.trf.xlu0
    %v5518 = vpop.trf.xlu0
    %v5519 = vpop.trf.xlu0
    %v5520 = vpop.trf.xlu0
    %v5521 = vpop.trf.xlu0
    %v5522 = vpop.trf.xlu0
    %v5523 = vpop.trf.xlu0
    %v5524 = vpop.trf.xlu0
    %v5525 = vpop.trf.xlu0
    %v5526 = vpop.trf.xlu0
    %v5527 = vsel %vm674, %v279, 0
    %5529 = vmatpush.msra.mxu0 0.0
    %5530 = vmatpush.msra.mxu0 0.0
    %5531 = vmatpush.msra.mxu0 0.0
    %5532 = vmatpush.msra.mxu0 0.0
    %5533 = vmatpush.msra.mxu0 0.0
    %5534 = vmatpush.msra.mxu0 0.0
    %5535 = vmatpush.msra.mxu0 0.0
    %5536 = vmatpush.msra.mxu0 0.0
    %5537 = vmatpush.msra.mxu0 0.0
    %5538 = vmatpush.msra.mxu0 0.0
    %5539 = vmatpush.msra.mxu0 0.0
    %5540 = vmatpush.msra.mxu0 0.0
    %5541 = vmatpush.msra.mxu0 0.0
    %5542 = vmatpush.msra.mxu0 0.0
    %5543 = vmatpush.msra.mxu0 0.0
    %5544 = vmatpush.msra.mxu0 %v5415
    %5545 = vmatmul.f32.gmra.mxu0 %v5527
    %v5546 = vpop.f32.mrf.mxu0
    %v5547 = vadd.f32 0.0, %v5546
    %5548 = vdwg.mxu0
    %v5549 = vsel %vm674, %v5331, 0
    %5551 = vmatpush.msra.mxu0 0.0
    %5552 = vmatpush.msra.mxu0 0.0
    %5553 = vmatpush.msra.mxu0 0.0
    %5554 = vmatpush.msra.mxu0 0.0
    %5555 = vmatpush.msra.mxu0 0.0
    %5556 = vmatpush.msra.mxu0 0.0
    %5557 = vmatpush.msra.mxu0 0.0
    %5558 = vmatpush.msra.mxu0 0.0
    %5559 = vmatpush.msra.mxu0 0.0
    %5560 = vmatpush.msra.mxu0 0.0
    %5561 = vmatpush.msra.mxu0 0.0
    %5562 = vmatpush.msra.mxu0 0.0
    %5563 = vmatpush.msra.mxu0 0.0
    %5564 = vmatpush.msra.mxu0 0.0
    %5565 = vmatpush.msra.mxu0 0.0
    %5566 = vmatpush.msra.mxu0 %v5447
    %5567 = vmatmul.f32.gmra.mxu0 %v5549
    %v5568 = vpop.f32.mrf.mxu0
    %v5569 = vadd.f32 0.0, %v5568
    %5570 = vdwg.mxu0
    %v5571 = vsel %vm674, %v5333, 0
    %5573 = vmatpush.msra.mxu0 0.0
    %5574 = vmatpush.msra.mxu0 0.0
    %5575 = vmatpush.msra.mxu0 0.0
    %5576 = vmatpush.msra.mxu0 0.0
    %5577 = vmatpush.msra.mxu0 0.0
    %5578 = vmatpush.msra.mxu0 0.0
    %5579 = vmatpush.msra.mxu0 0.0
    %5580 = vmatpush.msra.mxu0 0.0
    %5581 = vmatpush.msra.mxu0 0.0
    %5582 = vmatpush.msra.mxu0 0.0
    %5583 = vmatpush.msra.mxu0 0.0
    %5584 = vmatpush.msra.mxu0 0.0
    %5585 = vmatpush.msra.mxu0 0.0
    %5586 = vmatpush.msra.mxu0 0.0
    %5587 = vmatpush.msra.mxu0 0.0
    %5588 = vmatpush.msra.mxu0 %v5479
    %5589 = vmatmul.f32.gmra.mxu0 %v5571
    %v5590 = vpop.f32.mrf.mxu0
    %v5591 = vadd.f32 0.0, %v5590
    %5592 = vdwg.mxu0
    %v5593 = vsel %vm674, %v5335, 0
    %5595 = vmatpush.msra.mxu0 0.0
    %5596 = vmatpush.msra.mxu0 0.0
    %5597 = vmatpush.msra.mxu0 0.0
    %5598 = vmatpush.msra.mxu0 0.0
    %5599 = vmatpush.msra.mxu0 0.0
    %5600 = vmatpush.msra.mxu0 0.0
    %5601 = vmatpush.msra.mxu0 0.0
    %5602 = vmatpush.msra.mxu0 0.0
    %5603 = vmatpush.msra.mxu0 0.0
    %5604 = vmatpush.msra.mxu0 0.0
    %5605 = vmatpush.msra.mxu0 0.0
    %5606 = vmatpush.msra.mxu0 0.0
    %5607 = vmatpush.msra.mxu0 0.0
    %5608 = vmatpush.msra.mxu0 0.0
    %5609 = vmatpush.msra.mxu0 0.0
    %5610 = vmatpush.msra.mxu0 %v5511
    %5611 = vmatmul.f32.gmra.mxu0 %v5593
    %v5612 = vpop.f32.mrf.mxu0
    %v5613 = vadd.f32 0.0, %v5612
    %5614 = vdwg.mxu0
    %v5615 = vsel %vm5396, 1, 0
    %v5616 = vsel %vm5397, 1, 0
    %vm5617 = vcmp.eq.s32.totalorder %v5615, 1
    %vm5618 = vcmp.eq.s32.totalorder %v5616, 1
    %v5623 = vperm.slane %v5547, 0
    %v5624 = vlaneseq
    %v5625 = vshrl.u32 %v5624, 7
    %5627 = vset.pattern.permute.xlu0 %v5625
    %5628 = vperm.xlu0 %5627, %v5623
    %v5629 = vpop.permute.xlu0 %5628
    %v5630 = vlaneseq
    %v5631 = vshrl.u32 %v5630, 7
    %v5632 = vadd.s32 %v5631, 8
    %5633 = vset.pattern.permute.xlu0 %v5632
    %5634 = vperm.xlu0 %5633, %v5623
    %v5635 = vpop.permute.xlu0 %5634
    %v5636 = vperm.slane %v5547, 1
    %v5637 = vlaneseq
    %v5638 = vshrl.u32 %v5637, 7
    %5640 = vset.pattern.permute.xlu0 %v5638
    %5641 = vperm.xlu0 %5640, %v5636
    %v5642 = vpop.permute.xlu0 %5641
    %v5643 = vlaneseq
    %v5644 = vshrl.u32 %v5643, 7
    %v5645 = vadd.s32 %v5644, 8
    %5646 = vset.pattern.permute.xlu0 %v5645
    %5647 = vperm.xlu0 %5646, %v5636
    %v5648 = vpop.permute.xlu0 %5647
    %v5649 = vperm.slane %v5547, 2
    %v5650 = vlaneseq
    %v5651 = vshrl.u32 %v5650, 7
    %5653 = vset.pattern.permute.xlu0 %v5651
    %5654 = vperm.xlu0 %5653, %v5649
    %v5655 = vpop.permute.xlu0 %5654
    %v5656 = vlaneseq
    %v5657 = vshrl.u32 %v5656, 7
    %v5658 = vadd.s32 %v5657, 8
    %5659 = vset.pattern.permute.xlu0 %v5658
    %5660 = vperm.xlu0 %5659, %v5649
    %v5661 = vpop.permute.xlu0 %5660
    %v5662 = vperm.slane %v5547, 3
    %v5663 = vlaneseq
    %v5664 = vshrl.u32 %v5663, 7
    %5666 = vset.pattern.permute.xlu0 %v5664
    %5667 = vperm.xlu0 %5666, %v5662
    %v5668 = vpop.permute.xlu0 %5667
    %v5669 = vlaneseq
    %v5670 = vshrl.u32 %v5669, 7
    %v5671 = vadd.s32 %v5670, 8
    %5672 = vset.pattern.permute.xlu0 %v5671
    %5673 = vperm.xlu0 %5672, %v5662
    %v5674 = vpop.permute.xlu0 %5673
    %v5675 = vperm.slane %v5547, 4
    %v5676 = vlaneseq
    %v5677 = vshrl.u32 %v5676, 7
    %5679 = vset.pattern.permute.xlu0 %v5677
    %5680 = vperm.xlu0 %5679, %v5675
    %v5681 = vpop.permute.xlu0 %5680
    %v5682 = vlaneseq
    %v5683 = vshrl.u32 %v5682, 7
    %v5684 = vadd.s32 %v5683, 8
    %5685 = vset.pattern.permute.xlu0 %v5684
    %5686 = vperm.xlu0 %5685, %v5675
    %v5687 = vpop.permute.xlu0 %5686
    %v5688 = vperm.slane %v5547, 5
    %v5689 = vlaneseq
    %v5690 = vshrl.u32 %v5689, 7
    %5692 = vset.pattern.permute.xlu0 %v5690
    %5693 = vperm.xlu0 %5692, %v5688
    %v5694 = vpop.permute.xlu0 %5693
    %v5695 = vlaneseq
    %v5696 = vshrl.u32 %v5695, 7
    %v5697 = vadd.s32 %v5696, 8
    %5698 = vset.pattern.permute.xlu0 %v5697
    %5699 = vperm.xlu0 %5698, %v5688
    %v5700 = vpop.permute.xlu0 %5699
    %v5701 = vperm.slane %v5547, 6
    %v5702 = vlaneseq
    %v5703 = vshrl.u32 %v5702, 7
    %5705 = vset.pattern.permute.xlu0 %v5703
    %5706 = vperm.xlu0 %5705, %v5701
    %v5707 = vpop.permute.xlu0 %5706
    %v5708 = vlaneseq
    %v5709 = vshrl.u32 %v5708, 7
    %v5710 = vadd.s32 %v5709, 8
    %5711 = vset.pattern.permute.xlu0 %v5710
    %5712 = vperm.xlu0 %5711, %v5701
    %v5713 = vpop.permute.xlu0 %5712
    %v5714 = vperm.slane %v5547, 7
    %v5715 = vlaneseq
    %v5716 = vshrl.u32 %v5715, 7
    %5718 = vset.pattern.permute.xlu0 %v5716
    %5719 = vperm.xlu0 %5718, %v5714
    %v5720 = vpop.permute.xlu0 %5719
    %v5721 = vlaneseq
    %v5722 = vshrl.u32 %v5721, 7
    %v5723 = vadd.s32 %v5722, 8
    %5724 = vset.pattern.permute.xlu0 %v5723
    %5725 = vperm.xlu0 %5724, %v5714
    %v5726 = vpop.permute.xlu0 %5725
    %v5727 = vperm.slane %v5569, 0
    %v5728 = vlaneseq
    %v5729 = vshrl.u32 %v5728, 7
    %5731 = vset.pattern.permute.xlu0 %v5729
    %5732 = vperm.xlu0 %5731, %v5727
    %v5733 = vpop.permute.xlu0 %5732
    %v5734 = vlaneseq
    %v5735 = vshrl.u32 %v5734, 7
    %v5736 = vadd.s32 %v5735, 8
    %5737 = vset.pattern.permute.xlu0 %v5736
    %5738 = vperm.xlu0 %5737, %v5727
    %v5739 = vpop.permute.xlu0 %5738
    %v5740 = vperm.slane %v5569, 1
    %v5741 = vlaneseq
    %v5742 = vshrl.u32 %v5741, 7
    %5744 = vset.pattern.permute.xlu0 %v5742
    %5745 = vperm.xlu0 %5744, %v5740
    %v5746 = vpop.permute.xlu0 %5745
    %v5747 = vlaneseq
    %v5748 = vshrl.u32 %v5747, 7
    %v5749 = vadd.s32 %v5748, 8
    %5750 = vset.pattern.permute.xlu0 %v5749
    %5751 = vperm.xlu0 %5750, %v5740
    %v5752 = vpop.permute.xlu0 %5751
    %v5753 = vperm.slane %v5569, 2
    %v5754 = vlaneseq
    %v5755 = vshrl.u32 %v5754, 7
    %5757 = vset.pattern.permute.xlu0 %v5755
    %5758 = vperm.xlu0 %5757, %v5753
    %v5759 = vpop.permute.xlu0 %5758
    %v5760 = vlaneseq
    %v5761 = vshrl.u32 %v5760, 7
    %v5762 = vadd.s32 %v5761, 8
    %5763 = vset.pattern.permute.xlu0 %v5762
    %5764 = vperm.xlu0 %5763, %v5753
    %v5765 = vpop.permute.xlu0 %5764
    %v5766 = vperm.slane %v5569, 3
    %v5767 = vlaneseq
    %v5768 = vshrl.u32 %v5767, 7
    %5770 = vset.pattern.permute.xlu0 %v5768
    %5771 = vperm.xlu0 %5770, %v5766
    %v5772 = vpop.permute.xlu0 %5771
    %v5773 = vlaneseq
    %v5774 = vshrl.u32 %v5773, 7
    %v5775 = vadd.s32 %v5774, 8
    %5776 = vset.pattern.permute.xlu0 %v5775
    %5777 = vperm.xlu0 %5776, %v5766
    %v5778 = vpop.permute.xlu0 %5777
    %v5779 = vperm.slane %v5569, 4
    %v5780 = vlaneseq
    %v5781 = vshrl.u32 %v5780, 7
    %5783 = vset.pattern.permute.xlu0 %v5781
    %5784 = vperm.xlu0 %5783, %v5779
    %v5785 = vpop.permute.xlu0 %5784
    %v5786 = vlaneseq
    %v5787 = vshrl.u32 %v5786, 7
    %v5788 = vadd.s32 %v5787, 8
    %5789 = vset.pattern.permute.xlu0 %v5788
    %5790 = vperm.xlu0 %5789, %v5779
    %v5791 = vpop.permute.xlu0 %5790
    %v5792 = vperm.slane %v5569, 5
    %v5793 = vlaneseq
    %v5794 = vshrl.u32 %v5793, 7
    %5796 = vset.pattern.permute.xlu0 %v5794
    %5797 = vperm.xlu0 %5796, %v5792
    %v5798 = vpop.permute.xlu0 %5797
    %v5799 = vlaneseq
    %v5800 = vshrl.u32 %v5799, 7
    %v5801 = vadd.s32 %v5800, 8
    %5802 = vset.pattern.permute.xlu0 %v5801
    %5803 = vperm.xlu0 %5802, %v5792
    %v5804 = vpop.permute.xlu0 %5803
    %v5805 = vperm.slane %v5569, 6
    %v5806 = vlaneseq
    %v5807 = vshrl.u32 %v5806, 7
    %5809 = vset.pattern.permute.xlu0 %v5807
    %5810 = vperm.xlu0 %5809, %v5805
    %v5811 = vpop.permute.xlu0 %5810
    %v5812 = vlaneseq
    %v5813 = vshrl.u32 %v5812, 7
    %v5814 = vadd.s32 %v5813, 8
    %5815 = vset.pattern.permute.xlu0 %v5814
    %5816 = vperm.xlu0 %5815, %v5805
    %v5817 = vpop.permute.xlu0 %5816
    %v5818 = vperm.slane %v5569, 7
    %v5819 = vlaneseq
    %v5820 = vshrl.u32 %v5819, 7
    %5822 = vset.pattern.permute.xlu0 %v5820
    %5823 = vperm.xlu0 %5822, %v5818
    %v5824 = vpop.permute.xlu0 %5823
    %v5825 = vlaneseq
    %v5826 = vshrl.u32 %v5825, 7
    %v5827 = vadd.s32 %v5826, 8
    %5828 = vset.pattern.permute.xlu0 %v5827
    %5829 = vperm.xlu0 %5828, %v5818
    %v5830 = vpop.permute.xlu0 %5829
    %v5831 = vperm.slane %v5591, 0
    %v5832 = vlaneseq
    %v5833 = vshrl.u32 %v5832, 7
    %5835 = vset.pattern.permute.xlu0 %v5833
    %5836 = vperm.xlu0 %5835, %v5831
    %v5837 = vpop.permute.xlu0 %5836
    %v5838 = vlaneseq
    %v5839 = vshrl.u32 %v5838, 7
    %v5840 = vadd.s32 %v5839, 8
    %5841 = vset.pattern.permute.xlu0 %v5840
    %5842 = vperm.xlu0 %5841, %v5831
    %v5843 = vpop.permute.xlu0 %5842
    %v5844 = vperm.slane %v5591, 1
    %v5845 = vlaneseq
    %v5846 = vshrl.u32 %v5845, 7
    %5848 = vset.pattern.permute.xlu0 %v5846
    %5849 = vperm.xlu0 %5848, %v5844
    %v5850 = vpop.permute.xlu0 %5849
    %v5851 = vlaneseq
    %v5852 = vshrl.u32 %v5851, 7
    %v5853 = vadd.s32 %v5852, 8
    %5854 = vset.pattern.permute.xlu0 %v5853
    %5855 = vperm.xlu0 %5854, %v5844
    %v5856 = vpop.permute.xlu0 %5855
    %v5857 = vperm.slane %v5591, 2
    %v5858 = vlaneseq
    %v5859 = vshrl.u32 %v5858, 7
    %5861 = vset.pattern.permute.xlu0 %v5859
    %5862 = vperm.xlu0 %5861, %v5857
    %v5863 = vpop.permute.xlu0 %5862
    %v5864 = vlaneseq
    %v5865 = vshrl.u32 %v5864, 7
    %v5866 = vadd.s32 %v5865, 8
    %5867 = vset.pattern.permute.xlu0 %v5866
    %5868 = vperm.xlu0 %5867, %v5857
    %v5869 = vpop.permute.xlu0 %5868
    %v5870 = vperm.slane %v5591, 3
    %v5871 = vlaneseq
    %v5872 = vshrl.u32 %v5871, 7
    %5874 = vset.pattern.permute.xlu0 %v5872
    %5875 = vperm.xlu0 %5874, %v5870
    %v5876 = vpop.permute.xlu0 %5875
    %v5877 = vlaneseq
    %v5878 = vshrl.u32 %v5877, 7
    %v5879 = vadd.s32 %v5878, 8
    %5880 = vset.pattern.permute.xlu0 %v5879
    %5881 = vperm.xlu0 %5880, %v5870
    %v5882 = vpop.permute.xlu0 %5881
    %v5883 = vperm.slane %v5591, 4
    %v5884 = vlaneseq
    %v5885 = vshrl.u32 %v5884, 7
    %5887 = vset.pattern.permute.xlu0 %v5885
    %5888 = vperm.xlu0 %5887, %v5883
    %v5889 = vpop.permute.xlu0 %5888
    %v5890 = vlaneseq
    %v5891 = vshrl.u32 %v5890, 7
    %v5892 = vadd.s32 %v5891, 8
    %5893 = vset.pattern.permute.xlu0 %v5892
    %5894 = vperm.xlu0 %5893, %v5883
    %v5895 = vpop.permute.xlu0 %5894
    %v5896 = vperm.slane %v5591, 5
    %v5897 = vlaneseq
    %v5898 = vshrl.u32 %v5897, 7
    %5900 = vset.pattern.permute.xlu0 %v5898
    %5901 = vperm.xlu0 %5900, %v5896
    %v5902 = vpop.permute.xlu0 %5901
    %v5903 = vlaneseq
    %v5904 = vshrl.u32 %v5903, 7
    %v5905 = vadd.s32 %v5904, 8
    %5906 = vset.pattern.permute.xlu0 %v5905
    %5907 = vperm.xlu0 %5906, %v5896
    %v5908 = vpop.permute.xlu0 %5907
    %v5909 = vperm.slane %v5591, 6
    %v5910 = vlaneseq
    %v5911 = vshrl.u32 %v5910, 7
    %5913 = vset.pattern.permute.xlu0 %v5911
    %5914 = vperm.xlu0 %5913, %v5909
    %v5915 = vpop.permute.xlu0 %5914
    %v5916 = vlaneseq
    %v5917 = vshrl.u32 %v5916, 7
    %v5918 = vadd.s32 %v5917, 8
    %5919 = vset.pattern.permute.xlu0 %v5918
    %5920 = vperm.xlu0 %5919, %v5909
    %v5921 = vpop.permute.xlu0 %5920
    %v5922 = vperm.slane %v5591, 7
    %v5923 = vlaneseq
    %v5924 = vshrl.u32 %v5923, 7
    %5926 = vset.pattern.permute.xlu0 %v5924
    %5927 = vperm.xlu0 %5926, %v5922
    %v5928 = vpop.permute.xlu0 %5927
    %v5929 = vlaneseq
    %v5930 = vshrl.u32 %v5929, 7
    %v5931 = vadd.s32 %v5930, 8
    %5932 = vset.pattern.permute.xlu0 %v5931
    %5933 = vperm.xlu0 %5932, %v5922
    %v5934 = vpop.permute.xlu0 %5933
    %v5935 = vperm.slane %v5613, 0
    %v5936 = vlaneseq
    %v5937 = vshrl.u32 %v5936, 7
    %5939 = vset.pattern.permute.xlu0 %v5937
    %5940 = vperm.xlu0 %5939, %v5935
    %v5941 = vpop.permute.xlu0 %5940
    %v5942 = vlaneseq
    %v5943 = vshrl.u32 %v5942, 7
    %v5944 = vadd.s32 %v5943, 8
    %5945 = vset.pattern.permute.xlu0 %v5944
    %5946 = vperm.xlu0 %5945, %v5935
    %v5947 = vpop.permute.xlu0 %5946
    %v5948 = vperm.slane %v5613, 1
    %v5949 = vlaneseq
    %v5950 = vshrl.u32 %v5949, 7
    %5952 = vset.pattern.permute.xlu0 %v5950
    %5953 = vperm.xlu0 %5952, %v5948
    %v5954 = vpop.permute.xlu0 %5953
    %v5955 = vlaneseq
    %v5956 = vshrl.u32 %v5955, 7
    %v5957 = vadd.s32 %v5956, 8
    %5958 = vset.pattern.permute.xlu0 %v5957
    %5959 = vperm.xlu0 %5958, %v5948
    %v5960 = vpop.permute.xlu0 %5959
    %v5961 = vperm.slane %v5613, 2
    %v5962 = vlaneseq
    %v5963 = vshrl.u32 %v5962, 7
    %5965 = vset.pattern.permute.xlu0 %v5963
    %5966 = vperm.xlu0 %5965, %v5961
    %v5967 = vpop.permute.xlu0 %5966
    %v5968 = vlaneseq
    %v5969 = vshrl.u32 %v5968, 7
    %v5970 = vadd.s32 %v5969, 8
    %5971 = vset.pattern.permute.xlu0 %v5970
    %5972 = vperm.xlu0 %5971, %v5961
    %v5973 = vpop.permute.xlu0 %5972
    %v5974 = vperm.slane %v5613, 3
    %v5975 = vlaneseq
    %v5976 = vshrl.u32 %v5975, 7
    %5978 = vset.pattern.permute.xlu0 %v5976
    %5979 = vperm.xlu0 %5978, %v5974
    %v5980 = vpop.permute.xlu0 %5979
    %v5981 = vlaneseq
    %v5982 = vshrl.u32 %v5981, 7
    %v5983 = vadd.s32 %v5982, 8
    %5984 = vset.pattern.permute.xlu0 %v5983
    %5985 = vperm.xlu0 %5984, %v5974
    %v5986 = vpop.permute.xlu0 %5985
    %v5987 = vperm.slane %v5613, 4
    %v5988 = vlaneseq
    %v5989 = vshrl.u32 %v5988, 7
    %5991 = vset.pattern.permute.xlu0 %v5989
    %5992 = vperm.xlu0 %5991, %v5987
    %v5993 = vpop.permute.xlu0 %5992
    %v5994 = vlaneseq
    %v5995 = vshrl.u32 %v5994, 7
    %v5996 = vadd.s32 %v5995, 8
    %5997 = vset.pattern.permute.xlu0 %v5996
    %5998 = vperm.xlu0 %5997, %v5987
    %v5999 = vpop.permute.xlu0 %5998
    %v6000 = vperm.slane %v5613, 5
    %v6001 = vlaneseq
    %v6002 = vshrl.u32 %v6001, 7
    %6004 = vset.pattern.permute.xlu0 %v6002
    %6005 = vperm.xlu0 %6004, %v6000
    %v6006 = vpop.permute.xlu0 %6005
    %v6007 = vlaneseq
    %v6008 = vshrl.u32 %v6007, 7
    %v6009 = vadd.s32 %v6008, 8
    %6010 = vset.pattern.permute.xlu0 %v6009
    %6011 = vperm.xlu0 %6010, %v6000
    %v6012 = vpop.permute.xlu0 %6011
    %v6013 = vperm.slane %v5613, 6
    %v6014 = vlaneseq
    %v6015 = vshrl.u32 %v6014, 7
    %6017 = vset.pattern.permute.xlu0 %v6015
    %6018 = vperm.xlu0 %6017, %v6013
    %v6019 = vpop.permute.xlu0 %6018
    %v6020 = vlaneseq
    %v6021 = vshrl.u32 %v6020, 7
    %v6022 = vadd.s32 %v6021, 8
    %6023 = vset.pattern.permute.xlu0 %v6022
    %6024 = vperm.xlu0 %6023, %v6013
    %v6025 = vpop.permute.xlu0 %6024
    %v6026 = vperm.slane %v5613, 7
    %v6027 = vlaneseq
    %v6028 = vshrl.u32 %v6027, 7
    %6030 = vset.pattern.permute.xlu0 %v6028
    %6031 = vperm.xlu0 %6030, %v6026
    %v6032 = vpop.permute.xlu0 %6031
    %v6033 = vlaneseq
    %v6034 = vshrl.u32 %v6033, 7
    %v6035 = vadd.s32 %v6034, 8
    %6036 = vset.pattern.permute.xlu0 %v6035
    %6037 = vperm.xlu0 %6036, %v6026
    %v6038 = vpop.permute.xlu0 %6037
    %v6103 = vsel %vm5617, -1e+09, %v5629
    %v6104 = vsel %vm5618, -1e+09, %v5635
    %v6105 = vsel %vm5617, -1e+09, %v5642
    %v6106 = vsel %vm5618, -1e+09, %v5648
    %v6107 = vsel %vm5617, -1e+09, %v5655
    %v6108 = vsel %vm5618, -1e+09, %v5661
    %v6109 = vsel %vm5617, -1e+09, %v5668
    %v6110 = vsel %vm5618, -1e+09, %v5674
    %v6111 = vsel %vm5617, -1e+09, %v5681
    %v6112 = vsel %vm5618, -1e+09, %v5687
    %v6113 = vsel %vm5617, -1e+09, %v5694
    %v6114 = vsel %vm5618, -1e+09, %v5700
    %v6115 = vsel %vm5617, -1e+09, %v5707
    %v6116 = vsel %vm5618, -1e+09, %v5713
    %v6117 = vsel %vm5617, -1e+09, %v5720
    %v6118 = vsel %vm5618, -1e+09, %v5726
    %v6119 = vsel %vm5617, -1e+09, %v5733
    %v6120 = vsel %vm5618, -1e+09, %v5739
    %v6121 = vsel %vm5617, -1e+09, %v5746
    %v6122 = vsel %vm5618, -1e+09, %v5752
    %v6123 = vsel %vm5617, -1e+09, %v5759
    %v6124 = vsel %vm5618, -1e+09, %v5765
    %v6125 = vsel %vm5617, -1e+09, %v5772
    %v6126 = vsel %vm5618, -1e+09, %v5778
    %v6127 = vsel %vm5617, -1e+09, %v5785
    %v6128 = vsel %vm5618, -1e+09, %v5791
    %v6129 = vsel %vm5617, -1e+09, %v5798
    %v6130 = vsel %vm5618, -1e+09, %v5804
    %v6131 = vsel %vm5617, -1e+09, %v5811
    %v6132 = vsel %vm5618, -1e+09, %v5817
    %v6133 = vsel %vm5617, -1e+09, %v5824
    %v6134 = vsel %vm5618, -1e+09, %v5830
    %v6135 = vsel %vm5617, -1e+09, %v5837
    %v6136 = vsel %vm5618, -1e+09, %v5843
    %v6137 = vsel %vm5617, -1e+09, %v5850
    %v6138 = vsel %vm5618, -1e+09, %v5856
    %v6139 = vsel %vm5617, -1e+09, %v5863
    %v6140 = vsel %vm5618, -1e+09, %v5869
    %v6141 = vsel %vm5617, -1e+09, %v5876
    %v6142 = vsel %vm5618, -1e+09, %v5882
    %v6143 = vsel %vm5617, -1e+09, %v5889
    %v6144 = vsel %vm5618, -1e+09, %v5895
    %v6145 = vsel %vm5617, -1e+09, %v5902
    %v6146 = vsel %vm5618, -1e+09, %v5908
    %v6147 = vsel %vm5617, -1e+09, %v5915
    %v6148 = vsel %vm5618, -1e+09, %v5921
    %v6149 = vsel %vm5617, -1e+09, %v5928
    %v6150 = vsel %vm5618, -1e+09, %v5934
    %v6151 = vsel %vm5617, -1e+09, %v5941
    %v6152 = vsel %vm5618, -1e+09, %v5947
    %v6153 = vsel %vm5617, -1e+09, %v5954
    %v6154 = vsel %vm5618, -1e+09, %v5960
    %v6155 = vsel %vm5617, -1e+09, %v5967
    %v6156 = vsel %vm5618, -1e+09, %v5973
    %v6157 = vsel %vm5617, -1e+09, %v5980
    %v6158 = vsel %vm5618, -1e+09, %v5986
    %v6159 = vsel %vm5617, -1e+09, %v5993
    %v6160 = vsel %vm5618, -1e+09, %v5999
    %v6161 = vsel %vm5617, -1e+09, %v6006
    %v6162 = vsel %vm5618, -1e+09, %v6012
    %v6163 = vsel %vm5617, -1e+09, %v6019
    %v6164 = vsel %vm5618, -1e+09, %v6025
    %v6165 = vsel %vm5617, -1e+09, %v6032
    %v6166 = vsel %vm5618, -1e+09, %v6038
    %v6167 = vmul.f32 %v6103, 0.35355338
    %v6168 = vmul.f32 %v6104, 0.35355338
    %v6169 = vmul.f32 %v6105, 0.35355338
    %v6170 = vmul.f32 %v6106, 0.35355338
    %v6171 = vmul.f32 %v6107, 0.35355338
    %v6172 = vmul.f32 %v6108, 0.35355338
    %v6173 = vmul.f32 %v6109, 0.35355338
    %v6174 = vmul.f32 %v6110, 0.35355338
    %v6175 = vmul.f32 %v6111, 0.35355338
    %v6176 = vmul.f32 %v6112, 0.35355338
    %v6177 = vmul.f32 %v6113, 0.35355338
    %v6178 = vmul.f32 %v6114, 0.35355338
    %v6179 = vmul.f32 %v6115, 0.35355338
    %v6180 = vmul.f32 %v6116, 0.35355338
    %v6181 = vmul.f32 %v6117, 0.35355338
    %v6182 = vmul.f32 %v6118, 0.35355338
    %v6183 = vmul.f32 %v6119, 0.35355338
    %v6184 = vmul.f32 %v6120, 0.35355338
    %v6185 = vmul.f32 %v6121, 0.35355338
    %v6186 = vmul.f32 %v6122, 0.35355338
    %v6187 = vmul.f32 %v6123, 0.35355338
    %v6188 = vmul.f32 %v6124, 0.35355338
    %v6189 = vmul.f32 %v6125, 0.35355338
    %v6190 = vmul.f32 %v6126, 0.35355338
    %v6191 = vmul.f32 %v6127, 0.35355338
    %v6192 = vmul.f32 %v6128, 0.35355338
    %v6193 = vmul.f32 %v6129, 0.35355338
    %v6194 = vmul.f32 %v6130, 0.35355338
    %v6195 = vmul.f32 %v6131, 0.35355338
    %v6196 = vmul.f32 %v6132, 0.35355338
    %v6197 = vmul.f32 %v6133, 0.35355338
    %v6198 = vmul.f32 %v6134, 0.35355338
    %v6199 = vmul.f32 %v6135, 0.35355338
    %v6200 = vmul.f32 %v6136, 0.35355338
    %v6201 = vmul.f32 %v6137, 0.35355338
    %v6202 = vmul.f32 %v6138, 0.35355338
    %v6203 = vmul.f32 %v6139, 0.35355338
    %v6204 = vmul.f32 %v6140, 0.35355338
    %v6205 = vmul.f32 %v6141, 0.35355338
    %v6206 = vmul.f32 %v6142, 0.35355338
    %v6207 = vmul.f32 %v6143, 0.35355338
    %v6208 = vmul.f32 %v6144, 0.35355338
    %v6209 = vmul.f32 %v6145, 0.35355338
    %v6210 = vmul.f32 %v6146, 0.35355338
    %v6211 = vmul.f32 %v6147, 0.35355338
    %v6212 = vmul.f32 %v6148, 0.35355338
    %v6213 = vmul.f32 %v6149, 0.35355338
    %v6214 = vmul.f32 %v6150, 0.35355338
    %v6215 = vmul.f32 %v6151, 0.35355338
    %v6216 = vmul.f32 %v6152, 0.35355338
    %v6217 = vmul.f32 %v6153, 0.35355338
    %v6218 = vmul.f32 %v6154, 0.35355338
    %v6219 = vmul.f32 %v6155, 0.35355338
    %v6220 = vmul.f32 %v6156, 0.35355338
    %v6221 = vmul.f32 %v6157, 0.35355338
    %v6222 = vmul.f32 %v6158, 0.35355338
    %v6223 = vmul.f32 %v6159, 0.35355338
    %v6224 = vmul.f32 %v6160, 0.35355338
    %v6225 = vmul.f32 %v6161, 0.35355338
    %v6226 = vmul.f32 %v6162, 0.35355338
    %v6227 = vmul.f32 %v6163, 0.35355338
    %v6228 = vmul.f32 %v6164, 0.35355338
    %v6229 = vmul.f32 %v6165, 0.35355338
    %v6230 = vmul.f32 %v6166, 0.35355338
    %6295 = vset.pattern.permute.xlu0 0
    %6296 = vperm.xlu0 %6295, %v6167
    %v6297 = vpop.permute.xlu0 %6296
    %6298 = vset.pattern.permute.xlu0 0
    %6299 = vperm.xlu0 %6298, %v6168
    %v6300 = vpop.permute.xlu0 %6299
    %6301 = vset.pattern.permute.xlu0 0
    %6302 = vperm.xlu0 %6301, %v6169
    %v6303 = vpop.permute.xlu0 %6302
    %6304 = vset.pattern.permute.xlu0 0
    %6305 = vperm.xlu0 %6304, %v6170
    %v6306 = vpop.permute.xlu0 %6305
    %6307 = vset.pattern.permute.xlu0 0
    %6308 = vperm.xlu0 %6307, %v6171
    %v6309 = vpop.permute.xlu0 %6308
    %6310 = vset.pattern.permute.xlu0 0
    %6311 = vperm.xlu0 %6310, %v6172
    %v6312 = vpop.permute.xlu0 %6311
    %6313 = vset.pattern.permute.xlu0 0
    %6314 = vperm.xlu0 %6313, %v6173
    %v6315 = vpop.permute.xlu0 %6314
    %6316 = vset.pattern.permute.xlu0 0
    %6317 = vperm.xlu0 %6316, %v6174
    %v6318 = vpop.permute.xlu0 %6317
    %6319 = vset.pattern.permute.xlu0 0
    %6320 = vperm.xlu0 %6319, %v6175
    %v6321 = vpop.permute.xlu0 %6320
    %6322 = vset.pattern.permute.xlu0 0
    %6323 = vperm.xlu0 %6322, %v6176
    %v6324 = vpop.permute.xlu0 %6323
    %6325 = vset.pattern.permute.xlu0 0
    %6326 = vperm.xlu0 %6325, %v6177
    %v6327 = vpop.permute.xlu0 %6326
    %6328 = vset.pattern.permute.xlu0 0
    %6329 = vperm.xlu0 %6328, %v6178
    %v6330 = vpop.permute.xlu0 %6329
    %6331 = vset.pattern.permute.xlu0 0
    %6332 = vperm.xlu0 %6331, %v6179
    %v6333 = vpop.permute.xlu0 %6332
    %6334 = vset.pattern.permute.xlu0 0
    %6335 = vperm.xlu0 %6334, %v6180
    %v6336 = vpop.permute.xlu0 %6335
    %6337 = vset.pattern.permute.xlu0 0
    %6338 = vperm.xlu0 %6337, %v6181
    %v6339 = vpop.permute.xlu0 %6338
    %6340 = vset.pattern.permute.xlu0 0
    %6341 = vperm.xlu0 %6340, %v6182
    %v6342 = vpop.permute.xlu0 %6341
    %6343 = vset.pattern.permute.xlu0 0
    %6344 = vperm.xlu0 %6343, %v6183
    %v6345 = vpop.permute.xlu0 %6344
    %6346 = vset.pattern.permute.xlu0 0
    %6347 = vperm.xlu0 %6346, %v6184
    %v6348 = vpop.permute.xlu0 %6347
    %6349 = vset.pattern.permute.xlu0 0
    %6350 = vperm.xlu0 %6349, %v6185
    %v6351 = vpop.permute.xlu0 %6350
    %6352 = vset.pattern.permute.xlu0 0
    %6353 = vperm.xlu0 %6352, %v6186
    %v6354 = vpop.permute.xlu0 %6353
    %6355 = vset.pattern.permute.xlu0 0
    %6356 = vperm.xlu0 %6355, %v6187
    %v6357 = vpop.permute.xlu0 %6356
    %6358 = vset.pattern.permute.xlu0 0
    %6359 = vperm.xlu0 %6358, %v6188
    %v6360 = vpop.permute.xlu0 %6359
    %6361 = vset.pattern.permute.xlu0 0
    %6362 = vperm.xlu0 %6361, %v6189
    %v6363 = vpop.permute.xlu0 %6362
    %6364 = vset.pattern.permute.xlu0 0
    %6365 = vperm.xlu0 %6364, %v6190
    %v6366 = vpop.permute.xlu0 %6365
    %6367 = vset.pattern.permute.xlu0 0
    %6368 = vperm.xlu0 %6367, %v6191
    %v6369 = vpop.permute.xlu0 %6368
    %6370 = vset.pattern.permute.xlu0 0
    %6371 = vperm.xlu0 %6370, %v6192
    %v6372 = vpop.permute.xlu0 %6371
    %6373 = vset.pattern.permute.xlu0 0
    %6374 = vperm.xlu0 %6373, %v6193
    %v6375 = vpop.permute.xlu0 %6374
    %6376 = vset.pattern.permute.xlu0 0
    %6377 = vperm.xlu0 %6376, %v6194
    %v6378 = vpop.permute.xlu0 %6377
    %6379 = vset.pattern.permute.xlu0 0
    %6380 = vperm.xlu0 %6379, %v6195
    %v6381 = vpop.permute.xlu0 %6380
    %6382 = vset.pattern.permute.xlu0 0
    %6383 = vperm.xlu0 %6382, %v6196
    %v6384 = vpop.permute.xlu0 %6383
    %6385 = vset.pattern.permute.xlu0 0
    %6386 = vperm.xlu0 %6385, %v6197
    %v6387 = vpop.permute.xlu0 %6386
    %6388 = vset.pattern.permute.xlu0 0
    %6389 = vperm.xlu0 %6388, %v6198
    %v6390 = vpop.permute.xlu0 %6389
    %6391 = vset.pattern.permute.xlu0 0
    %6392 = vperm.xlu0 %6391, %v6199
    %v6393 = vpop.permute.xlu0 %6392
    %6394 = vset.pattern.permute.xlu0 0
    %6395 = vperm.xlu0 %6394, %v6200
    %v6396 = vpop.permute.xlu0 %6395
    %6397 = vset.pattern.permute.xlu0 0
    %6398 = vperm.xlu0 %6397, %v6201
    %v6399 = vpop.permute.xlu0 %6398
    %6400 = vset.pattern.permute.xlu0 0
    %6401 = vperm.xlu0 %6400, %v6202
    %v6402 = vpop.permute.xlu0 %6401
    %6403 = vset.pattern.permute.xlu0 0
    %6404 = vperm.xlu0 %6403, %v6203
    %v6405 = vpop.permute.xlu0 %6404
    %6406 = vset.pattern.permute.xlu0 0
    %6407 = vperm.xlu0 %6406, %v6204
    %v6408 = vpop.permute.xlu0 %6407
    %6409 = vset.pattern.permute.xlu0 0
    %6410 = vperm.xlu0 %6409, %v6205
    %v6411 = vpop.permute.xlu0 %6410
    %6412 = vset.pattern.permute.xlu0 0
    %6413 = vperm.xlu0 %6412, %v6206
    %v6414 = vpop.permute.xlu0 %6413
    %6415 = vset.pattern.permute.xlu0 0
    %6416 = vperm.xlu0 %6415, %v6207
    %v6417 = vpop.permute.xlu0 %6416
    %6418 = vset.pattern.permute.xlu0 0
    %6419 = vperm.xlu0 %6418, %v6208
    %v6420 = vpop.permute.xlu0 %6419
    %6421 = vset.pattern.permute.xlu0 0
    %6422 = vperm.xlu0 %6421, %v6209
    %v6423 = vpop.permute.xlu0 %6422
    %6424 = vset.pattern.permute.xlu0 0
    %6425 = vperm.xlu0 %6424, %v6210
    %v6426 = vpop.permute.xlu0 %6425
    %6427 = vset.pattern.permute.xlu0 0
    %6428 = vperm.xlu0 %6427, %v6211
    %v6429 = vpop.permute.xlu0 %6428
    %6430 = vset.pattern.permute.xlu0 0
    %6431 = vperm.xlu0 %6430, %v6212
    %v6432 = vpop.permute.xlu0 %6431
    %6433 = vset.pattern.permute.xlu0 0
    %6434 = vperm.xlu0 %6433, %v6213
    %v6435 = vpop.permute.xlu0 %6434
    %6436 = vset.pattern.permute.xlu0 0
    %6437 = vperm.xlu0 %6436, %v6214
    %v6438 = vpop.permute.xlu0 %6437
    %6439 = vset.pattern.permute.xlu0 0
    %6440 = vperm.xlu0 %6439, %v6215
    %v6441 = vpop.permute.xlu0 %6440
    %6442 = vset.pattern.permute.xlu0 0
    %6443 = vperm.xlu0 %6442, %v6216
    %v6444 = vpop.permute.xlu0 %6443
    %6445 = vset.pattern.permute.xlu0 0
    %6446 = vperm.xlu0 %6445, %v6217
    %v6447 = vpop.permute.xlu0 %6446
    %6448 = vset.pattern.permute.xlu0 0
    %6449 = vperm.xlu0 %6448, %v6218
    %v6450 = vpop.permute.xlu0 %6449
    %6451 = vset.pattern.permute.xlu0 0
    %6452 = vperm.xlu0 %6451, %v6219
    %v6453 = vpop.permute.xlu0 %6452
    %6454 = vset.pattern.permute.xlu0 0
    %6455 = vperm.xlu0 %6454, %v6220
    %v6456 = vpop.permute.xlu0 %6455
    %6457 = vset.pattern.permute.xlu0 0
    %6458 = vperm.xlu0 %6457, %v6221
    %v6459 = vpop.permute.xlu0 %6458
    %6460 = vset.pattern.permute.xlu0 0
    %6461 = vperm.xlu0 %6460, %v6222
    %v6462 = vpop.permute.xlu0 %6461
    %6463 = vset.pattern.permute.xlu0 0
    %6464 = vperm.xlu0 %6463, %v6223
    %v6465 = vpop.permute.xlu0 %6464
    %6466 = vset.pattern.permute.xlu0 0
    %6467 = vperm.xlu0 %6466, %v6224
    %v6468 = vpop.permute.xlu0 %6467
    %6469 = vset.pattern.permute.xlu0 0
    %6470 = vperm.xlu0 %6469, %v6225
    %v6471 = vpop.permute.xlu0 %6470
    %6472 = vset.pattern.permute.xlu0 0
    %6473 = vperm.xlu0 %6472, %v6226
    %v6474 = vpop.permute.xlu0 %6473
    %6475 = vset.pattern.permute.xlu0 0
    %6476 = vperm.xlu0 %6475, %v6227
    %v6477 = vpop.permute.xlu0 %6476
    %6478 = vset.pattern.permute.xlu0 0
    %6479 = vperm.xlu0 %6478, %v6228
    %v6480 = vpop.permute.xlu0 %6479
    %6481 = vset.pattern.permute.xlu0 0
    %6482 = vperm.xlu0 %6481, %v6229
    %v6483 = vpop.permute.xlu0 %6482
    %6484 = vset.pattern.permute.xlu0 0
    %6485 = vperm.xlu0 %6484, %v6230
    %v6486 = vpop.permute.xlu0 %6485
    %v6487 = vperm.slane %v6297, %v1636
    %v6488 = vperm.slane %v6300, %v1638
    %v6489 = vsel %vm1640, %v6488, %v6487
    %v6490 = vperm.slane %v6303, %v1636
    %v6491 = vperm.slane %v6306, %v1638
    %v6492 = vsel %vm1640, %v6491, %v6490
    %v6493 = vperm.slane %v6309, %v1636
    %v6494 = vperm.slane %v6312, %v1638
    %v6495 = vsel %vm1640, %v6494, %v6493
    %v6496 = vperm.slane %v6315, %v1636
    %v6497 = vperm.slane %v6318, %v1638
    %v6498 = vsel %vm1640, %v6497, %v6496
    %v6499 = vperm.slane %v6321, %v1636
    %v6500 = vperm.slane %v6324, %v1638
    %v6501 = vsel %vm1640, %v6500, %v6499
    %v6502 = vperm.slane %v6327, %v1636
    %v6503 = vperm.slane %v6330, %v1638
    %v6504 = vsel %vm1640, %v6503, %v6502
    %v6505 = vperm.slane %v6333, %v1636
    %v6506 = vperm.slane %v6336, %v1638
    %v6507 = vsel %vm1640, %v6506, %v6505
    %v6508 = vperm.slane %v6339, %v1636
    %v6509 = vperm.slane %v6342, %v1638
    %v6510 = vsel %vm1640, %v6509, %v6508
    %v6511 = vperm.slane %v6345, %v1636
    %v6512 = vperm.slane %v6348, %v1638
    %v6513 = vsel %vm1640, %v6512, %v6511
    %v6514 = vperm.slane %v6351, %v1636
    %v6515 = vperm.slane %v6354, %v1638
    %v6516 = vsel %vm1640, %v6515, %v6514
    %v6517 = vperm.slane %v6357, %v1636
    %v6518 = vperm.slane %v6360, %v1638
    %v6519 = vsel %vm1640, %v6518, %v6517
    %v6520 = vperm.slane %v6363, %v1636
    %v6521 = vperm.slane %v6366, %v1638
    %v6522 = vsel %vm1640, %v6521, %v6520
    %v6523 = vperm.slane %v6369, %v1636
    %v6524 = vperm.slane %v6372, %v1638
    %v6525 = vsel %vm1640, %v6524, %v6523
    %v6526 = vperm.slane %v6375, %v1636
    %v6527 = vperm.slane %v6378, %v1638
    %v6528 = vsel %vm1640, %v6527, %v6526
    %v6529 = vperm.slane %v6381, %v1636
    %v6530 = vperm.slane %v6384, %v1638
    %v6531 = vsel %vm1640, %v6530, %v6529
    %v6532 = vperm.slane %v6387, %v1636
    %v6533 = vperm.slane %v6390, %v1638
    %v6534 = vsel %vm1640, %v6533, %v6532
    %v6535 = vperm.slane %v6393, %v1636
    %v6536 = vperm.slane %v6396, %v1638
    %v6537 = vsel %vm1640, %v6536, %v6535
    %v6538 = vperm.slane %v6399, %v1636
    %v6539 = vperm.slane %v6402, %v1638
    %v6540 = vsel %vm1640, %v6539, %v6538
    %v6541 = vperm.slane %v6405, %v1636
    %v6542 = vperm.slane %v6408, %v1638
    %v6543 = vsel %vm1640, %v6542, %v6541
    %v6544 = vperm.slane %v6411, %v1636
    %v6545 = vperm.slane %v6414, %v1638
    %v6546 = vsel %vm1640, %v6545, %v6544
    %v6547 = vperm.slane %v6417, %v1636
    %v6548 = vperm.slane %v6420, %v1638
    %v6549 = vsel %vm1640, %v6548, %v6547
    %v6550 = vperm.slane %v6423, %v1636
    %v6551 = vperm.slane %v6426, %v1638
    %v6552 = vsel %vm1640, %v6551, %v6550
    %v6553 = vperm.slane %v6429, %v1636
    %v6554 = vperm.slane %v6432, %v1638
    %v6555 = vsel %vm1640, %v6554, %v6553
    %v6556 = vperm.slane %v6435, %v1636
    %v6557 = vperm.slane %v6438, %v1638
    %v6558 = vsel %vm1640, %v6557, %v6556
    %v6559 = vperm.slane %v6441, %v1636
    %v6560 = vperm.slane %v6444, %v1638
    %v6561 = vsel %vm1640, %v6560, %v6559
    %v6562 = vperm.slane %v6447, %v1636
    %v6563 = vperm.slane %v6450, %v1638
    %v6564 = vsel %vm1640, %v6563, %v6562
    %v6565 = vperm.slane %v6453, %v1636
    %v6566 = vperm.slane %v6456, %v1638
    %v6567 = vsel %vm1640, %v6566, %v6565
    %v6568 = vperm.slane %v6459, %v1636
    %v6569 = vperm.slane %v6462, %v1638
    %v6570 = vsel %vm1640, %v6569, %v6568
    %v6571 = vperm.slane %v6465, %v1636
    %v6572 = vperm.slane %v6468, %v1638
    %v6573 = vsel %vm1640, %v6572, %v6571
    %v6574 = vperm.slane %v6471, %v1636
    %v6575 = vperm.slane %v6474, %v1638
    %v6576 = vsel %vm1640, %v6575, %v6574
    %v6577 = vperm.slane %v6477, %v1636
    %v6578 = vperm.slane %v6480, %v1638
    %v6579 = vsel %vm1640, %v6578, %v6577
    %v6580 = vperm.slane %v6483, %v1636
    %v6581 = vperm.slane %v6486, %v1638
    %v6582 = vsel %vm1640, %v6581, %v6580
    %v6583 = vsel %vm1735, %v6492, %v6489
    %v6584 = vsel %vm1737, %v6495, %v6583
    %v6585 = vsel %vm1739, %v6498, %v6584
    %v6586 = vsel %vm1741, %v6501, %v6585
    %v6587 = vsel %vm1743, %v6504, %v6586
    %v6588 = vsel %vm1745, %v6507, %v6587
    %v6589 = vsel %vm1747, %v6510, %v6588
    %v6590 = vsel %vm1735, %v6516, %v6513
    %v6591 = vsel %vm1737, %v6519, %v6590
    %v6592 = vsel %vm1739, %v6522, %v6591
    %v6593 = vsel %vm1741, %v6525, %v6592
    %v6594 = vsel %vm1743, %v6528, %v6593
    %v6595 = vsel %vm1745, %v6531, %v6594
    %v6596 = vsel %vm1747, %v6534, %v6595
    %v6597 = vsel %vm1735, %v6540, %v6537
    %v6598 = vsel %vm1737, %v6543, %v6597
    %v6599 = vsel %vm1739, %v6546, %v6598
    %v6600 = vsel %vm1741, %v6549, %v6599
    %v6601 = vsel %vm1743, %v6552, %v6600
    %v6602 = vsel %vm1745, %v6555, %v6601
    %v6603 = vsel %vm1747, %v6558, %v6602
    %v6604 = vsel %vm1735, %v6564, %v6561
    %v6605 = vsel %vm1737, %v6567, %v6604
    %v6606 = vsel %vm1739, %v6570, %v6605
    %v6607 = vsel %vm1741, %v6573, %v6606
    %v6608 = vsel %vm1743, %v6576, %v6607
    %v6609 = vsel %vm1745, %v6579, %v6608
    %v6610 = vsel %vm1747, %v6582, %v6609
    %v6615 = vsel %vm1774, %v6589, -inf
    %6616 = vmax.xlane.f32.xlu0 %v6615
    %v6617 = vpop.xlane.xlu0 %6616
    %v6618 = vsel %vm1774, %v6596, -inf
    %6619 = vmax.xlane.f32.xlu0 %v6618
    %v6620 = vpop.xlane.xlu0 %6619
    %v6621 = vsel %vm1774, %v6603, -inf
    %6622 = vmax.xlane.f32.xlu0 %v6621
    %v6623 = vpop.xlane.xlu0 %6622
    %v6624 = vsel %vm1774, %v6610, -inf
    %6625 = vmax.xlane.f32.xlu0 %v6624
    %v6626 = vpop.xlane.xlu0 %6625
    %v6631 = vperm.slane %v6617, 0
    %v6632 = vperm.slane %v6617, 1
    %v6633 = vperm.slane %v6617, 2
    %v6634 = vperm.slane %v6617, 3
    %v6635 = vperm.slane %v6617, 4
    %v6636 = vperm.slane %v6617, 5
    %v6637 = vperm.slane %v6617, 6
    %v6638 = vperm.slane %v6617, 7
    %v6639 = vperm.slane %v6620, 0
    %v6640 = vperm.slane %v6620, 1
    %v6641 = vperm.slane %v6620, 2
    %v6642 = vperm.slane %v6620, 3
    %v6643 = vperm.slane %v6620, 4
    %v6644 = vperm.slane %v6620, 5
    %v6645 = vperm.slane %v6620, 6
    %v6646 = vperm.slane %v6620, 7
    %v6647 = vperm.slane %v6623, 0
    %v6648 = vperm.slane %v6623, 1
    %v6649 = vperm.slane %v6623, 2
    %v6650 = vperm.slane %v6623, 3
    %v6651 = vperm.slane %v6623, 4
    %v6652 = vperm.slane %v6623, 5
    %v6653 = vperm.slane %v6623, 6
    %v6654 = vperm.slane %v6623, 7
    %v6655 = vperm.slane %v6626, 0
    %v6656 = vperm.slane %v6626, 1
    %v6657 = vperm.slane %v6626, 2
    %v6658 = vperm.slane %v6626, 3
    %v6659 = vperm.slane %v6626, 4
    %v6660 = vperm.slane %v6626, 5
    %v6661 = vperm.slane %v6626, 6
    %v6662 = vperm.slane %v6626, 7
    %v6695 = vsub.f32 %v6167, %v6631
    %v6696 = vsub.f32 %v6168, %v6631
    %v6697 = vsub.f32 %v6169, %v6632
    %v6698 = vsub.f32 %v6170, %v6632
    %v6699 = vsub.f32 %v6171, %v6633
    %v6700 = vsub.f32 %v6172, %v6633
    %v6701 = vsub.f32 %v6173, %v6634
    %v6702 = vsub.f32 %v6174, %v6634
    %v6703 = vsub.f32 %v6175, %v6635
    %v6704 = vsub.f32 %v6176, %v6635
    %v6705 = vsub.f32 %v6177, %v6636
    %v6706 = vsub.f32 %v6178, %v6636
    %v6707 = vsub.f32 %v6179, %v6637
    %v6708 = vsub.f32 %v6180, %v6637
    %v6709 = vsub.f32 %v6181, %v6638
    %v6710 = vsub.f32 %v6182, %v6638
    %v6711 = vsub.f32 %v6183, %v6639
    %v6712 = vsub.f32 %v6184, %v6639
    %v6713 = vsub.f32 %v6185, %v6640
    %v6714 = vsub.f32 %v6186, %v6640
    %v6715 = vsub.f32 %v6187, %v6641
    %v6716 = vsub.f32 %v6188, %v6641
    %v6717 = vsub.f32 %v6189, %v6642
    %v6718 = vsub.f32 %v6190, %v6642
    %v6719 = vsub.f32 %v6191, %v6643
    %v6720 = vsub.f32 %v6192, %v6643
    %v6721 = vsub.f32 %v6193, %v6644
    %v6722 = vsub.f32 %v6194, %v6644
    %v6723 = vsub.f32 %v6195, %v6645
    %v6724 = vsub.f32 %v6196, %v6645
    %v6725 = vsub.f32 %v6197, %v6646
    %v6726 = vsub.f32 %v6198, %v6646
    %v6727 = vsub.f32 %v6199, %v6647
    %v6728 = vsub.f32 %v6200, %v6647
    %v6729 = vsub.f32 %v6201, %v6648
    %v6730 = vsub.f32 %v6202, %v6648
    %v6731 = vsub.f32 %v6203, %v6649
    %v6732 = vsub.f32 %v6204, %v6649
    %v6733 = vsub.f32 %v6205, %v6650
    %v6734 = vsub.f32 %v6206, %v6650
    %v6735 = vsub.f32 %v6207, %v6651
    %v6736 = vsub.f32 %v6208, %v6651
    %v6737 = vsub.f32 %v6209, %v6652
    %v6738 = vsub.f32 %v6210, %v6652
    %v6739 = vsub.f32 %v6211, %v6653
    %v6740 = vsub.f32 %v6212, %v6653
    %v6741 = vsub.f32 %v6213, %v6654
    %v6742 = vsub.f32 %v6214, %v6654
    %v6743 = vsub.f32 %v6215, %v6655
    %v6744 = vsub.f32 %v6216, %v6655
    %v6745 = vsub.f32 %v6217, %v6656
    %v6746 = vsub.f32 %v6218, %v6656
    %v6747 = vsub.f32 %v6219, %v6657
    %v6748 = vsub.f32 %v6220, %v6657
    %v6749 = vsub.f32 %v6221, %v6658
    %v6750 = vsub.f32 %v6222, %v6658
    %v6751 = vsub.f32 %v6223, %v6659
    %v6752 = vsub.f32 %v6224, %v6659
    %v6753 = vsub.f32 %v6225, %v6660
    %v6754 = vsub.f32 %v6226, %v6660
    %v6755 = vsub.f32 %v6227, %v6661
    %v6756 = vsub.f32 %v6228, %v6661
    %v6757 = vsub.f32 %v6229, %v6662
    %v6758 = vsub.f32 %v6230, %v6662
    %v6759 = vmul.f32 %v6695, 1.442695
    %v6760 = vpow.pop %v6759
    %v6761 = vmul.f32 %v6696, 1.442695
    %v6762 = vpow.pop %v6761
    %v6763 = vmul.f32 %v6697, 1.442695
    %v6764 = vpow.pop %v6763
    %v6765 = vmul.f32 %v6698, 1.442695
    %v6766 = vpow.pop %v6765
    %v6767 = vmul.f32 %v6699, 1.442695
    %v6768 = vpow.pop %v6767
    %v6769 = vmul.f32 %v6700, 1.442695
    %v6770 = vpow.pop %v6769
    %v6771 = vmul.f32 %v6701, 1.442695
    %v6772 = vpow.pop %v6771
    %v6773 = vmul.f32 %v6702, 1.442695
    %v6774 = vpow.pop %v6773
    %v6775 = vmul.f32 %v6703, 1.442695
    %v6776 = vpow.pop %v6775
    %v6777 = vmul.f32 %v6704, 1.442695
    %v6778 = vpow.pop %v6777
    %v6779 = vmul.f32 %v6705, 1.442695
    %v6780 = vpow.pop %v6779
    %v6781 = vmul.f32 %v6706, 1.442695
    %v6782 = vpow.pop %v6781
    %v6783 = vmul.f32 %v6707, 1.442695
    %v6784 = vpow.pop %v6783
    %v6785 = vmul.f32 %v6708, 1.442695
    %v6786 = vpow.pop %v6785
    %v6787 = vmul.f32 %v6709, 1.442695
    %v6788 = vpow.pop %v6787
    %v6789 = vmul.f32 %v6710, 1.442695
    %v6790 = vpow.pop %v6789
    %v6791 = vmul.f32 %v6711, 1.442695
    %v6792 = vpow.pop %v6791
    %v6793 = vmul.f32 %v6712, 1.442695
    %v6794 = vpow.pop %v6793
    %v6795 = vmul.f32 %v6713, 1.442695
    %v6796 = vpow.pop %v6795
    %v6797 = vmul.f32 %v6714, 1.442695
    %v6798 = vpow.pop %v6797
    %v6799 = vmul.f32 %v6715, 1.442695
    %v6800 = vpow.pop %v6799
    %v6801 = vmul.f32 %v6716, 1.442695
    %v6802 = vpow.pop %v6801
    %v6803 = vmul.f32 %v6717, 1.442695
    %v6804 = vpow.pop %v6803
    %v6805 = vmul.f32 %v6718, 1.442695
    %v6806 = vpow.pop %v6805
    %v6807 = vmul.f32 %v6719, 1.442695
    %v6808 = vpow.pop %v6807
    %v6809 = vmul.f32 %v6720, 1.442695
    %v6810 = vpow.pop %v6809
    %v6811 = vmul.f32 %v6721, 1.442695
    %v6812 = vpow.pop %v6811
    %v6813 = vmul.f32 %v6722, 1.442695
    %v6814 = vpow.pop %v6813
    %v6815 = vmul.f32 %v6723, 1.442695
    %v6816 = vpow.pop %v6815
    %v6817 = vmul.f32 %v6724, 1.442695
    %v6818 = vpow.pop %v6817
    %v6819 = vmul.f32 %v6725, 1.442695
    %v6820 = vpow.pop %v6819
    %v6821 = vmul.f32 %v6726, 1.442695
    %v6822 = vpow.pop %v6821
    %v6823 = vmul.f32 %v6727, 1.442695
    %v6824 = vpow.pop %v6823
    %v6825 = vmul.f32 %v6728, 1.442695
    %v6826 = vpow.pop %v6825
    %v6827 = vmul.f32 %v6729, 1.442695
    %v6828 = vpow.pop %v6827
    %v6829 = vmul.f32 %v6730, 1.442695
    %v6830 = vpow.pop %v6829
    %v6831 = vmul.f32 %v6731, 1.442695
    %v6832 = vpow.pop %v6831
    %v6833 = vmul.f32 %v6732, 1.442695
    %v6834 = vpow.pop %v6833
    %v6835 = vmul.f32 %v6733, 1.442695
    %v6836 = vpow.pop %v6835
    %v6837 = vmul.f32 %v6734, 1.442695
    %v6838 = vpow.pop %v6837
    %v6839 = vmul.f32 %v6735, 1.442695
    %v6840 = vpow.pop %v6839
    %v6841 = vmul.f32 %v6736, 1.442695
    %v6842 = vpow.pop %v6841
    %v6843 = vmul.f32 %v6737, 1.442695
    %v6844 = vpow.pop %v6843
    %v6845 = vmul.f32 %v6738, 1.442695
    %v6846 = vpow.pop %v6845
    %v6847 = vmul.f32 %v6739, 1.442695
    %v6848 = vpow.pop %v6847
    %v6849 = vmul.f32 %v6740, 1.442695
    %v6850 = vpow.pop %v6849
    %v6851 = vmul.f32 %v6741, 1.442695
    %v6852 = vpow.pop %v6851
    %v6853 = vmul.f32 %v6742, 1.442695
    %v6854 = vpow.pop %v6853
    %v6855 = vmul.f32 %v6743, 1.442695
    %v6856 = vpow.pop %v6855
    %v6857 = vmul.f32 %v6744, 1.442695
    %v6858 = vpow.pop %v6857
    %v6859 = vmul.f32 %v6745, 1.442695
    %v6860 = vpow.pop %v6859
    %v6861 = vmul.f32 %v6746, 1.442695
    %v6862 = vpow.pop %v6861
    %v6863 = vmul.f32 %v6747, 1.442695
    %v6864 = vpow.pop %v6863
    %v6865 = vmul.f32 %v6748, 1.442695
    %v6866 = vpow.pop %v6865
    %v6867 = vmul.f32 %v6749, 1.442695
    %v6868 = vpow.pop %v6867
    %v6869 = vmul.f32 %v6750, 1.442695
    %v6870 = vpow.pop %v6869
    %v6871 = vmul.f32 %v6751, 1.442695
    %v6872 = vpow.pop %v6871
    %v6873 = vmul.f32 %v6752, 1.442695
    %v6874 = vpow.pop %v6873
    %v6875 = vmul.f32 %v6753, 1.442695
    %v6876 = vpow.pop %v6875
    %v6877 = vmul.f32 %v6754, 1.442695
    %v6878 = vpow.pop %v6877
    %v6879 = vmul.f32 %v6755, 1.442695
    %v6880 = vpow.pop %v6879
    %v6881 = vmul.f32 %v6756, 1.442695
    %v6882 = vpow.pop %v6881
    %v6883 = vmul.f32 %v6757, 1.442695
    %v6884 = vpow.pop %v6883
    %v6885 = vmul.f32 %v6758, 1.442695
    %v6886 = vpow.pop %v6885
    %6951 = vset.pattern.permute.xlu0 0
    %6952 = vperm.xlu0 %6951, %v6760
    %v6953 = vpop.permute.xlu0 %6952
    %6954 = vset.pattern.permute.xlu0 0
    %6955 = vperm.xlu0 %6954, %v6762
    %v6956 = vpop.permute.xlu0 %6955
    %6957 = vset.pattern.permute.xlu0 0
    %6958 = vperm.xlu0 %6957, %v6764
    %v6959 = vpop.permute.xlu0 %6958
    %6960 = vset.pattern.permute.xlu0 0
    %6961 = vperm.xlu0 %6960, %v6766
    %v6962 = vpop.permute.xlu0 %6961
    %6963 = vset.pattern.permute.xlu0 0
    %6964 = vperm.xlu0 %6963, %v6768
    %v6965 = vpop.permute.xlu0 %6964
    %6966 = vset.pattern.permute.xlu0 0
    %6967 = vperm.xlu0 %6966, %v6770
    %v6968 = vpop.permute.xlu0 %6967
    %6969 = vset.pattern.permute.xlu0 0
    %6970 = vperm.xlu0 %6969, %v6772
    %v6971 = vpop.permute.xlu0 %6970
    %6972 = vset.pattern.permute.xlu0 0
    %6973 = vperm.xlu0 %6972, %v6774
    %v6974 = vpop.permute.xlu0 %6973
    %6975 = vset.pattern.permute.xlu0 0
    %6976 = vperm.xlu0 %6975, %v6776
    %v6977 = vpop.permute.xlu0 %6976
    %6978 = vset.pattern.permute.xlu0 0
    %6979 = vperm.xlu0 %6978, %v6778
    %v6980 = vpop.permute.xlu0 %6979
    %6981 = vset.pattern.permute.xlu0 0
    %6982 = vperm.xlu0 %6981, %v6780
    %v6983 = vpop.permute.xlu0 %6982
    %6984 = vset.pattern.permute.xlu0 0
    %6985 = vperm.xlu0 %6984, %v6782
    %v6986 = vpop.permute.xlu0 %6985
    %6987 = vset.pattern.permute.xlu0 0
    %6988 = vperm.xlu0 %6987, %v6784
    %v6989 = vpop.permute.xlu0 %6988
    %6990 = vset.pattern.permute.xlu0 0
    %6991 = vperm.xlu0 %6990, %v6786
    %v6992 = vpop.permute.xlu0 %6991
    %6993 = vset.pattern.permute.xlu0 0
    %6994 = vperm.xlu0 %6993, %v6788
    %v6995 = vpop.permute.xlu0 %6994
    %6996 = vset.pattern.permute.xlu0 0
    %6997 = vperm.xlu0 %6996, %v6790
    %v6998 = vpop.permute.xlu0 %6997
    %6999 = vset.pattern.permute.xlu0 0
    %7000 = vperm.xlu0 %6999, %v6792
    %v7001 = vpop.permute.xlu0 %7000
    %7002 = vset.pattern.permute.xlu0 0
    %7003 = vperm.xlu0 %7002, %v6794
    %v7004 = vpop.permute.xlu0 %7003
    %7005 = vset.pattern.permute.xlu0 0
    %7006 = vperm.xlu0 %7005, %v6796
    %v7007 = vpop.permute.xlu0 %7006
    %7008 = vset.pattern.permute.xlu0 0
    %7009 = vperm.xlu0 %7008, %v6798
    %v7010 = vpop.permute.xlu0 %7009
    %7011 = vset.pattern.permute.xlu0 0
    %7012 = vperm.xlu0 %7011, %v6800
    %v7013 = vpop.permute.xlu0 %7012
    %7014 = vset.pattern.permute.xlu0 0
    %7015 = vperm.xlu0 %7014, %v6802
    %v7016 = vpop.permute.xlu0 %7015
    %7017 = vset.pattern.permute.xlu0 0
    %7018 = vperm.xlu0 %7017, %v6804
    %v7019 = vpop.permute.xlu0 %7018
    %7020 = vset.pattern.permute.xlu0 0
    %7021 = vperm.xlu0 %7020, %v6806
    %v7022 = vpop.permute.xlu0 %7021
    %7023 = vset.pattern.permute.xlu0 0
    %7024 = vperm.xlu0 %7023, %v6808
    %v7025 = vpop.permute.xlu0 %7024
    %7026 = vset.pattern.permute.xlu0 0
    %7027 = vperm.xlu0 %7026, %v6810
    %v7028 = vpop.permute.xlu0 %7027
    %7029 = vset.pattern.permute.xlu0 0
    %7030 = vperm.xlu0 %7029, %v6812
    %v7031 = vpop.permute.xlu0 %7030
    %7032 = vset.pattern.permute.xlu0 0
    %7033 = vperm.xlu0 %7032, %v6814
    %v7034 = vpop.permute.xlu0 %7033
    %7035 = vset.pattern.permute.xlu0 0
    %7036 = vperm.xlu0 %7035, %v6816
    %v7037 = vpop.permute.xlu0 %7036
    %7038 = vset.pattern.permute.xlu0 0
    %7039 = vperm.xlu0 %7038, %v6818
    %v7040 = vpop.permute.xlu0 %7039
    %7041 = vset.pattern.permute.xlu0 0
    %7042 = vperm.xlu0 %7041, %v6820
    %v7043 = vpop.permute.xlu0 %7042
    %7044 = vset.pattern.permute.xlu0 0
    %7045 = vperm.xlu0 %7044, %v6822
    %v7046 = vpop.permute.xlu0 %7045
    %7047 = vset.pattern.permute.xlu0 0
    %7048 = vperm.xlu0 %7047, %v6824
    %v7049 = vpop.permute.xlu0 %7048
    %7050 = vset.pattern.permute.xlu0 0
    %7051 = vperm.xlu0 %7050, %v6826
    %v7052 = vpop.permute.xlu0 %7051
    %7053 = vset.pattern.permute.xlu0 0
    %7054 = vperm.xlu0 %7053, %v6828
    %v7055 = vpop.permute.xlu0 %7054
    %7056 = vset.pattern.permute.xlu0 0
    %7057 = vperm.xlu0 %7056, %v6830
    %v7058 = vpop.permute.xlu0 %7057
    %7059 = vset.pattern.permute.xlu0 0
    %7060 = vperm.xlu0 %7059, %v6832
    %v7061 = vpop.permute.xlu0 %7060
    %7062 = vset.pattern.permute.xlu0 0
    %7063 = vperm.xlu0 %7062, %v6834
    %v7064 = vpop.permute.xlu0 %7063
    %7065 = vset.pattern.permute.xlu0 0
    %7066 = vperm.xlu0 %7065, %v6836
    %v7067 = vpop.permute.xlu0 %7066
    %7068 = vset.pattern.permute.xlu0 0
    %7069 = vperm.xlu0 %7068, %v6838
    %v7070 = vpop.permute.xlu0 %7069
    %7071 = vset.pattern.permute.xlu0 0
    %7072 = vperm.xlu0 %7071, %v6840
    %v7073 = vpop.permute.xlu0 %7072
    %7074 = vset.pattern.permute.xlu0 0
    %7075 = vperm.xlu0 %7074, %v6842
    %v7076 = vpop.permute.xlu0 %7075
    %7077 = vset.pattern.permute.xlu0 0
    %7078 = vperm.xlu0 %7077, %v6844
    %v7079 = vpop.permute.xlu0 %7078
    %7080 = vset.pattern.permute.xlu0 0
    %7081 = vperm.xlu0 %7080, %v6846
    %v7082 = vpop.permute.xlu0 %7081
    %7083 = vset.pattern.permute.xlu0 0
    %7084 = vperm.xlu0 %7083, %v6848
    %v7085 = vpop.permute.xlu0 %7084
    %7086 = vset.pattern.permute.xlu0 0
    %7087 = vperm.xlu0 %7086, %v6850
    %v7088 = vpop.permute.xlu0 %7087
    %7089 = vset.pattern.permute.xlu0 0
    %7090 = vperm.xlu0 %7089, %v6852
    %v7091 = vpop.permute.xlu0 %7090
    %7092 = vset.pattern.permute.xlu0 0
    %7093 = vperm.xlu0 %7092, %v6854
    %v7094 = vpop.permute.xlu0 %7093
    %7095 = vset.pattern.permute.xlu0 0
    %7096 = vperm.xlu0 %7095, %v6856
    %v7097 = vpop.permute.xlu0 %7096
    %7098 = vset.pattern.permute.xlu0 0
    %7099 = vperm.xlu0 %7098, %v6858
    %v7100 = vpop.permute.xlu0 %7099
    %7101 = vset.pattern.permute.xlu0 0
    %7102 = vperm.xlu0 %7101, %v6860
    %v7103 = vpop.permute.xlu0 %7102
    %7104 = vset.pattern.permute.xlu0 0
    %7105 = vperm.xlu0 %7104, %v6862
    %v7106 = vpop.permute.xlu0 %7105
    %7107 = vset.pattern.permute.xlu0 0
    %7108 = vperm.xlu0 %7107, %v6864
    %v7109 = vpop.permute.xlu0 %7108
    %7110 = vset.pattern.permute.xlu0 0
    %7111 = vperm.xlu0 %7110, %v6866
    %v7112 = vpop.permute.xlu0 %7111
    %7113 = vset.pattern.permute.xlu0 0
    %7114 = vperm.xlu0 %7113, %v6868
    %v7115 = vpop.permute.xlu0 %7114
    %7116 = vset.pattern.permute.xlu0 0
    %7117 = vperm.xlu0 %7116, %v6870
    %v7118 = vpop.permute.xlu0 %7117
    %7119 = vset.pattern.permute.xlu0 0
    %7120 = vperm.xlu0 %7119, %v6872
    %v7121 = vpop.permute.xlu0 %7120
    %7122 = vset.pattern.permute.xlu0 0
    %7123 = vperm.xlu0 %7122, %v6874
    %v7124 = vpop.permute.xlu0 %7123
    %7125 = vset.pattern.permute.xlu0 0
    %7126 = vperm.xlu0 %7125, %v6876
    %v7127 = vpop.permute.xlu0 %7126
    %7128 = vset.pattern.permute.xlu0 0
    %7129 = vperm.xlu0 %7128, %v6878
    %v7130 = vpop.permute.xlu0 %7129
    %7131 = vset.pattern.permute.xlu0 0
    %7132 = vperm.xlu0 %7131, %v6880
    %v7133 = vpop.permute.xlu0 %7132
    %7134 = vset.pattern.permute.xlu0 0
    %7135 = vperm.xlu0 %7134, %v6882
    %v7136 = vpop.permute.xlu0 %7135
    %7137 = vset.pattern.permute.xlu0 0
    %7138 = vperm.xlu0 %7137, %v6884
    %v7139 = vpop.permute.xlu0 %7138
    %7140 = vset.pattern.permute.xlu0 0
    %7141 = vperm.xlu0 %7140, %v6886
    %v7142 = vpop.permute.xlu0 %7141
    %v7143 = vperm.slane %v6953, %v1636
    %v7144 = vperm.slane %v6956, %v1638
    %v7145 = vsel %vm1640, %v7144, %v7143
    %v7146 = vperm.slane %v6959, %v1636
    %v7147 = vperm.slane %v6962, %v1638
    %v7148 = vsel %vm1640, %v7147, %v7146
    %v7149 = vperm.slane %v6965, %v1636
    %v7150 = vperm.slane %v6968, %v1638
    %v7151 = vsel %vm1640, %v7150, %v7149
    %v7152 = vperm.slane %v6971, %v1636
    %v7153 = vperm.slane %v6974, %v1638
    %v7154 = vsel %vm1640, %v7153, %v7152
    %v7155 = vperm.slane %v6977, %v1636
    %v7156 = vperm.slane %v6980, %v1638
    %v7157 = vsel %vm1640, %v7156, %v7155
    %v7158 = vperm.slane %v6983, %v1636
    %v7159 = vperm.slane %v6986, %v1638
    %v7160 = vsel %vm1640, %v7159, %v7158
    %v7161 = vperm.slane %v6989, %v1636
    %v7162 = vperm.slane %v6992, %v1638
    %v7163 = vsel %vm1640, %v7162, %v7161
    %v7164 = vperm.slane %v6995, %v1636
    %v7165 = vperm.slane %v6998, %v1638
    %v7166 = vsel %vm1640, %v7165, %v7164
    %v7167 = vperm.slane %v7001, %v1636
    %v7168 = vperm.slane %v7004, %v1638
    %v7169 = vsel %vm1640, %v7168, %v7167
    %v7170 = vperm.slane %v7007, %v1636
    %v7171 = vperm.slane %v7010, %v1638
    %v7172 = vsel %vm1640, %v7171, %v7170
    %v7173 = vperm.slane %v7013, %v1636
    %v7174 = vperm.slane %v7016, %v1638
    %v7175 = vsel %vm1640, %v7174, %v7173
    %v7176 = vperm.slane %v7019, %v1636
    %v7177 = vperm.slane %v7022, %v1638
    %v7178 = vsel %vm1640, %v7177, %v7176
    %v7179 = vperm.slane %v7025, %v1636
    %v7180 = vperm.slane %v7028, %v1638
    %v7181 = vsel %vm1640, %v7180, %v7179
    %v7182 = vperm.slane %v7031, %v1636
    %v7183 = vperm.slane %v7034, %v1638
    %v7184 = vsel %vm1640, %v7183, %v7182
    %v7185 = vperm.slane %v7037, %v1636
    %v7186 = vperm.slane %v7040, %v1638
    %v7187 = vsel %vm1640, %v7186, %v7185
    %v7188 = vperm.slane %v7043, %v1636
    %v7189 = vperm.slane %v7046, %v1638
    %v7190 = vsel %vm1640, %v7189, %v7188
    %v7191 = vperm.slane %v7049, %v1636
    %v7192 = vperm.slane %v7052, %v1638
    %v7193 = vsel %vm1640, %v7192, %v7191
    %v7194 = vperm.slane %v7055, %v1636
    %v7195 = vperm.slane %v7058, %v1638
    %v7196 = vsel %vm1640, %v7195, %v7194
    %v7197 = vperm.slane %v7061, %v1636
    %v7198 = vperm.slane %v7064, %v1638
    %v7199 = vsel %vm1640, %v7198, %v7197
    %v7200 = vperm.slane %v7067, %v1636
    %v7201 = vperm.slane %v7070, %v1638
    %v7202 = vsel %vm1640, %v7201, %v7200
    %v7203 = vperm.slane %v7073, %v1636
    %v7204 = vperm.slane %v7076, %v1638
    %v7205 = vsel %vm1640, %v7204, %v7203
    %v7206 = vperm.slane %v7079, %v1636
    %v7207 = vperm.slane %v7082, %v1638
    %v7208 = vsel %vm1640, %v7207, %v7206
    %v7209 = vperm.slane %v7085, %v1636
    %v7210 = vperm.slane %v7088, %v1638
    %v7211 = vsel %vm1640, %v7210, %v7209
    %v7212 = vperm.slane %v7091, %v1636
    %v7213 = vperm.slane %v7094, %v1638
    %v7214 = vsel %vm1640, %v7213, %v7212
    %v7215 = vperm.slane %v7097, %v1636
    %v7216 = vperm.slane %v7100, %v1638
    %v7217 = vsel %vm1640, %v7216, %v7215
    %v7218 = vperm.slane %v7103, %v1636
    %v7219 = vperm.slane %v7106, %v1638
    %v7220 = vsel %vm1640, %v7219, %v7218
    %v7221 = vperm.slane %v7109, %v1636
    %v7222 = vperm.slane %v7112, %v1638
    %v7223 = vsel %vm1640, %v7222, %v7221
    %v7224 = vperm.slane %v7115, %v1636
    %v7225 = vperm.slane %v7118, %v1638
    %v7226 = vsel %vm1640, %v7225, %v7224
    %v7227 = vperm.slane %v7121, %v1636
    %v7228 = vperm.slane %v7124, %v1638
    %v7229 = vsel %vm1640, %v7228, %v7227
    %v7230 = vperm.slane %v7127, %v1636
    %v7231 = vperm.slane %v7130, %v1638
    %v7232 = vsel %vm1640, %v7231, %v7230
    %v7233 = vperm.slane %v7133, %v1636
    %v7234 = vperm.slane %v7136, %v1638
    %v7235 = vsel %vm1640, %v7234, %v7233
    %v7236 = vperm.slane %v7139, %v1636
    %v7237 = vperm.slane %v7142, %v1638
    %v7238 = vsel %vm1640, %v7237, %v7236
    %v7239 = vsel %vm1735, %v7148, %v7145
    %v7240 = vsel %vm1737, %v7151, %v7239
    %v7241 = vsel %vm1739, %v7154, %v7240
    %v7242 = vsel %vm1741, %v7157, %v7241
    %v7243 = vsel %vm1743, %v7160, %v7242
    %v7244 = vsel %vm1745, %v7163, %v7243
    %v7245 = vsel %vm1747, %v7166, %v7244
    %v7246 = vsel %vm1735, %v7172, %v7169
    %v7247 = vsel %vm1737, %v7175, %v7246
    %v7248 = vsel %vm1739, %v7178, %v7247
    %v7249 = vsel %vm1741, %v7181, %v7248
    %v7250 = vsel %vm1743, %v7184, %v7249
    %v7251 = vsel %vm1745, %v7187, %v7250
    %v7252 = vsel %vm1747, %v7190, %v7251
    %v7253 = vsel %vm1735, %v7196, %v7193
    %v7254 = vsel %vm1737, %v7199, %v7253
    %v7255 = vsel %vm1739, %v7202, %v7254
    %v7256 = vsel %vm1741, %v7205, %v7255
    %v7257 = vsel %vm1743, %v7208, %v7256
    %v7258 = vsel %vm1745, %v7211, %v7257
    %v7259 = vsel %vm1747, %v7214, %v7258
    %v7260 = vsel %vm1735, %v7220, %v7217
    %v7261 = vsel %vm1737, %v7223, %v7260
    %v7262 = vsel %vm1739, %v7226, %v7261
    %v7263 = vsel %vm1741, %v7229, %v7262
    %v7264 = vsel %vm1743, %v7232, %v7263
    %v7265 = vsel %vm1745, %v7235, %v7264
    %v7266 = vsel %vm1747, %v7238, %v7265
    %v7271 = vsel %vm1774, %v7245, 0.0
    %7272 = vadd.xlane.f32.xlu0 %v7271
    %v7273 = vpop.xlane.xlu0 %7272
    %v7274 = vsel %vm1774, %v7252, 0.0
    %7275 = vadd.xlane.f32.xlu0 %v7274
    %v7276 = vpop.xlane.xlu0 %7275
    %v7277 = vsel %vm1774, %v7259, 0.0
    %7278 = vadd.xlane.f32.xlu0 %v7277
    %v7279 = vpop.xlane.xlu0 %7278
    %v7280 = vsel %vm1774, %v7266, 0.0
    %7281 = vadd.xlane.f32.xlu0 %v7280
    %v7282 = vpop.xlane.xlu0 %7281
    %v7283 = vrcp.pop %v7273
    %v7284 = vrcp.pop %v7276
    %v7285 = vrcp.pop %v7279
    %v7286 = vrcp.pop %v7282
    %v7291 = vperm.slane %v7283, 0
    %v7292 = vperm.slane %v7283, 1
    %v7293 = vperm.slane %v7283, 2
    %v7294 = vperm.slane %v7283, 3
    %v7295 = vperm.slane %v7283, 4
    %v7296 = vperm.slane %v7283, 5
    %v7297 = vperm.slane %v7283, 6
    %v7298 = vperm.slane %v7283, 7
    %v7299 = vperm.slane %v7284, 0
    %v7300 = vperm.slane %v7284, 1
    %v7301 = vperm.slane %v7284, 2
    %v7302 = vperm.slane %v7284, 3
    %v7303 = vperm.slane %v7284, 4
    %v7304 = vperm.slane %v7284, 5
    %v7305 = vperm.slane %v7284, 6
    %v7306 = vperm.slane %v7284, 7
    %v7307 = vperm.slane %v7285, 0
    %v7308 = vperm.slane %v7285, 1
    %v7309 = vperm.slane %v7285, 2
    %v7310 = vperm.slane %v7285, 3
    %v7311 = vperm.slane %v7285, 4
    %v7312 = vperm.slane %v7285, 5
    %v7313 = vperm.slane %v7285, 6
    %v7314 = vperm.slane %v7285, 7
    %v7315 = vperm.slane %v7286, 0
    %v7316 = vperm.slane %v7286, 1
    %v7317 = vperm.slane %v7286, 2
    %v7318 = vperm.slane %v7286, 3
    %v7319 = vperm.slane %v7286, 4
    %v7320 = vperm.slane %v7286, 5
    %v7321 = vperm.slane %v7286, 6
    %v7322 = vperm.slane %v7286, 7
    %v7355 = vmul.f32 %v6760, %v7291
    %v7356 = vmul.f32 %v6762, %v7291
    %v7357 = vmul.f32 %v6764, %v7292
    %v7358 = vmul.f32 %v6766, %v7292
    %v7359 = vmul.f32 %v6768, %v7293
    %v7360 = vmul.f32 %v6770, %v7293
    %v7361 = vmul.f32 %v6772, %v7294
    %v7362 = vmul.f32 %v6774, %v7294
    %v7363 = vmul.f32 %v6776, %v7295
    %v7364 = vmul.f32 %v6778, %v7295
    %v7365 = vmul.f32 %v6780, %v7296
    %v7366 = vmul.f32 %v6782, %v7296
    %v7367 = vmul.f32 %v6784, %v7297
    %v7368 = vmul.f32 %v6786, %v7297
    %v7369 = vmul.f32 %v6788, %v7298
    %v7370 = vmul.f32 %v6790, %v7298
    %v7371 = vmul.f32 %v6792, %v7299
    %v7372 = vmul.f32 %v6794, %v7299
    %v7373 = vmul.f32 %v6796, %v7300
    %v7374 = vmul.f32 %v6798, %v7300
    %v7375 = vmul.f32 %v6800, %v7301
    %v7376 = vmul.f32 %v6802, %v7301
    %v7377 = vmul.f32 %v6804, %v7302
    %v7378 = vmul.f32 %v6806, %v7302
    %v7379 = vmul.f32 %v6808, %v7303
    %v7380 = vmul.f32 %v6810, %v7303
    %v7381 = vmul.f32 %v6812, %v7304
    %v7382 = vmul.f32 %v6814, %v7304
    %v7383 = vmul.f32 %v6816, %v7305
    %v7384 = vmul.f32 %v6818, %v7305
    %v7385 = vmul.f32 %v6820, %v7306
    %v7386 = vmul.f32 %v6822, %v7306
    %v7387 = vmul.f32 %v6824, %v7307
    %v7388 = vmul.f32 %v6826, %v7307
    %v7389 = vmul.f32 %v6828, %v7308
    %v7390 = vmul.f32 %v6830, %v7308
    %v7391 = vmul.f32 %v6832, %v7309
    %v7392 = vmul.f32 %v6834, %v7309
    %v7393 = vmul.f32 %v6836, %v7310
    %v7394 = vmul.f32 %v6838, %v7310
    %v7395 = vmul.f32 %v6840, %v7311
    %v7396 = vmul.f32 %v6842, %v7311
    %v7397 = vmul.f32 %v6844, %v7312
    %v7398 = vmul.f32 %v6846, %v7312
    %v7399 = vmul.f32 %v6848, %v7313
    %v7400 = vmul.f32 %v6850, %v7313
    %v7401 = vmul.f32 %v6852, %v7314
    %v7402 = vmul.f32 %v6854, %v7314
    %v7403 = vmul.f32 %v6856, %v7315
    %v7404 = vmul.f32 %v6858, %v7315
    %v7405 = vmul.f32 %v6860, %v7316
    %v7406 = vmul.f32 %v6862, %v7316
    %v7407 = vmul.f32 %v6864, %v7317
    %v7408 = vmul.f32 %v6866, %v7317
    %v7409 = vmul.f32 %v6868, %v7318
    %v7410 = vmul.f32 %v6870, %v7318
    %v7411 = vmul.f32 %v6872, %v7319
    %v7412 = vmul.f32 %v6874, %v7319
    %v7413 = vmul.f32 %v6876, %v7320
    %v7414 = vmul.f32 %v6878, %v7320
    %v7415 = vmul.f32 %v6880, %v7321
    %v7416 = vmul.f32 %v6882, %v7321
    %v7417 = vmul.f32 %v6884, %v7322
    %v7418 = vmul.f32 %v6886, %v7322
    %7419 = vxpose.xlu0.b32.start [1/16] %v392, 128
    %7420 = vxpose.xlu0.b32.cont [2/16] %v393, 128
    %7421 = vxpose.xlu0.b32.cont [3/16] 0.0, 128
    %7422 = vxpose.xlu0.b32.cont [4/16] 0.0, 128
    %7423 = vxpose.xlu0.b32.cont [5/16] 0.0, 128
    %7424 = vxpose.xlu0.b32.cont [6/16] 0.0, 128
    %7425 = vxpose.xlu0.b32.cont [7/16] 0.0, 128
    %7426 = vxpose.xlu0.b32.cont [8/16] 0.0, 128
    %7427 = vxpose.xlu0.b32.cont [9/16] 0.0, 128
    %7428 = vxpose.xlu0.b32.cont [10/16] 0.0, 128
    %7429 = vxpose.xlu0.b32.cont [11/16] 0.0, 128
    %7430 = vxpose.xlu0.b32.cont [12/16] 0.0, 128
    %7431 = vxpose.xlu0.b32.cont [13/16] 0.0, 128
    %7432 = vxpose.xlu0.b32.cont [14/16] 0.0, 128
    %7433 = vxpose.xlu0.b32.cont [15/16] 0.0, 128
    %7434 = vxpose.xlu0.b32.end [16/16] 0.0, 128
    %v7435 = vpop.trf.xlu0
    %v7436 = vpop.trf.xlu0
    %v7437 = vpop.trf.xlu0
    %v7438 = vpop.trf.xlu0
    %v7439 = vpop.trf.xlu0
    %v7440 = vpop.trf.xlu0
    %v7441 = vpop.trf.xlu0
    %v7442 = vpop.trf.xlu0
    %v7443 = vpop.trf.xlu0
    %v7444 = vpop.trf.xlu0
    %v7445 = vpop.trf.xlu0
    %v7446 = vpop.trf.xlu0
    %v7447 = vpop.trf.xlu0
    %v7448 = vpop.trf.xlu0
    %v7449 = vpop.trf.xlu0
    %v7450 = vpop.trf.xlu0
    %7451 = vxpose.xlu0.b32.start [1/16] %v5359, 128
    %7452 = vxpose.xlu0.b32.cont [2/16] %v5361, 128
    %7453 = vxpose.xlu0.b32.cont [3/16] 0.0, 128
    %7454 = vxpose.xlu0.b32.cont [4/16] 0.0, 128
    %7455 = vxpose.xlu0.b32.cont [5/16] 0.0, 128
    %7456 = vxpose.xlu0.b32.cont [6/16] 0.0, 128
    %7457 = vxpose.xlu0.b32.cont [7/16] 0.0, 128
    %7458 = vxpose.xlu0.b32.cont [8/16] 0.0, 128
    %7459 = vxpose.xlu0.b32.cont [9/16] 0.0, 128
    %7460 = vxpose.xlu0.b32.cont [10/16] 0.0, 128
    %7461 = vxpose.xlu0.b32.cont [11/16] 0.0, 128
    %7462 = vxpose.xlu0.b32.cont [12/16] 0.0, 128
    %7463 = vxpose.xlu0.b32.cont [13/16] 0.0, 128
    %7464 = vxpose.xlu0.b32.cont [14/16] 0.0, 128
    %7465 = vxpose.xlu0.b32.cont [15/16] 0.0, 128
    %7466 = vxpose.xlu0.b32.end [16/16] 0.0, 128
    %v7467 = vpop.trf.xlu0
    %v7468 = vpop.trf.xlu0
    %v7469 = vpop.trf.xlu0
    %v7470 = vpop.trf.xlu0
    %v7471 = vpop.trf.xlu0
    %v7472 = vpop.trf.xlu0
    %v7473 = vpop.trf.xlu0
    %v7474 = vpop.trf.xlu0
    %v7475 = vpop.trf.xlu0
    %v7476 = vpop.trf.xlu0
    %v7477 = vpop.trf.xlu0
    %v7478 = vpop.trf.xlu0
    %v7479 = vpop.trf.xlu0
    %v7480 = vpop.trf.xlu0
    %v7481 = vpop.trf.xlu0
    %v7482 = vpop.trf.xlu0
    %7483 = vxpose.xlu0.b32.start [1/16] %v5365, 128
    %7484 = vxpose.xlu0.b32.cont [2/16] %v5367, 128
    %7485 = vxpose.xlu0.b32.cont [3/16] 0.0, 128
    %7486 = vxpose.xlu0.b32.cont [4/16] 0.0, 128
    %7487 = vxpose.xlu0.b32.cont [5/16] 0.0, 128
    %7488 = vxpose.xlu0.b32.cont [6/16] 0.0, 128
    %7489 = vxpose.xlu0.b32.cont [7/16] 0.0, 128
    %7490 = vxpose.xlu0.b32.cont [8/16] 0.0, 128
    %7491 = vxpose.xlu0.b32.cont [9/16] 0.0, 128
    %7492 = vxpose.xlu0.b32.cont [10/16] 0.0, 128
    %7493 = vxpose.xlu0.b32.cont [11/16] 0.0, 128
    %7494 = vxpose.xlu0.b32.cont [12/16] 0.0, 128
    %7495 = vxpose.xlu0.b32.cont [13/16] 0.0, 128
    %7496 = vxpose.xlu0.b32.cont [14/16] 0.0, 128
    %7497 = vxpose.xlu0.b32.cont [15/16] 0.0, 128
    %7498 = vxpose.xlu0.b32.end [16/16] 0.0, 128
    %v7499 = vpop.trf.xlu0
    %v7500 = vpop.trf.xlu0
    %v7501 = vpop.trf.xlu0
    %v7502 = vpop.trf.xlu0
    %v7503 = vpop.trf.xlu0
    %v7504 = vpop.trf.xlu0
    %v7505 = vpop.trf.xlu0
    %v7506 = vpop.trf.xlu0
    %v7507 = vpop.trf.xlu0
    %v7508 = vpop.trf.xlu0
    %v7509 = vpop.trf.xlu0
    %v7510 = vpop.trf.xlu0
    %v7511 = vpop.trf.xlu0
    %v7512 = vpop.trf.xlu0
    %v7513 = vpop.trf.xlu0
    %v7514 = vpop.trf.xlu0
    %7515 = vxpose.xlu0.b32.start [1/16] %v5371, 128
    %7516 = vxpose.xlu0.b32.cont [2/16] %v5373, 128
    %7517 = vxpose.xlu0.b32.cont [3/16] 0.0, 128
    %7518 = vxpose.xlu0.b32.cont [4/16] 0.0, 128
    %7519 = vxpose.xlu0.b32.cont [5/16] 0.0, 128
    %7520 = vxpose.xlu0.b32.cont [6/16] 0.0, 128
    %7521 = vxpose.xlu0.b32.cont [7/16] 0.0, 128
    %7522 = vxpose.xlu0.b32.cont [8/16] 0.0, 128
    %7523 = vxpose.xlu0.b32.cont [9/16] 0.0, 128
    %7524 = vxpose.xlu0.b32.cont [10/16] 0.0, 128
    %7525 = vxpose.xlu0.b32.cont [11/16] 0.0, 128
    %7526 = vxpose.xlu0.b32.cont [12/16] 0.0, 128
    %7527 = vxpose.xlu0.b32.cont [13/16] 0.0, 128
    %7528 = vxpose.xlu0.b32.cont [14/16] 0.0, 128
    %7529 = vxpose.xlu0.b32.cont [15/16] 0.0, 128
    %7530 = vxpose.xlu0.b32.end [16/16] 0.0, 128
    %v7531 = vpop.trf.xlu0
    %v7532 = vpop.trf.xlu0
    %v7533 = vpop.trf.xlu0
    %v7534 = vpop.trf.xlu0
    %v7535 = vpop.trf.xlu0
    %v7536 = vpop.trf.xlu0
    %v7537 = vpop.trf.xlu0
    %v7538 = vpop.trf.xlu0
    %v7539 = vpop.trf.xlu0
    %v7540 = vpop.trf.xlu0
    %v7541 = vpop.trf.xlu0
    %v7542 = vpop.trf.xlu0
    %v7543 = vpop.trf.xlu0
    %v7544 = vpop.trf.xlu0
    %v7545 = vpop.trf.xlu0
    %v7546 = vpop.trf.xlu0
    %7563 = vset.pattern.permute.xlu0 0
    %7564 = vperm.xlu0 %7563, %v7355
    %v7565 = vpop.permute.xlu0 %7564
    %7566 = vset.pattern.permute.xlu0 0
    %7567 = vperm.xlu0 %7566, %v7356
    %v7568 = vpop.permute.xlu0 %7567
    %7569 = vset.pattern.permute.xlu0 0
    %7570 = vperm.xlu0 %7569, %v7357
    %v7571 = vpop.permute.xlu0 %7570
    %7572 = vset.pattern.permute.xlu0 0
    %7573 = vperm.xlu0 %7572, %v7358
    %v7574 = vpop.permute.xlu0 %7573
    %7575 = vset.pattern.permute.xlu0 0
    %7576 = vperm.xlu0 %7575, %v7359
    %v7577 = vpop.permute.xlu0 %7576
    %7578 = vset.pattern.permute.xlu0 0
    %7579 = vperm.xlu0 %7578, %v7360
    %v7580 = vpop.permute.xlu0 %7579
    %7581 = vset.pattern.permute.xlu0 0
    %7582 = vperm.xlu0 %7581, %v7361
    %v7583 = vpop.permute.xlu0 %7582
    %7584 = vset.pattern.permute.xlu0 0
    %7585 = vperm.xlu0 %7584, %v7362
    %v7586 = vpop.permute.xlu0 %7585
    %7587 = vset.pattern.permute.xlu0 0
    %7588 = vperm.xlu0 %7587, %v7363
    %v7589 = vpop.permute.xlu0 %7588
    %7590 = vset.pattern.permute.xlu0 0
    %7591 = vperm.xlu0 %7590, %v7364
    %v7592 = vpop.permute.xlu0 %7591
    %7593 = vset.pattern.permute.xlu0 0
    %7594 = vperm.xlu0 %7593, %v7365
    %v7595 = vpop.permute.xlu0 %7594
    %7596 = vset.pattern.permute.xlu0 0
    %7597 = vperm.xlu0 %7596, %v7366
    %v7598 = vpop.permute.xlu0 %7597
    %7599 = vset.pattern.permute.xlu0 0
    %7600 = vperm.xlu0 %7599, %v7367
    %v7601 = vpop.permute.xlu0 %7600
    %7602 = vset.pattern.permute.xlu0 0
    %7603 = vperm.xlu0 %7602, %v7368
    %v7604 = vpop.permute.xlu0 %7603
    %7605 = vset.pattern.permute.xlu0 0
    %7606 = vperm.xlu0 %7605, %v7369
    %v7607 = vpop.permute.xlu0 %7606
    %7608 = vset.pattern.permute.xlu0 0
    %7609 = vperm.xlu0 %7608, %v7370
    %v7610 = vpop.permute.xlu0 %7609
    %v7611 = vperm.slane %v7565, %v1636
    %v7612 = vperm.slane %v7568, %v1638
    %v7613 = vsel %vm1640, %v7612, %v7611
    %v7614 = vperm.slane %v7571, %v1636
    %v7615 = vperm.slane %v7574, %v1638
    %v7616 = vsel %vm1640, %v7615, %v7614
    %v7617 = vperm.slane %v7577, %v1636
    %v7618 = vperm.slane %v7580, %v1638
    %v7619 = vsel %vm1640, %v7618, %v7617
    %v7620 = vperm.slane %v7583, %v1636
    %v7621 = vperm.slane %v7586, %v1638
    %v7622 = vsel %vm1640, %v7621, %v7620
    %v7623 = vperm.slane %v7589, %v1636
    %v7624 = vperm.slane %v7592, %v1638
    %v7625 = vsel %vm1640, %v7624, %v7623
    %v7626 = vperm.slane %v7595, %v1636
    %v7627 = vperm.slane %v7598, %v1638
    %v7628 = vsel %vm1640, %v7627, %v7626
    %v7629 = vperm.slane %v7601, %v1636
    %v7630 = vperm.slane %v7604, %v1638
    %v7631 = vsel %vm1640, %v7630, %v7629
    %v7632 = vperm.slane %v7607, %v1636
    %v7633 = vperm.slane %v7610, %v1638
    %v7634 = vsel %vm1640, %v7633, %v7632
    %v7635 = vsel %vm1735, %v7616, %v7613
    %v7636 = vsel %vm1737, %v7619, %v7635
    %v7637 = vsel %vm1739, %v7622, %v7636
    %v7638 = vsel %vm1741, %v7625, %v7637
    %v7639 = vsel %vm1743, %v7628, %v7638
    %v7640 = vsel %vm1745, %v7631, %v7639
    %v7641 = vsel %vm1747, %v7634, %v7640
    %v7643 = vsel %vm1774, %v7435, 0
    %v7645 = vsel %vm1774, %v7641, 0
    %7647 = vmatpush.xpose.msra.mxu0 0.0
    %7648 = vmatpush.xpose.msra.mxu0 0.0
    %7649 = vmatpush.xpose.msra.mxu0 0.0
    %7650 = vmatpush.xpose.msra.mxu0 0.0
    %7651 = vmatpush.xpose.msra.mxu0 0.0
    %7652 = vmatpush.xpose.msra.mxu0 0.0
    %7653 = vmatpush.xpose.msra.mxu0 0.0
    %7654 = vmatpush.xpose.msra.mxu0 0.0
    %7655 = vmatpush.xpose.msra.mxu0 0.0
    %7656 = vmatpush.xpose.msra.mxu0 0.0
    %7657 = vmatpush.xpose.msra.mxu0 0.0
    %7658 = vmatpush.xpose.msra.mxu0 0.0
    %7659 = vmatpush.xpose.msra.mxu0 0.0
    %7660 = vmatpush.xpose.msra.mxu0 0.0
    %7661 = vmatpush.xpose.msra.mxu0 0.0
    %7662 = vmatpush.xpose.msra.mxu0 %v7645
    %7663 = vmatmul.f32.gmra.mxu0 %v7643
    %v7664 = vpop.f32.mrf.mxu0
    %v7665 = vadd.f32 0.0, %v7664
    %7666 = vdwg.mxu0
    %7683 = vset.pattern.permute.xlu0 0
    %7684 = vperm.xlu0 %7683, %v7371
    %v7685 = vpop.permute.xlu0 %7684
    %7686 = vset.pattern.permute.xlu0 0
    %7687 = vperm.xlu0 %7686, %v7372
    %v7688 = vpop.permute.xlu0 %7687
    %7689 = vset.pattern.permute.xlu0 0
    %7690 = vperm.xlu0 %7689, %v7373
    %v7691 = vpop.permute.xlu0 %7690
    %7692 = vset.pattern.permute.xlu0 0
    %7693 = vperm.xlu0 %7692, %v7374
    %v7694 = vpop.permute.xlu0 %7693
    %7695 = vset.pattern.permute.xlu0 0
    %7696 = vperm.xlu0 %7695, %v7375
    %v7697 = vpop.permute.xlu0 %7696
    %7698 = vset.pattern.permute.xlu0 0
    %7699 = vperm.xlu0 %7698, %v7376
    %v7700 = vpop.permute.xlu0 %7699
    %7701 = vset.pattern.permute.xlu0 0
    %7702 = vperm.xlu0 %7701, %v7377
    %v7703 = vpop.permute.xlu0 %7702
    %7704 = vset.pattern.permute.xlu0 0
    %7705 = vperm.xlu0 %7704, %v7378
    %v7706 = vpop.permute.xlu0 %7705
    %7707 = vset.pattern.permute.xlu0 0
    %7708 = vperm.xlu0 %7707, %v7379
    %v7709 = vpop.permute.xlu0 %7708
    %7710 = vset.pattern.permute.xlu0 0
    %7711 = vperm.xlu0 %7710, %v7380
    %v7712 = vpop.permute.xlu0 %7711
    %7713 = vset.pattern.permute.xlu0 0
    %7714 = vperm.xlu0 %7713, %v7381
    %v7715 = vpop.permute.xlu0 %7714
    %7716 = vset.pattern.permute.xlu0 0
    %7717 = vperm.xlu0 %7716, %v7382
    %v7718 = vpop.permute.xlu0 %7717
    %7719 = vset.pattern.permute.xlu0 0
    %7720 = vperm.xlu0 %7719, %v7383
    %v7721 = vpop.permute.xlu0 %7720
    %7722 = vset.pattern.permute.xlu0 0
    %7723 = vperm.xlu0 %7722, %v7384
    %v7724 = vpop.permute.xlu0 %7723
    %7725 = vset.pattern.permute.xlu0 0
    %7726 = vperm.xlu0 %7725, %v7385
    %v7727 = vpop.permute.xlu0 %7726
    %7728 = vset.pattern.permute.xlu0 0
    %7729 = vperm.xlu0 %7728, %v7386
    %v7730 = vpop.permute.xlu0 %7729
    %v7731 = vperm.slane %v7685, %v1636
    %v7732 = vperm.slane %v7688, %v1638
    %v7733 = vsel %vm1640, %v7732, %v7731
    %v7734 = vperm.slane %v7691, %v1636
    %v7735 = vperm.slane %v7694, %v1638
    %v7736 = vsel %vm1640, %v7735, %v7734
    %v7737 = vperm.slane %v7697, %v1636
    %v7738 = vperm.slane %v7700, %v1638
    %v7739 = vsel %vm1640, %v7738, %v7737
    %v7740 = vperm.slane %v7703, %v1636
    %v7741 = vperm.slane %v7706, %v1638
    %v7742 = vsel %vm1640, %v7741, %v7740
    %v7743 = vperm.slane %v7709, %v1636
    %v7744 = vperm.slane %v7712, %v1638
    %v7745 = vsel %vm1640, %v7744, %v7743
    %v7746 = vperm.slane %v7715, %v1636
    %v7747 = vperm.slane %v7718, %v1638
    %v7748 = vsel %vm1640, %v7747, %v7746
    %v7749 = vperm.slane %v7721, %v1636
    %v7750 = vperm.slane %v7724, %v1638
    %v7751 = vsel %vm1640, %v7750, %v7749
    %v7752 = vperm.slane %v7727, %v1636
    %v7753 = vperm.slane %v7730, %v1638
    %v7754 = vsel %vm1640, %v7753, %v7752
    %v7755 = vsel %vm1735, %v7736, %v7733
    %v7756 = vsel %vm1737, %v7739, %v7755
    %v7757 = vsel %vm1739, %v7742, %v7756
    %v7758 = vsel %vm1741, %v7745, %v7757
    %v7759 = vsel %vm1743, %v7748, %v7758
    %v7760 = vsel %vm1745, %v7751, %v7759
    %v7761 = vsel %vm1747, %v7754, %v7760
    %v7763 = vsel %vm1774, %v7467, 0
    %v7765 = vsel %vm1774, %v7761, 0
    %7767 = vmatpush.xpose.msra.mxu0 0.0
    %7768 = vmatpush.xpose.msra.mxu0 0.0
    %7769 = vmatpush.xpose.msra.mxu0 0.0
    %7770 = vmatpush.xpose.msra.mxu0 0.0
    %7771 = vmatpush.xpose.msra.mxu0 0.0
    %7772 = vmatpush.xpose.msra.mxu0 0.0
    %7773 = vmatpush.xpose.msra.mxu0 0.0
    %7774 = vmatpush.xpose.msra.mxu0 0.0
    %7775 = vmatpush.xpose.msra.mxu0 0.0
    %7776 = vmatpush.xpose.msra.mxu0 0.0
    %7777 = vmatpush.xpose.msra.mxu0 0.0
    %7778 = vmatpush.xpose.msra.mxu0 0.0
    %7779 = vmatpush.xpose.msra.mxu0 0.0
    %7780 = vmatpush.xpose.msra.mxu0 0.0
    %7781 = vmatpush.xpose.msra.mxu0 0.0
    %7782 = vmatpush.xpose.msra.mxu0 %v7765
    %7783 = vmatmul.f32.gmra.mxu0 %v7763
    %v7784 = vpop.f32.mrf.mxu0
    %v7785 = vadd.f32 0.0, %v7784
    %7786 = vdwg.mxu0
    %7803 = vset.pattern.permute.xlu0 0
    %7804 = vperm.xlu0 %7803, %v7387
    %v7805 = vpop.permute.xlu0 %7804
    %7806 = vset.pattern.permute.xlu0 0
    %7807 = vperm.xlu0 %7806, %v7388
    %v7808 = vpop.permute.xlu0 %7807
    %7809 = vset.pattern.permute.xlu0 0
    %7810 = vperm.xlu0 %7809, %v7389
    %v7811 = vpop.permute.xlu0 %7810
    %7812 = vset.pattern.permute.xlu0 0
    %7813 = vperm.xlu0 %7812, %v7390
    %v7814 = vpop.permute.xlu0 %7813
    %7815 = vset.pattern.permute.xlu0 0
    %7816 = vperm.xlu0 %7815, %v7391
    %v7817 = vpop.permute.xlu0 %7816
    %7818 = vset.pattern.permute.xlu0 0
    %7819 = vperm.xlu0 %7818, %v7392
    %v7820 = vpop.permute.xlu0 %7819
    %7821 = vset.pattern.permute.xlu0 0
    %7822 = vperm.xlu0 %7821, %v7393
    %v7823 = vpop.permute.xlu0 %7822
    %7824 = vset.pattern.permute.xlu0 0
    %7825 = vperm.xlu0 %7824, %v7394
    %v7826 = vpop.permute.xlu0 %7825
    %7827 = vset.pattern.permute.xlu0 0
    %7828 = vperm.xlu0 %7827, %v7395
    %v7829 = vpop.permute.xlu0 %7828
    %7830 = vset.pattern.permute.xlu0 0
    %7831 = vperm.xlu0 %7830, %v7396
    %v7832 = vpop.permute.xlu0 %7831
    %7833 = vset.pattern.permute.xlu0 0
    %7834 = vperm.xlu0 %7833, %v7397
    %v7835 = vpop.permute.xlu0 %7834
    %7836 = vset.pattern.permute.xlu0 0
    %7837 = vperm.xlu0 %7836, %v7398
    %v7838 = vpop.permute.xlu0 %7837
    %7839 = vset.pattern.permute.xlu0 0
    %7840 = vperm.xlu0 %7839, %v7399
    %v7841 = vpop.permute.xlu0 %7840
    %7842 = vset.pattern.permute.xlu0 0
    %7843 = vperm.xlu0 %7842, %v7400
    %v7844 = vpop.permute.xlu0 %7843
    %7845 = vset.pattern.permute.xlu0 0
    %7846 = vperm.xlu0 %7845, %v7401
    %v7847 = vpop.permute.xlu0 %7846
    %7848 = vset.pattern.permute.xlu0 0
    %7849 = vperm.xlu0 %7848, %v7402
    %v7850 = vpop.permute.xlu0 %7849
    %v7851 = vperm.slane %v7805, %v1636
    %v7852 = vperm.slane %v7808, %v1638
    %v7853 = vsel %vm1640, %v7852, %v7851
    %v7854 = vperm.slane %v7811, %v1636
    %v7855 = vperm.slane %v7814, %v1638
    %v7856 = vsel %vm1640, %v7855, %v7854
    %v7857 = vperm.slane %v7817, %v1636
    %v7858 = vperm.slane %v7820, %v1638
    %v7859 = vsel %vm1640, %v7858, %v7857
    %v7860 = vperm.slane %v7823, %v1636
    %v7861 = vperm.slane %v7826, %v1638
    %v7862 = vsel %vm1640, %v7861, %v7860
    %v7863 = vperm.slane %v7829, %v1636
    %v7864 = vperm.slane %v7832, %v1638
    %v7865 = vsel %vm1640, %v7864, %v7863
    %v7866 = vperm.slane %v7835, %v1636
    %v7867 = vperm.slane %v7838, %v1638
    %v7868 = vsel %vm1640, %v7867, %v7866
    %v7869 = vperm.slane %v7841, %v1636
    %v7870 = vperm.slane %v7844, %v1638
    %v7871 = vsel %vm1640, %v7870, %v7869
    %v7872 = vperm.slane %v7847, %v1636
    %v7873 = vperm.slane %v7850, %v1638
    %v7874 = vsel %vm1640, %v7873, %v7872
    %v7875 = vsel %vm1735, %v7856, %v7853
    %v7876 = vsel %vm1737, %v7859, %v7875
    %v7877 = vsel %vm1739, %v7862, %v7876
    %v7878 = vsel %vm1741, %v7865, %v7877
    %v7879 = vsel %vm1743, %v7868, %v7878
    %v7880 = vsel %vm1745, %v7871, %v7879
    %v7881 = vsel %vm1747, %v7874, %v7880
    %v7883 = vsel %vm1774, %v7499, 0
    %v7885 = vsel %vm1774, %v7881, 0
    %7887 = vmatpush.xpose.msra.mxu0 0.0
    %7888 = vmatpush.xpose.msra.mxu0 0.0
    %7889 = vmatpush.xpose.msra.mxu0 0.0
    %7890 = vmatpush.xpose.msra.mxu0 0.0
    %7891 = vmatpush.xpose.msra.mxu0 0.0
    %7892 = vmatpush.xpose.msra.mxu0 0.0
    %7893 = vmatpush.xpose.msra.mxu0 0.0
    %7894 = vmatpush.xpose.msra.mxu0 0.0
    %7895 = vmatpush.xpose.msra.mxu0 0.0
    %7896 = vmatpush.xpose.msra.mxu0 0.0
    %7897 = vmatpush.xpose.msra.mxu0 0.0
    %7898 = vmatpush.xpose.msra.mxu0 0.0
    %7899 = vmatpush.xpose.msra.mxu0 0.0
    %7900 = vmatpush.xpose.msra.mxu0 0.0
    %7901 = vmatpush.xpose.msra.mxu0 0.0
    %7902 = vmatpush.xpose.msra.mxu0 %v7885
    %7903 = vmatmul.f32.gmra.mxu0 %v7883
    %v7904 = vpop.f32.mrf.mxu0
    %v7905 = vadd.f32 0.0, %v7904
    %7906 = vdwg.mxu0
    %7923 = vset.pattern.permute.xlu0 0
    %7924 = vperm.xlu0 %7923, %v7403
    %v7925 = vpop.permute.xlu0 %7924
    %7926 = vset.pattern.permute.xlu0 0
    %7927 = vperm.xlu0 %7926, %v7404
    %v7928 = vpop.permute.xlu0 %7927
    %7929 = vset.pattern.permute.xlu0 0
    %7930 = vperm.xlu0 %7929, %v7405
    %v7931 = vpop.permute.xlu0 %7930
    %7932 = vset.pattern.permute.xlu0 0
    %7933 = vperm.xlu0 %7932, %v7406
    %v7934 = vpop.permute.xlu0 %7933
    %7935 = vset.pattern.permute.xlu0 0
    %7936 = vperm.xlu0 %7935, %v7407
    %v7937 = vpop.permute.xlu0 %7936
    %7938 = vset.pattern.permute.xlu0 0
    %7939 = vperm.xlu0 %7938, %v7408
    %v7940 = vpop.permute.xlu0 %7939
    %7941 = vset.pattern.permute.xlu0 0
    %7942 = vperm.xlu0 %7941, %v7409
    %v7943 = vpop.permute.xlu0 %7942
    %7944 = vset.pattern.permute.xlu0 0
    %7945 = vperm.xlu0 %7944, %v7410
    %v7946 = vpop.permute.xlu0 %7945
    %7947 = vset.pattern.permute.xlu0 0
    %7948 = vperm.xlu0 %7947, %v7411
    %v7949 = vpop.permute.xlu0 %7948
    %7950 = vset.pattern.permute.xlu0 0
    %7951 = vperm.xlu0 %7950, %v7412
    %v7952 = vpop.permute.xlu0 %7951
    %7953 = vset.pattern.permute.xlu0 0
    %7954 = vperm.xlu0 %7953, %v7413
    %v7955 = vpop.permute.xlu0 %7954
    %7956 = vset.pattern.permute.xlu0 0
    %7957 = vperm.xlu0 %7956, %v7414
    %v7958 = vpop.permute.xlu0 %7957
    %7959 = vset.pattern.permute.xlu0 0
    %7960 = vperm.xlu0 %7959, %v7415
    %v7961 = vpop.permute.xlu0 %7960
    %7962 = vset.pattern.permute.xlu0 0
    %7963 = vperm.xlu0 %7962, %v7416
    %v7964 = vpop.permute.xlu0 %7963
    %7965 = vset.pattern.permute.xlu0 0
    %7966 = vperm.xlu0 %7965, %v7417
    %v7967 = vpop.permute.xlu0 %7966
    %7968 = vset.pattern.permute.xlu0 0
    %7969 = vperm.xlu0 %7968, %v7418
    %v7970 = vpop.permute.xlu0 %7969
    %v7971 = vperm.slane %v7925, %v1636
    %v7972 = vperm.slane %v7928, %v1638
    %v7973 = vsel %vm1640, %v7972, %v7971
    %v7974 = vperm.slane %v7931, %v1636
    %v7975 = vperm.slane %v7934, %v1638
    %v7976 = vsel %vm1640, %v7975, %v7974
    %v7977 = vperm.slane %v7937, %v1636
    %v7978 = vperm.slane %v7940, %v1638
    %v7979 = vsel %vm1640, %v7978, %v7977
    %v7980 = vperm.slane %v7943, %v1636
    %v7981 = vperm.slane %v7946, %v1638
    %v7982 = vsel %vm1640, %v7981, %v7980
    %v7983 = vperm.slane %v7949, %v1636
    %v7984 = vperm.slane %v7952, %v1638
    %v7985 = vsel %vm1640, %v7984, %v7983
    %v7986 = vperm.slane %v7955, %v1636
    %v7987 = vperm.slane %v7958, %v1638
    %v7988 = vsel %vm1640, %v7987, %v7986
    %v7989 = vperm.slane %v7961, %v1636
    %v7990 = vperm.slane %v7964, %v1638
    %v7991 = vsel %vm1640, %v7990, %v7989
    %v7992 = vperm.slane %v7967, %v1636
    %v7993 = vperm.slane %v7970, %v1638
    %v7994 = vsel %vm1640, %v7993, %v7992
    %v7995 = vsel %vm1735, %v7976, %v7973
    %v7996 = vsel %vm1737, %v7979, %v7995
    %v7997 = vsel %vm1739, %v7982, %v7996
    %v7998 = vsel %vm1741, %v7985, %v7997
    %v7999 = vsel %vm1743, %v7988, %v7998
    %v8000 = vsel %vm1745, %v7991, %v7999
    %v8001 = vsel %vm1747, %v7994, %v8000
    %v8003 = vsel %vm1774, %v7531, 0
    %v8005 = vsel %vm1774, %v8001, 0
    %8007 = vmatpush.xpose.msra.mxu0 0.0
    %8008 = vmatpush.xpose.msra.mxu0 0.0
    %8009 = vmatpush.xpose.msra.mxu0 0.0
    %8010 = vmatpush.xpose.msra.mxu0 0.0
    %8011 = vmatpush.xpose.msra.mxu0 0.0
    %8012 = vmatpush.xpose.msra.mxu0 0.0
    %8013 = vmatpush.xpose.msra.mxu0 0.0
    %8014 = vmatpush.xpose.msra.mxu0 0.0
    %8015 = vmatpush.xpose.msra.mxu0 0.0
    %8016 = vmatpush.xpose.msra.mxu0 0.0
    %8017 = vmatpush.xpose.msra.mxu0 0.0
    %8018 = vmatpush.xpose.msra.mxu0 0.0
    %8019 = vmatpush.xpose.msra.mxu0 0.0
    %8020 = vmatpush.xpose.msra.mxu0 0.0
    %8021 = vmatpush.xpose.msra.mxu0 0.0
    %8022 = vmatpush.xpose.msra.mxu0 %v8005
    %8023 = vmatmul.f32.gmra.mxu0 %v8003
    %v8024 = vpop.f32.mrf.mxu0
    %v8025 = vadd.f32 0.0, %v8024
    %8026 = vdwg.mxu0
    %8027 = vxpose.xlu0.b32.start [1/16] %v7665, 128
    %8028 = vxpose.xlu0.b32.cont [2/16] 0.0, 128
    %8029 = vxpose.xlu0.b32.cont [3/16] 0.0, 128
    %8030 = vxpose.xlu0.b32.cont [4/16] 0.0, 128
    %8031 = vxpose.xlu0.b32.cont [5/16] 0.0, 128
    %8032 = vxpose.xlu0.b32.cont [6/16] 0.0, 128
    %8033 = vxpose.xlu0.b32.cont [7/16] 0.0, 128
    %8034 = vxpose.xlu0.b32.cont [8/16] 0.0, 128
    %8035 = vxpose.xlu0.b32.cont [9/16] 0.0, 128
    %8036 = vxpose.xlu0.b32.cont [10/16] 0.0, 128
    %8037 = vxpose.xlu0.b32.cont [11/16] 0.0, 128
    %8038 = vxpose.xlu0.b32.cont [12/16] 0.0, 128
    %8039 = vxpose.xlu0.b32.cont [13/16] 0.0, 128
    %8040 = vxpose.xlu0.b32.cont [14/16] 0.0, 128
    %8041 = vxpose.xlu0.b32.cont [15/16] 0.0, 128
    %8042 = vxpose.xlu0.b32.end [16/16] 0.0, 128
    %v8043 = vpop.trf.xlu0
    %v8044 = vpop.trf.xlu0
    %v8045 = vpop.trf.xlu0
    %v8046 = vpop.trf.xlu0
    %v8047 = vpop.trf.xlu0
    %v8048 = vpop.trf.xlu0
    %v8049 = vpop.trf.xlu0
    %v8050 = vpop.trf.xlu0
    %v8051 = vpop.trf.xlu0
    %v8052 = vpop.trf.xlu0
    %v8053 = vpop.trf.xlu0
    %v8054 = vpop.trf.xlu0
    %v8055 = vpop.trf.xlu0
    %v8056 = vpop.trf.xlu0
    %v8057 = vpop.trf.xlu0
    %v8058 = vpop.trf.xlu0
    %8059 = vxpose.xlu0.b32.start [1/16] %v7785, 128
    %8060 = vxpose.xlu0.b32.cont [2/16] 0.0, 128
    %8061 = vxpose.xlu0.b32.cont [3/16] 0.0, 128
    %8062 = vxpose.xlu0.b32.cont [4/16] 0.0, 128
    %8063 = vxpose.xlu0.b32.cont [5/16] 0.0, 128
    %8064 = vxpose.xlu0.b32.cont [6/16] 0.0, 128
    %8065 = vxpose.xlu0.b32.cont [7/16] 0.0, 128
    %8066 = vxpose.xlu0.b32.cont [8/16] 0.0, 128
    %8067 = vxpose.xlu0.b32.cont [9/16] 0.0, 128
    %8068 = vxpose.xlu0.b32.cont [10/16] 0.0, 128
    %8069 = vxpose.xlu0.b32.cont [11/16] 0.0, 128
    %8070 = vxpose.xlu0.b32.cont [12/16] 0.0, 128
    %8071 = vxpose.xlu0.b32.cont [13/16] 0.0, 128
    %8072 = vxpose.xlu0.b32.cont [14/16] 0.0, 128
    %8073 = vxpose.xlu0.b32.cont [15/16] 0.0, 128
    %8074 = vxpose.xlu0.b32.end [16/16] 0.0, 128
    %v8075 = vpop.trf.xlu0
    %v8076 = vpop.trf.xlu0
    %v8077 = vpop.trf.xlu0
    %v8078 = vpop.trf.xlu0
    %v8079 = vpop.trf.xlu0
    %v8080 = vpop.trf.xlu0
    %v8081 = vpop.trf.xlu0
    %v8082 = vpop.trf.xlu0
    %v8083 = vpop.trf.xlu0
    %v8084 = vpop.trf.xlu0
    %v8085 = vpop.trf.xlu0
    %v8086 = vpop.trf.xlu0
    %v8087 = vpop.trf.xlu0
    %v8088 = vpop.trf.xlu0
    %v8089 = vpop.trf.xlu0
    %v8090 = vpop.trf.xlu0
    %8091 = vxpose.xlu0.b32.start [1/16] %v7905, 128
    %8092 = vxpose.xlu0.b32.cont [2/16] 0.0, 128
    %8093 = vxpose.xlu0.b32.cont [3/16] 0.0, 128
    %8094 = vxpose.xlu0.b32.cont [4/16] 0.0, 128
    %8095 = vxpose.xlu0.b32.cont [5/16] 0.0, 128
    %8096 = vxpose.xlu0.b32.cont [6/16] 0.0, 128
    %8097 = vxpose.xlu0.b32.cont [7/16] 0.0, 128
    %8098 = vxpose.xlu0.b32.cont [8/16] 0.0, 128
    %8099 = vxpose.xlu0.b32.cont [9/16] 0.0, 128
    %8100 = vxpose.xlu0.b32.cont [10/16] 0.0, 128
    %8101 = vxpose.xlu0.b32.cont [11/16] 0.0, 128
    %8102 = vxpose.xlu0.b32.cont [12/16] 0.0, 128
    %8103 = vxpose.xlu0.b32.cont [13/16] 0.0, 128
    %8104 = vxpose.xlu0.b32.cont [14/16] 0.0, 128
    %8105 = vxpose.xlu0.b32.cont [15/16] 0.0, 128
    %8106 = vxpose.xlu0.b32.end [16/16] 0.0, 128
    %v8107 = vpop.trf.xlu0
    %v8108 = vpop.trf.xlu0
    %v8109 = vpop.trf.xlu0
    %v8110 = vpop.trf.xlu0
    %v8111 = vpop.trf.xlu0
    %v8112 = vpop.trf.xlu0
    %v8113 = vpop.trf.xlu0
    %v8114 = vpop.trf.xlu0
    %v8115 = vpop.trf.xlu0
    %v8116 = vpop.trf.xlu0
    %v8117 = vpop.trf.xlu0
    %v8118 = vpop.trf.xlu0
    %v8119 = vpop.trf.xlu0
    %v8120 = vpop.trf.xlu0
    %v8121 = vpop.trf.xlu0
    %v8122 = vpop.trf.xlu0
    %8123 = vxpose.xlu0.b32.start [1/16] %v8025, 128
    %8124 = vxpose.xlu0.b32.cont [2/16] 0.0, 128
    %8125 = vxpose.xlu0.b32.cont [3/16] 0.0, 128
    %8126 = vxpose.xlu0.b32.cont [4/16] 0.0, 128
    %8127 = vxpose.xlu0.b32.cont [5/16] 0.0, 128
    %8128 = vxpose.xlu0.b32.cont [6/16] 0.0, 128
    %8129 = vxpose.xlu0.b32.cont [7/16] 0.0, 128
    %8130 = vxpose.xlu0.b32.cont [8/16] 0.0, 128
    %8131 = vxpose.xlu0.b32.cont [9/16] 0.0, 128
    %8132 = vxpose.xlu0.b32.cont [10/16] 0.0, 128
    %8133 = vxpose.xlu0.b32.cont [11/16] 0.0, 128
    %8134 = vxpose.xlu0.b32.cont [12/16] 0.0, 128
    %8135 = vxpose.xlu0.b32.cont [13/16] 0.0, 128
    %8136 = vxpose.xlu0.b32.cont [14/16] 0.0, 128
    %8137 = vxpose.xlu0.b32.cont [15/16] 0.0, 128
    %8138 = vxpose.xlu0.b32.end [16/16] 0.0, 128
    %v8139 = vpop.trf.xlu0
    %v8140 = vpop.trf.xlu0
    %v8141 = vpop.trf.xlu0
    %v8142 = vpop.trf.xlu0
    %v8143 = vpop.trf.xlu0
    %v8144 = vpop.trf.xlu0
    %v8145 = vpop.trf.xlu0
    %v8146 = vpop.trf.xlu0
    %v8147 = vpop.trf.xlu0
    %v8148 = vpop.trf.xlu0
    %v8149 = vpop.trf.xlu0
    %v8150 = vpop.trf.xlu0
    %v8151 = vpop.trf.xlu0
    %v8152 = vpop.trf.xlu0
    %v8153 = vpop.trf.xlu0
    %v8154 = vpop.trf.xlu0
    %v8155 = vrot.slane %v8107, 4
    %v8156 = vsel %vm3316, %v8155, %v8043
    %v8157 = vrot.slane %v8043, 4
    %v8158 = vsel %vm3316, %v8107, %v8157
    %v8160 = vunpack.c.l.s4 1983009808
    %v8161 = vunpack.c.0.s8 %v8160
    %v8162 = vperm.slane %v8156, %v8161
    %v8164 = vunpack.c.l.s4 1983009808
    %v8165 = vunpack.c.0.s8 %v8164
    %v8166 = vperm.slane %v8158, %v8165
    %v8167 = vrot.slane %v8139, 4
    %v8168 = vsel %vm3316, %v8167, %v8075
    %v8169 = vrot.slane %v8075, 4
    %v8170 = vsel %vm3316, %v8139, %v8169
    %v8172 = vunpack.c.l.s4 1983009808
    %v8173 = vunpack.c.0.s8 %v8172
    %v8174 = vperm.slane %v8168, %v8173
    %v8176 = vunpack.c.l.s4 1983009808
    %v8177 = vunpack.c.0.s8 %v8176
    %v8178 = vperm.slane %v8170, %v8177
    %v8179 = vrot.slane %v8174, 4
    %v8180 = vsel %vm3316, %v8179, %v8162
    %v8181 = vrot.slane %v8162, 4
    %v8182 = vsel %vm3316, %v8174, %v8181
    %v8184 = vunpack.c.l.s4 1934713408
    %v8185 = vunpack.c.0.s8 %v8184
    %v8186 = vperm.slane %v8180, %v8185
    %v8188 = vunpack.c.l.s4 1934713408
    %v8189 = vunpack.c.0.s8 %v8188
    %v8190 = vperm.slane %v8182, %v8189
    %v8191 = vrot.slane %v8178, 4
    %v8192 = vsel %vm3316, %v8191, %v8166
    %v8193 = vrot.slane %v8166, 4
    %v8194 = vsel %vm3316, %v8178, %v8193
    %v8196 = vunpack.c.l.s4 1934713408
    %v8197 = vunpack.c.0.s8 %v8196
    %v8198 = vperm.slane %v8192, %v8197
    %v8200 = vunpack.c.l.s4 1934713408
    %v8201 = vunpack.c.0.s8 %v8200
    %v8202 = vperm.slane %v8194, %v8201
    %v8203 = vrot.slane %v8186, 4
    %v8204 = vsel %vm3316, 0.0, %v8203
    %v8205 = vrot.slane %v8190, 4
    %v8206 = vsel %vm3316, 0.0, %v8205
    %v8207 = vrot.slane %v8198, 4
    %v8208 = vsel %vm3316, 0.0, %v8207
    %v8209 = vrot.slane %v8202, 4
    %v8210 = vsel %vm3316, 0.0, %v8209
    %v8211 = vsel %vm3316, %v8205, %v8186
    %v8213 = vunpack.c.l.s4 1983009808
    %v8214 = vunpack.c.0.s8 %v8213
    %v8215 = vperm.slane %v8211, %v8214
    %v8216 = vrot.slane %v8206, 4
    %v8217 = vsel %vm3316, %v8216, %v8204
    %v8219 = vunpack.c.l.s4 1983009808
    %v8220 = vunpack.c.0.s8 %v8219
    %v8221 = vperm.slane %v8217, %v8220
    %v8222 = vsel %vm3316, %v8209, %v8198
    %v8224 = vunpack.c.l.s4 1983009808
    %v8225 = vunpack.c.0.s8 %v8224
    %v8226 = vperm.slane %v8222, %v8225
    %v8227 = vrot.slane %v8210, 4
    %v8228 = vsel %vm3316, %v8227, %v8208
    %v8230 = vunpack.c.l.s4 1983009808
    %v8231 = vunpack.c.0.s8 %v8230
    %v8232 = vperm.slane %v8228, %v8231
    %v8233 = vrot.slane %v8221, 4
    %v8234 = vsel %vm3316, %v8233, %v8215
    %v8235 = vrot.slane %v8215, 4
    %v8236 = vsel %vm3316, %v8221, %v8235
    %v8238 = vunpack.c.l.s4 1934713408
    %v8239 = vunpack.c.0.s8 %v8238
    %v8240 = vperm.slane %v8234, %v8239
    %v8242 = vunpack.c.l.s4 1934713408
    %v8243 = vunpack.c.0.s8 %v8242
    %v8244 = vperm.slane %v8236, %v8243
    %v8245 = vrot.slane %v8232, 4
    %v8246 = vsel %vm3316, %v8245, %v8226
    %v8247 = vrot.slane %v8226, 4
    %v8248 = vsel %vm3316, %v8232, %v8247
    %v8250 = vunpack.c.l.s4 1934713408
    %v8251 = vunpack.c.0.s8 %v8250
    %v8252 = vperm.slane %v8246, %v8251
    %v8254 = vunpack.c.l.s4 1934713408
    %v8255 = vunpack.c.0.s8 %v8254
    %v8256 = vperm.slane %v8248, %v8255
    %v8257 = vrot.slane %v8252, 4
    %v8258 = vsel %vm3316, %v8257, %v8240
    %v8259 = vrot.slane %v8240, 4
    %v8260 = vsel %vm3316, %v8252, %v8259
    %v8261 = vrot.slane %v8256, 4
    %v8262 = vsel %vm3316, %v8261, %v8244
    %v8263 = vrot.slane %v8244, 4
    %v8264 = vsel %vm3316, %v8256, %v8263
    %8266 = vrot.lane.b32.xlu0 %v8260, 8
    %v8267 = vpop.permute.xlu0 %8266
    %8270 = vrot.lane.b32.xlu0 %v8262, 16
    %v8271 = vpop.permute.xlu0 %8270
    %8274 = vrot.lane.b32.xlu0 %v8264, 24
    %v8275 = vpop.permute.xlu0 %8274
    %v8277 = vsel %vm674, %v8258, %v8267
    %v8278 = vsel %vm1774, %v8277, %v8271
    %v8279 = vsel %vm3440, %v8278, %v8275
    %8280 = vxpose.xlu0.b32.start [1/16] %v442, 128
    %8281 = vxpose.xlu0.b32.cont [2/16] 0.0, 128
    %8282 = vxpose.xlu0.b32.cont [3/16] 0.0, 128
    %8283 = vxpose.xlu0.b32.cont [4/16] 0.0, 128
    %8284 = vxpose.xlu0.b32.cont [5/16] 0.0, 128
    %8285 = vxpose.xlu0.b32.cont [6/16] 0.0, 128
    %8286 = vxpose.xlu0.b32.cont [7/16] 0.0, 128
    %8287 = vxpose.xlu0.b32.cont [8/16] 0.0, 128
    %8288 = vxpose.xlu0.b32.cont [9/16] 0.0, 128
    %8289 = vxpose.xlu0.b32.cont [10/16] 0.0, 128
    %8290 = vxpose.xlu0.b32.cont [11/16] 0.0, 128
    %8291 = vxpose.xlu0.b32.cont [12/16] 0.0, 128
    %8292 = vxpose.xlu0.b32.cont [13/16] 0.0, 128
    %8293 = vxpose.xlu0.b32.cont [14/16] 0.0, 128
    %8294 = vxpose.xlu0.b32.cont [15/16] 0.0, 128
    %8295 = vxpose.xlu0.b32.end [16/16] 0.0, 128
    %v8296 = vpop.trf.xlu0
    %v8297 = vpop.trf.xlu0
    %v8298 = vpop.trf.xlu0
    %v8299 = vpop.trf.xlu0
    %v8300 = vpop.trf.xlu0
    %v8301 = vpop.trf.xlu0
    %v8302 = vpop.trf.xlu0
    %v8303 = vpop.trf.xlu0
    %v8304 = vpop.trf.xlu0
    %v8305 = vpop.trf.xlu0
    %v8306 = vpop.trf.xlu0
    %v8307 = vpop.trf.xlu0
    %v8308 = vpop.trf.xlu0
    %v8309 = vpop.trf.xlu0
    %v8310 = vpop.trf.xlu0
    %v8311 = vpop.trf.xlu0
    %8312 = vxpose.xlu0.b32.start [1/16] %v5378, 128
    %8313 = vxpose.xlu0.b32.cont [2/16] 0.0, 128
    %8314 = vxpose.xlu0.b32.cont [3/16] 0.0, 128
    %8315 = vxpose.xlu0.b32.cont [4/16] 0.0, 128
    %8316 = vxpose.xlu0.b32.cont [5/16] 0.0, 128
    %8317 = vxpose.xlu0.b32.cont [6/16] 0.0, 128
    %8318 = vxpose.xlu0.b32.cont [7/16] 0.0, 128
    %8319 = vxpose.xlu0.b32.cont [8/16] 0.0, 128
    %8320 = vxpose.xlu0.b32.cont [9/16] 0.0, 128
    %8321 = vxpose.xlu0.b32.cont [10/16] 0.0, 128
    %8322 = vxpose.xlu0.b32.cont [11/16] 0.0, 128
    %8323 = vxpose.xlu0.b32.cont [12/16] 0.0, 128
    %8324 = vxpose.xlu0.b32.cont [13/16] 0.0, 128
    %8325 = vxpose.xlu0.b32.cont [14/16] 0.0, 128
    %8326 = vxpose.xlu0.b32.cont [15/16] 0.0, 128
    %8327 = vxpose.xlu0.b32.end [16/16] 0.0, 128
    %v8328 = vpop.trf.xlu0
    %v8329 = vpop.trf.xlu0
    %v8330 = vpop.trf.xlu0
    %v8331 = vpop.trf.xlu0
    %v8332 = vpop.trf.xlu0
    %v8333 = vpop.trf.xlu0
    %v8334 = vpop.trf.xlu0
    %v8335 = vpop.trf.xlu0
    %v8336 = vpop.trf.xlu0
    %v8337 = vpop.trf.xlu0
    %v8338 = vpop.trf.xlu0
    %v8339 = vpop.trf.xlu0
    %v8340 = vpop.trf.xlu0
    %v8341 = vpop.trf.xlu0
    %v8342 = vpop.trf.xlu0
    %v8343 = vpop.trf.xlu0
    %8344 = vxpose.xlu0.b32.start [1/16] %v5381, 128
    %8345 = vxpose.xlu0.b32.cont [2/16] 0.0, 128
    %8346 = vxpose.xlu0.b32.cont [3/16] 0.0, 128
    %8347 = vxpose.xlu0.b32.cont [4/16] 0.0, 128
    %8348 = vxpose.xlu0.b32.cont [5/16] 0.0, 128
    %8349 = vxpose.xlu0.b32.cont [6/16] 0.0, 128
    %8350 = vxpose.xlu0.b32.cont [7/16] 0.0, 128
    %8351 = vxpose.xlu0.b32.cont [8/16] 0.0, 128
    %8352 = vxpose.xlu0.b32.cont [9/16] 0.0, 128
    %8353 = vxpose.xlu0.b32.cont [10/16] 0.0, 128
    %8354 = vxpose.xlu0.b32.cont [11/16] 0.0, 128
    %8355 = vxpose.xlu0.b32.cont [12/16] 0.0, 128
    %8356 = vxpose.xlu0.b32.cont [13/16] 0.0, 128
    %8357 = vxpose.xlu0.b32.cont [14/16] 0.0, 128
    %8358 = vxpose.xlu0.b32.cont [15/16] 0.0, 128
    %8359 = vxpose.xlu0.b32.end [16/16] 0.0, 128
    %v8360 = vpop.trf.xlu0
    %v8361 = vpop.trf.xlu0
    %v8362 = vpop.trf.xlu0
    %v8363 = vpop.trf.xlu0
    %v8364 = vpop.trf.xlu0
    %v8365 = vpop.trf.xlu0
    %v8366 = vpop.trf.xlu0
    %v8367 = vpop.trf.xlu0
    %v8368 = vpop.trf.xlu0
    %v8369 = vpop.trf.xlu0
    %v8370 = vpop.trf.xlu0
    %v8371 = vpop.trf.xlu0
    %v8372 = vpop.trf.xlu0
    %v8373 = vpop.trf.xlu0
    %v8374 = vpop.trf.xlu0
    %v8375 = vpop.trf.xlu0
    %8376 = vxpose.xlu0.b32.start [1/16] %v5384, 128
    %8377 = vxpose.xlu0.b32.cont [2/16] 0.0, 128
    %8378 = vxpose.xlu0.b32.cont [3/16] 0.0, 128
    %8379 = vxpose.xlu0.b32.cont [4/16] 0.0, 128
    %8380 = vxpose.xlu0.b32.cont [5/16] 0.0, 128
    %8381 = vxpose.xlu0.b32.cont [6/16] 0.0, 128
    %8382 = vxpose.xlu0.b32.cont [7/16] 0.0, 128
    %8383 = vxpose.xlu0.b32.cont [8/16] 0.0, 128
    %8384 = vxpose.xlu0.b32.cont [9/16] 0.0, 128
    %8385 = vxpose.xlu0.b32.cont [10/16] 0.0, 128
    %8386 = vxpose.xlu0.b32.cont [11/16] 0.0, 128
    %8387 = vxpose.xlu0.b32.cont [12/16] 0.0, 128
    %8388 = vxpose.xlu0.b32.cont [13/16] 0.0, 128
    %8389 = vxpose.xlu0.b32.cont [14/16] 0.0, 128
    %8390 = vxpose.xlu0.b32.cont [15/16] 0.0, 128
    %8391 = vxpose.xlu0.b32.end [16/16] 0.0, 128
    %v8392 = vpop.trf.xlu0
    %v8393 = vpop.trf.xlu0
    %v8394 = vpop.trf.xlu0
    %v8395 = vpop.trf.xlu0
    %v8396 = vpop.trf.xlu0
    %v8397 = vpop.trf.xlu0
    %v8398 = vpop.trf.xlu0
    %v8399 = vpop.trf.xlu0
    %v8400 = vpop.trf.xlu0
    %v8401 = vpop.trf.xlu0
    %v8402 = vpop.trf.xlu0
    %v8403 = vpop.trf.xlu0
    %v8404 = vpop.trf.xlu0
    %v8405 = vpop.trf.xlu0
    %v8406 = vpop.trf.xlu0
    %v8407 = vpop.trf.xlu0
    %v8408 = vsel %vm674, %v475, 0
    %8410 = vmatpush.msra.mxu0 0.0
    %8411 = vmatpush.msra.mxu0 0.0
    %8412 = vmatpush.msra.mxu0 0.0
    %8413 = vmatpush.msra.mxu0 0.0
    %8414 = vmatpush.msra.mxu0 0.0
    %8415 = vmatpush.msra.mxu0 0.0
    %8416 = vmatpush.msra.mxu0 0.0
    %8417 = vmatpush.msra.mxu0 0.0
    %8418 = vmatpush.msra.mxu0 0.0
    %8419 = vmatpush.msra.mxu0 0.0
    %8420 = vmatpush.msra.mxu0 0.0
    %8421 = vmatpush.msra.mxu0 0.0
    %8422 = vmatpush.msra.mxu0 0.0
    %8423 = vmatpush.msra.mxu0 0.0
    %8424 = vmatpush.msra.mxu0 0.0
    %8425 = vmatpush.msra.mxu0 %v8296
    %8426 = vmatmul.f32.gmra.mxu0 %v8408
    %v8427 = vpop.f32.mrf.mxu0
    %v8428 = vadd.f32 0.0, %v8427
    %8429 = vdwg.mxu0
    %v8430 = vsel %vm674, %v5388, 0
    %8432 = vmatpush.msra.mxu0 0.0
    %8433 = vmatpush.msra.mxu0 0.0
    %8434 = vmatpush.msra.mxu0 0.0
    %8435 = vmatpush.msra.mxu0 0.0
    %8436 = vmatpush.msra.mxu0 0.0
    %8437 = vmatpush.msra.mxu0 0.0
    %8438 = vmatpush.msra.mxu0 0.0
    %8439 = vmatpush.msra.mxu0 0.0
    %8440 = vmatpush.msra.mxu0 0.0
    %8441 = vmatpush.msra.mxu0 0.0
    %8442 = vmatpush.msra.mxu0 0.0
    %8443 = vmatpush.msra.mxu0 0.0
    %8444 = vmatpush.msra.mxu0 0.0
    %8445 = vmatpush.msra.mxu0 0.0
    %8446 = vmatpush.msra.mxu0 0.0
    %8447 = vmatpush.msra.mxu0 %v8328
    %8448 = vmatmul.f32.gmra.mxu0 %v8430
    %v8449 = vpop.f32.mrf.mxu0
    %v8450 = vadd.f32 0.0, %v8449
    %8451 = vdwg.mxu0
    %v8452 = vsel %vm674, %v5391, 0
    %8454 = vmatpush.msra.mxu0 0.0
    %8455 = vmatpush.msra.mxu0 0.0
    %8456 = vmatpush.msra.mxu0 0.0
    %8457 = vmatpush.msra.mxu0 0.0
    %8458 = vmatpush.msra.mxu0 0.0
    %8459 = vmatpush.msra.mxu0 0.0
    %8460 = vmatpush.msra.mxu0 0.0
    %8461 = vmatpush.msra.mxu0 0.0
    %8462 = vmatpush.msra.mxu0 0.0
    %8463 = vmatpush.msra.mxu0 0.0
    %8464 = vmatpush.msra.mxu0 0.0
    %8465 = vmatpush.msra.mxu0 0.0
    %8466 = vmatpush.msra.mxu0 0.0
    %8467 = vmatpush.msra.mxu0 0.0
    %8468 = vmatpush.msra.mxu0 0.0
    %8469 = vmatpush.msra.mxu0 %v8360
    %8470 = vmatmul.f32.gmra.mxu0 %v8452
    %v8471 = vpop.f32.mrf.mxu0
    %v8472 = vadd.f32 0.0, %v8471
    %8473 = vdwg.mxu0
    %v8474 = vsel %vm674, %v5394, 0
    %8476 = vmatpush.msra.mxu0 0.0
    %8477 = vmatpush.msra.mxu0 0.0
    %8478 = vmatpush.msra.mxu0 0.0
    %8479 = vmatpush.msra.mxu0 0.0
    %8480 = vmatpush.msra.mxu0 0.0
    %8481 = vmatpush.msra.mxu0 0.0
    %8482 = vmatpush.msra.mxu0 0.0
    %8483 = vmatpush.msra.mxu0 0.0
    %8484 = vmatpush.msra.mxu0 0.0
    %8485 = vmatpush.msra.mxu0 0.0
    %8486 = vmatpush.msra.mxu0 0.0
    %8487 = vmatpush.msra.mxu0 0.0
    %8488 = vmatpush.msra.mxu0 0.0
    %8489 = vmatpush.msra.mxu0 0.0
    %8490 = vmatpush.msra.mxu0 0.0
    %8491 = vmatpush.msra.mxu0 %v8392
    %8492 = vmatmul.f32.gmra.mxu0 %v8474
    %v8493 = vpop.f32.mrf.mxu0
    %v8494 = vadd.f32 0.0, %v8493
    %8495 = vdwg.mxu0
    %v8496 = vsel %vm5398, 1, 0
    %vm8497 = vcmp.eq.s32.totalorder %v8496, 1
    %v8502 = vperm.slane %v8428, 0
    %v8503 = vlaneseq
    %v8504 = vshrl.u32 %v8503, 7
    %8506 = vset.pattern.permute.xlu0 %v8504
    %8507 = vperm.xlu0 %8506, %v8502
    %v8508 = vpop.permute.xlu0 %8507
    %v8509 = vperm.slane %v8428, 1
    %v8510 = vlaneseq
    %v8511 = vshrl.u32 %v8510, 7
    %8513 = vset.pattern.permute.xlu0 %v8511
    %8514 = vperm.xlu0 %8513, %v8509
    %v8515 = vpop.permute.xlu0 %8514
    %v8516 = vperm.slane %v8428, 2
    %v8517 = vlaneseq
    %v8518 = vshrl.u32 %v8517, 7
    %8520 = vset.pattern.permute.xlu0 %v8518
    %8521 = vperm.xlu0 %8520, %v8516
    %v8522 = vpop.permute.xlu0 %8521
    %v8523 = vperm.slane %v8428, 3
    %v8524 = vlaneseq
    %v8525 = vshrl.u32 %v8524, 7
    %8527 = vset.pattern.permute.xlu0 %v8525
    %8528 = vperm.xlu0 %8527, %v8523
    %v8529 = vpop.permute.xlu0 %8528
    %v8530 = vperm.slane %v8428, 4
    %v8531 = vlaneseq
    %v8532 = vshrl.u32 %v8531, 7
    %8534 = vset.pattern.permute.xlu0 %v8532
    %8535 = vperm.xlu0 %8534, %v8530
    %v8536 = vpop.permute.xlu0 %8535
    %v8537 = vperm.slane %v8428, 5
    %v8538 = vlaneseq
    %v8539 = vshrl.u32 %v8538, 7
    %8541 = vset.pattern.permute.xlu0 %v8539
    %8542 = vperm.xlu0 %8541, %v8537
    %v8543 = vpop.permute.xlu0 %8542
    %v8544 = vperm.slane %v8428, 6
    %v8545 = vlaneseq
    %v8546 = vshrl.u32 %v8545, 7
    %8548 = vset.pattern.permute.xlu0 %v8546
    %8549 = vperm.xlu0 %8548, %v8544
    %v8550 = vpop.permute.xlu0 %8549
    %v8551 = vperm.slane %v8428, 7
    %v8552 = vlaneseq
    %v8553 = vshrl.u32 %v8552, 7
    %8555 = vset.pattern.permute.xlu0 %v8553
    %8556 = vperm.xlu0 %8555, %v8551
    %v8557 = vpop.permute.xlu0 %8556
    %v8558 = vperm.slane %v8450, 0
    %v8559 = vlaneseq
    %v8560 = vshrl.u32 %v8559, 7
    %8562 = vset.pattern.permute.xlu0 %v8560
    %8563 = vperm.xlu0 %8562, %v8558
    %v8564 = vpop.permute.xlu0 %8563
    %v8565 = vperm.slane %v8450, 1
    %v8566 = vlaneseq
    %v8567 = vshrl.u32 %v8566, 7
    %8569 = vset.pattern.permute.xlu0 %v8567
    %8570 = vperm.xlu0 %8569, %v8565
    %v8571 = vpop.permute.xlu0 %8570
    %v8572 = vperm.slane %v8450, 2
    %v8573 = vlaneseq
    %v8574 = vshrl.u32 %v8573, 7
    %8576 = vset.pattern.permute.xlu0 %v8574
    %8577 = vperm.xlu0 %8576, %v8572
    %v8578 = vpop.permute.xlu0 %8577
    %v8579 = vperm.slane %v8450, 3
    %v8580 = vlaneseq
    %v8581 = vshrl.u32 %v8580, 7
    %8583 = vset.pattern.permute.xlu0 %v8581
    %8584 = vperm.xlu0 %8583, %v8579
    %v8585 = vpop.permute.xlu0 %8584
    %v8586 = vperm.slane %v8450, 4
    %v8587 = vlaneseq
    %v8588 = vshrl.u32 %v8587, 7
    %8590 = vset.pattern.permute.xlu0 %v8588
    %8591 = vperm.xlu0 %8590, %v8586
    %v8592 = vpop.permute.xlu0 %8591
    %v8593 = vperm.slane %v8450, 5
    %v8594 = vlaneseq
    %v8595 = vshrl.u32 %v8594, 7
    %8597 = vset.pattern.permute.xlu0 %v8595
    %8598 = vperm.xlu0 %8597, %v8593
    %v8599 = vpop.permute.xlu0 %8598
    %v8600 = vperm.slane %v8450, 6
    %v8601 = vlaneseq
    %v8602 = vshrl.u32 %v8601, 7
    %8604 = vset.pattern.permute.xlu0 %v8602
    %8605 = vperm.xlu0 %8604, %v8600
    %v8606 = vpop.permute.xlu0 %8605
    %v8607 = vperm.slane %v8450, 7
    %v8608 = vlaneseq
    %v8609 = vshrl.u32 %v8608, 7
    %8611 = vset.pattern.permute.xlu0 %v8609
    %8612 = vperm.xlu0 %8611, %v8607
    %v8613 = vpop.permute.xlu0 %8612
    %v8614 = vperm.slane %v8472, 0
    %v8615 = vlaneseq
    %v8616 = vshrl.u32 %v8615, 7
    %8618 = vset.pattern.permute.xlu0 %v8616
    %8619 = vperm.xlu0 %8618, %v8614
    %v8620 = vpop.permute.xlu0 %8619
    %v8621 = vperm.slane %v8472, 1
    %v8622 = vlaneseq
    %v8623 = vshrl.u32 %v8622, 7
    %8625 = vset.pattern.permute.xlu0 %v8623
    %8626 = vperm.xlu0 %8625, %v8621
    %v8627 = vpop.permute.xlu0 %8626
    %v8628 = vperm.slane %v8472, 2
    %v8629 = vlaneseq
    %v8630 = vshrl.u32 %v8629, 7
    %8632 = vset.pattern.permute.xlu0 %v8630
    %8633 = vperm.xlu0 %8632, %v8628
    %v8634 = vpop.permute.xlu0 %8633
    %v8635 = vperm.slane %v8472, 3
    %v8636 = vlaneseq
    %v8637 = vshrl.u32 %v8636, 7
    %8639 = vset.pattern.permute.xlu0 %v8637
    %8640 = vperm.xlu0 %8639, %v8635
    %v8641 = vpop.permute.xlu0 %8640
    %v8642 = vperm.slane %v8472, 4
    %v8643 = vlaneseq
    %v8644 = vshrl.u32 %v8643, 7
    %8646 = vset.pattern.permute.xlu0 %v8644
    %8647 = vperm.xlu0 %8646, %v8642
    %v8648 = vpop.permute.xlu0 %8647
    %v8649 = vperm.slane %v8472, 5
    %v8650 = vlaneseq
    %v8651 = vshrl.u32 %v8650, 7
    %8653 = vset.pattern.permute.xlu0 %v8651
    %8654 = vperm.xlu0 %8653, %v8649
    %v8655 = vpop.permute.xlu0 %8654
    %v8656 = vperm.slane %v8472, 6
    %v8657 = vlaneseq
    %v8658 = vshrl.u32 %v8657, 7
    %8660 = vset.pattern.permute.xlu0 %v8658
    %8661 = vperm.xlu0 %8660, %v8656
    %v8662 = vpop.permute.xlu0 %8661
    %v8663 = vperm.slane %v8472, 7
    %v8664 = vlaneseq
    %v8665 = vshrl.u32 %v8664, 7
    %8667 = vset.pattern.permute.xlu0 %v8665
    %8668 = vperm.xlu0 %8667, %v8663
    %v8669 = vpop.permute.xlu0 %8668
    %v8670 = vperm.slane %v8494, 0
    %v8671 = vlaneseq
    %v8672 = vshrl.u32 %v8671, 7
    %8674 = vset.pattern.permute.xlu0 %v8672
    %8675 = vperm.xlu0 %8674, %v8670
    %v8676 = vpop.permute.xlu0 %8675
    %v8677 = vperm.slane %v8494, 1
    %v8678 = vlaneseq
    %v8679 = vshrl.u32 %v8678, 7
    %8681 = vset.pattern.permute.xlu0 %v8679
    %8682 = vperm.xlu0 %8681, %v8677
    %v8683 = vpop.permute.xlu0 %8682
    %v8684 = vperm.slane %v8494, 2
    %v8685 = vlaneseq
    %v8686 = vshrl.u32 %v8685, 7
    %8688 = vset.pattern.permute.xlu0 %v8686
    %8689 = vperm.xlu0 %8688, %v8684
    %v8690 = vpop.permute.xlu0 %8689
    %v8691 = vperm.slane %v8494, 3
    %v8692 = vlaneseq
    %v8693 = vshrl.u32 %v8692, 7
    %8695 = vset.pattern.permute.xlu0 %v8693
    %8696 = vperm.xlu0 %8695, %v8691
    %v8697 = vpop.permute.xlu0 %8696
    %v8698 = vperm.slane %v8494, 4
    %v8699 = vlaneseq
    %v8700 = vshrl.u32 %v8699, 7
    %8702 = vset.pattern.permute.xlu0 %v8700
    %8703 = vperm.xlu0 %8702, %v8698
    %v8704 = vpop.permute.xlu0 %8703
    %v8705 = vperm.slane %v8494, 5
    %v8706 = vlaneseq
    %v8707 = vshrl.u32 %v8706, 7
    %8709 = vset.pattern.permute.xlu0 %v8707
    %8710 = vperm.xlu0 %8709, %v8705
    %v8711 = vpop.permute.xlu0 %8710
    %v8712 = vperm.slane %v8494, 6
    %v8713 = vlaneseq
    %v8714 = vshrl.u32 %v8713, 7
    %8716 = vset.pattern.permute.xlu0 %v8714
    %8717 = vperm.xlu0 %8716, %v8712
    %v8718 = vpop.permute.xlu0 %8717
    %v8719 = vperm.slane %v8494, 7
    %v8720 = vlaneseq
    %v8721 = vshrl.u32 %v8720, 7
    %8723 = vset.pattern.permute.xlu0 %v8721
    %8724 = vperm.xlu0 %8723, %v8719
    %v8725 = vpop.permute.xlu0 %8724
    %v8758 = vsel %vm8497, -1e+09, %v8508
    %v8759 = vsel %vm8497, -1e+09, %v8515
    %v8760 = vsel %vm8497, -1e+09, %v8522
    %v8761 = vsel %vm8497, -1e+09, %v8529
    %v8762 = vsel %vm8497, -1e+09, %v8536
    %v8763 = vsel %vm8497, -1e+09, %v8543
    %v8764 = vsel %vm8497, -1e+09, %v8550
    %v8765 = vsel %vm8497, -1e+09, %v8557
    %v8766 = vsel %vm8497, -1e+09, %v8564
    %v8767 = vsel %vm8497, -1e+09, %v8571
    %v8768 = vsel %vm8497, -1e+09, %v8578
    %v8769 = vsel %vm8497, -1e+09, %v8585
    %v8770 = vsel %vm8497, -1e+09, %v8592
    %v8771 = vsel %vm8497, -1e+09, %v8599
    %v8772 = vsel %vm8497, -1e+09, %v8606
    %v8773 = vsel %vm8497, -1e+09, %v8613
    %v8774 = vsel %vm8497, -1e+09, %v8620
    %v8775 = vsel %vm8497, -1e+09, %v8627
    %v8776 = vsel %vm8497, -1e+09, %v8634
    %v8777 = vsel %vm8497, -1e+09, %v8641
    %v8778 = vsel %vm8497, -1e+09, %v8648
    %v8779 = vsel %vm8497, -1e+09, %v8655
    %v8780 = vsel %vm8497, -1e+09, %v8662
    %v8781 = vsel %vm8497, -1e+09, %v8669
    %v8782 = vsel %vm8497, -1e+09, %v8676
    %v8783 = vsel %vm8497, -1e+09, %v8683
    %v8784 = vsel %vm8497, -1e+09, %v8690
    %v8785 = vsel %vm8497, -1e+09, %v8697
    %v8786 = vsel %vm8497, -1e+09, %v8704
    %v8787 = vsel %vm8497, -1e+09, %v8711
    %v8788 = vsel %vm8497, -1e+09, %v8718
    %v8789 = vsel %vm8497, -1e+09, %v8725
    %v8790 = vmul.f32 %v8758, 0.35355338
    %v8791 = vmul.f32 %v8759, 0.35355338
    %v8792 = vmul.f32 %v8760, 0.35355338
    %v8793 = vmul.f32 %v8761, 0.35355338
    %v8794 = vmul.f32 %v8762, 0.35355338
    %v8795 = vmul.f32 %v8763, 0.35355338
    %v8796 = vmul.f32 %v8764, 0.35355338
    %v8797 = vmul.f32 %v8765, 0.35355338
    %v8798 = vmul.f32 %v8766, 0.35355338
    %v8799 = vmul.f32 %v8767, 0.35355338
    %v8800 = vmul.f32 %v8768, 0.35355338
    %v8801 = vmul.f32 %v8769, 0.35355338
    %v8802 = vmul.f32 %v8770, 0.35355338
    %v8803 = vmul.f32 %v8771, 0.35355338
    %v8804 = vmul.f32 %v8772, 0.35355338
    %v8805 = vmul.f32 %v8773, 0.35355338
    %v8806 = vmul.f32 %v8774, 0.35355338
    %v8807 = vmul.f32 %v8775, 0.35355338
    %v8808 = vmul.f32 %v8776, 0.35355338
    %v8809 = vmul.f32 %v8777, 0.35355338
    %v8810 = vmul.f32 %v8778, 0.35355338
    %v8811 = vmul.f32 %v8779, 0.35355338
    %v8812 = vmul.f32 %v8780, 0.35355338
    %v8813 = vmul.f32 %v8781, 0.35355338
    %v8814 = vmul.f32 %v8782, 0.35355338
    %v8815 = vmul.f32 %v8783, 0.35355338
    %v8816 = vmul.f32 %v8784, 0.35355338
    %v8817 = vmul.f32 %v8785, 0.35355338
    %v8818 = vmul.f32 %v8786, 0.35355338
    %v8819 = vmul.f32 %v8787, 0.35355338
    %v8820 = vmul.f32 %v8788, 0.35355338
    %v8821 = vmul.f32 %v8789, 0.35355338
    %8854 = vset.pattern.permute.xlu0 0
    %8855 = vperm.xlu0 %8854, %v8790
    %v8856 = vpop.permute.xlu0 %8855
    %8857 = vset.pattern.permute.xlu0 0
    %8858 = vperm.xlu0 %8857, %v8791
    %v8859 = vpop.permute.xlu0 %8858
    %8860 = vset.pattern.permute.xlu0 0
    %8861 = vperm.xlu0 %8860, %v8792
    %v8862 = vpop.permute.xlu0 %8861
    %8863 = vset.pattern.permute.xlu0 0
    %8864 = vperm.xlu0 %8863, %v8793
    %v8865 = vpop.permute.xlu0 %8864
    %8866 = vset.pattern.permute.xlu0 0
    %8867 = vperm.xlu0 %8866, %v8794
    %v8868 = vpop.permute.xlu0 %8867
    %8869 = vset.pattern.permute.xlu0 0
    %8870 = vperm.xlu0 %8869, %v8795
    %v8871 = vpop.permute.xlu0 %8870
    %8872 = vset.pattern.permute.xlu0 0
    %8873 = vperm.xlu0 %8872, %v8796
    %v8874 = vpop.permute.xlu0 %8873
    %8875 = vset.pattern.permute.xlu0 0
    %8876 = vperm.xlu0 %8875, %v8797
    %v8877 = vpop.permute.xlu0 %8876
    %8878 = vset.pattern.permute.xlu0 0
    %8879 = vperm.xlu0 %8878, %v8798
    %v8880 = vpop.permute.xlu0 %8879
    %8881 = vset.pattern.permute.xlu0 0
    %8882 = vperm.xlu0 %8881, %v8799
    %v8883 = vpop.permute.xlu0 %8882
    %8884 = vset.pattern.permute.xlu0 0
    %8885 = vperm.xlu0 %8884, %v8800
    %v8886 = vpop.permute.xlu0 %8885
    %8887 = vset.pattern.permute.xlu0 0
    %8888 = vperm.xlu0 %8887, %v8801
    %v8889 = vpop.permute.xlu0 %8888
    %8890 = vset.pattern.permute.xlu0 0
    %8891 = vperm.xlu0 %8890, %v8802
    %v8892 = vpop.permute.xlu0 %8891
    %8893 = vset.pattern.permute.xlu0 0
    %8894 = vperm.xlu0 %8893, %v8803
    %v8895 = vpop.permute.xlu0 %8894
    %8896 = vset.pattern.permute.xlu0 0
    %8897 = vperm.xlu0 %8896, %v8804
    %v8898 = vpop.permute.xlu0 %8897
    %8899 = vset.pattern.permute.xlu0 0
    %8900 = vperm.xlu0 %8899, %v8805
    %v8901 = vpop.permute.xlu0 %8900
    %8902 = vset.pattern.permute.xlu0 0
    %8903 = vperm.xlu0 %8902, %v8806
    %v8904 = vpop.permute.xlu0 %8903
    %8905 = vset.pattern.permute.xlu0 0
    %8906 = vperm.xlu0 %8905, %v8807
    %v8907 = vpop.permute.xlu0 %8906
    %8908 = vset.pattern.permute.xlu0 0
    %8909 = vperm.xlu0 %8908, %v8808
    %v8910 = vpop.permute.xlu0 %8909
    %8911 = vset.pattern.permute.xlu0 0
    %8912 = vperm.xlu0 %8911, %v8809
    %v8913 = vpop.permute.xlu0 %8912
    %8914 = vset.pattern.permute.xlu0 0
    %8915 = vperm.xlu0 %8914, %v8810
    %v8916 = vpop.permute.xlu0 %8915
    %8917 = vset.pattern.permute.xlu0 0
    %8918 = vperm.xlu0 %8917, %v8811
    %v8919 = vpop.permute.xlu0 %8918
    %8920 = vset.pattern.permute.xlu0 0
    %8921 = vperm.xlu0 %8920, %v8812
    %v8922 = vpop.permute.xlu0 %8921
    %8923 = vset.pattern.permute.xlu0 0
    %8924 = vperm.xlu0 %8923, %v8813
    %v8925 = vpop.permute.xlu0 %8924
    %8926 = vset.pattern.permute.xlu0 0
    %8927 = vperm.xlu0 %8926, %v8814
    %v8928 = vpop.permute.xlu0 %8927
    %8929 = vset.pattern.permute.xlu0 0
    %8930 = vperm.xlu0 %8929, %v8815
    %v8931 = vpop.permute.xlu0 %8930
    %8932 = vset.pattern.permute.xlu0 0
    %8933 = vperm.xlu0 %8932, %v8816
    %v8934 = vpop.permute.xlu0 %8933
    %8935 = vset.pattern.permute.xlu0 0
    %8936 = vperm.xlu0 %8935, %v8817
    %v8937 = vpop.permute.xlu0 %8936
    %8938 = vset.pattern.permute.xlu0 0
    %8939 = vperm.xlu0 %8938, %v8818
    %v8940 = vpop.permute.xlu0 %8939
    %8941 = vset.pattern.permute.xlu0 0
    %8942 = vperm.xlu0 %8941, %v8819
    %v8943 = vpop.permute.xlu0 %8942
    %8944 = vset.pattern.permute.xlu0 0
    %8945 = vperm.xlu0 %8944, %v8820
    %v8946 = vpop.permute.xlu0 %8945
    %8947 = vset.pattern.permute.xlu0 0
    %8948 = vperm.xlu0 %8947, %v8821
    %v8949 = vpop.permute.xlu0 %8948
    %v8950 = vperm.slane %v8856, %v1636
    %v8951 = vperm.slane %v8859, %v1636
    %v8952 = vperm.slane %v8862, %v1636
    %v8953 = vperm.slane %v8865, %v1636
    %v8954 = vperm.slane %v8868, %v1636
    %v8955 = vperm.slane %v8871, %v1636
    %v8956 = vperm.slane %v8874, %v1636
    %v8957 = vperm.slane %v8877, %v1636
    %v8958 = vperm.slane %v8880, %v1636
    %v8959 = vperm.slane %v8883, %v1636
    %v8960 = vperm.slane %v8886, %v1636
    %v8961 = vperm.slane %v8889, %v1636
    %v8962 = vperm.slane %v8892, %v1636
    %v8963 = vperm.slane %v8895, %v1636
    %v8964 = vperm.slane %v8898, %v1636
    %v8965 = vperm.slane %v8901, %v1636
    %v8966 = vperm.slane %v8904, %v1636
    %v8967 = vperm.slane %v8907, %v1636
    %v8968 = vperm.slane %v8910, %v1636
    %v8969 = vperm.slane %v8913, %v1636
    %v8970 = vperm.slane %v8916, %v1636
    %v8971 = vperm.slane %v8919, %v1636
    %v8972 = vperm.slane %v8922, %v1636
    %v8973 = vperm.slane %v8925, %v1636
    %v8974 = vperm.slane %v8928, %v1636
    %v8975 = vperm.slane %v8931, %v1636
    %v8976 = vperm.slane %v8934, %v1636
    %v8977 = vperm.slane %v8937, %v1636
    %v8978 = vperm.slane %v8940, %v1636
    %v8979 = vperm.slane %v8943, %v1636
    %v8980 = vperm.slane %v8946, %v1636
    %v8981 = vperm.slane %v8949, %v1636
    %v8982 = vsel %vm1735, %v8951, %v8950
    %v8983 = vsel %vm1737, %v8952, %v8982
    %v8984 = vsel %vm1739, %v8953, %v8983
    %v8985 = vsel %vm1741, %v8954, %v8984
    %v8986 = vsel %vm1743, %v8955, %v8985
    %v8987 = vsel %vm1745, %v8956, %v8986
    %v8988 = vsel %vm1747, %v8957, %v8987
    %v8989 = vsel %vm1735, %v8959, %v8958
    %v8990 = vsel %vm1737, %v8960, %v8989
    %v8991 = vsel %vm1739, %v8961, %v8990
    %v8992 = vsel %vm1741, %v8962, %v8991
    %v8993 = vsel %vm1743, %v8963, %v8992
    %v8994 = vsel %vm1745, %v8964, %v8993
    %v8995 = vsel %vm1747, %v8965, %v8994
    %v8996 = vsel %vm1735, %v8967, %v8966
    %v8997 = vsel %vm1737, %v8968, %v8996
    %v8998 = vsel %vm1739, %v8969, %v8997
    %v8999 = vsel %vm1741, %v8970, %v8998
    %v9000 = vsel %vm1743, %v8971, %v8999
    %v9001 = vsel %vm1745, %v8972, %v9000
    %v9002 = vsel %vm1747, %v8973, %v9001
    %v9003 = vsel %vm1735, %v8975, %v8974
    %v9004 = vsel %vm1737, %v8976, %v9003
    %v9005 = vsel %vm1739, %v8977, %v9004
    %v9006 = vsel %vm1741, %v8978, %v9005
    %v9007 = vsel %vm1743, %v8979, %v9006
    %v9008 = vsel %vm1745, %v8980, %v9007
    %v9009 = vsel %vm1747, %v8981, %v9008
    %v9014 = vsel %vm674, %v8988, -inf
    %9015 = vmax.xlane.f32.xlu0 %v9014
    %v9016 = vpop.xlane.xlu0 %9015
    %v9017 = vsel %vm674, %v8995, -inf
    %9018 = vmax.xlane.f32.xlu0 %v9017
    %v9019 = vpop.xlane.xlu0 %9018
    %v9020 = vsel %vm674, %v9002, -inf
    %9021 = vmax.xlane.f32.xlu0 %v9020
    %v9022 = vpop.xlane.xlu0 %9021
    %v9023 = vsel %vm674, %v9009, -inf
    %9024 = vmax.xlane.f32.xlu0 %v9023
    %v9025 = vpop.xlane.xlu0 %9024
    %v9030 = vperm.slane %v9016, 0
    %v9031 = vperm.slane %v9016, 1
    %v9032 = vperm.slane %v9016, 2
    %v9033 = vperm.slane %v9016, 3
    %v9034 = vperm.slane %v9016, 4
    %v9035 = vperm.slane %v9016, 5
    %v9036 = vperm.slane %v9016, 6
    %v9037 = vperm.slane %v9016, 7
    %v9038 = vperm.slane %v9019, 0
    %v9039 = vperm.slane %v9019, 1
    %v9040 = vperm.slane %v9019, 2
    %v9041 = vperm.slane %v9019, 3
    %v9042 = vperm.slane %v9019, 4
    %v9043 = vperm.slane %v9019, 5
    %v9044 = vperm.slane %v9019, 6
    %v9045 = vperm.slane %v9019, 7
    %v9046 = vperm.slane %v9022, 0
    %v9047 = vperm.slane %v9022, 1
    %v9048 = vperm.slane %v9022, 2
    %v9049 = vperm.slane %v9022, 3
    %v9050 = vperm.slane %v9022, 4
    %v9051 = vperm.slane %v9022, 5
    %v9052 = vperm.slane %v9022, 6
    %v9053 = vperm.slane %v9022, 7
    %v9054 = vperm.slane %v9025, 0
    %v9055 = vperm.slane %v9025, 1
    %v9056 = vperm.slane %v9025, 2
    %v9057 = vperm.slane %v9025, 3
    %v9058 = vperm.slane %v9025, 4
    %v9059 = vperm.slane %v9025, 5
    %v9060 = vperm.slane %v9025, 6
    %v9061 = vperm.slane %v9025, 7
    %v9094 = vsub.f32 %v8790, %v9030
    %v9095 = vsub.f32 %v8791, %v9031
    %v9096 = vsub.f32 %v8792, %v9032
    %v9097 = vsub.f32 %v8793, %v9033
    %v9098 = vsub.f32 %v8794, %v9034
    %v9099 = vsub.f32 %v8795, %v9035
    %v9100 = vsub.f32 %v8796, %v9036
    %v9101 = vsub.f32 %v8797, %v9037
    %v9102 = vsub.f32 %v8798, %v9038
    %v9103 = vsub.f32 %v8799, %v9039
    %v9104 = vsub.f32 %v8800, %v9040
    %v9105 = vsub.f32 %v8801, %v9041
    %v9106 = vsub.f32 %v8802, %v9042
    %v9107 = vsub.f32 %v8803, %v9043
    %v9108 = vsub.f32 %v8804, %v9044
    %v9109 = vsub.f32 %v8805, %v9045
    %v9110 = vsub.f32 %v8806, %v9046
    %v9111 = vsub.f32 %v8807, %v9047
    %v9112 = vsub.f32 %v8808, %v9048
    %v9113 = vsub.f32 %v8809, %v9049
    %v9114 = vsub.f32 %v8810, %v9050
    %v9115 = vsub.f32 %v8811, %v9051
    %v9116 = vsub.f32 %v8812, %v9052
    %v9117 = vsub.f32 %v8813, %v9053
    %v9118 = vsub.f32 %v8814, %v9054
    %v9119 = vsub.f32 %v8815, %v9055
    %v9120 = vsub.f32 %v8816, %v9056
    %v9121 = vsub.f32 %v8817, %v9057
    %v9122 = vsub.f32 %v8818, %v9058
    %v9123 = vsub.f32 %v8819, %v9059
    %v9124 = vsub.f32 %v8820, %v9060
    %v9125 = vsub.f32 %v8821, %v9061
    %v9126 = vmul.f32 %v9094, 1.442695
    %v9127 = vpow.pop %v9126
    %v9128 = vmul.f32 %v9095, 1.442695
    %v9129 = vpow.pop %v9128
    %v9130 = vmul.f32 %v9096, 1.442695
    %v9131 = vpow.pop %v9130
    %v9132 = vmul.f32 %v9097, 1.442695
    %v9133 = vpow.pop %v9132
    %v9134 = vmul.f32 %v9098, 1.442695
    %v9135 = vpow.pop %v9134
    %v9136 = vmul.f32 %v9099, 1.442695
    %v9137 = vpow.pop %v9136
    %v9138 = vmul.f32 %v9100, 1.442695
    %v9139 = vpow.pop %v9138
    %v9140 = vmul.f32 %v9101, 1.442695
    %v9141 = vpow.pop %v9140
    %v9142 = vmul.f32 %v9102, 1.442695
    %v9143 = vpow.pop %v9142
    %v9144 = vmul.f32 %v9103, 1.442695
    %v9145 = vpow.pop %v9144
    %v9146 = vmul.f32 %v9104, 1.442695
    %v9147 = vpow.pop %v9146
    %v9148 = vmul.f32 %v9105, 1.442695
    %v9149 = vpow.pop %v9148
    %v9150 = vmul.f32 %v9106, 1.442695
    %v9151 = vpow.pop %v9150
    %v9152 = vmul.f32 %v9107, 1.442695
    %v9153 = vpow.pop %v9152
    %v9154 = vmul.f32 %v9108, 1.442695
    %v9155 = vpow.pop %v9154
    %v9156 = vmul.f32 %v9109, 1.442695
    %v9157 = vpow.pop %v9156
    %v9158 = vmul.f32 %v9110, 1.442695
    %v9159 = vpow.pop %v9158
    %v9160 = vmul.f32 %v9111, 1.442695
    %v9161 = vpow.pop %v9160
    %v9162 = vmul.f32 %v9112, 1.442695
    %v9163 = vpow.pop %v9162
    %v9164 = vmul.f32 %v9113, 1.442695
    %v9165 = vpow.pop %v9164
    %v9166 = vmul.f32 %v9114, 1.442695
    %v9167 = vpow.pop %v9166
    %v9168 = vmul.f32 %v9115, 1.442695
    %v9169 = vpow.pop %v9168
    %v9170 = vmul.f32 %v9116, 1.442695
    %v9171 = vpow.pop %v9170
    %v9172 = vmul.f32 %v9117, 1.442695
    %v9173 = vpow.pop %v9172
    %v9174 = vmul.f32 %v9118, 1.442695
    %v9175 = vpow.pop %v9174
    %v9176 = vmul.f32 %v9119, 1.442695
    %v9177 = vpow.pop %v9176
    %v9178 = vmul.f32 %v9120, 1.442695
    %v9179 = vpow.pop %v9178
    %v9180 = vmul.f32 %v9121, 1.442695
    %v9181 = vpow.pop %v9180
    %v9182 = vmul.f32 %v9122, 1.442695
    %v9183 = vpow.pop %v9182
    %v9184 = vmul.f32 %v9123, 1.442695
    %v9185 = vpow.pop %v9184
    %v9186 = vmul.f32 %v9124, 1.442695
    %v9187 = vpow.pop %v9186
    %v9188 = vmul.f32 %v9125, 1.442695
    %v9189 = vpow.pop %v9188
    %9222 = vset.pattern.permute.xlu0 0
    %9223 = vperm.xlu0 %9222, %v9127
    %v9224 = vpop.permute.xlu0 %9223
    %9225 = vset.pattern.permute.xlu0 0
    %9226 = vperm.xlu0 %9225, %v9129
    %v9227 = vpop.permute.xlu0 %9226
    %9228 = vset.pattern.permute.xlu0 0
    %9229 = vperm.xlu0 %9228, %v9131
    %v9230 = vpop.permute.xlu0 %9229
    %9231 = vset.pattern.permute.xlu0 0
    %9232 = vperm.xlu0 %9231, %v9133
    %v9233 = vpop.permute.xlu0 %9232
    %9234 = vset.pattern.permute.xlu0 0
    %9235 = vperm.xlu0 %9234, %v9135
    %v9236 = vpop.permute.xlu0 %9235
    %9237 = vset.pattern.permute.xlu0 0
    %9238 = vperm.xlu0 %9237, %v9137
    %v9239 = vpop.permute.xlu0 %9238
    %9240 = vset.pattern.permute.xlu0 0
    %9241 = vperm.xlu0 %9240, %v9139
    %v9242 = vpop.permute.xlu0 %9241
    %9243 = vset.pattern.permute.xlu0 0
    %9244 = vperm.xlu0 %9243, %v9141
    %v9245 = vpop.permute.xlu0 %9244
    %9246 = vset.pattern.permute.xlu0 0
    %9247 = vperm.xlu0 %9246, %v9143
    %v9248 = vpop.permute.xlu0 %9247
    %9249 = vset.pattern.permute.xlu0 0
    %9250 = vperm.xlu0 %9249, %v9145
    %v9251 = vpop.permute.xlu0 %9250
    %9252 = vset.pattern.permute.xlu0 0
    %9253 = vperm.xlu0 %9252, %v9147
    %v9254 = vpop.permute.xlu0 %9253
    %9255 = vset.pattern.permute.xlu0 0
    %9256 = vperm.xlu0 %9255, %v9149
    %v9257 = vpop.permute.xlu0 %9256
    %9258 = vset.pattern.permute.xlu0 0
    %9259 = vperm.xlu0 %9258, %v9151
    %v9260 = vpop.permute.xlu0 %9259
    %9261 = vset.pattern.permute.xlu0 0
    %9262 = vperm.xlu0 %9261, %v9153
    %v9263 = vpop.permute.xlu0 %9262
    %9264 = vset.pattern.permute.xlu0 0
    %9265 = vperm.xlu0 %9264, %v9155
    %v9266 = vpop.permute.xlu0 %9265
    %9267 = vset.pattern.permute.xlu0 0
    %9268 = vperm.xlu0 %9267, %v9157
    %v9269 = vpop.permute.xlu0 %9268
    %9270 = vset.pattern.permute.xlu0 0
    %9271 = vperm.xlu0 %9270, %v9159
    %v9272 = vpop.permute.xlu0 %9271
    %9273 = vset.pattern.permute.xlu0 0
    %9274 = vperm.xlu0 %9273, %v9161
    %v9275 = vpop.permute.xlu0 %9274
    %9276 = vset.pattern.permute.xlu0 0
    %9277 = vperm.xlu0 %9276, %v9163
    %v9278 = vpop.permute.xlu0 %9277
    %9279 = vset.pattern.permute.xlu0 0
    %9280 = vperm.xlu0 %9279, %v9165
    %v9281 = vpop.permute.xlu0 %9280
    %9282 = vset.pattern.permute.xlu0 0
    %9283 = vperm.xlu0 %9282, %v9167
    %v9284 = vpop.permute.xlu0 %9283
    %9285 = vset.pattern.permute.xlu0 0
    %9286 = vperm.xlu0 %9285, %v9169
    %v9287 = vpop.permute.xlu0 %9286
    %9288 = vset.pattern.permute.xlu0 0
    %9289 = vperm.xlu0 %9288, %v9171
    %v9290 = vpop.permute.xlu0 %9289
    %9291 = vset.pattern.permute.xlu0 0
    %9292 = vperm.xlu0 %9291, %v9173
    %v9293 = vpop.permute.xlu0 %9292
    %9294 = vset.pattern.permute.xlu0 0
    %9295 = vperm.xlu0 %9294, %v9175
    %v9296 = vpop.permute.xlu0 %9295
    %9297 = vset.pattern.permute.xlu0 0
    %9298 = vperm.xlu0 %9297, %v9177
    %v9299 = vpop.permute.xlu0 %9298
    %9300 = vset.pattern.permute.xlu0 0
    %9301 = vperm.xlu0 %9300, %v9179
    %v9302 = vpop.permute.xlu0 %9301
    %9303 = vset.pattern.permute.xlu0 0
    %9304 = vperm.xlu0 %9303, %v9181
    %v9305 = vpop.permute.xlu0 %9304
    %9306 = vset.pattern.permute.xlu0 0
    %9307 = vperm.xlu0 %9306, %v9183
    %v9308 = vpop.permute.xlu0 %9307
    %9309 = vset.pattern.permute.xlu0 0
    %9310 = vperm.xlu0 %9309, %v9185
    %v9311 = vpop.permute.xlu0 %9310
    %9312 = vset.pattern.permute.xlu0 0
    %9313 = vperm.xlu0 %9312, %v9187
    %v9314 = vpop.permute.xlu0 %9313
    %9315 = vset.pattern.permute.xlu0 0
    %9316 = vperm.xlu0 %9315, %v9189
    %v9317 = vpop.permute.xlu0 %9316
    %v9318 = vperm.slane %v9224, %v1636
    %v9319 = vperm.slane %v9227, %v1636
    %v9320 = vperm.slane %v9230, %v1636
    %v9321 = vperm.slane %v9233, %v1636
    %v9322 = vperm.slane %v9236, %v1636
    %v9323 = vperm.slane %v9239, %v1636
    %v9324 = vperm.slane %v9242, %v1636
    %v9325 = vperm.slane %v9245, %v1636
    %v9326 = vperm.slane %v9248, %v1636
    %v9327 = vperm.slane %v9251, %v1636
    %v9328 = vperm.slane %v9254, %v1636
    %v9329 = vperm.slane %v9257, %v1636
    %v9330 = vperm.slane %v9260, %v1636
    %v9331 = vperm.slane %v9263, %v1636
    %v9332 = vperm.slane %v9266, %v1636
    %v9333 = vperm.slane %v9269, %v1636
    %v9334 = vperm.slane %v9272, %v1636
    %v9335 = vperm.slane %v9275, %v1636
    %v9336 = vperm.slane %v9278, %v1636
    %v9337 = vperm.slane %v9281, %v1636
    %v9338 = vperm.slane %v9284, %v1636
    %v9339 = vperm.slane %v9287, %v1636
    %v9340 = vperm.slane %v9290, %v1636
    %v9341 = vperm.slane %v9293, %v1636
    %v9342 = vperm.slane %v9296, %v1636
    %v9343 = vperm.slane %v9299, %v1636
    %v9344 = vperm.slane %v9302, %v1636
    %v9345 = vperm.slane %v9305, %v1636
    %v9346 = vperm.slane %v9308, %v1636
    %v9347 = vperm.slane %v9311, %v1636
    %v9348 = vperm.slane %v9314, %v1636
    %v9349 = vperm.slane %v9317, %v1636
    %v9350 = vsel %vm1735, %v9319, %v9318
    %v9351 = vsel %vm1737, %v9320, %v9350
    %v9352 = vsel %vm1739, %v9321, %v9351
    %v9353 = vsel %vm1741, %v9322, %v9352
    %v9354 = vsel %vm1743, %v9323, %v9353
    %v9355 = vsel %vm1745, %v9324, %v9354
    %v9356 = vsel %vm1747, %v9325, %v9355
    %v9357 = vsel %vm1735, %v9327, %v9326
    %v9358 = vsel %vm1737, %v9328, %v9357
    %v9359 = vsel %vm1739, %v9329, %v9358
    %v9360 = vsel %vm1741, %v9330, %v9359
    %v9361 = vsel %vm1743, %v9331, %v9360
    %v9362 = vsel %vm1745, %v9332, %v9361
    %v9363 = vsel %vm1747, %v9333, %v9362
    %v9364 = vsel %vm1735, %v9335, %v9334
    %v9365 = vsel %vm1737, %v9336, %v9364
    %v9366 = vsel %vm1739, %v9337, %v9365
    %v9367 = vsel %vm1741, %v9338, %v9366
    %v9368 = vsel %vm1743, %v9339, %v9367
    %v9369 = vsel %vm1745, %v9340, %v9368
    %v9370 = vsel %vm1747, %v9341, %v9369
    %v9371 = vsel %vm1735, %v9343, %v9342
    %v9372 = vsel %vm1737, %v9344, %v9371
    %v9373 = vsel %vm1739, %v9345, %v9372
    %v9374 = vsel %vm1741, %v9346, %v9373
    %v9375 = vsel %vm1743, %v9347, %v9374
    %v9376 = vsel %vm1745, %v9348, %v9375
    %v9377 = vsel %vm1747, %v9349, %v9376
    %v9382 = vsel %vm674, %v9356, 0.0
    %9383 = vadd.xlane.f32.xlu0 %v9382
    %v9384 = vpop.xlane.xlu0 %9383
    %v9385 = vsel %vm674, %v9363, 0.0
    %9386 = vadd.xlane.f32.xlu0 %v9385
    %v9387 = vpop.xlane.xlu0 %9386
    %v9388 = vsel %vm674, %v9370, 0.0
    %9389 = vadd.xlane.f32.xlu0 %v9388
    %v9390 = vpop.xlane.xlu0 %9389
    %v9391 = vsel %vm674, %v9377, 0.0
    %9392 = vadd.xlane.f32.xlu0 %v9391
    %v9393 = vpop.xlane.xlu0 %9392
    %v9394 = vrcp.pop %v9384
    %v9395 = vrcp.pop %v9387
    %v9396 = vrcp.pop %v9390
    %v9397 = vrcp.pop %v9393
    %v9402 = vperm.slane %v9394, 0
    %v9403 = vperm.slane %v9394, 1
    %v9404 = vperm.slane %v9394, 2
    %v9405 = vperm.slane %v9394, 3
    %v9406 = vperm.slane %v9394, 4
    %v9407 = vperm.slane %v9394, 5
    %v9408 = vperm.slane %v9394, 6
    %v9409 = vperm.slane %v9394, 7
    %v9410 = vperm.slane %v9395, 0
    %v9411 = vperm.slane %v9395, 1
    %v9412 = vperm.slane %v9395, 2
    %v9413 = vperm.slane %v9395, 3
    %v9414 = vperm.slane %v9395, 4
    %v9415 = vperm.slane %v9395, 5
    %v9416 = vperm.slane %v9395, 6
    %v9417 = vperm.slane %v9395, 7
    %v9418 = vperm.slane %v9396, 0
    %v9419 = vperm.slane %v9396, 1
    %v9420 = vperm.slane %v9396, 2
    %v9421 = vperm.slane %v9396, 3
    %v9422 = vperm.slane %v9396, 4
    %v9423 = vperm.slane %v9396, 5
    %v9424 = vperm.slane %v9396, 6
    %v9425 = vperm.slane %v9396, 7
    %v9426 = vperm.slane %v9397, 0
    %v9427 = vperm.slane %v9397, 1
    %v9428 = vperm.slane %v9397, 2
    %v9429 = vperm.slane %v9397, 3
    %v9430 = vperm.slane %v9397, 4
    %v9431 = vperm.slane %v9397, 5
    %v9432 = vperm.slane %v9397, 6
    %v9433 = vperm.slane %v9397, 7
    %v9466 = vmul.f32 %v9127, %v9402
    %v9467 = vmul.f32 %v9129, %v9403
    %v9468 = vmul.f32 %v9131, %v9404
    %v9469 = vmul.f32 %v9133, %v9405
    %v9470 = vmul.f32 %v9135, %v9406
    %v9471 = vmul.f32 %v9137, %v9407
    %v9472 = vmul.f32 %v9139, %v9408
    %v9473 = vmul.f32 %v9141, %v9409
    %v9474 = vmul.f32 %v9143, %v9410
    %v9475 = vmul.f32 %v9145, %v9411
    %v9476 = vmul.f32 %v9147, %v9412
    %v9477 = vmul.f32 %v9149, %v9413
    %v9478 = vmul.f32 %v9151, %v9414
    %v9479 = vmul.f32 %v9153, %v9415
    %v9480 = vmul.f32 %v9155, %v9416
    %v9481 = vmul.f32 %v9157, %v9417
    %v9482 = vmul.f32 %v9159, %v9418
    %v9483 = vmul.f32 %v9161, %v9419
    %v9484 = vmul.f32 %v9163, %v9420
    %v9485 = vmul.f32 %v9165, %v9421
    %v9486 = vmul.f32 %v9167, %v9422
    %v9487 = vmul.f32 %v9169, %v9423
    %v9488 = vmul.f32 %v9171, %v9424
    %v9489 = vmul.f32 %v9173, %v9425
    %v9490 = vmul.f32 %v9175, %v9426
    %v9491 = vmul.f32 %v9177, %v9427
    %v9492 = vmul.f32 %v9179, %v9428
    %v9493 = vmul.f32 %v9181, %v9429
    %v9494 = vmul.f32 %v9183, %v9430
    %v9495 = vmul.f32 %v9185, %v9431
    %v9496 = vmul.f32 %v9187, %v9432
    %v9497 = vmul.f32 %v9189, %v9433
    %9498 = vxpose.xlu0.b32.start [1/16] %v475, 128
    %9499 = vxpose.xlu0.b32.cont [2/16] 0.0, 128
    %9500 = vxpose.xlu0.b32.cont [3/16] 0.0, 128
    %9501 = vxpose.xlu0.b32.cont [4/16] 0.0, 128
    %9502 = vxpose.xlu0.b32.cont [5/16] 0.0, 128
    %9503 = vxpose.xlu0.b32.cont [6/16] 0.0, 128
    %9504 = vxpose.xlu0.b32.cont [7/16] 0.0, 128
    %9505 = vxpose.xlu0.b32.cont [8/16] 0.0, 128
    %9506 = vxpose.xlu0.b32.cont [9/16] 0.0, 128
    %9507 = vxpose.xlu0.b32.cont [10/16] 0.0, 128
    %9508 = vxpose.xlu0.b32.cont [11/16] 0.0, 128
    %9509 = vxpose.xlu0.b32.cont [12/16] 0.0, 128
    %9510 = vxpose.xlu0.b32.cont [13/16] 0.0, 128
    %9511 = vxpose.xlu0.b32.cont [14/16] 0.0, 128
    %9512 = vxpose.xlu0.b32.cont [15/16] 0.0, 128
    %9513 = vxpose.xlu0.b32.end [16/16] 0.0, 128
    %v9514 = vpop.trf.xlu0
    %v9515 = vpop.trf.xlu0
    %v9516 = vpop.trf.xlu0
    %v9517 = vpop.trf.xlu0
    %v9518 = vpop.trf.xlu0
    %v9519 = vpop.trf.xlu0
    %v9520 = vpop.trf.xlu0
    %v9521 = vpop.trf.xlu0
    %v9522 = vpop.trf.xlu0
    %v9523 = vpop.trf.xlu0
    %v9524 = vpop.trf.xlu0
    %v9525 = vpop.trf.xlu0
    %v9526 = vpop.trf.xlu0
    %v9527 = vpop.trf.xlu0
    %v9528 = vpop.trf.xlu0
    %v9529 = vpop.trf.xlu0
    %9530 = vxpose.xlu0.b32.start [1/16] %v5388, 128
    %9531 = vxpose.xlu0.b32.cont [2/16] 0.0, 128
    %9532 = vxpose.xlu0.b32.cont [3/16] 0.0, 128
    %9533 = vxpose.xlu0.b32.cont [4/16] 0.0, 128
    %9534 = vxpose.xlu0.b32.cont [5/16] 0.0, 128
    %9535 = vxpose.xlu0.b32.cont [6/16] 0.0, 128
    %9536 = vxpose.xlu0.b32.cont [7/16] 0.0, 128
    %9537 = vxpose.xlu0.b32.cont [8/16] 0.0, 128
    %9538 = vxpose.xlu0.b32.cont [9/16] 0.0, 128
    %9539 = vxpose.xlu0.b32.cont [10/16] 0.0, 128
    %9540 = vxpose.xlu0.b32.cont [11/16] 0.0, 128
    %9541 = vxpose.xlu0.b32.cont [12/16] 0.0, 128
    %9542 = vxpose.xlu0.b32.cont [13/16] 0.0, 128
    %9543 = vxpose.xlu0.b32.cont [14/16] 0.0, 128
    %9544 = vxpose.xlu0.b32.cont [15/16] 0.0, 128
    %9545 = vxpose.xlu0.b32.end [16/16] 0.0, 128
    %v9546 = vpop.trf.xlu0
    %v9547 = vpop.trf.xlu0
    %v9548 = vpop.trf.xlu0
    %v9549 = vpop.trf.xlu0
    %v9550 = vpop.trf.xlu0
    %v9551 = vpop.trf.xlu0
    %v9552 = vpop.trf.xlu0
    %v9553 = vpop.trf.xlu0
    %v9554 = vpop.trf.xlu0
    %v9555 = vpop.trf.xlu0
    %v9556 = vpop.trf.xlu0
    %v9557 = vpop.trf.xlu0
    %v9558 = vpop.trf.xlu0
    %v9559 = vpop.trf.xlu0
    %v9560 = vpop.trf.xlu0
    %v9561 = vpop.trf.xlu0
    %9562 = vxpose.xlu0.b32.start [1/16] %v5391, 128
    %9563 = vxpose.xlu0.b32.cont [2/16] 0.0, 128
    %9564 = vxpose.xlu0.b32.cont [3/16] 0.0, 128
    %9565 = vxpose.xlu0.b32.cont [4/16] 0.0, 128
    %9566 = vxpose.xlu0.b32.cont [5/16] 0.0, 128
    %9567 = vxpose.xlu0.b32.cont [6/16] 0.0, 128
    %9568 = vxpose.xlu0.b32.cont [7/16] 0.0, 128
    %9569 = vxpose.xlu0.b32.cont [8/16] 0.0, 128
    %9570 = vxpose.xlu0.b32.cont [9/16] 0.0, 128
    %9571 = vxpose.xlu0.b32.cont [10/16] 0.0, 128
    %9572 = vxpose.xlu0.b32.cont [11/16] 0.0, 128
    %9573 = vxpose.xlu0.b32.cont [12/16] 0.0, 128
    %9574 = vxpose.xlu0.b32.cont [13/16] 0.0, 128
    %9575 = vxpose.xlu0.b32.cont [14/16] 0.0, 128
    %9576 = vxpose.xlu0.b32.cont [15/16] 0.0, 128
    %9577 = vxpose.xlu0.b32.end [16/16] 0.0, 128
    %v9578 = vpop.trf.xlu0
    %v9579 = vpop.trf.xlu0
    %v9580 = vpop.trf.xlu0
    %v9581 = vpop.trf.xlu0
    %v9582 = vpop.trf.xlu0
    %v9583 = vpop.trf.xlu0
    %v9584 = vpop.trf.xlu0
    %v9585 = vpop.trf.xlu0
    %v9586 = vpop.trf.xlu0
    %v9587 = vpop.trf.xlu0
    %v9588 = vpop.trf.xlu0
    %v9589 = vpop.trf.xlu0
    %v9590 = vpop.trf.xlu0
    %v9591 = vpop.trf.xlu0
    %v9592 = vpop.trf.xlu0
    %v9593 = vpop.trf.xlu0
    %9594 = vxpose.xlu0.b32.start [1/16] %v5394, 128
    %9595 = vxpose.xlu0.b32.cont [2/16] 0.0, 128
    %9596 = vxpose.xlu0.b32.cont [3/16] 0.0, 128
    %9597 = vxpose.xlu0.b32.cont [4/16] 0.0, 128
    %9598 = vxpose.xlu0.b32.cont [5/16] 0.0, 128
    %9599 = vxpose.xlu0.b32.cont [6/16] 0.0, 128
    %9600 = vxpose.xlu0.b32.cont [7/16] 0.0, 128
    %9601 = vxpose.xlu0.b32.cont [8/16] 0.0, 128
    %9602 = vxpose.xlu0.b32.cont [9/16] 0.0, 128
    %9603 = vxpose.xlu0.b32.cont [10/16] 0.0, 128
    %9604 = vxpose.xlu0.b32.cont [11/16] 0.0, 128
    %9605 = vxpose.xlu0.b32.cont [12/16] 0.0, 128
    %9606 = vxpose.xlu0.b32.cont [13/16] 0.0, 128
    %9607 = vxpose.xlu0.b32.cont [14/16] 0.0, 128
    %9608 = vxpose.xlu0.b32.cont [15/16] 0.0, 128
    %9609 = vxpose.xlu0.b32.end [16/16] 0.0, 128
    %v9610 = vpop.trf.xlu0
    %v9611 = vpop.trf.xlu0
    %v9612 = vpop.trf.xlu0
    %v9613 = vpop.trf.xlu0
    %v9614 = vpop.trf.xlu0
    %v9615 = vpop.trf.xlu0
    %v9616 = vpop.trf.xlu0
    %v9617 = vpop.trf.xlu0
    %v9618 = vpop.trf.xlu0
    %v9619 = vpop.trf.xlu0
    %v9620 = vpop.trf.xlu0
    %v9621 = vpop.trf.xlu0
    %v9622 = vpop.trf.xlu0
    %v9623 = vpop.trf.xlu0
    %v9624 = vpop.trf.xlu0
    %v9625 = vpop.trf.xlu0
    %9634 = vset.pattern.permute.xlu0 0
    %9635 = vperm.xlu0 %9634, %v9466
    %v9636 = vpop.permute.xlu0 %9635
    %9637 = vset.pattern.permute.xlu0 0
    %9638 = vperm.xlu0 %9637, %v9467
    %v9639 = vpop.permute.xlu0 %9638
    %9640 = vset.pattern.permute.xlu0 0
    %9641 = vperm.xlu0 %9640, %v9468
    %v9642 = vpop.permute.xlu0 %9641
    %9643 = vset.pattern.permute.xlu0 0
    %9644 = vperm.xlu0 %9643, %v9469
    %v9645 = vpop.permute.xlu0 %9644
    %9646 = vset.pattern.permute.xlu0 0
    %9647 = vperm.xlu0 %9646, %v9470
    %v9648 = vpop.permute.xlu0 %9647
    %9649 = vset.pattern.permute.xlu0 0
    %9650 = vperm.xlu0 %9649, %v9471
    %v9651 = vpop.permute.xlu0 %9650
    %9652 = vset.pattern.permute.xlu0 0
    %9653 = vperm.xlu0 %9652, %v9472
    %v9654 = vpop.permute.xlu0 %9653
    %9655 = vset.pattern.permute.xlu0 0
    %9656 = vperm.xlu0 %9655, %v9473
    %v9657 = vpop.permute.xlu0 %9656
    %v9658 = vperm.slane %v9636, %v1636
    %v9659 = vperm.slane %v9639, %v1636
    %v9660 = vperm.slane %v9642, %v1636
    %v9661 = vperm.slane %v9645, %v1636
    %v9662 = vperm.slane %v9648, %v1636
    %v9663 = vperm.slane %v9651, %v1636
    %v9664 = vperm.slane %v9654, %v1636
    %v9665 = vperm.slane %v9657, %v1636
    %v9666 = vsel %vm1735, %v9659, %v9658
    %v9667 = vsel %vm1737, %v9660, %v9666
    %v9668 = vsel %vm1739, %v9661, %v9667
    %v9669 = vsel %vm1741, %v9662, %v9668
    %v9670 = vsel %vm1743, %v9663, %v9669
    %v9671 = vsel %vm1745, %v9664, %v9670
    %v9672 = vsel %vm1747, %v9665, %v9671
    %v9674 = vsel %vm674, %v9514, 0
    %v9676 = vsel %vm674, %v9672, 0
    %9678 = vmatpush.xpose.msra.mxu0 0.0
    %9679 = vmatpush.xpose.msra.mxu0 0.0
    %9680 = vmatpush.xpose.msra.mxu0 0.0
    %9681 = vmatpush.xpose.msra.mxu0 0.0
    %9682 = vmatpush.xpose.msra.mxu0 0.0
    %9683 = vmatpush.xpose.msra.mxu0 0.0
    %9684 = vmatpush.xpose.msra.mxu0 0.0
    %9685 = vmatpush.xpose.msra.mxu0 0.0
    %9686 = vmatpush.xpose.msra.mxu0 0.0
    %9687 = vmatpush.xpose.msra.mxu0 0.0
    %9688 = vmatpush.xpose.msra.mxu0 0.0
    %9689 = vmatpush.xpose.msra.mxu0 0.0
    %9690 = vmatpush.xpose.msra.mxu0 0.0
    %9691 = vmatpush.xpose.msra.mxu0 0.0
    %9692 = vmatpush.xpose.msra.mxu0 0.0
    %9693 = vmatpush.xpose.msra.mxu0 %v9676
    %9694 = vmatmul.f32.gmra.mxu0 %v9674
    %v9695 = vpop.f32.mrf.mxu0
    %v9696 = vadd.f32 0.0, %v9695
    %9697 = vdwg.mxu0
    %9706 = vset.pattern.permute.xlu0 0
    %9707 = vperm.xlu0 %9706, %v9474
    %v9708 = vpop.permute.xlu0 %9707
    %9709 = vset.pattern.permute.xlu0 0
    %9710 = vperm.xlu0 %9709, %v9475
    %v9711 = vpop.permute.xlu0 %9710
    %9712 = vset.pattern.permute.xlu0 0
    %9713 = vperm.xlu0 %9712, %v9476
    %v9714 = vpop.permute.xlu0 %9713
    %9715 = vset.pattern.permute.xlu0 0
    %9716 = vperm.xlu0 %9715, %v9477
    %v9717 = vpop.permute.xlu0 %9716
    %9718 = vset.pattern.permute.xlu0 0
    %9719 = vperm.xlu0 %9718, %v9478
    %v9720 = vpop.permute.xlu0 %9719
    %9721 = vset.pattern.permute.xlu0 0
    %9722 = vperm.xlu0 %9721, %v9479
    %v9723 = vpop.permute.xlu0 %9722
    %9724 = vset.pattern.permute.xlu0 0
    %9725 = vperm.xlu0 %9724, %v9480
    %v9726 = vpop.permute.xlu0 %9725
    %9727 = vset.pattern.permute.xlu0 0
    %9728 = vperm.xlu0 %9727, %v9481
    %v9729 = vpop.permute.xlu0 %9728
    %v9730 = vperm.slane %v9708, %v1636
    %v9731 = vperm.slane %v9711, %v1636
    %v9732 = vperm.slane %v9714, %v1636
    %v9733 = vperm.slane %v9717, %v1636
    %v9734 = vperm.slane %v9720, %v1636
    %v9735 = vperm.slane %v9723, %v1636
    %v9736 = vperm.slane %v9726, %v1636
    %v9737 = vperm.slane %v9729, %v1636
    %v9738 = vsel %vm1735, %v9731, %v9730
    %v9739 = vsel %vm1737, %v9732, %v9738
    %v9740 = vsel %vm1739, %v9733, %v9739
    %v9741 = vsel %vm1741, %v9734, %v9740
    %v9742 = vsel %vm1743, %v9735, %v9741
    %v9743 = vsel %vm1745, %v9736, %v9742
    %v9744 = vsel %vm1747, %v9737, %v9743
    %v9746 = vsel %vm674, %v9546, 0
    %v9748 = vsel %vm674, %v9744, 0
    %9750 = vmatpush.xpose.msra.mxu0 0.0
    %9751 = vmatpush.xpose.msra.mxu0 0.0
    %9752 = vmatpush.xpose.msra.mxu0 0.0
    %9753 = vmatpush.xpose.msra.mxu0 0.0
    %9754 = vmatpush.xpose.msra.mxu0 0.0
    %9755 = vmatpush.xpose.msra.mxu0 0.0
    %9756 = vmatpush.xpose.msra.mxu0 0.0
    %9757 = vmatpush.xpose.msra.mxu0 0.0
    %9758 = vmatpush.xpose.msra.mxu0 0.0
    %9759 = vmatpush.xpose.msra.mxu0 0.0
    %9760 = vmatpush.xpose.msra.mxu0 0.0
    %9761 = vmatpush.xpose.msra.mxu0 0.0
    %9762 = vmatpush.xpose.msra.mxu0 0.0
    %9763 = vmatpush.xpose.msra.mxu0 0.0
    %9764 = vmatpush.xpose.msra.mxu0 0.0
    %9765 = vmatpush.xpose.msra.mxu0 %v9748
    %9766 = vmatmul.f32.gmra.mxu0 %v9746
    %v9767 = vpop.f32.mrf.mxu0
    %v9768 = vadd.f32 0.0, %v9767
    %9769 = vdwg.mxu0
    %9778 = vset.pattern.permute.xlu0 0
    %9779 = vperm.xlu0 %9778, %v9482
    %v9780 = vpop.permute.xlu0 %9779
    %9781 = vset.pattern.permute.xlu0 0
    %9782 = vperm.xlu0 %9781, %v9483
    %v9783 = vpop.permute.xlu0 %9782
    %9784 = vset.pattern.permute.xlu0 0
    %9785 = vperm.xlu0 %9784, %v9484
    %v9786 = vpop.permute.xlu0 %9785
    %9787 = vset.pattern.permute.xlu0 0
    %9788 = vperm.xlu0 %9787, %v9485
    %v9789 = vpop.permute.xlu0 %9788
    %9790 = vset.pattern.permute.xlu0 0
    %9791 = vperm.xlu0 %9790, %v9486
    %v9792 = vpop.permute.xlu0 %9791
    %9793 = vset.pattern.permute.xlu0 0
    %9794 = vperm.xlu0 %9793, %v9487
    %v9795 = vpop.permute.xlu0 %9794
    %9796 = vset.pattern.permute.xlu0 0
    %9797 = vperm.xlu0 %9796, %v9488
    %v9798 = vpop.permute.xlu0 %9797
    %9799 = vset.pattern.permute.xlu0 0
    %9800 = vperm.xlu0 %9799, %v9489
    %v9801 = vpop.permute.xlu0 %9800
    %v9802 = vperm.slane %v9780, %v1636
    %v9803 = vperm.slane %v9783, %v1636
    %v9804 = vperm.slane %v9786, %v1636
    %v9805 = vperm.slane %v9789, %v1636
    %v9806 = vperm.slane %v9792, %v1636
    %v9807 = vperm.slane %v9795, %v1636
    %v9808 = vperm.slane %v9798, %v1636
    %v9809 = vperm.slane %v9801, %v1636
    %v9810 = vsel %vm1735, %v9803, %v9802
    %v9811 = vsel %vm1737, %v9804, %v9810
    %v9812 = vsel %vm1739, %v9805, %v9811
    %v9813 = vsel %vm1741, %v9806, %v9812
    %v9814 = vsel %vm1743, %v9807, %v9813
    %v9815 = vsel %vm1745, %v9808, %v9814
    %v9816 = vsel %vm1747, %v9809, %v9815
    %v9818 = vsel %vm674, %v9578, 0
    %v9820 = vsel %vm674, %v9816, 0
    %9822 = vmatpush.xpose.msra.mxu0 0.0
    %9823 = vmatpush.xpose.msra.mxu0 0.0
    %9824 = vmatpush.xpose.msra.mxu0 0.0
    %9825 = vmatpush.xpose.msra.mxu0 0.0
    %9826 = vmatpush.xpose.msra.mxu0 0.0
    %9827 = vmatpush.xpose.msra.mxu0 0.0
    %9828 = vmatpush.xpose.msra.mxu0 0.0
    %9829 = vmatpush.xpose.msra.mxu0 0.0
    %9830 = vmatpush.xpose.msra.mxu0 0.0
    %9831 = vmatpush.xpose.msra.mxu0 0.0
    %9832 = vmatpush.xpose.msra.mxu0 0.0
    %9833 = vmatpush.xpose.msra.mxu0 0.0
    %9834 = vmatpush.xpose.msra.mxu0 0.0
    %9835 = vmatpush.xpose.msra.mxu0 0.0
    %9836 = vmatpush.xpose.msra.mxu0 0.0
    %9837 = vmatpush.xpose.msra.mxu0 %v9820
    %9838 = vmatmul.f32.gmra.mxu0 %v9818
    %v9839 = vpop.f32.mrf.mxu0
    %v9840 = vadd.f32 0.0, %v9839
    %9841 = vdwg.mxu0
    %9850 = vset.pattern.permute.xlu0 0
    %9851 = vperm.xlu0 %9850, %v9490
    %v9852 = vpop.permute.xlu0 %9851
    %9853 = vset.pattern.permute.xlu0 0
    %9854 = vperm.xlu0 %9853, %v9491
    %v9855 = vpop.permute.xlu0 %9854
    %9856 = vset.pattern.permute.xlu0 0
    %9857 = vperm.xlu0 %9856, %v9492
    %v9858 = vpop.permute.xlu0 %9857
    %9859 = vset.pattern.permute.xlu0 0
    %9860 = vperm.xlu0 %9859, %v9493
    %v9861 = vpop.permute.xlu0 %9860
    %9862 = vset.pattern.permute.xlu0 0
    %9863 = vperm.xlu0 %9862, %v9494
    %v9864 = vpop.permute.xlu0 %9863
    %9865 = vset.pattern.permute.xlu0 0
    %9866 = vperm.xlu0 %9865, %v9495
    %v9867 = vpop.permute.xlu0 %9866
    %9868 = vset.pattern.permute.xlu0 0
    %9869 = vperm.xlu0 %9868, %v9496
    %v9870 = vpop.permute.xlu0 %9869
    %9871 = vset.pattern.permute.xlu0 0
    %9872 = vperm.xlu0 %9871, %v9497
    %v9873 = vpop.permute.xlu0 %9872
    %v9874 = vperm.slane %v9852, %v1636
    %v9875 = vperm.slane %v9855, %v1636
    %v9876 = vperm.slane %v9858, %v1636
    %v9877 = vperm.slane %v9861, %v1636
    %v9878 = vperm.slane %v9864, %v1636
    %v9879 = vperm.slane %v9867, %v1636
    %v9880 = vperm.slane %v9870, %v1636
    %v9881 = vperm.slane %v9873, %v1636
    %v9882 = vsel %vm1735, %v9875, %v9874
    %v9883 = vsel %vm1737, %v9876, %v9882
    %v9884 = vsel %vm1739, %v9877, %v9883
    %v9885 = vsel %vm1741, %v9878, %v9884
    %v9886 = vsel %vm1743, %v9879, %v9885
    %v9887 = vsel %vm1745, %v9880, %v9886
    %v9888 = vsel %vm1747, %v9881, %v9887
    %v9890 = vsel %vm674, %v9610, 0
    %v9892 = vsel %vm674, %v9888, 0
    %9894 = vmatpush.xpose.msra.mxu0 0.0
    %9895 = vmatpush.xpose.msra.mxu0 0.0
    %9896 = vmatpush.xpose.msra.mxu0 0.0
    %9897 = vmatpush.xpose.msra.mxu0 0.0
    %9898 = vmatpush.xpose.msra.mxu0 0.0
    %9899 = vmatpush.xpose.msra.mxu0 0.0
    %9900 = vmatpush.xpose.msra.mxu0 0.0
    %9901 = vmatpush.xpose.msra.mxu0 0.0
    %9902 = vmatpush.xpose.msra.mxu0 0.0
    %9903 = vmatpush.xpose.msra.mxu0 0.0
    %9904 = vmatpush.xpose.msra.mxu0 0.0
    %9905 = vmatpush.xpose.msra.mxu0 0.0
    %9906 = vmatpush.xpose.msra.mxu0 0.0
    %9907 = vmatpush.xpose.msra.mxu0 0.0
    %9908 = vmatpush.xpose.msra.mxu0 0.0
    %9909 = vmatpush.xpose.msra.mxu0 %v9892
    %9910 = vmatmul.f32.gmra.mxu0 %v9890
    %v9911 = vpop.f32.mrf.mxu0
    %v9912 = vadd.f32 0.0, %v9911
    %9913 = vdwg.mxu0
    %9914 = vxpose.xlu0.b32.start [1/16] %v9696, 128
    %9915 = vxpose.xlu0.b32.cont [2/16] 0.0, 128
    %9916 = vxpose.xlu0.b32.cont [3/16] 0.0, 128
    %9917 = vxpose.xlu0.b32.cont [4/16] 0.0, 128
    %9918 = vxpose.xlu0.b32.cont [5/16] 0.0, 128
    %9919 = vxpose.xlu0.b32.cont [6/16] 0.0, 128
    %9920 = vxpose.xlu0.b32.cont [7/16] 0.0, 128
    %9921 = vxpose.xlu0.b32.cont [8/16] 0.0, 128
    %9922 = vxpose.xlu0.b32.cont [9/16] 0.0, 128
    %9923 = vxpose.xlu0.b32.cont [10/16] 0.0, 128
    %9924 = vxpose.xlu0.b32.cont [11/16] 0.0, 128
    %9925 = vxpose.xlu0.b32.cont [12/16] 0.0, 128
    %9926 = vxpose.xlu0.b32.cont [13/16] 0.0, 128
    %9927 = vxpose.xlu0.b32.cont [14/16] 0.0, 128
    %9928 = vxpose.xlu0.b32.cont [15/16] 0.0, 128
    %9929 = vxpose.xlu0.b32.end [16/16] 0.0, 128
    %v9930 = vpop.trf.xlu0
    %v9931 = vpop.trf.xlu0
    %v9932 = vpop.trf.xlu0
    %v9933 = vpop.trf.xlu0
    %v9934 = vpop.trf.xlu0
    %v9935 = vpop.trf.xlu0
    %v9936 = vpop.trf.xlu0
    %v9937 = vpop.trf.xlu0
    %v9938 = vpop.trf.xlu0
    %v9939 = vpop.trf.xlu0
    %v9940 = vpop.trf.xlu0
    %v9941 = vpop.trf.xlu0
    %v9942 = vpop.trf.xlu0
    %v9943 = vpop.trf.xlu0
    %v9944 = vpop.trf.xlu0
    %v9945 = vpop.trf.xlu0
    %9946 = vxpose.xlu0.b32.start [1/16] %v9768, 128
    %9947 = vxpose.xlu0.b32.cont [2/16] 0.0, 128
    %9948 = vxpose.xlu0.b32.cont [3/16] 0.0, 128
    %9949 = vxpose.xlu0.b32.cont [4/16] 0.0, 128
    %9950 = vxpose.xlu0.b32.cont [5/16] 0.0, 128
    %9951 = vxpose.xlu0.b32.cont [6/16] 0.0, 128
    %9952 = vxpose.xlu0.b32.cont [7/16] 0.0, 128
    %9953 = vxpose.xlu0.b32.cont [8/16] 0.0, 128
    %9954 = vxpose.xlu0.b32.cont [9/16] 0.0, 128
    %9955 = vxpose.xlu0.b32.cont [10/16] 0.0, 128
    %9956 = vxpose.xlu0.b32.cont [11/16] 0.0, 128
    %9957 = vxpose.xlu0.b32.cont [12/16] 0.0, 128
    %9958 = vxpose.xlu0.b32.cont [13/16] 0.0, 128
    %9959 = vxpose.xlu0.b32.cont [14/16] 0.0, 128
    %9960 = vxpose.xlu0.b32.cont [15/16] 0.0, 128
    %9961 = vxpose.xlu0.b32.end [16/16] 0.0, 128
    %v9962 = vpop.trf.xlu0
    %v9963 = vpop.trf.xlu0
    %v9964 = vpop.trf.xlu0
    %v9965 = vpop.trf.xlu0
    %v9966 = vpop.trf.xlu0
    %v9967 = vpop.trf.xlu0
    %v9968 = vpop.trf.xlu0
    %v9969 = vpop.trf.xlu0
    %v9970 = vpop.trf.xlu0
    %v9971 = vpop.trf.xlu0
    %v9972 = vpop.trf.xlu0
    %v9973 = vpop.trf.xlu0
    %v9974 = vpop.trf.xlu0
    %v9975 = vpop.trf.xlu0
    %v9976 = vpop.trf.xlu0
    %v9977 = vpop.trf.xlu0
    %9978 = vxpose.xlu0.b32.start [1/16] %v9840, 128
    %9979 = vxpose.xlu0.b32.cont [2/16] 0.0, 128
    %9980 = vxpose.xlu0.b32.cont [3/16] 0.0, 128
    %9981 = vxpose.xlu0.b32.cont [4/16] 0.0, 128
    %9982 = vxpose.xlu0.b32.cont [5/16] 0.0, 128
    %9983 = vxpose.xlu0.b32.cont [6/16] 0.0, 128
    %9984 = vxpose.xlu0.b32.cont [7/16] 0.0, 128
    %9985 = vxpose.xlu0.b32.cont [8/16] 0.0, 128
    %9986 = vxpose.xlu0.b32.cont [9/16] 0.0, 128
    %9987 = vxpose.xlu0.b32.cont [10/16] 0.0, 128
    %9988 = vxpose.xlu0.b32.cont [11/16] 0.0, 128
    %9989 = vxpose.xlu0.b32.cont [12/16] 0.0, 128
    %9990 = vxpose.xlu0.b32.cont [13/16] 0.0, 128
    %9991 = vxpose.xlu0.b32.cont [14/16] 0.0, 128
    %9992 = vxpose.xlu0.b32.cont [15/16] 0.0, 128
    %9993 = vxpose.xlu0.b32.end [16/16] 0.0, 128
    %v9994 = vpop.trf.xlu0
    %v9995 = vpop.trf.xlu0
    %v9996 = vpop.trf.xlu0
    %v9997 = vpop.trf.xlu0
    %v9998 = vpop.trf.xlu0
    %v9999 = vpop.trf.xlu0
    %v10000 = vpop.trf.xlu0
    %v10001 = vpop.trf.xlu0
    %v10002 = vpop.trf.xlu0
    %v10003 = vpop.trf.xlu0
    %v10004 = vpop.trf.xlu0
    %v10005 = vpop.trf.xlu0
    %v10006 = vpop.trf.xlu0
    %v10007 = vpop.trf.xlu0
    %v10008 = vpop.trf.xlu0
    %v10009 = vpop.trf.xlu0
    %10010 = vxpose.xlu0.b32.start [1/16] %v9912, 128
    %10011 = vxpose.xlu0.b32.cont [2/16] 0.0, 128
    %10012 = vxpose.xlu0.b32.cont [3/16] 0.0, 128
    %10013 = vxpose.xlu0.b32.cont [4/16] 0.0, 128
    %10014 = vxpose.xlu0.b32.cont [5/16] 0.0, 128
    %10015 = vxpose.xlu0.b32.cont [6/16] 0.0, 128
    %10016 = vxpose.xlu0.b32.cont [7/16] 0.0, 128
    %10017 = vxpose.xlu0.b32.cont [8/16] 0.0, 128
    %10018 = vxpose.xlu0.b32.cont [9/16] 0.0, 128
    %10019 = vxpose.xlu0.b32.cont [10/16] 0.0, 128
    %10020 = vxpose.xlu0.b32.cont [11/16] 0.0, 128
    %10021 = vxpose.xlu0.b32.cont [12/16] 0.0, 128
    %10022 = vxpose.xlu0.b32.cont [13/16] 0.0, 128
    %10023 = vxpose.xlu0.b32.cont [14/16] 0.0, 128
    %10024 = vxpose.xlu0.b32.cont [15/16] 0.0, 128
    %10025 = vxpose.xlu0.b32.end [16/16] 0.0, 128
    %v10026 = vpop.trf.xlu0
    %v10027 = vpop.trf.xlu0
    %v10028 = vpop.trf.xlu0
    %v10029 = vpop.trf.xlu0
    %v10030 = vpop.trf.xlu0
    %v10031 = vpop.trf.xlu0
    %v10032 = vpop.trf.xlu0
    %v10033 = vpop.trf.xlu0
    %v10034 = vpop.trf.xlu0
    %v10035 = vpop.trf.xlu0
    %v10036 = vpop.trf.xlu0
    %v10037 = vpop.trf.xlu0
    %v10038 = vpop.trf.xlu0
    %v10039 = vpop.trf.xlu0
    %v10040 = vpop.trf.xlu0
    %v10041 = vpop.trf.xlu0
    %v10042 = vrot.slane %v9994, 4
    %v10043 = vsel %vm3316, %v10042, %v9930
    %v10044 = vrot.slane %v9930, 4
    %v10045 = vsel %vm3316, %v9994, %v10044
    %v10047 = vunpack.c.l.s4 1983009808
    %v10048 = vunpack.c.0.s8 %v10047
    %v10049 = vperm.slane %v10043, %v10048
    %v10051 = vunpack.c.l.s4 1983009808
    %v10052 = vunpack.c.0.s8 %v10051
    %v10053 = vperm.slane %v10045, %v10052
    %v10054 = vrot.slane %v10026, 4
    %v10055 = vsel %vm3316, %v10054, %v9962
    %v10056 = vrot.slane %v9962, 4
    %v10057 = vsel %vm3316, %v10026, %v10056
    %v10059 = vunpack.c.l.s4 1983009808
    %v10060 = vunpack.c.0.s8 %v10059
    %v10061 = vperm.slane %v10055, %v10060
    %v10063 = vunpack.c.l.s4 1983009808
    %v10064 = vunpack.c.0.s8 %v10063
    %v10065 = vperm.slane %v10057, %v10064
    %v10066 = vrot.slane %v10061, 4
    %v10067 = vsel %vm3316, %v10066, %v10049
    %v10068 = vrot.slane %v10049, 4
    %v10069 = vsel %vm3316, %v10061, %v10068
    %v10071 = vunpack.c.l.s4 1934713408
    %v10072 = vunpack.c.0.s8 %v10071
    %v10073 = vperm.slane %v10067, %v10072
    %v10075 = vunpack.c.l.s4 1934713408
    %v10076 = vunpack.c.0.s8 %v10075
    %v10077 = vperm.slane %v10069, %v10076
    %v10078 = vrot.slane %v10065, 4
    %v10079 = vsel %vm3316, %v10078, %v10053
    %v10080 = vrot.slane %v10053, 4
    %v10081 = vsel %vm3316, %v10065, %v10080
    %v10083 = vunpack.c.l.s4 1934713408
    %v10084 = vunpack.c.0.s8 %v10083
    %v10085 = vperm.slane %v10079, %v10084
    %v10087 = vunpack.c.l.s4 1934713408
    %v10088 = vunpack.c.0.s8 %v10087
    %v10089 = vperm.slane %v10081, %v10088
    %v10090 = vrot.slane %v10073, 4
    %v10091 = vsel %vm3316, 0.0, %v10090
    %v10092 = vrot.slane %v10077, 4
    %v10093 = vsel %vm3316, 0.0, %v10092
    %v10094 = vrot.slane %v10085, 4
    %v10095 = vsel %vm3316, 0.0, %v10094
    %v10096 = vrot.slane %v10089, 4
    %v10097 = vsel %vm3316, 0.0, %v10096
    %v10098 = vsel %vm3316, %v10092, %v10073
    %v10100 = vunpack.c.l.s4 1983009808
    %v10101 = vunpack.c.0.s8 %v10100
    %v10102 = vperm.slane %v10098, %v10101
    %v10103 = vrot.slane %v10093, 4
    %v10104 = vsel %vm3316, %v10103, %v10091
    %v10106 = vunpack.c.l.s4 1983009808
    %v10107 = vunpack.c.0.s8 %v10106
    %v10108 = vperm.slane %v10104, %v10107
    %v10109 = vsel %vm3316, %v10096, %v10085
    %v10111 = vunpack.c.l.s4 1983009808
    %v10112 = vunpack.c.0.s8 %v10111
    %v10113 = vperm.slane %v10109, %v10112
    %v10114 = vrot.slane %v10097, 4
    %v10115 = vsel %vm3316, %v10114, %v10095
    %v10117 = vunpack.c.l.s4 1983009808
    %v10118 = vunpack.c.0.s8 %v10117
    %v10119 = vperm.slane %v10115, %v10118
    %v10120 = vrot.slane %v10108, 4
    %v10121 = vsel %vm3316, %v10120, %v10102
    %v10122 = vrot.slane %v10102, 4
    %v10123 = vsel %vm3316, %v10108, %v10122
    %v10125 = vunpack.c.l.s4 1934713408
    %v10126 = vunpack.c.0.s8 %v10125
    %v10127 = vperm.slane %v10121, %v10126
    %v10129 = vunpack.c.l.s4 1934713408
    %v10130 = vunpack.c.0.s8 %v10129
    %v10131 = vperm.slane %v10123, %v10130
    %v10132 = vrot.slane %v10119, 4
    %v10133 = vsel %vm3316, %v10132, %v10113
    %v10134 = vrot.slane %v10113, 4
    %v10135 = vsel %vm3316, %v10119, %v10134
    %v10137 = vunpack.c.l.s4 1934713408
    %v10138 = vunpack.c.0.s8 %v10137
    %v10139 = vperm.slane %v10133, %v10138
    %v10141 = vunpack.c.l.s4 1934713408
    %v10142 = vunpack.c.0.s8 %v10141
    %v10143 = vperm.slane %v10135, %v10142
    %v10144 = vrot.slane %v10139, 4
    %v10145 = vsel %vm3316, %v10144, %v10127
    %v10146 = vrot.slane %v10127, 4
    %v10147 = vsel %vm3316, %v10139, %v10146
    %v10148 = vrot.slane %v10143, 4
    %v10149 = vsel %vm3316, %v10148, %v10131
    %v10150 = vrot.slane %v10131, 4
    %v10151 = vsel %vm3316, %v10143, %v10150
    %10153 = vrot.lane.b32.xlu0 %v10147, 8
    %v10154 = vpop.permute.xlu0 %10153
    %10157 = vrot.lane.b32.xlu0 %v10149, 16
    %v10158 = vpop.permute.xlu0 %10157
    %10161 = vrot.lane.b32.xlu0 %v10151, 24
    %v10162 = vpop.permute.xlu0 %10161
    %v10164 = vsel %vm674, %v10145, %v10154
    %v10165 = vsel %vm1774, %v10164, %v10158
    %v10166 = vsel %vm3440, %v10165, %v10162
    %v10167 = vld [vmem:[#allocation13] sm:$0xff]
    %v10168 = vld [vmem:[#allocation13 + $0x8] sm:$0xff]
    %v10169 = vld [vmem:[#allocation13 + $0x10] sm:$0xff]
    %v10170 = vld [vmem:[#allocation13 + $0x18] sm:$0xff]
    %v10171 = vld [vmem:[#allocation14] sm:$0xff]
    %v10172 = vld [vmem:[#allocation14 + $0x8] sm:$0xff]
    %v10173 = vld [vmem:[#allocation14 + $0x10] sm:$0xff]
    %v10174 = vld [vmem:[#allocation14 + $0x18] sm:$0xff]
    %v10176 = vsel %vm238, %v3441, 0
    %v10179 = vsel %vm238, %v8279, 0
    %10181 = vmatpush.msra.mxu0 0.0
    %10182 = vmatpush.msra.mxu0 0.0
    %10183 = vmatpush.msra.mxu0 0.0
    %10184 = vmatpush.msra.mxu0 0.0
    %10185 = vmatpush.msra.mxu0 0.0
    %10186 = vmatpush.msra.mxu0 0.0
    %10187 = vmatpush.msra.mxu0 0.0
    %10188 = vmatpush.msra.mxu0 0.0
    %10189 = vmatpush.msra.mxu0 0.0
    %10190 = vmatpush.msra.mxu0 0.0
    %10191 = vmatpush.msra.mxu0 0.0
    %10192 = vmatpush.msra.mxu0 0.0
    %10193 = vmatpush.msra.mxu0 %v10174
    %10194 = vmatpush.msra.mxu0 %v10173
    %10195 = vmatpush.msra.mxu0 %v10172
    %10196 = vmatpush.msra.mxu0 %v10171
    %10197 = vmatmul.f32.gmra.mxu0 %v10176
    %v10198 = vpop.f32.mrf.mxu0
    %v10199 = vadd.f32 0.0, %v10198
    %10200 = vmatmul.f32.gmra.mxu0 %v10179
    %v10201 = vpop.f32.mrf.mxu0
    %v10202 = vadd.f32 0.0, %v10201
    %10203 = vdwg.mxu0
    %v10205 = vsel %vm238, %v206, 0
    %v10208 = vsel %vm238, %v207, 0
    %10210 = vmatpush.msra.mxu0 0.0
    %10211 = vmatpush.msra.mxu0 0.0
    %10212 = vmatpush.msra.mxu0 0.0
    %10213 = vmatpush.msra.mxu0 0.0
    %10214 = vmatpush.msra.mxu0 0.0
    %10215 = vmatpush.msra.mxu0 0.0
    %10216 = vmatpush.msra.mxu0 0.0
    %10217 = vmatpush.msra.mxu0 0.0
    %10218 = vmatpush.msra.mxu0 0.0
    %10219 = vmatpush.msra.mxu0 0.0
    %10220 = vmatpush.msra.mxu0 0.0
    %10221 = vmatpush.msra.mxu0 0.0
    %10222 = vmatpush.msra.mxu0 %v10170
    %10223 = vmatpush.msra.mxu0 %v10169
    %10224 = vmatpush.msra.mxu0 %v10168
    %10225 = vmatpush.msra.mxu0 %v10167
    %10226 = vmatmul.f32.gmra.mxu0 %v10205
    %v10227 = vpop.f32.mrf.mxu0
    %v10228 = vadd.f32 %v10199, %v10227
    %10229 = vmatmul.f32.gmra.mxu0 %v10208
    %v10230 = vpop.f32.mrf.mxu0
    %v10231 = vadd.f32 %v10202, %v10230
    %10232 = vdwg.mxu0
    %v10233 = vld [vmem:[#allocation16] sm:$0xff]
    %v10234 = vld [vmem:[#allocation16 + $0x8] sm:$0xff]
    %v10235 = vld [vmem:[#allocation16 + $0x10] sm:$0xff]
    %v10236 = vld [vmem:[#allocation16 + $0x18] sm:$0xff]
    %v10238 = vsel %vm238, %v5328, 0
    %v10241 = vsel %vm238, %v10166, 0
    %10243 = vmatpush.msra.mxu0 0.0
    %10244 = vmatpush.msra.mxu0 0.0
    %10245 = vmatpush.msra.mxu0 0.0
    %10246 = vmatpush.msra.mxu0 0.0
    %10247 = vmatpush.msra.mxu0 0.0
    %10248 = vmatpush.msra.mxu0 0.0
    %10249 = vmatpush.msra.mxu0 0.0
    %10250 = vmatpush.msra.mxu0 0.0
    %10251 = vmatpush.msra.mxu0 0.0
    %10252 = vmatpush.msra.mxu0 0.0
    %10253 = vmatpush.msra.mxu0 0.0
    %10254 = vmatpush.msra.mxu0 0.0
    %10255 = vmatpush.msra.mxu0 %v10236
    %10256 = vmatpush.msra.mxu0 %v10235
    %10257 = vmatpush.msra.mxu0 %v10234
    %10258 = vmatpush.msra.mxu0 %v10233
    %10259 = vmatmul.f32.gmra.mxu0 %v10238
    %v10260 = vpop.f32.mrf.mxu0
    %v10261 = vadd.f32 0.0, %v10260
    %10262 = vmatmul.f32.gmra.mxu0 %v10241
    %v10263 = vpop.f32.mrf.mxu0
    %v10264 = vadd.f32 0.0, %v10263
    %10265 = vdwg.mxu0
    %v10266 = vadd.f32 %v10228, %v10261
    %v10267 = vadd.f32 %v10231, %v10264
    %v10268 = vld [vmem:[%s19] sm:$0x1]
    %v10270 = vperm.slane %v10268, 0
    %v10272 = vadd.f32 %v10266, %v10270
    %v10273 = vadd.f32 %v10267, %v10270
    %vm10274 = vcmask 523264
    %10275 = vst.msk [vmem:[#allocation17] sm:$0xff] %vm10274, %v10272
    %10276 = vst.msk [vmem:[#allocation17 + $0x8] sm:$0xff] %vm10274, %v10273
    // Predicated region
    $region118: #{tpu_custom_call.1} parent=1 // pred_check
      _
    $region119: #{tpu_custom_call.1} parent=1 // pred_check_branch
      %10278 = sbr.rel (0) target = $region121
    $region120: #{tpu_custom_call.1} parent=1 // pred_region
      %10280 = vsyncadd [#allocation4], 0
      %s10281 = sshll.u32 [#allocation17], 4
      %s10282 = int_to_ptr.vmem [resolvable:$true] %s10281
      %s10283 = sshll.u32 %s20, 4
      %s10284 = int_to_ptr.hbm [resolvable:$true] %s10283
      %10289 = dma.vmem_to_hbm [thread:$0]  %s10282, 256, %s10284, [#allocation4], 128, 128, 8
    $region121: #{tpu_custom_call.1} parent=1 // pred_fallthru
      _
    // Predicated region
    $region122: #{tpu_custom_call.1} parent=1 // pred_check
      _
    $region123: #{tpu_custom_call.1} parent=1 // pred_check_branch
      %10291 = sbr.rel (0) target = $region125
    $region124: #{tpu_custom_call.1} parent=1 // pred_region
      %10293 = dma.done [#allocation4], 256
    $region125: #{tpu_custom_call.1} parent=1 // pred_fallthru
      _
    %10294 = vsyncpa [#allocation3], 1
    %10295 = vsyncpa [#allocation6], 1
    %10296 = vsyncpa [#allocation9], 1
    %10297 = vsyncpa [#allocation12], 1
    %10298 = vsyncpa [#allocation15], 1
    %10299 = vsyncpa [#allocation4], 1

</llo_original>
